<compile_context>
chip_gen: v6e
topology: v6e:2x2x1
jax: 0.10.0
libtpu: 0.0.40
codegen_flags: <defaults>
</compile_context>

<pallas_src>
import jax
import jax.numpy as jnp
from jax import lax
from jax.experimental import pallas as pl
from jax.experimental.pallas import tpu as pltpu


LEAKY_SLOPE = 0.1


def _leaky(x):
    return jnp.where(x >= 0.0, x, LEAKY_SLOPE * x)


# ---------------------------------------------------------------------------
# Kernel A: fused  conv1 -> conv2 -> sub-pixel ConvTranspose  (one image/step)
# ---------------------------------------------------------------------------
def _make_kernel_a(H, W):
    HW = H * W

    def kernel(x_ref, w1_ref, b1_ref, w2_ref, b2_ref, wd_ref, o_ref,
               pad_a, pad_b):
        # ---------------- conv1: 256 -> 128, 3x3, pad 1, bias, LeakyReLU ----
        pad_a[...] = jnp.zeros(pad_a.shape, pad_a.dtype)
        pad_a[1:1 + H, 1:1 + W, :] = x_ref[...]
        acc = jnp.zeros((HW, 128), jnp.float32)
        for ky in range(3):
            for kx in range(3):
                slab = pad_a[ky:ky + H, kx:kx + W, :]
                slab = slab.reshape(HW, 256).astype(jnp.bfloat16)
                acc = acc + jnp.dot(slab, w1_ref[ky * 3 + kx],
                                    preferred_element_type=jnp.float32)
        out1 = _leaky(acc + b1_ref[...])

        # ---------------- conv2: 128 -> 128, 3x3, pad 1, bias, LeakyReLU ----
        pad_b[...] = jnp.zeros(pad_b.shape, pad_b.dtype)
        pad_b[1:1 + H, 1:1 + W, :] = out1.reshape(H, W, 128)
        acc = jnp.zeros((HW, 128), jnp.float32)
        for ky in range(3):
            for kx in range(3):
                slab = pad_b[ky:ky + H, kx:kx + W, :]
                slab = slab.reshape(HW, 128).astype(jnp.bfloat16)
                acc = acc + jnp.dot(slab, w2_ref[ky * 3 + kx],
                                    preferred_element_type=jnp.float32)
        out2 = _leaky(acc + b2_ref[...])

        # ------- ConvTranspose2d(128->64, k4, s2, p1) as 4 sub-pixel phases -
        # Reuse pad_b: only the interior is rewritten, the zero border stays.
        pad_b[1:1 + H, 1:1 + W, :] = out2.reshape(H, W, 128)
        for ry in range(2):
            for rx in range(2):
                acc = jnp.zeros((HW, 64), jnp.float32)
                for dy in range(2):
                    for dx in range(2):
                        slab = pad_b[ry + dy:ry + dy + H,
                                     rx + dx:rx + dx + W, :]
                        slab = slab.reshape(HW, 128).astype(jnp.bfloat16)
                        acc = acc + jnp.dot(
                            slab, wd_ref[ry * 2 + rx, dy * 2 + dx],
                            preferred_element_type=jnp.float32)
                # output phase (ry, rx): up[2*py+ry, 2*px+rx] = acc[py*W+px]
                o_ref[ry * 2 + rx] = _leaky(acc)

    return kernel


def _deconv_phases(x, w1, b1, w2, b2, wd):
    """x: [N, H, W, 256] -> phase-separated deconv output [N, 4, H*W, 64]."""
    N, H, W, _ = x.shape
    return pl.pallas_call(
        _make_kernel_a(H, W),
        out_shape=jax.ShapeDtypeStruct((N, 4, H * W, 64), jnp.float32),
        grid=(N,),
        in_specs=[
            pl.BlockSpec((pl.Squeezed(), H, W, 256), lambda n: (n, 0, 0, 0)),
            pl.BlockSpec((9, 256, 128), lambda n: (0, 0, 0)),
            pl.BlockSpec((1, 128), lambda n: (0, 0)),
            pl.BlockSpec((9, 128, 128), lambda n: (0, 0, 0)),
            pl.BlockSpec((1, 128), lambda n: (0, 0)),
            pl.BlockSpec((4, 4, 128, 64), lambda n: (0, 0, 0, 0)),
        ],
        out_specs=pl.BlockSpec((pl.Squeezed(), 4, H * W, 64),
                               lambda n: (n, 0, 0, 0)),
        scratch_shapes=[
            pltpu.VMEM((H + 2, W + 2, 256), jnp.float32),   # padded conv1 in
            pltpu.VMEM((H + 2, W + 2, 128), jnp.float32),   # padded conv2/deconv in
        ],
        compiler_params=pltpu.CompilerParams(
            dimension_semantics=("parallel",)),
    )(x, w1, b1, w2, b2, wd)


# ---------------------------------------------------------------------------
# Kernel B: est_normal conv (Cout padded 3->128, lane-dense) + fused L2 norm
# ---------------------------------------------------------------------------
def _make_kernel_b(Ho, Wo):
    HW = Ho * Wo

    def kernel(x_ref, w3_ref, o_ref, pad_c):
        pad_c[...] = jnp.zeros(pad_c.shape, pad_c.dtype)
        pad_c[1:1 + Ho, 1:1 + Wo, :] = x_ref[...]
        acc = jnp.zeros((HW, 128), jnp.float32)
        for ky in range(3):
            for kx in range(3):
                slab = pad_c[ky:ky + Ho, kx:kx + Wo, :]
                slab = slab.reshape(HW, 64).astype(jnp.bfloat16)
                acc = acc + jnp.dot(slab, w3_ref[ky * 3 + kx],
                                    preferred_element_type=jnp.float32)
        # F.normalize(p=2, eps=1e-12): x * rsqrt(max(sum(x^2), eps^2))
        # (padded channels 3..127 are exactly zero, so the norm is unchanged)
        ssq = jnp.sum(acc * acc, axis=-1, keepdims=True)
        inv = lax.rsqrt(jnp.maximum(ssq, 1e-24))
        o_ref[...] = (acc * inv).reshape(Ho, Wo, 128)

    return kernel


def _normal_head(up, w3p):
    """up: [N, 2H, 2W, 64] -> normalized map [N, 2H, 2W, 128] (cols 0:3 real)."""
    N, Ho, Wo, _ = up.shape
    return pl.pallas_call(
        _make_kernel_b(Ho, Wo),
        out_shape=jax.ShapeDtypeStruct((N, Ho, Wo, 128), jnp.float32),
        grid=(N,),
        in_specs=[
            pl.BlockSpec((pl.Squeezed(), Ho, Wo, 64), lambda n: (n, 0, 0, 0)),
            pl.BlockSpec((9, 64, 128), lambda n: (0, 0, 0)),
        ],
        out_specs=pl.BlockSpec((pl.Squeezed(), Ho, Wo, 128),
                               lambda n: (n, 0, 0, 0)),
        scratch_shapes=[pltpu.VMEM((Ho + 2, Wo + 2, 64), jnp.float32)],
        compiler_params=pltpu.CompilerParams(
            dimension_semantics=("parallel",)),
    )(up, w3p)


# ---------------------------------------------------------------------------
# Parameters (deterministic, kaiming-style; PyTorch layouts re-packed for TPU)
# ---------------------------------------------------------------------------
def init_params(key):
    k1, k2, k3, k4, k5, k6 = jax.random.split(key, 6)

    def kaiming(k, shape, fan_in):
        return jax.random.normal(k, shape, jnp.float32) * jnp.sqrt(2.0 / fan_in)

    # PyTorch-layout weights
    w1_t = kaiming(k1, (128, 256, 3, 3), 256 * 9)   # Conv2d(256,128,3,p1), bias
    b1 = 0.01 * jax.random.normal(k5, (1, 128), jnp.float32)
    w2_t = kaiming(k2, (128, 128, 3, 3), 128 * 9)   # Conv2d(128,128,3,p1), bias
    b2 = 0.01 * jax.random.normal(k6, (1, 128), jnp.float32)
    wd_t = kaiming(k3, (128, 64, 4, 4), 128 * 16)   # ConvTranspose2d(128,64,4,2,1)
    w3_t = kaiming(k4, (3, 64, 3, 3), 64 * 9)       # Conv2d(64,3,3,p1), no bias

    def conv_w(wt):        # [Cout, Cin, K, K] -> [K*K, Cin, Cout] bf16 (MXU operand)
        K = wt.shape[-1]
        w = jnp.transpose(wt, (2, 3, 1, 0)).reshape(K * K, wt.shape[1], wt.shape[0])
        return w.astype(jnp.bfloat16)

    def deconv_phase_w(wt):
        # [Cin, Cout, 4, 4] -> [phase=ry*2+rx, tap=dy*2+dx, Cin, Cout]
        # out[2py+ry, 2px+rx] += x[py+dy-1+ry, px+dx-1+rx] @ Wt[:,:,3-ry-2dy,3-rx-2dx]
        mats = []
        for ry in range(2):
            for rx in range(2):
                for dy in range(2):
                    for dx in range(2):
                        mats.append(wt[:, :, 3 - ry - 2 * dy, 3 - rx - 2 * dx])
        w = jnp.stack(mats, 0).reshape(4, 4, wt.shape[0], wt.shape[1])
        return w.astype(jnp.bfloat16)

    def out_head_w(wt):    # [3, 64, 3, 3] -> [9, 64, 128] zero-padded (lane-dense)
        K = wt.shape[-1]
        w = jnp.transpose(wt, (2, 3, 1, 0)).reshape(K * K, wt.shape[1], wt.shape[0])
        w = jnp.pad(w, ((0, 0), (0, 0), (0, 128 - wt.shape[0])))
        return w.astype(jnp.bfloat16)

    return dict(w1=conv_w(w1_t), b1=b1, w2=conv_w(w2_t), b2=b2,
                wd=deconv_phase_w(wd_t), w3=out_head_w(w3_t))


# ---------------------------------------------------------------------------
# Full Regressor forward
# ---------------------------------------------------------------------------
def regressor_forward(x, params):
    """x: [N, 256, D, H, W] (PyTorch NCDHW) -> normal map [N, 3, 2H, 2W]."""
    x = x.astype(jnp.float32)
    # max_pool3d over the full depth axis, done BEFORE the layout transpose
    x = jnp.max(x, axis=2)                              # [N, 256, H, W]
    x = jnp.transpose(x, (0, 2, 3, 1))                  # NHWC
    N, H, W, _ = x.shape

    # fused conv1 + conv2 + sub-pixel ConvTranspose -> 4 output phases
    ph = _deconv_phases(x, params['w1'], params['b1'],
                        params['w2'], params['b2'], params['wd'])

    # interleave phases: up[n, 2py+ry, 2px+rx, c] = ph[n, ry*2+rx, py*W+px, c]
    up = ph.reshape(N, 2, 2, H, W, 64)
    up = jnp.transpose(up, (0, 3, 1, 4, 2, 5)).reshape(N, 2 * H, 2 * W, 64)

    # est_normal conv (Cout padded to 128) + fused L2 normalization
    normal = _normal_head(up, params['w3'])[..., :3]    # [N, 2H, 2W, 3]
    return jnp.transpose(normal, (0, 3, 1, 2))          # NCHW


if __name__ == "__main__":
    key = jax.random.PRNGKey(0)
    kx, kp = jax.random.split(key)

    N, C, D, H, W = 2, 256, 3, 8, 8      # small shapes consistent with the module
    x = jax.random.normal(kx, (N, C, D, H, W), jnp.float32)
    params = init_params(kp)

    fwd = jax.jit(regressor_forward)
    out = jax.block_until_ready(fwd(x, params))

    assert out.shape == (N, 3, 2 * H, 2 * W), out.shape
    assert bool(jnp.all(jnp.isfinite(out)))
    nrm = jnp.sqrt(jnp.sum(out * out, axis=1))          # unit-norm per pixel
    assert bool(jnp.all(jnp.abs(nrm - 1.0) < 3e-3))
    print("KERNEL_OK")
</pallas_src>

<mosaic_0001>
module attributes {stable_mosaic.version = 11 : i64} {
  func.func @kernel(%arg0: i32, %arg1: memref<1x8x8x256xf32, #tpu.memory_space<vmem>>, %arg2: memref<9x256x128xbf16, #tpu.memory_space<vmem>>, %arg3: memref<1x128xf32, #tpu.memory_space<vmem>>, %arg4: memref<9x128x128xbf16, #tpu.memory_space<vmem>>, %arg5: memref<1x128xf32, #tpu.memory_space<vmem>>, %arg6: memref<4x4x128x64xbf16, #tpu.memory_space<vmem>>, %arg7: memref<1x4x64x64xf32, #tpu.memory_space<vmem>>, %arg8: memref<10x10x256xf32, #tpu.memory_space<vmem>>, %arg9: memref<10x10x128xf32, #tpu.memory_space<vmem>>) attributes {dimension_semantics = [#tpu.dimension_semantics<parallel>], iteration_bounds = array<i64: 2>, scalar_prefetch = 0 : i64, scratch_operands = 2 : i64, tpu.core_type = #tpu.core_type<tc>, window_params = [{transform_indices = @transform_0, window_bounds = array<i64: 1, 8, 8, 256>}, {pipeline_mode = #tpu.pipeline_mode<synchronous>, transform_indices = @transform_1, window_bounds = array<i64: 9, 256, 128>}, {pipeline_mode = #tpu.pipeline_mode<synchronous>, transform_indices = @transform_2, window_bounds = array<i64: 1, 128>}, {pipeline_mode = #tpu.pipeline_mode<synchronous>, transform_indices = @transform_3, window_bounds = array<i64: 9, 128, 128>}, {pipeline_mode = #tpu.pipeline_mode<synchronous>, transform_indices = @transform_4, window_bounds = array<i64: 1, 128>}, {pipeline_mode = #tpu.pipeline_mode<synchronous>, transform_indices = @transform_5, window_bounds = array<i64: 4, 4, 128, 64>}, {transform_indices = @transform_6, window_bounds = array<i64: 1, 4, 64, 64>}]} {
    %cst = arith.constant 0.000000e+00 : f32
    %0 = vector.broadcast %cst : f32 to vector<10x10x256xf32>
    %c0 = arith.constant 0 : index
    %c0_0 = arith.constant 0 : index
    %c0_1 = arith.constant 0 : index
    %1 = vector.load %arg8[%c0, %c0_0, %c0_1] : memref<10x10x256xf32, #tpu.memory_space<vmem>>, vector<10x10x256xf32>
    tpu.vector_store %arg8[%c0, %c0_0, %c0_1], %0 {strides = array<i32>} : memref<10x10x256xf32, #tpu.memory_space<vmem>>, vector<10x10x256xf32>,
    %c0_2 = arith.constant 0 : index
    %c0_3 = arith.constant 0 : index
    %c0_4 = arith.constant 0 : index
    %c0_5 = arith.constant 0 : index
    %2 = vector.load %arg1[%c0_2, %c0_3, %c0_4, %c0_5] : memref<1x8x8x256xf32, #tpu.memory_space<vmem>>, vector<1x8x8x256xf32>
    %3 = vector.shape_cast %2 : vector<1x8x8x256xf32> to vector<8x8x256xf32>
    %c1 = arith.constant 1 : index
    %c1_6 = arith.constant 1 : index
    %c0_7 = arith.constant 0 : index
    %4 = vector.load %arg8[%c1, %c1_6, %c0_7] : memref<10x10x256xf32, #tpu.memory_space<vmem>>, vector<8x8x256xf32>
    tpu.vector_store %arg8[%c1, %c1_6, %c0_7], %3 {strides = array<i32>} : memref<10x10x256xf32, #tpu.memory_space<vmem>>, vector<8x8x256xf32>,
    %cst_8 = arith.constant 0.000000e+00 : f32
    %5 = vector.broadcast %cst_8 : f32 to vector<64x128xf32>
    %c0_9 = arith.constant 0 : index
    %c0_10 = arith.constant 0 : index
    %c0_11 = arith.constant 0 : index
    %6 = vector.load %arg8[%c0_9, %c0_10, %c0_11] : memref<10x10x256xf32, #tpu.memory_space<vmem>>, vector<8x8x256xf32>
    %7 = vector.shape_cast %6 : vector<8x8x256xf32> to vector<64x256xf32>
    %8 = arith.truncf %7 : vector<64x256xf32> to vector<64x256xbf16>
    %c0_12 = arith.constant 0 : index
    %c0_13 = arith.constant 0 : index
    %c0_14 = arith.constant 0 : index
    %9 = vector.load %arg2[%c0_12, %c0_13, %c0_14] : memref<9x256x128xbf16, #tpu.memory_space<vmem>>, vector<1x256x128xbf16>
    %10 = vector.shape_cast %9 : vector<1x256x128xbf16> to vector<256x128xbf16>
    %cst_15 = arith.constant dense<0.000000e+00> : vector<64x128xf32>
    %11 = tpu.matmul %8, %10, %cst_15 {dimension_numbers = #tpu.dot_dimension_numbers<[1], [0], [0], [1], [0, 0, 1, 1], [], []>} : vector<64x256xbf16>, vector<256x128xbf16>, vector<64x128xf32> -> vector<64x128xf32>
    %12 = arith.addf %5, %11 : vector<64x128xf32>
    %c0_16 = arith.constant 0 : index
    %c1_17 = arith.constant 1 : index
    %c0_18 = arith.constant 0 : index
    %13 = vector.load %arg8[%c0_16, %c1_17, %c0_18] : memref<10x10x256xf32, #tpu.memory_space<vmem>>, vector<8x8x256xf32>
    %14 = vector.shape_cast %13 : vector<8x8x256xf32> to vector<64x256xf32>
    %15 = arith.truncf %14 : vector<64x256xf32> to vector<64x256xbf16>
    %c1_19 = arith.constant 1 : index
    %c0_20 = arith.constant 0 : index
    %c0_21 = arith.constant 0 : index
    %16 = vector.load %arg2[%c1_19, %c0_20, %c0_21] : memref<9x256x128xbf16, #tpu.memory_space<vmem>>, vector<1x256x128xbf16>
    %17 = vector.shape_cast %16 : vector<1x256x128xbf16> to vector<256x128xbf16>
    %cst_22 = arith.constant dense<0.000000e+00> : vector<64x128xf32>
    %18 = tpu.matmul %15, %17, %cst_22 {dimension_numbers = #tpu.dot_dimension_numbers<[1], [0], [0], [1], [0, 0, 1, 1], [], []>} : vector<64x256xbf16>, vector<256x128xbf16>, vector<64x128xf32> -> vector<64x128xf32>
    %19 = arith.addf %12, %18 : vector<64x128xf32>
    %c0_23 = arith.constant 0 : index
    %c2 = arith.constant 2 : index
    %c0_24 = arith.constant 0 : index
    %20 = vector.load %arg8[%c0_23, %c2, %c0_24] : memref<10x10x256xf32, #tpu.memory_space<vmem>>, vector<8x8x256xf32>
    %21 = vector.shape_cast %20 : vector<8x8x256xf32> to vector<64x256xf32>
    %22 = arith.truncf %21 : vector<64x256xf32> to vector<64x256xbf16>
    %c2_25 = arith.constant 2 : index
    %c0_26 = arith.constant 0 : index
    %c0_27 = arith.constant 0 : index
    %23 = vector.load %arg2[%c2_25, %c0_26, %c0_27] : memref<9x256x128xbf16, #tpu.memory_space<vmem>>, vector<1x256x128xbf16>
    %24 = vector.shape_cast %23 : vector<1x256x128xbf16> to vector<256x128xbf16>
    %cst_28 = arith.constant dense<0.000000e+00> : vector<64x128xf32>
    %25 = tpu.matmul %22, %24, %cst_28 {dimension_numbers = #tpu.dot_dimension_numbers<[1], [0], [0], [1], [0, 0, 1, 1], [], []>} : vector<64x256xbf16>, vector<256x128xbf16>, vector<64x128xf32> -> vector<64x128xf32>
    %26 = arith.addf %19, %25 : vector<64x128xf32>
    %c1_29 = arith.constant 1 : index
    %c0_30 = arith.constant 0 : index
    %c0_31 = arith.constant 0 : index
    %27 = vector.load %arg8[%c1_29, %c0_30, %c0_31] : memref<10x10x256xf32, #tpu.memory_space<vmem>>, vector<8x8x256xf32>
    %28 = vector.shape_cast %27 : vector<8x8x256xf32> to vector<64x256xf32>
    %29 = arith.truncf %28 : vector<64x256xf32> to vector<64x256xbf16>
    %c3 = arith.constant 3 : index
    %c0_32 = arith.constant 0 : index
    %c0_33 = arith.constant 0 : index
    %30 = vector.load %arg2[%c3, %c0_32, %c0_33] : memref<9x256x128xbf16, #tpu.memory_space<vmem>>, vector<1x256x128xbf16>
    %31 = vector.shape_cast %30 : vector<1x256x128xbf16> to vector<256x128xbf16>
    %cst_34 = arith.constant dense<0.000000e+00> : vector<64x128xf32>
    %32 = tpu.matmul %29, %31, %cst_34 {dimension_numbers = #tpu.dot_dimension_numbers<[1], [0], [0], [1], [0, 0, 1, 1], [], []>} : vector<64x256xbf16>, vector<256x128xbf16>, vector<64x128xf32> -> vector<64x128xf32>
    %33 = arith.addf %26, %32 : vector<64x128xf32>
    %c1_35 = arith.constant 1 : index
    %c1_36 = arith.constant 1 : index
    %c0_37 = arith.constant 0 : index
    %34 = vector.load %arg8[%c1_35, %c1_36, %c0_37] : memref<10x10x256xf32, #tpu.memory_space<vmem>>, vector<8x8x256xf32>
    %35 = vector.shape_cast %34 : vector<8x8x256xf32> to vector<64x256xf32>
    %36 = arith.truncf %35 : vector<64x256xf32> to vector<64x256xbf16>
    %c4 = arith.constant 4 : index
    %c0_38 = arith.constant 0 : index
    %c0_39 = arith.constant 0 : index
    %37 = vector.load %arg2[%c4, %c0_38, %c0_39] : memref<9x256x128xbf16, #tpu.memory_space<vmem>>, vector<1x256x128xbf16>
    %38 = vector.shape_cast %37 : vector<1x256x128xbf16> to vector<256x128xbf16>
    %cst_40 = arith.constant dense<0.000000e+00> : vector<64x128xf32>
    %39 = tpu.matmul %36, %38, %cst_40 {dimension_numbers = #tpu.dot_dimension_numbers<[1], [0], [0], [1], [0, 0, 1, 1], [], []>} : vector<64x256xbf16>, vector<256x128xbf16>, vector<64x128xf32> -> vector<64x128xf32>
    %40 = arith.addf %33, %39 : vector<64x128xf32>
    %c1_41 = arith.constant 1 : index
    %c2_42 = arith.constant 2 : index
    %c0_43 = arith.constant 0 : index
    %41 = vector.load %arg8[%c1_41, %c2_42, %c0_43] : memref<10x10x256xf32, #tpu.memory_space<vmem>>, vector<8x8x256xf32>
    %42 = vector.shape_cast %41 : vector<8x8x256xf32> to vector<64x256xf32>
    %43 = arith.truncf %42 : vector<64x256xf32> to vector<64x256xbf16>
    %c5 = arith.constant 5 : index
    %c0_44 = arith.constant 0 : index
    %c0_45 = arith.constant 0 : index
    %44 = vector.load %arg2[%c5, %c0_44, %c0_45] : memref<9x256x128xbf16, #tpu.memory_space<vmem>>, vector<1x256x128xbf16>
    %45 = vector.shape_cast %44 : vector<1x256x128xbf16> to vector<256x128xbf16>
    %cst_46 = arith.constant dense<0.000000e+00> : vector<64x128xf32>
    %46 = tpu.matmul %43, %45, %cst_46 {dimension_numbers = #tpu.dot_dimension_numbers<[1], [0], [0], [1], [0, 0, 1, 1], [], []>} : vector<64x256xbf16>, vector<256x128xbf16>, vector<64x128xf32> -> vector<64x128xf32>
    %47 = arith.addf %40, %46 : vector<64x128xf32>
    %c2_47 = arith.constant 2 : index
    %c0_48 = arith.constant 0 : index
    %c0_49 = arith.constant 0 : index
    %48 = vector.load %arg8[%c2_47, %c0_48, %c0_49] : memref<10x10x256xf32, #tpu.memory_space<vmem>>, vector<8x8x256xf32>
    %49 = vector.shape_cast %48 : vector<8x8x256xf32> to vector<64x256xf32>
    %50 = arith.truncf %49 : vector<64x256xf32> to vector<64x256xbf16>
    %c6 = arith.constant 6 : index
    %c0_50 = arith.constant 0 : index
    %c0_51 = arith.constant 0 : index
    %51 = vector.load %arg2[%c6, %c0_50, %c0_51] : memref<9x256x128xbf16, #tpu.memory_space<vmem>>, vector<1x256x128xbf16>
    %52 = vector.shape_cast %51 : vector<1x256x128xbf16> to vector<256x128xbf16>
    %cst_52 = arith.constant dense<0.000000e+00> : vector<64x128xf32>
    %53 = tpu.matmul %50, %52, %cst_52 {dimension_numbers = #tpu.dot_dimension_numbers<[1], [0], [0], [1], [0, 0, 1, 1], [], []>} : vector<64x256xbf16>, vector<256x128xbf16>, vector<64x128xf32> -> vector<64x128xf32>
    %54 = arith.addf %47, %53 : vector<64x128xf32>
    %c2_53 = arith.constant 2 : index
    %c1_54 = arith.constant 1 : index
    %c0_55 = arith.constant 0 : index
    %55 = vector.load %arg8[%c2_53, %c1_54, %c0_55] : memref<10x10x256xf32, #tpu.memory_space<vmem>>, vector<8x8x256xf32>
    %56 = vector.shape_cast %55 : vector<8x8x256xf32> to vector<64x256xf32>
    %57 = arith.truncf %56 : vector<64x256xf32> to vector<64x256xbf16>
    %c7 = arith.constant 7 : index
    %c0_56 = arith.constant 0 : index
    %c0_57 = arith.constant 0 : index
    %58 = vector.load %arg2[%c7, %c0_56, %c0_57] : memref<9x256x128xbf16, #tpu.memory_space<vmem>>, vector<1x256x128xbf16>
    %59 = vector.shape_cast %58 : vector<1x256x128xbf16> to vector<256x128xbf16>
    %cst_58 = arith.constant dense<0.000000e+00> : vector<64x128xf32>
    %60 = tpu.matmul %57, %59, %cst_58 {dimension_numbers = #tpu.dot_dimension_numbers<[1], [0], [0], [1], [0, 0, 1, 1], [], []>} : vector<64x256xbf16>, vector<256x128xbf16>, vector<64x128xf32> -> vector<64x128xf32>
    %61 = arith.addf %54, %60 : vector<64x128xf32>
    %c2_59 = arith.constant 2 : index
    %c2_60 = arith.constant 2 : index
    %c0_61 = arith.constant 0 : index
    %62 = vector.load %arg8[%c2_59, %c2_60, %c0_61] : memref<10x10x256xf32, #tpu.memory_space<vmem>>, vector<8x8x256xf32>
    %63 = vector.shape_cast %62 : vector<8x8x256xf32> to vector<64x256xf32>
    %64 = arith.truncf %63 : vector<64x256xf32> to vector<64x256xbf16>
    %c8 = arith.constant 8 : index
    %c0_62 = arith.constant 0 : index
    %c0_63 = arith.constant 0 : index
    %65 = vector.load %arg2[%c8, %c0_62, %c0_63] : memref<9x256x128xbf16, #tpu.memory_space<vmem>>, vector<1x256x128xbf16>
    %66 = vector.shape_cast %65 : vector<1x256x128xbf16> to vector<256x128xbf16>
    %cst_64 = arith.constant dense<0.000000e+00> : vector<64x128xf32>
    %67 = tpu.matmul %64, %66, %cst_64 {dimension_numbers = #tpu.dot_dimension_numbers<[1], [0], [0], [1], [0, 0, 1, 1], [], []>} : vector<64x256xbf16>, vector<256x128xbf16>, vector<64x128xf32> -> vector<64x128xf32>
    %68 = arith.addf %61, %67 : vector<64x128xf32>
    %c0_65 = arith.constant 0 : index
    %c0_66 = arith.constant 0 : index
    %69 = vector.load %arg3[%c0_65, %c0_66] : memref<1x128xf32, #tpu.memory_space<vmem>>, vector<1x128xf32>
    %70 = vector.broadcast %69 : vector<1x128xf32> to vector<64x128xf32>
    %71 = arith.addf %68, %70 : vector<64x128xf32>
    %cst_67 = arith.constant 0.000000e+00 : f32
    %72 = vector.broadcast %cst_67 : f32 to vector<64x128xf32>
    %73 = arith.cmpf oge, %71, %72 : vector<64x128xf32>
    %cst_68 = arith.constant 1.000000e-01 : f32
    %74 = vector.broadcast %cst_68 : f32 to vector<64x128xf32>
    %75 = arith.mulf %74, %71 : vector<64x128xf32>
    %76 = arith.select %73, %71, %75 : vector<64x128xi1>, vector<64x128xf32>
    %cst_69 = arith.constant 0.000000e+00 : f32
    %77 = vector.broadcast %cst_69 : f32 to vector<10x10x128xf32>
    %c0_70 = arith.constant 0 : index
    %c0_71 = arith.constant 0 : index
    %c0_72 = arith.constant 0 : index
    %78 = vector.load %arg9[%c0_70, %c0_71, %c0_72] : memref<10x10x128xf32, #tpu.memory_space<vmem>>, vector<10x10x128xf32>
    tpu.vector_store %arg9[%c0_70, %c0_71, %c0_72], %77 {strides = array<i32>} : memref<10x10x128xf32, #tpu.memory_space<vmem>>, vector<10x10x128xf32>,
    %79 = vector.shape_cast %76 : vector<64x128xf32> to vector<8x8x128xf32>
    %c1_73 = arith.constant 1 : index
    %c1_74 = arith.constant 1 : index
    %c0_75 = arith.constant 0 : index
    %80 = vector.load %arg9[%c1_73, %c1_74, %c0_75] : memref<10x10x128xf32, #tpu.memory_space<vmem>>, vector<8x8x128xf32>
    tpu.vector_store %arg9[%c1_73, %c1_74, %c0_75], %79 {strides = array<i32>} : memref<10x10x128xf32, #tpu.memory_space<vmem>>, vector<8x8x128xf32>,
    %cst_76 = arith.constant 0.000000e+00 : f32
    %81 = vector.broadcast %cst_76 : f32 to vector<64x128xf32>
    %c0_77 = arith.constant 0 : index
    %c0_78 = arith.constant 0 : index
    %c0_79 = arith.constant 0 : index
    %82 = vector.load %arg9[%c0_77, %c0_78, %c0_79] : memref<10x10x128xf32, #tpu.memory_space<vmem>>, vector<8x8x128xf32>
    %83 = vector.shape_cast %82 : vector<8x8x128xf32> to vector<64x128xf32>
    %84 = arith.truncf %83 : vector<64x128xf32> to vector<64x128xbf16>
    %c0_80 = arith.constant 0 : index
    %c0_81 = arith.constant 0 : index
    %c0_82 = arith.constant 0 : index
    %85 = vector.load %arg4[%c0_80, %c0_81, %c0_82] : memref<9x128x128xbf16, #tpu.memory_space<vmem>>, vector<1x128x128xbf16>
    %86 = vector.shape_cast %85 : vector<1x128x128xbf16> to vector<128x128xbf16>
    %cst_83 = arith.constant dense<0.000000e+00> : vector<64x128xf32>
    %87 = tpu.matmul %84, %86, %cst_83 {dimension_numbers = #tpu.dot_dimension_numbers<[1], [0], [0], [1], [0, 0, 1, 1], [], []>} : vector<64x128xbf16>, vector<128x128xbf16>, vector<64x128xf32> -> vector<64x128xf32>
    %88 = arith.addf %81, %87 : vector<64x128xf32>
    %c0_84 = arith.constant 0 : index
    %c1_85 = arith.constant 1 : index
    %c0_86 = arith.constant 0 : index
    %89 = vector.load %arg9[%c0_84, %c1_85, %c0_86] : memref<10x10x128xf32, #tpu.memory_space<vmem>>, vector<8x8x128xf32>
    %90 = vector.shape_cast %89 : vector<8x8x128xf32> to vector<64x128xf32>
    %91 = arith.truncf %90 : vector<64x128xf32> to vector<64x128xbf16>
    %c1_87 = arith.constant 1 : index
    %c0_88 = arith.constant 0 : index
    %c0_89 = arith.constant 0 : index
    %92 = vector.load %arg4[%c1_87, %c0_88, %c0_89] : memref<9x128x128xbf16, #tpu.memory_space<vmem>>, vector<1x128x128xbf16>
    %93 = vector.shape_cast %92 : vector<1x128x128xbf16> to vector<128x128xbf16>
    %cst_90 = arith.constant dense<0.000000e+00> : vector<64x128xf32>
    %94 = tpu.matmul %91, %93, %cst_90 {dimension_numbers = #tpu.dot_dimension_numbers<[1], [0], [0], [1], [0, 0, 1, 1], [], []>} : vector<64x128xbf16>, vector<128x128xbf16>, vector<64x128xf32> -> vector<64x128xf32>
    %95 = arith.addf %88, %94 : vector<64x128xf32>
    %c0_91 = arith.constant 0 : index
    %c2_92 = arith.constant 2 : index
    %c0_93 = arith.constant 0 : index
    %96 = vector.load %arg9[%c0_91, %c2_92, %c0_93] : memref<10x10x128xf32, #tpu.memory_space<vmem>>, vector<8x8x128xf32>
    %97 = vector.shape_cast %96 : vector<8x8x128xf32> to vector<64x128xf32>
    %98 = arith.truncf %97 : vector<64x128xf32> to vector<64x128xbf16>
    %c2_94 = arith.constant 2 : index
    %c0_95 = arith.constant 0 : index
    %c0_96 = arith.constant 0 : index
    %99 = vector.load %arg4[%c2_94, %c0_95, %c0_96] : memref<9x128x128xbf16, #tpu.memory_space<vmem>>, vector<1x128x128xbf16>
    %100 = vector.shape_cast %99 : vector<1x128x128xbf16> to vector<128x128xbf16>
    %cst_97 = arith.constant dense<0.000000e+00> : vector<64x128xf32>
    %101 = tpu.matmul %98, %100, %cst_97 {dimension_numbers = #tpu.dot_dimension_numbers<[1], [0], [0], [1], [0, 0, 1, 1], [], []>} : vector<64x128xbf16>, vector<128x128xbf16>, vector<64x128xf32> -> vector<64x128xf32>
    %102 = arith.addf %95, %101 : vector<64x128xf32>
    %c1_98 = arith.constant 1 : index
    %c0_99 = arith.constant 0 : index
    %c0_100 = arith.constant 0 : index
    %103 = vector.load %arg9[%c1_98, %c0_99, %c0_100] : memref<10x10x128xf32, #tpu.memory_space<vmem>>, vector<8x8x128xf32>
    %104 = vector.shape_cast %103 : vector<8x8x128xf32> to vector<64x128xf32>
    %105 = arith.truncf %104 : vector<64x128xf32> to vector<64x128xbf16>
    %c3_101 = arith.constant 3 : index
    %c0_102 = arith.constant 0 : index
    %c0_103 = arith.constant 0 : index
    %106 = vector.load %arg4[%c3_101, %c0_102, %c0_103] : memref<9x128x128xbf16, #tpu.memory_space<vmem>>, vector<1x128x128xbf16>
    %107 = vector.shape_cast %106 : vector<1x128x128xbf16> to vector<128x128xbf16>
    %cst_104 = arith.constant dense<0.000000e+00> : vector<64x128xf32>
    %108 = tpu.matmul %105, %107, %cst_104 {dimension_numbers = #tpu.dot_dimension_numbers<[1], [0], [0], [1], [0, 0, 1, 1], [], []>} : vector<64x128xbf16>, vector<128x128xbf16>, vector<64x128xf32> -> vector<64x128xf32>
    %109 = arith.addf %102, %108 : vector<64x128xf32>
    %c1_105 = arith.constant 1 : index
    %c1_106 = arith.constant 1 : index
    %c0_107 = arith.constant 0 : index
    %110 = vector.load %arg9[%c1_105, %c1_106, %c0_107] : memref<10x10x128xf32, #tpu.memory_space<vmem>>, vector<8x8x128xf32>
    %111 = vector.shape_cast %110 : vector<8x8x128xf32> to vector<64x128xf32>
    %112 = arith.truncf %111 : vector<64x128xf32> to vector<64x128xbf16>
    %c4_108 = arith.constant 4 : index
    %c0_109 = arith.constant 0 : index
    %c0_110 = arith.constant 0 : index
    %113 = vector.load %arg4[%c4_108, %c0_109, %c0_110] : memref<9x128x128xbf16, #tpu.memory_space<vmem>>, vector<1x128x128xbf16>
    %114 = vector.shape_cast %113 : vector<1x128x128xbf16> to vector<128x128xbf16>
    %cst_111 = arith.constant dense<0.000000e+00> : vector<64x128xf32>
    %115 = tpu.matmul %112, %114, %cst_111 {dimension_numbers = #tpu.dot_dimension_numbers<[1], [0], [0], [1], [0, 0, 1, 1], [], []>} : vector<64x128xbf16>, vector<128x128xbf16>, vector<64x128xf32> -> vector<64x128xf32>
    %116 = arith.addf %109, %115 : vector<64x128xf32>
    %c1_112 = arith.constant 1 : index
    %c2_113 = arith.constant 2 : index
    %c0_114 = arith.constant 0 : index
    %117 = vector.load %arg9[%c1_112, %c2_113, %c0_114] : memref<10x10x128xf32, #tpu.memory_space<vmem>>, vector<8x8x128xf32>
    %118 = vector.shape_cast %117 : vector<8x8x128xf32> to vector<64x128xf32>
    %119 = arith.truncf %118 : vector<64x128xf32> to vector<64x128xbf16>
    %c5_115 = arith.constant 5 : index
    %c0_116 = arith.constant 0 : index
    %c0_117 = arith.constant 0 : index
    %120 = vector.load %arg4[%c5_115, %c0_116, %c0_117] : memref<9x128x128xbf16, #tpu.memory_space<vmem>>, vector<1x128x128xbf16>
    %121 = vector.shape_cast %120 : vector<1x128x128xbf16> to vector<128x128xbf16>
    %cst_118 = arith.constant dense<0.000000e+00> : vector<64x128xf32>
    %122 = tpu.matmul %119, %121, %cst_118 {dimension_numbers = #tpu.dot_dimension_numbers<[1], [0], [0], [1], [0, 0, 1, 1], [], []>} : vector<64x128xbf16>, vector<128x128xbf16>, vector<64x128xf32> -> vector<64x128xf32>
    %123 = arith.addf %116, %122 : vector<64x128xf32>
    %c2_119 = arith.constant 2 : index
    %c0_120 = arith.constant 0 : index
    %c0_121 = arith.constant 0 : index
    %124 = vector.load %arg9[%c2_119, %c0_120, %c0_121] : memref<10x10x128xf32, #tpu.memory_space<vmem>>, vector<8x8x128xf32>
    %125 = vector.shape_cast %124 : vector<8x8x128xf32> to vector<64x128xf32>
    %126 = arith.truncf %125 : vector<64x128xf32> to vector<64x128xbf16>
    %c6_122 = arith.constant 6 : index
    %c0_123 = arith.constant 0 : index
    %c0_124 = arith.constant 0 : index
    %127 = vector.load %arg4[%c6_122, %c0_123, %c0_124] : memref<9x128x128xbf16, #tpu.memory_space<vmem>>, vector<1x128x128xbf16>
    %128 = vector.shape_cast %127 : vector<1x128x128xbf16> to vector<128x128xbf16>
    %cst_125 = arith.constant dense<0.000000e+00> : vector<64x128xf32>
    %129 = tpu.matmul %126, %128, %cst_125 {dimension_numbers = #tpu.dot_dimension_numbers<[1], [0], [0], [1], [0, 0, 1, 1], [], []>} : vector<64x128xbf16>, vector<128x128xbf16>, vector<64x128xf32> -> vector<64x128xf32>
    %130 = arith.addf %123, %129 : vector<64x128xf32>
    %c2_126 = arith.constant 2 : index
    %c1_127 = arith.constant 1 : index
    %c0_128 = arith.constant 0 : index
    %131 = vector.load %arg9[%c2_126, %c1_127, %c0_128] : memref<10x10x128xf32, #tpu.memory_space<vmem>>, vector<8x8x128xf32>
    %132 = vector.shape_cast %131 : vector<8x8x128xf32> to vector<64x128xf32>
    %133 = arith.truncf %132 : vector<64x128xf32> to vector<64x128xbf16>
    %c7_129 = arith.constant 7 : index
    %c0_130 = arith.constant 0 : index
    %c0_131 = arith.constant 0 : index
    %134 = vector.load %arg4[%c7_129, %c0_130, %c0_131] : memref<9x128x128xbf16, #tpu.memory_space<vmem>>, vector<1x128x128xbf16>
    %135 = vector.shape_cast %134 : vector<1x128x128xbf16> to vector<128x128xbf16>
    %cst_132 = arith.constant dense<0.000000e+00> : vector<64x128xf32>
    %136 = tpu.matmul %133, %135, %cst_132 {dimension_numbers = #tpu.dot_dimension_numbers<[1], [0], [0], [1], [0, 0, 1, 1], [], []>} : vector<64x128xbf16>, vector<128x128xbf16>, vector<64x128xf32> -> vector<64x128xf32>
    %137 = arith.addf %130, %136 : vector<64x128xf32>
    %c2_133 = arith.constant 2 : index
    %c2_134 = arith.constant 2 : index
    %c0_135 = arith.constant 0 : index
    %138 = vector.load %arg9[%c2_133, %c2_134, %c0_135] : memref<10x10x128xf32, #tpu.memory_space<vmem>>, vector<8x8x128xf32>
    %139 = vector.shape_cast %138 : vector<8x8x128xf32> to vector<64x128xf32>
    %140 = arith.truncf %139 : vector<64x128xf32> to vector<64x128xbf16>
    %c8_136 = arith.constant 8 : index
    %c0_137 = arith.constant 0 : index
    %c0_138 = arith.constant 0 : index
    %141 = vector.load %arg4[%c8_136, %c0_137, %c0_138] : memref<9x128x128xbf16, #tpu.memory_space<vmem>>, vector<1x128x128xbf16>
    %142 = vector.shape_cast %141 : vector<1x128x128xbf16> to vector<128x128xbf16>
    %cst_139 = arith.constant dense<0.000000e+00> : vector<64x128xf32>
    %143 = tpu.matmul %140, %142, %cst_139 {dimension_numbers = #tpu.dot_dimension_numbers<[1], [0], [0], [1], [0, 0, 1, 1], [], []>} : vector<64x128xbf16>, vector<128x128xbf16>, vector<64x128xf32> -> vector<64x128xf32>
    %144 = arith.addf %137, %143 : vector<64x128xf32>
    %c0_140 = arith.constant 0 : index
    %c0_141 = arith.constant 0 : index
    %145 = vector.load %arg5[%c0_140, %c0_141] : memref<1x128xf32, #tpu.memory_space<vmem>>, vector<1x128xf32>
    %146 = vector.broadcast %145 : vector<1x128xf32> to vector<64x128xf32>
    %147 = arith.addf %144, %146 : vector<64x128xf32>
    %cst_142 = arith.constant 0.000000e+00 : f32
    %148 = vector.broadcast %cst_142 : f32 to vector<64x128xf32>
    %149 = arith.cmpf oge, %147, %148 : vector<64x128xf32>
    %cst_143 = arith.constant 1.000000e-01 : f32
    %150 = vector.broadcast %cst_143 : f32 to vector<64x128xf32>
    %151 = arith.mulf %150, %147 : vector<64x128xf32>
    %152 = arith.select %149, %147, %151 : vector<64x128xi1>, vector<64x128xf32>
    %153 = vector.shape_cast %152 : vector<64x128xf32> to vector<8x8x128xf32>
    %c1_144 = arith.constant 1 : index
    %c1_145 = arith.constant 1 : index
    %c0_146 = arith.constant 0 : index
    %154 = vector.load %arg9[%c1_144, %c1_145, %c0_146] : memref<10x10x128xf32, #tpu.memory_space<vmem>>, vector<8x8x128xf32>
    tpu.vector_store %arg9[%c1_144, %c1_145, %c0_146], %153 {strides = array<i32>} : memref<10x10x128xf32, #tpu.memory_space<vmem>>, vector<8x8x128xf32>,
    %cst_147 = arith.constant 0.000000e+00 : f32
    %155 = vector.broadcast %cst_147 : f32 to vector<64x64xf32>
    %c0_148 = arith.constant 0 : index
    %c0_149 = arith.constant 0 : index
    %c0_150 = arith.constant 0 : index
    %156 = vector.load %arg9[%c0_148, %c0_149, %c0_150] : memref<10x10x128xf32, #tpu.memory_space<vmem>>, vector<8x8x128xf32>
    %157 = vector.shape_cast %156 : vector<8x8x128xf32> to vector<64x128xf32>
    %158 = arith.truncf %157 : vector<64x128xf32> to vector<64x128xbf16>
    %c0_151 = arith.constant 0 : index
    %c0_152 = arith.constant 0 : index
    %c0_153 = arith.constant 0 : index
    %c0_154 = arith.constant 0 : index
    %159 = vector.load %arg6[%c0_151, %c0_152, %c0_153, %c0_154] : memref<4x4x128x64xbf16, #tpu.memory_space<vmem>>, vector<1x1x128x64xbf16>
    %160 = vector.shape_cast %159 : vector<1x1x128x64xbf16> to vector<128x64xbf16>
    %cst_155 = arith.constant dense<0.000000e+00> : vector<64x64xf32>
    %161 = tpu.matmul %158, %160, %cst_155 {dimension_numbers = #tpu.dot_dimension_numbers<[1], [0], [0], [1], [0, 0, 1, 1], [], []>} : vector<64x128xbf16>, vector<128x64xbf16>, vector<64x64xf32> -> vector<64x64xf32>
    %162 = arith.addf %155, %161 : vector<64x64xf32>
    %c0_156 = arith.constant 0 : index
    %c1_157 = arith.constant 1 : index
    %c0_158 = arith.constant 0 : index
    %163 = vector.load %arg9[%c0_156, %c1_157, %c0_158] : memref<10x10x128xf32, #tpu.memory_space<vmem>>, vector<8x8x128xf32>
    %164 = vector.shape_cast %163 : vector<8x8x128xf32> to vector<64x128xf32>
    %165 = arith.truncf %164 : vector<64x128xf32> to vector<64x128xbf16>
    %c0_159 = arith.constant 0 : index
    %c1_160 = arith.constant 1 : index
    %c0_161 = arith.constant 0 : index
    %c0_162 = arith.constant 0 : index
    %166 = vector.load %arg6[%c0_159, %c1_160, %c0_161, %c0_162] : memref<4x4x128x64xbf16, #tpu.memory_space<vmem>>, vector<1x1x128x64xbf16>
    %167 = vector.shape_cast %166 : vector<1x1x128x64xbf16> to vector<128x64xbf16>
    %cst_163 = arith.constant dense<0.000000e+00> : vector<64x64xf32>
    %168 = tpu.matmul %165, %167, %cst_163 {dimension_numbers = #tpu.dot_dimension_numbers<[1], [0], [0], [1], [0, 0, 1, 1], [], []>} : vector<64x128xbf16>, vector<128x64xbf16>, vector<64x64xf32> -> vector<64x64xf32>
    %169 = arith.addf %162, %168 : vector<64x64xf32>
    %c1_164 = arith.constant 1 : index
    %c0_165 = arith.constant 0 : index
    %c0_166 = arith.constant 0 : index
    %170 = vector.load %arg9[%c1_164, %c0_165, %c0_166] : memref<10x10x128xf32, #tpu.memory_space<vmem>>, vector<8x8x128xf32>
    %171 = vector.shape_cast %170 : vector<8x8x128xf32> to vector<64x128xf32>
    %172 = arith.truncf %171 : vector<64x128xf32> to vector<64x128xbf16>
    %c0_167 = arith.constant 0 : index
    %c2_168 = arith.constant 2 : index
    %c0_169 = arith.constant 0 : index
    %c0_170 = arith.constant 0 : index
    %173 = vector.load %arg6[%c0_167, %c2_168, %c0_169, %c0_170] : memref<4x4x128x64xbf16, #tpu.memory_space<vmem>>, vector<1x1x128x64xbf16>
    %174 = vector.shape_cast %173 : vector<1x1x128x64xbf16> to vector<128x64xbf16>
    %cst_171 = arith.constant dense<0.000000e+00> : vector<64x64xf32>
    %175 = tpu.matmul %172, %174, %cst_171 {dimension_numbers = #tpu.dot_dimension_numbers<[1], [0], [0], [1], [0, 0, 1, 1], [], []>} : vector<64x128xbf16>, vector<128x64xbf16>, vector<64x64xf32> -> vector<64x64xf32>
    %176 = arith.addf %169, %175 : vector<64x64xf32>
    %c1_172 = arith.constant 1 : index
    %c1_173 = arith.constant 1 : index
    %c0_174 = arith.constant 0 : index
    %177 = vector.load %arg9[%c1_172, %c1_173, %c0_174] : memref<10x10x128xf32, #tpu.memory_space<vmem>>, vector<8x8x128xf32>
    %178 = vector.shape_cast %177 : vector<8x8x128xf32> to vector<64x128xf32>
    %179 = arith.truncf %178 : vector<64x128xf32> to vector<64x128xbf16>
    %c0_175 = arith.constant 0 : index
    %c3_176 = arith.constant 3 : index
    %c0_177 = arith.constant 0 : index
    %c0_178 = arith.constant 0 : index
    %180 = vector.load %arg6[%c0_175, %c3_176, %c0_177, %c0_178] : memref<4x4x128x64xbf16, #tpu.memory_space<vmem>>, vector<1x1x128x64xbf16>
    %181 = vector.shape_cast %180 : vector<1x1x128x64xbf16> to vector<128x64xbf16>
    %cst_179 = arith.constant dense<0.000000e+00> : vector<64x64xf32>
    %182 = tpu.matmul %179, %181, %cst_179 {dimension_numbers = #tpu.dot_dimension_numbers<[1], [0], [0], [1], [0, 0, 1, 1], [], []>} : vector<64x128xbf16>, vector<128x64xbf16>, vector<64x64xf32> -> vector<64x64xf32>
    %183 = arith.addf %176, %182 : vector<64x64xf32>
    %cst_180 = arith.constant 0.000000e+00 : f32
    %184 = vector.broadcast %cst_180 : f32 to vector<64x64xf32>
    %185 = arith.cmpf oge, %183, %184 : vector<64x64xf32>
    %cst_181 = arith.constant 1.000000e-01 : f32
    %186 = vector.broadcast %cst_181 : f32 to vector<64x64xf32>
    %187 = arith.mulf %186, %183 : vector<64x64xf32>
    %188 = arith.select %185, %183, %187 : vector<64x64xi1>, vector<64x64xf32>
    %c0_182 = arith.constant 0 : index
    %c0_183 = arith.constant 0 : index
    %c0_184 = arith.constant 0 : index
    %c0_185 = arith.constant 0 : index
    %189 = vector.load %arg7[%c0_182, %c0_183, %c0_184, %c0_185] : memref<1x4x64x64xf32, #tpu.memory_space<vmem>>, vector<1x1x64x64xf32>
    %190 = vector.shape_cast %189 : vector<1x1x64x64xf32> to vector<64x64xf32>
    %191 = vector.shape_cast %188 : vector<64x64xf32> to vector<1x1x64x64xf32>
    tpu.vector_store %arg7[%c0_182, %c0_183, %c0_184, %c0_185], %191 {strides = array<i32>} : memref<1x4x64x64xf32, #tpu.memory_space<vmem>>, vector<1x1x64x64xf32>,
    %cst_186 = arith.constant 0.000000e+00 : f32
    %192 = vector.broadcast %cst_186 : f32 to vector<64x64xf32>
    %c0_187 = arith.constant 0 : index
    %c1_188 = arith.constant 1 : index
    %c0_189 = arith.constant 0 : index
    %193 = vector.load %arg9[%c0_187, %c1_188, %c0_189] : memref<10x10x128xf32, #tpu.memory_space<vmem>>, vector<8x8x128xf32>
    %194 = vector.shape_cast %193 : vector<8x8x128xf32> to vector<64x128xf32>
    %195 = arith.truncf %194 : vector<64x128xf32> to vector<64x128xbf16>
    %c1_190 = arith.constant 1 : index
    %c0_191 = arith.constant 0 : index
    %c0_192 = arith.constant 0 : index
    %c0_193 = arith.constant 0 : index
    %196 = vector.load %arg6[%c1_190, %c0_191, %c0_192, %c0_193] : memref<4x4x128x64xbf16, #tpu.memory_space<vmem>>, vector<1x1x128x64xbf16>
    %197 = vector.shape_cast %196 : vector<1x1x128x64xbf16> to vector<128x64xbf16>
    %cst_194 = arith.constant dense<0.000000e+00> : vector<64x64xf32>
    %198 = tpu.matmul %195, %197, %cst_194 {dimension_numbers = #tpu.dot_dimension_numbers<[1], [0], [0], [1], [0, 0, 1, 1], [], []>} : vector<64x128xbf16>, vector<128x64xbf16>, vector<64x64xf32> -> vector<64x64xf32>
    %199 = arith.addf %192, %198 : vector<64x64xf32>
    %c0_195 = arith.constant 0 : index
    %c2_196 = arith.constant 2 : index
    %c0_197 = arith.constant 0 : index
    %200 = vector.load %arg9[%c0_195, %c2_196, %c0_197] : memref<10x10x128xf32, #tpu.memory_space<vmem>>, vector<8x8x128xf32>
    %201 = vector.shape_cast %200 : vector<8x8x128xf32> to vector<64x128xf32>
    %202 = arith.truncf %201 : vector<64x128xf32> to vector<64x128xbf16>
    %c1_198 = arith.constant 1 : index
    %c1_199 = arith.constant 1 : index
    %c0_200 = arith.constant 0 : index
    %c0_201 = arith.constant 0 : index
    %203 = vector.load %arg6[%c1_198, %c1_199, %c0_200, %c0_201] : memref<4x4x128x64xbf16, #tpu.memory_space<vmem>>, vector<1x1x128x64xbf16>
    %204 = vector.shape_cast %203 : vector<1x1x128x64xbf16> to vector<128x64xbf16>
    %cst_202 = arith.constant dense<0.000000e+00> : vector<64x64xf32>
    %205 = tpu.matmul %202, %204, %cst_202 {dimension_numbers = #tpu.dot_dimension_numbers<[1], [0], [0], [1], [0, 0, 1, 1], [], []>} : vector<64x128xbf16>, vector<128x64xbf16>, vector<64x64xf32> -> vector<64x64xf32>
    %206 = arith.addf %199, %205 : vector<64x64xf32>
    %c1_203 = arith.constant 1 : index
    %c1_204 = arith.constant 1 : index
    %c0_205 = arith.constant 0 : index
    %207 = vector.load %arg9[%c1_203, %c1_204, %c0_205] : memref<10x10x128xf32, #tpu.memory_space<vmem>>, vector<8x8x128xf32>
    %208 = vector.shape_cast %207 : vector<8x8x128xf32> to vector<64x128xf32>
    %209 = arith.truncf %208 : vector<64x128xf32> to vector<64x128xbf16>
    %c1_206 = arith.constant 1 : index
    %c2_207 = arith.constant 2 : index
    %c0_208 = arith.constant 0 : index
    %c0_209 = arith.constant 0 : index
    %210 = vector.load %arg6[%c1_206, %c2_207, %c0_208, %c0_209] : memref<4x4x128x64xbf16, #tpu.memory_space<vmem>>, vector<1x1x128x64xbf16>
    %211 = vector.shape_cast %210 : vector<1x1x128x64xbf16> to vector<128x64xbf16>
    %cst_210 = arith.constant dense<0.000000e+00> : vector<64x64xf32>
    %212 = tpu.matmul %209, %211, %cst_210 {dimension_numbers = #tpu.dot_dimension_numbers<[1], [0], [0], [1], [0, 0, 1, 1], [], []>} : vector<64x128xbf16>, vector<128x64xbf16>, vector<64x64xf32> -> vector<64x64xf32>
    %213 = arith.addf %206, %212 : vector<64x64xf32>
    %c1_211 = arith.constant 1 : index
    %c2_212 = arith.constant 2 : index
    %c0_213 = arith.constant 0 : index
    %214 = vector.load %arg9[%c1_211, %c2_212, %c0_213] : memref<10x10x128xf32, #tpu.memory_space<vmem>>, vector<8x8x128xf32>
    %215 = vector.shape_cast %214 : vector<8x8x128xf32> to vector<64x128xf32>
    %216 = arith.truncf %215 : vector<64x128xf32> to vector<64x128xbf16>
    %c1_214 = arith.constant 1 : index
    %c3_215 = arith.constant 3 : index
    %c0_216 = arith.constant 0 : index
    %c0_217 = arith.constant 0 : index
    %217 = vector.load %arg6[%c1_214, %c3_215, %c0_216, %c0_217] : memref<4x4x128x64xbf16, #tpu.memory_space<vmem>>, vector<1x1x128x64xbf16>
    %218 = vector.shape_cast %217 : vector<1x1x128x64xbf16> to vector<128x64xbf16>
    %cst_218 = arith.constant dense<0.000000e+00> : vector<64x64xf32>
    %219 = tpu.matmul %216, %218, %cst_218 {dimension_numbers = #tpu.dot_dimension_numbers<[1], [0], [0], [1], [0, 0, 1, 1], [], []>} : vector<64x128xbf16>, vector<128x64xbf16>, vector<64x64xf32> -> vector<64x64xf32>
    %220 = arith.addf %213, %219 : vector<64x64xf32>
    %cst_219 = arith.constant 0.000000e+00 : f32
    %221 = vector.broadcast %cst_219 : f32 to vector<64x64xf32>
    %222 = arith.cmpf oge, %220, %221 : vector<64x64xf32>
    %cst_220 = arith.constant 1.000000e-01 : f32
    %223 = vector.broadcast %cst_220 : f32 to vector<64x64xf32>
    %224 = arith.mulf %223, %220 : vector<64x64xf32>
    %225 = arith.select %222, %220, %224 : vector<64x64xi1>, vector<64x64xf32>
    %c0_221 = arith.constant 0 : index
    %c1_222 = arith.constant 1 : index
    %c0_223 = arith.constant 0 : index
    %c0_224 = arith.constant 0 : index
    %226 = vector.load %arg7[%c0_221, %c1_222, %c0_223, %c0_224] : memref<1x4x64x64xf32, #tpu.memory_space<vmem>>, vector<1x1x64x64xf32>
    %227 = vector.shape_cast %226 : vector<1x1x64x64xf32> to vector<64x64xf32>
    %228 = vector.shape_cast %225 : vector<64x64xf32> to vector<1x1x64x64xf32>
    tpu.vector_store %arg7[%c0_221, %c1_222, %c0_223, %c0_224], %228 {strides = array<i32>} : memref<1x4x64x64xf32, #tpu.memory_space<vmem>>, vector<1x1x64x64xf32>,
    %cst_225 = arith.constant 0.000000e+00 : f32
    %229 = vector.broadcast %cst_225 : f32 to vector<64x64xf32>
    %c1_226 = arith.constant 1 : index
    %c0_227 = arith.constant 0 : index
    %c0_228 = arith.constant 0 : index
    %230 = vector.load %arg9[%c1_226, %c0_227, %c0_228] : memref<10x10x128xf32, #tpu.memory_space<vmem>>, vector<8x8x128xf32>
    %231 = vector.shape_cast %230 : vector<8x8x128xf32> to vector<64x128xf32>
    %232 = arith.truncf %231 : vector<64x128xf32> to vector<64x128xbf16>
    %c2_229 = arith.constant 2 : index
    %c0_230 = arith.constant 0 : index
    %c0_231 = arith.constant 0 : index
    %c0_232 = arith.constant 0 : index
    %233 = vector.load %arg6[%c2_229, %c0_230, %c0_231, %c0_232] : memref<4x4x128x64xbf16, #tpu.memory_space<vmem>>, vector<1x1x128x64xbf16>
    %234 = vector.shape_cast %233 : vector<1x1x128x64xbf16> to vector<128x64xbf16>
    %cst_233 = arith.constant dense<0.000000e+00> : vector<64x64xf32>
    %235 = tpu.matmul %232, %234, %cst_233 {dimension_numbers = #tpu.dot_dimension_numbers<[1], [0], [0], [1], [0, 0, 1, 1], [], []>} : vector<64x128xbf16>, vector<128x64xbf16>, vector<64x64xf32> -> vector<64x64xf32>
    %236 = arith.addf %229, %235 : vector<64x64xf32>
    %c1_234 = arith.constant 1 : index
    %c1_235 = arith.constant 1 : index
    %c0_236 = arith.constant 0 : index
    %237 = vector.load %arg9[%c1_234, %c1_235, %c0_236] : memref<10x10x128xf32, #tpu.memory_space<vmem>>, vector<8x8x128xf32>
    %238 = vector.shape_cast %237 : vector<8x8x128xf32> to vector<64x128xf32>
    %239 = arith.truncf %238 : vector<64x128xf32> to vector<64x128xbf16>
    %c2_237 = arith.constant 2 : index
    %c1_238 = arith.constant 1 : index
    %c0_239 = arith.constant 0 : index
    %c0_240 = arith.constant 0 : index
    %240 = vector.load %arg6[%c2_237, %c1_238, %c0_239, %c0_240] : memref<4x4x128x64xbf16, #tpu.memory_space<vmem>>, vector<1x1x128x64xbf16>
    %241 = vector.shape_cast %240 : vector<1x1x128x64xbf16> to vector<128x64xbf16>
    %cst_241 = arith.constant dense<0.000000e+00> : vector<64x64xf32>
    %242 = tpu.matmul %239, %241, %cst_241 {dimension_numbers = #tpu.dot_dimension_numbers<[1], [0], [0], [1], [0, 0, 1, 1], [], []>} : vector<64x128xbf16>, vector<128x64xbf16>, vector<64x64xf32> -> vector<64x64xf32>
    %243 = arith.addf %236, %242 : vector<64x64xf32>
    %c2_242 = arith.constant 2 : index
    %c0_243 = arith.constant 0 : index
    %c0_244 = arith.constant 0 : index
    %244 = vector.load %arg9[%c2_242, %c0_243, %c0_244] : memref<10x10x128xf32, #tpu.memory_space<vmem>>, vector<8x8x128xf32>
    %245 = vector.shape_cast %244 : vector<8x8x128xf32> to vector<64x128xf32>
    %246 = arith.truncf %245 : vector<64x128xf32> to vector<64x128xbf16>
    %c2_245 = arith.constant 2 : index
    %c2_246 = arith.constant 2 : index
    %c0_247 = arith.constant 0 : index
    %c0_248 = arith.constant 0 : index
    %247 = vector.load %arg6[%c2_245, %c2_246, %c0_247, %c0_248] : memref<4x4x128x64xbf16, #tpu.memory_space<vmem>>, vector<1x1x128x64xbf16>
    %248 = vector.shape_cast %247 : vector<1x1x128x64xbf16> to vector<128x64xbf16>
    %cst_249 = arith.constant dense<0.000000e+00> : vector<64x64xf32>
    %249 = tpu.matmul %246, %248, %cst_249 {dimension_numbers = #tpu.dot_dimension_numbers<[1], [0], [0], [1], [0, 0, 1, 1], [], []>} : vector<64x128xbf16>, vector<128x64xbf16>, vector<64x64xf32> -> vector<64x64xf32>
    %250 = arith.addf %243, %249 : vector<64x64xf32>
    %c2_250 = arith.constant 2 : index
    %c1_251 = arith.constant 1 : index
    %c0_252 = arith.constant 0 : index
    %251 = vector.load %arg9[%c2_250, %c1_251, %c0_252] : memref<10x10x128xf32, #tpu.memory_space<vmem>>, vector<8x8x128xf32>
    %252 = vector.shape_cast %251 : vector<8x8x128xf32> to vector<64x128xf32>
    %253 = arith.truncf %252 : vector<64x128xf32> to vector<64x128xbf16>
    %c2_253 = arith.constant 2 : index
    %c3_254 = arith.constant 3 : index
    %c0_255 = arith.constant 0 : index
    %c0_256 = arith.constant 0 : index
    %254 = vector.load %arg6[%c2_253, %c3_254, %c0_255, %c0_256] : memref<4x4x128x64xbf16, #tpu.memory_space<vmem>>, vector<1x1x128x64xbf16>
    %255 = vector.shape_cast %254 : vector<1x1x128x64xbf16> to vector<128x64xbf16>
    %cst_257 = arith.constant dense<0.000000e+00> : vector<64x64xf32>
    %256 = tpu.matmul %253, %255, %cst_257 {dimension_numbers = #tpu.dot_dimension_numbers<[1], [0], [0], [1], [0, 0, 1, 1], [], []>} : vector<64x128xbf16>, vector<128x64xbf16>, vector<64x64xf32> -> vector<64x64xf32>
    %257 = arith.addf %250, %256 : vector<64x64xf32>
    %cst_258 = arith.constant 0.000000e+00 : f32
    %258 = vector.broadcast %cst_258 : f32 to vector<64x64xf32>
    %259 = arith.cmpf oge, %257, %258 : vector<64x64xf32>
    %cst_259 = arith.constant 1.000000e-01 : f32
    %260 = vector.broadcast %cst_259 : f32 to vector<64x64xf32>
    %261 = arith.mulf %260, %257 : vector<64x64xf32>
    %262 = arith.select %259, %257, %261 : vector<64x64xi1>, vector<64x64xf32>
    %c0_260 = arith.constant 0 : index
    %c2_261 = arith.constant 2 : index
    %c0_262 = arith.constant 0 : index
    %c0_263 = arith.constant 0 : index
    %263 = vector.load %arg7[%c0_260, %c2_261, %c0_262, %c0_263] : memref<1x4x64x64xf32, #tpu.memory_space<vmem>>, vector<1x1x64x64xf32>
    %264 = vector.shape_cast %263 : vector<1x1x64x64xf32> to vector<64x64xf32>
    %265 = vector.shape_cast %262 : vector<64x64xf32> to vector<1x1x64x64xf32>
    tpu.vector_store %arg7[%c0_260, %c2_261, %c0_262, %c0_263], %265 {strides = array<i32>} : memref<1x4x64x64xf32, #tpu.memory_space<vmem>>, vector<1x1x64x64xf32>,
    %cst_264 = arith.constant 0.000000e+00 : f32
    %266 = vector.broadcast %cst_264 : f32 to vector<64x64xf32>
    %c1_265 = arith.constant 1 : index
    %c1_266 = arith.constant 1 : index
    %c0_267 = arith.constant 0 : index
    %267 = vector.load %arg9[%c1_265, %c1_266, %c0_267] : memref<10x10x128xf32, #tpu.memory_space<vmem>>, vector<8x8x128xf32>
    %268 = vector.shape_cast %267 : vector<8x8x128xf32> to vector<64x128xf32>
    %269 = arith.truncf %268 : vector<64x128xf32> to vector<64x128xbf16>
    %c3_268 = arith.constant 3 : index
    %c0_269 = arith.constant 0 : index
    %c0_270 = arith.constant 0 : index
    %c0_271 = arith.constant 0 : index
    %270 = vector.load %arg6[%c3_268, %c0_269, %c0_270, %c0_271] : memref<4x4x128x64xbf16, #tpu.memory_space<vmem>>, vector<1x1x128x64xbf16>
    %271 = vector.shape_cast %270 : vector<1x1x128x64xbf16> to vector<128x64xbf16>
    %cst_272 = arith.constant dense<0.000000e+00> : vector<64x64xf32>
    %272 = tpu.matmul %269, %271, %cst_272 {dimension_numbers = #tpu.dot_dimension_numbers<[1], [0], [0], [1], [0, 0, 1, 1], [], []>} : vector<64x128xbf16>, vector<128x64xbf16>, vector<64x64xf32> -> vector<64x64xf32>
    %273 = arith.addf %266, %272 : vector<64x64xf32>
    %c1_273 = arith.constant 1 : index
    %c2_274 = arith.constant 2 : index
    %c0_275 = arith.constant 0 : index
    %274 = vector.load %arg9[%c1_273, %c2_274, %c0_275] : memref<10x10x128xf32, #tpu.memory_space<vmem>>, vector<8x8x128xf32>
    %275 = vector.shape_cast %274 : vector<8x8x128xf32> to vector<64x128xf32>
    %276 = arith.truncf %275 : vector<64x128xf32> to vector<64x128xbf16>
    %c3_276 = arith.constant 3 : index
    %c1_277 = arith.constant 1 : index
    %c0_278 = arith.constant 0 : index
    %c0_279 = arith.constant 0 : index
    %277 = vector.load %arg6[%c3_276, %c1_277, %c0_278, %c0_279] : memref<4x4x128x64xbf16, #tpu.memory_space<vmem>>, vector<1x1x128x64xbf16>
    %278 = vector.shape_cast %277 : vector<1x1x128x64xbf16> to vector<128x64xbf16>
    %cst_280 = arith.constant dense<0.000000e+00> : vector<64x64xf32>
    %279 = tpu.matmul %276, %278, %cst_280 {dimension_numbers = #tpu.dot_dimension_numbers<[1], [0], [0], [1], [0, 0, 1, 1], [], []>} : vector<64x128xbf16>, vector<128x64xbf16>, vector<64x64xf32> -> vector<64x64xf32>
    %280 = arith.addf %273, %279 : vector<64x64xf32>
    %c2_281 = arith.constant 2 : index
    %c1_282 = arith.constant 1 : index
    %c0_283 = arith.constant 0 : index
    %281 = vector.load %arg9[%c2_281, %c1_282, %c0_283] : memref<10x10x128xf32, #tpu.memory_space<vmem>>, vector<8x8x128xf32>
    %282 = vector.shape_cast %281 : vector<8x8x128xf32> to vector<64x128xf32>
    %283 = arith.truncf %282 : vector<64x128xf32> to vector<64x128xbf16>
    %c3_284 = arith.constant 3 : index
    %c2_285 = arith.constant 2 : index
    %c0_286 = arith.constant 0 : index
    %c0_287 = arith.constant 0 : index
    %284 = vector.load %arg6[%c3_284, %c2_285, %c0_286, %c0_287] : memref<4x4x128x64xbf16, #tpu.memory_space<vmem>>, vector<1x1x128x64xbf16>
    %285 = vector.shape_cast %284 : vector<1x1x128x64xbf16> to vector<128x64xbf16>
    %cst_288 = arith.constant dense<0.000000e+00> : vector<64x64xf32>
    %286 = tpu.matmul %283, %285, %cst_288 {dimension_numbers = #tpu.dot_dimension_numbers<[1], [0], [0], [1], [0, 0, 1, 1], [], []>} : vector<64x128xbf16>, vector<128x64xbf16>, vector<64x64xf32> -> vector<64x64xf32>
    %287 = arith.addf %280, %286 : vector<64x64xf32>
    %c2_289 = arith.constant 2 : index
    %c2_290 = arith.constant 2 : index
    %c0_291 = arith.constant 0 : index
    %288 = vector.load %arg9[%c2_289, %c2_290, %c0_291] : memref<10x10x128xf32, #tpu.memory_space<vmem>>, vector<8x8x128xf32>
    %289 = vector.shape_cast %288 : vector<8x8x128xf32> to vector<64x128xf32>
    %290 = arith.truncf %289 : vector<64x128xf32> to vector<64x128xbf16>
    %c3_292 = arith.constant 3 : index
    %c3_293 = arith.constant 3 : index
    %c0_294 = arith.constant 0 : index
    %c0_295 = arith.constant 0 : index
    %291 = vector.load %arg6[%c3_292, %c3_293, %c0_294, %c0_295] : memref<4x4x128x64xbf16, #tpu.memory_space<vmem>>, vector<1x1x128x64xbf16>
    %292 = vector.shape_cast %291 : vector<1x1x128x64xbf16> to vector<128x64xbf16>
    %cst_296 = arith.constant dense<0.000000e+00> : vector<64x64xf32>
    %293 = tpu.matmul %290, %292, %cst_296 {dimension_numbers = #tpu.dot_dimension_numbers<[1], [0], [0], [1], [0, 0, 1, 1], [], []>} : vector<64x128xbf16>, vector<128x64xbf16>, vector<64x64xf32> -> vector<64x64xf32>
    %294 = arith.addf %287, %293 : vector<64x64xf32>
    %cst_297 = arith.constant 0.000000e+00 : f32
    %295 = vector.broadcast %cst_297 : f32 to vector<64x64xf32>
    %296 = arith.cmpf oge, %294, %295 : vector<64x64xf32>
    %cst_298 = arith.constant 1.000000e-01 : f32
    %297 = vector.broadcast %cst_298 : f32 to vector<64x64xf32>
    %298 = arith.mulf %297, %294 : vector<64x64xf32>
    %299 = arith.select %296, %294, %298 : vector<64x64xi1>, vector<64x64xf32>
    %c0_299 = arith.constant 0 : index
    %c3_300 = arith.constant 3 : index
    %c0_301 = arith.constant 0 : index
    %c0_302 = arith.constant 0 : index
    %300 = vector.load %arg7[%c0_299, %c3_300, %c0_301, %c0_302] : memref<1x4x64x64xf32, #tpu.memory_space<vmem>>, vector<1x1x64x64xf32>
    %301 = vector.shape_cast %300 : vector<1x1x64x64xf32> to vector<64x64xf32>
    %302 = vector.shape_cast %299 : vector<64x64xf32> to vector<1x1x64x64xf32>
    tpu.vector_store %arg7[%c0_299, %c3_300, %c0_301, %c0_302], %302 {strides = array<i32>} : memref<1x4x64x64xf32, #tpu.memory_space<vmem>>, vector<1x1x64x64xf32>,
    return
  }
  func.func @transform_0(%arg0: i32) -> (i32, i32, i32, i32) {
    %c0_i32 = arith.constant 0 : i32
    %c0_i32_0 = arith.constant 0 : i32
    %c0_i32_1 = arith.constant 0 : i32
    %c0_i32_2 = arith.constant 0 : i32
    return %arg0, %c0_i32, %c0_i32_0, %c0_i32_1 : i32, i32, i32, i32
  }
  func.func @transform_1(%arg0: i32) -> (i32, i32, i32) {
    %c0_i32 = arith.constant 0 : i32
    %c0_i32_0 = arith.constant 0 : i32
    %c0_i32_1 = arith.constant 0 : i32
    %c0_i32_2 = arith.constant 0 : i32
    return %c0_i32, %c0_i32_0, %c0_i32_1 : i32, i32, i32
  }
  func.func @transform_2(%arg0: i32) -> (i32, i32) {
    %c0_i32 = arith.constant 0 : i32
    %c0_i32_0 = arith.constant 0 : i32
    %c0_i32_1 = arith.constant 0 : i32
    return %c0_i32, %c0_i32_0 : i32, i32
  }
  func.func @transform_3(%arg0: i32) -> (i32, i32, i32) {
    %c0_i32 = arith.constant 0 : i32
    %c0_i32_0 = arith.constant 0 : i32
    %c0_i32_1 = arith.constant 0 : i32
    %c0_i32_2 = arith.constant 0 : i32
    return %c0_i32, %c0_i32_0, %c0_i32_1 : i32, i32, i32
  }
  func.func @transform_4(%arg0: i32) -> (i32, i32) {
    %c0_i32 = arith.constant 0 : i32
    %c0_i32_0 = arith.constant 0 : i32
    %c0_i32_1 = arith.constant 0 : i32
    return %c0_i32, %c0_i32_0 : i32, i32
  }
  func.func @transform_5(%arg0: i32) -> (i32, i32, i32, i32) {
    %c0_i32 = arith.constant 0 : i32
    %c0_i32_0 = arith.constant 0 : i32
    %c0_i32_1 = arith.constant 0 : i32
    %c0_i32_2 = arith.constant 0 : i32
    %c0_i32_3 = arith.constant 0 : i32
    return %c0_i32, %c0_i32_0, %c0_i32_1, %c0_i32_2 : i32, i32, i32, i32
  }
  func.func @transform_6(%arg0: i32) -> (i32, i32, i32, i32) {
    %c0_i32 = arith.constant 0 : i32
    %c0_i32_0 = arith.constant 0 : i32
    %c0_i32_1 = arith.constant 0 : i32
    %c0_i32_2 = arith.constant 0 : i32
    return %arg0, %c0_i32, %c0_i32_0, %c0_i32_1 : i32, i32, i32, i32
  }
}

module attributes {stable_mosaic.version = 11 : i64} {
  func.func @kernel(%arg0: i32, %arg1: memref<1x16x16x64xf32, #tpu.memory_space<vmem>>, %arg2: memref<9x64x128xbf16, #tpu.memory_space<vmem>>, %arg3: memref<1x16x16x128xf32, #tpu.memory_space<vmem>>, %arg4: memref<18x18x64xf32, #tpu.memory_space<vmem>>) attributes {dimension_semantics = [#tpu.dimension_semantics<parallel>], iteration_bounds = array<i64: 2>, scalar_prefetch = 0 : i64, scratch_operands = 1 : i64, tpu.core_type = #tpu.core_type<tc>, window_params = [{transform_indices = @transform_0, window_bounds = array<i64: 1, 16, 16, 64>}, {pipeline_mode = #tpu.pipeline_mode<synchronous>, transform_indices = @transform_1, window_bounds = array<i64: 9, 64, 128>}, {transform_indices = @transform_2, window_bounds = array<i64: 1, 16, 16, 128>}]} {
    %cst = arith.constant 0.000000e+00 : f32
    %0 = vector.broadcast %cst : f32 to vector<18x18x64xf32>
    %c0 = arith.constant 0 : index
    %c0_0 = arith.constant 0 : index
    %c0_1 = arith.constant 0 : index
    %1 = vector.load %arg4[%c0, %c0_0, %c0_1] : memref<18x18x64xf32, #tpu.memory_space<vmem>>, vector<18x18x64xf32>
    tpu.vector_store %arg4[%c0, %c0_0, %c0_1], %0 {strides = array<i32>} : memref<18x18x64xf32, #tpu.memory_space<vmem>>, vector<18x18x64xf32>,
    %c0_2 = arith.constant 0 : index
    %c0_3 = arith.constant 0 : index
    %c0_4 = arith.constant 0 : index
    %c0_5 = arith.constant 0 : index
    %2 = vector.load %arg1[%c0_2, %c0_3, %c0_4, %c0_5] : memref<1x16x16x64xf32, #tpu.memory_space<vmem>>, vector<1x16x16x64xf32>
    %3 = vector.shape_cast %2 : vector<1x16x16x64xf32> to vector<16x16x64xf32>
    %c1 = arith.constant 1 : index
    %c1_6 = arith.constant 1 : index
    %c0_7 = arith.constant 0 : index
    %4 = vector.load %arg4[%c1, %c1_6, %c0_7] : memref<18x18x64xf32, #tpu.memory_space<vmem>>, vector<16x16x64xf32>
    tpu.vector_store %arg4[%c1, %c1_6, %c0_7], %3 {strides = array<i32>} : memref<18x18x64xf32, #tpu.memory_space<vmem>>, vector<16x16x64xf32>,
    %cst_8 = arith.constant 0.000000e+00 : f32
    %5 = vector.broadcast %cst_8 : f32 to vector<256x128xf32>
    %c0_9 = arith.constant 0 : index
    %c0_10 = arith.constant 0 : index
    %c0_11 = arith.constant 0 : index
    %6 = vector.load %arg4[%c0_9, %c0_10, %c0_11] : memref<18x18x64xf32, #tpu.memory_space<vmem>>, vector<16x16x64xf32>
    %7 = vector.shape_cast %6 : vector<16x16x64xf32> to vector<256x64xf32>
    %8 = arith.truncf %7 : vector<256x64xf32> to vector<256x64xbf16>
    %c0_12 = arith.constant 0 : index
    %c0_13 = arith.constant 0 : index
    %c0_14 = arith.constant 0 : index
    %9 = vector.load %arg2[%c0_12, %c0_13, %c0_14] : memref<9x64x128xbf16, #tpu.memory_space<vmem>>, vector<1x64x128xbf16>
    %10 = vector.shape_cast %9 : vector<1x64x128xbf16> to vector<64x128xbf16>
    %cst_15 = arith.constant dense<0.000000e+00> : vector<256x128xf32>
    %11 = tpu.matmul %8, %10, %cst_15 {dimension_numbers = #tpu.dot_dimension_numbers<[1], [0], [0], [1], [0, 0, 1, 1], [], []>} : vector<256x64xbf16>, vector<64x128xbf16>, vector<256x128xf32> -> vector<256x128xf32>
    %12 = arith.addf %5, %11 : vector<256x128xf32>
    %c0_16 = arith.constant 0 : index
    %c1_17 = arith.constant 1 : index
    %c0_18 = arith.constant 0 : index
    %13 = vector.load %arg4[%c0_16, %c1_17, %c0_18] : memref<18x18x64xf32, #tpu.memory_space<vmem>>, vector<16x16x64xf32>
    %14 = vector.shape_cast %13 : vector<16x16x64xf32> to vector<256x64xf32>
    %15 = arith.truncf %14 : vector<256x64xf32> to vector<256x64xbf16>
    %c1_19 = arith.constant 1 : index
    %c0_20 = arith.constant 0 : index
    %c0_21 = arith.constant 0 : index
    %16 = vector.load %arg2[%c1_19, %c0_20, %c0_21] : memref<9x64x128xbf16, #tpu.memory_space<vmem>>, vector<1x64x128xbf16>
    %17 = vector.shape_cast %16 : vector<1x64x128xbf16> to vector<64x128xbf16>
    %cst_22 = arith.constant dense<0.000000e+00> : vector<256x128xf32>
    %18 = tpu.matmul %15, %17, %cst_22 {dimension_numbers = #tpu.dot_dimension_numbers<[1], [0], [0], [1], [0, 0, 1, 1], [], []>} : vector<256x64xbf16>, vector<64x128xbf16>, vector<256x128xf32> -> vector<256x128xf32>
    %19 = arith.addf %12, %18 : vector<256x128xf32>
    %c0_23 = arith.constant 0 : index
    %c2 = arith.constant 2 : index
    %c0_24 = arith.constant 0 : index
    %20 = vector.load %arg4[%c0_23, %c2, %c0_24] : memref<18x18x64xf32, #tpu.memory_space<vmem>>, vector<16x16x64xf32>
    %21 = vector.shape_cast %20 : vector<16x16x64xf32> to vector<256x64xf32>
    %22 = arith.truncf %21 : vector<256x64xf32> to vector<256x64xbf16>
    %c2_25 = arith.constant 2 : index
    %c0_26 = arith.constant 0 : index
    %c0_27 = arith.constant 0 : index
    %23 = vector.load %arg2[%c2_25, %c0_26, %c0_27] : memref<9x64x128xbf16, #tpu.memory_space<vmem>>, vector<1x64x128xbf16>
    %24 = vector.shape_cast %23 : vector<1x64x128xbf16> to vector<64x128xbf16>
    %cst_28 = arith.constant dense<0.000000e+00> : vector<256x128xf32>
    %25 = tpu.matmul %22, %24, %cst_28 {dimension_numbers = #tpu.dot_dimension_numbers<[1], [0], [0], [1], [0, 0, 1, 1], [], []>} : vector<256x64xbf16>, vector<64x128xbf16>, vector<256x128xf32> -> vector<256x128xf32>
    %26 = arith.addf %19, %25 : vector<256x128xf32>
    %c1_29 = arith.constant 1 : index
    %c0_30 = arith.constant 0 : index
    %c0_31 = arith.constant 0 : index
    %27 = vector.load %arg4[%c1_29, %c0_30, %c0_31] : memref<18x18x64xf32, #tpu.memory_space<vmem>>, vector<16x16x64xf32>
    %28 = vector.shape_cast %27 : vector<16x16x64xf32> to vector<256x64xf32>
    %29 = arith.truncf %28 : vector<256x64xf32> to vector<256x64xbf16>
    %c3 = arith.constant 3 : index
    %c0_32 = arith.constant 0 : index
    %c0_33 = arith.constant 0 : index
    %30 = vector.load %arg2[%c3, %c0_32, %c0_33] : memref<9x64x128xbf16, #tpu.memory_space<vmem>>, vector<1x64x128xbf16>
    %31 = vector.shape_cast %30 : vector<1x64x128xbf16> to vector<64x128xbf16>
    %cst_34 = arith.constant dense<0.000000e+00> : vector<256x128xf32>
    %32 = tpu.matmul %29, %31, %cst_34 {dimension_numbers = #tpu.dot_dimension_numbers<[1], [0], [0], [1], [0, 0, 1, 1], [], []>} : vector<256x64xbf16>, vector<64x128xbf16>, vector<256x128xf32> -> vector<256x128xf32>
    %33 = arith.addf %26, %32 : vector<256x128xf32>
    %c1_35 = arith.constant 1 : index
    %c1_36 = arith.constant 1 : index
    %c0_37 = arith.constant 0 : index
    %34 = vector.load %arg4[%c1_35, %c1_36, %c0_37] : memref<18x18x64xf32, #tpu.memory_space<vmem>>, vector<16x16x64xf32>
    %35 = vector.shape_cast %34 : vector<16x16x64xf32> to vector<256x64xf32>
    %36 = arith.truncf %35 : vector<256x64xf32> to vector<256x64xbf16>
    %c4 = arith.constant 4 : index
    %c0_38 = arith.constant 0 : index
    %c0_39 = arith.constant 0 : index
    %37 = vector.load %arg2[%c4, %c0_38, %c0_39] : memref<9x64x128xbf16, #tpu.memory_space<vmem>>, vector<1x64x128xbf16>
    %38 = vector.shape_cast %37 : vector<1x64x128xbf16> to vector<64x128xbf16>
    %cst_40 = arith.constant dense<0.000000e+00> : vector<256x128xf32>
    %39 = tpu.matmul %36, %38, %cst_40 {dimension_numbers = #tpu.dot_dimension_numbers<[1], [0], [0], [1], [0, 0, 1, 1], [], []>} : vector<256x64xbf16>, vector<64x128xbf16>, vector<256x128xf32> -> vector<256x128xf32>
    %40 = arith.addf %33, %39 : vector<256x128xf32>
    %c1_41 = arith.constant 1 : index
    %c2_42 = arith.constant 2 : index
    %c0_43 = arith.constant 0 : index
    %41 = vector.load %arg4[%c1_41, %c2_42, %c0_43] : memref<18x18x64xf32, #tpu.memory_space<vmem>>, vector<16x16x64xf32>
    %42 = vector.shape_cast %41 : vector<16x16x64xf32> to vector<256x64xf32>
    %43 = arith.truncf %42 : vector<256x64xf32> to vector<256x64xbf16>
    %c5 = arith.constant 5 : index
    %c0_44 = arith.constant 0 : index
    %c0_45 = arith.constant 0 : index
    %44 = vector.load %arg2[%c5, %c0_44, %c0_45] : memref<9x64x128xbf16, #tpu.memory_space<vmem>>, vector<1x64x128xbf16>
    %45 = vector.shape_cast %44 : vector<1x64x128xbf16> to vector<64x128xbf16>
    %cst_46 = arith.constant dense<0.000000e+00> : vector<256x128xf32>
    %46 = tpu.matmul %43, %45, %cst_46 {dimension_numbers = #tpu.dot_dimension_numbers<[1], [0], [0], [1], [0, 0, 1, 1], [], []>} : vector<256x64xbf16>, vector<64x128xbf16>, vector<256x128xf32> -> vector<256x128xf32>
    %47 = arith.addf %40, %46 : vector<256x128xf32>
    %c2_47 = arith.constant 2 : index
    %c0_48 = arith.constant 0 : index
    %c0_49 = arith.constant 0 : index
    %48 = vector.load %arg4[%c2_47, %c0_48, %c0_49] : memref<18x18x64xf32, #tpu.memory_space<vmem>>, vector<16x16x64xf32>
    %49 = vector.shape_cast %48 : vector<16x16x64xf32> to vector<256x64xf32>
    %50 = arith.truncf %49 : vector<256x64xf32> to vector<256x64xbf16>
    %c6 = arith.constant 6 : index
    %c0_50 = arith.constant 0 : index
    %c0_51 = arith.constant 0 : index
    %51 = vector.load %arg2[%c6, %c0_50, %c0_51] : memref<9x64x128xbf16, #tpu.memory_space<vmem>>, vector<1x64x128xbf16>
    %52 = vector.shape_cast %51 : vector<1x64x128xbf16> to vector<64x128xbf16>
    %cst_52 = arith.constant dense<0.000000e+00> : vector<256x128xf32>
    %53 = tpu.matmul %50, %52, %cst_52 {dimension_numbers = #tpu.dot_dimension_numbers<[1], [0], [0], [1], [0, 0, 1, 1], [], []>} : vector<256x64xbf16>, vector<64x128xbf16>, vector<256x128xf32> -> vector<256x128xf32>
    %54 = arith.addf %47, %53 : vector<256x128xf32>
    %c2_53 = arith.constant 2 : index
    %c1_54 = arith.constant 1 : index
    %c0_55 = arith.constant 0 : index
    %55 = vector.load %arg4[%c2_53, %c1_54, %c0_55] : memref<18x18x64xf32, #tpu.memory_space<vmem>>, vector<16x16x64xf32>
    %56 = vector.shape_cast %55 : vector<16x16x64xf32> to vector<256x64xf32>
    %57 = arith.truncf %56 : vector<256x64xf32> to vector<256x64xbf16>
    %c7 = arith.constant 7 : index
    %c0_56 = arith.constant 0 : index
    %c0_57 = arith.constant 0 : index
    %58 = vector.load %arg2[%c7, %c0_56, %c0_57] : memref<9x64x128xbf16, #tpu.memory_space<vmem>>, vector<1x64x128xbf16>
    %59 = vector.shape_cast %58 : vector<1x64x128xbf16> to vector<64x128xbf16>
    %cst_58 = arith.constant dense<0.000000e+00> : vector<256x128xf32>
    %60 = tpu.matmul %57, %59, %cst_58 {dimension_numbers = #tpu.dot_dimension_numbers<[1], [0], [0], [1], [0, 0, 1, 1], [], []>} : vector<256x64xbf16>, vector<64x128xbf16>, vector<256x128xf32> -> vector<256x128xf32>
    %61 = arith.addf %54, %60 : vector<256x128xf32>
    %c2_59 = arith.constant 2 : index
    %c2_60 = arith.constant 2 : index
    %c0_61 = arith.constant 0 : index
    %62 = vector.load %arg4[%c2_59, %c2_60, %c0_61] : memref<18x18x64xf32, #tpu.memory_space<vmem>>, vector<16x16x64xf32>
    %63 = vector.shape_cast %62 : vector<16x16x64xf32> to vector<256x64xf32>
    %64 = arith.truncf %63 : vector<256x64xf32> to vector<256x64xbf16>
    %c8 = arith.constant 8 : index
    %c0_62 = arith.constant 0 : index
    %c0_63 = arith.constant 0 : index
    %65 = vector.load %arg2[%c8, %c0_62, %c0_63] : memref<9x64x128xbf16, #tpu.memory_space<vmem>>, vector<1x64x128xbf16>
    %66 = vector.shape_cast %65 : vector<1x64x128xbf16> to vector<64x128xbf16>
    %cst_64 = arith.constant dense<0.000000e+00> : vector<256x128xf32>
    %67 = tpu.matmul %64, %66, %cst_64 {dimension_numbers = #tpu.dot_dimension_numbers<[1], [0], [0], [1], [0, 0, 1, 1], [], []>} : vector<256x64xbf16>, vector<64x128xbf16>, vector<256x128xf32> -> vector<256x128xf32>
    %68 = arith.addf %61, %67 : vector<256x128xf32>
    %69 = arith.mulf %68, %68 : vector<256x128xf32>
    %cst_65 = arith.constant dense<0.000000e+00> : vector<256xf32>
    %70 = vector.multi_reduction <add>, %69, %cst_65 [1] : vector<256x128xf32> to vector<256xf32>
    %71 = vector.shape_cast %70 : vector<256xf32> to vector<256x1xf32>
    %cst_66 = arith.constant 1.000000e-24 : f32
    %72 = vector.broadcast %cst_66 : f32 to vector<256x1xf32>
    %73 = arith.maximumf %71, %72 : vector<256x1xf32>
    %74 = math.rsqrt %73 : vector<256x1xf32>
    %75 = vector.broadcast %74 : vector<256x1xf32> to vector<256x128xf32>
    %76 = arith.mulf %68, %75 : vector<256x128xf32>
    %77 = vector.shape_cast %76 : vector<256x128xf32> to vector<16x16x128xf32>
    %c0_67 = arith.constant 0 : index
    %c0_68 = arith.constant 0 : index
    %c0_69 = arith.constant 0 : index
    %c0_70 = arith.constant 0 : index
    %78 = vector.load %arg3[%c0_67, %c0_68, %c0_69, %c0_70] : memref<1x16x16x128xf32, #tpu.memory_space<vmem>>, vector<1x16x16x128xf32>
    %79 = vector.shape_cast %78 : vector<1x16x16x128xf32> to vector<16x16x128xf32>
    %80 = vector.shape_cast %77 : vector<16x16x128xf32> to vector<1x16x16x128xf32>
    tpu.vector_store %arg3[%c0_67, %c0_68, %c0_69, %c0_70], %80 {strides = array<i32>} : memref<1x16x16x128xf32, #tpu.memory_space<vmem>>, vector<1x16x16x128xf32>,
    return
  }
  func.func @transform_0(%arg0: i32) -> (i32, i32, i32, i32) {
    %c0_i32 = arith.constant 0 : i32
    %c0_i32_0 = arith.constant 0 : i32
    %c0_i32_1 = arith.constant 0 : i32
    %c0_i32_2 = arith.constant 0 : i32
    return %arg0, %c0_i32, %c0_i32_0, %c0_i32_1 : i32, i32, i32, i32
  }
  func.func @transform_1(%arg0: i32) -> (i32, i32, i32) {
    %c0_i32 = arith.constant 0 : i32
    %c0_i32_0 = arith.constant 0 : i32
    %c0_i32_1 = arith.constant 0 : i32
    %c0_i32_2 = arith.constant 0 : i32
    return %c0_i32, %c0_i32_0, %c0_i32_1 : i32, i32, i32
  }
  func.func @transform_2(%arg0: i32) -> (i32, i32, i32, i32) {
    %c0_i32 = arith.constant 0 : i32
    %c0_i32_0 = arith.constant 0 : i32
    %c0_i32_1 = arith.constant 0 : i32
    %c0_i32_2 = arith.constant 0 : i32
    return %arg0, %c0_i32, %c0_i32_0, %c0_i32_1 : i32, i32, i32, i32
  }
}

</mosaic_0001>

<llo_original>
// kernel: regressor_forward.3
$region0: #{regressor_forward.3}
  #allocation0 [shape = 'u32[]', space=smem, size = 0x4, offset = 0x4, fixed_abs, tag = 'smem constant byte address 0x4 - core index']
  #allocation1 [shape = 'u32[144,128]{1,0:T(1,128)}', space=vmem, size = 0x12000, scoped, tag = 'internal scratch']
  #allocation2 [shape = 'f32[18,18,64]{2,1,0:T(8,128)}', space=vmem, size = 0x36000, scoped, tag = 'scratch operand']
  %s0 = inlined_call_operand.vmem [shape: f32[2,16,16,64], index: 0, kind: input, shape index: {}]
  %s1 = inlined_call_operand.vmem [shape: bf16[9,64,128], index: 1, kind: input, shape index: {}]
  %s2 = inlined_call_operand.vmem [shape: f32[2,16,16,128], index: 2, kind: output, shape index: {}]
  %s3 = sld [smem:[#allocation0]]
  $region41: #{regressor_forward.3} parent=0
    _
  %s5 = ssub.s32 1, %s3
  %s6 = scalar_select 0, %s5, %s3
  loop: start=0, step=1, limit=4
  $region2: #{regressor_forward.3} parent=0 // loop_pre_header
    _
  $region3: #{regressor_forward.3} parent=0 // loop_header
    %s8 = sphi 0, %s12
    %p9 = scmp.ge.s32.totalorder %s8, 4
    %s18 = sphi 0, %s20
    %s21 = sphi 0, %s18
    %s22 = sphi 0, %s21
    %s38 = sphi 0, %s22
    %s42 = sphi 0, %s42
    %s44 = sphi 0, %s42
    %s45 = sphi 0, %s44
    %s59 = sphi 0, %s45
    %s65 = sphi 0, %s67
    %s68 = sphi 0, %s65
    %s69 = sphi 0, %s68
    %s85 = sphi 0, %s69
  $region4: #{regressor_forward.3} parent=0 // loop_header_branch
    %11 = sbr.rel (%p9) target = $region8
  $region5: #{regressor_forward.3} parent=0 // loop_body
    %s13 = ssub.s32 %s8, 1
    %s14 = ssub.s32 %s8, 2
    %s15 = sadd.s32 %s8, 1
    %s16 = ssub.s32 %s8, %s15
    %p17 = scmp.eq.s32.totalorder %s16, 0
    %s19 = sadd.s32 %s18, 1
    %s20 = scalar_select %p17, %s18, %s19
    %p23 = pneg %p17
    %p24 = scmp.eq.s32.totalorder %s8, 1
    %p25 = por %p23, %p24
    %p26 = scmp.ne.s32.totalorder %s18, %s21
    %p27 = scmp.eq.s32.totalorder %s8, 0
    %p28 = por %p26, %p27
    %p29 = scmp.ne.s32.totalorder %s18, %s21
    %p30 = scmp.eq.s32.totalorder %s13, 1
    %p31 = por %p29, %p30
    %p32 = scmp.ne.s32.totalorder %s21, %s22
    %p33 = scmp.eq.s32.totalorder %s13, 0
    %p34 = por %p32, %p33
    %p35 = scmp.ne.s32.totalorder %s21, %s22
    %p36 = scmp.eq.s32.totalorder %s14, 1
    %p37 = por %p35, %p36
    %p39 = scmp.ne.s32.totalorder %s22, %s38
    %p40 = scmp.eq.s32.totalorder %s14, 0
    %p41 = por %p39, %p40
    %s43 = sadd.s32 %s42, 1
    %p46 = scmp.eq.s32.totalorder %s8, 1
    %p47 = scmp.ne.s32.totalorder %s42, %s44
    %p48 = scmp.eq.s32.totalorder %s8, 0
    %p49 = por %p47, %p48
    %p50 = scmp.ne.s32.totalorder %s42, %s44
    %p51 = scmp.eq.s32.totalorder %s13, 1
    %p52 = por %p50, %p51
    %p53 = scmp.ne.s32.totalorder %s44, %s45
    %p54 = scmp.eq.s32.totalorder %s13, 0
    %p55 = por %p53, %p54
    %p56 = scmp.ne.s32.totalorder %s44, %s45
    %p57 = scmp.eq.s32.totalorder %s14, 1
    %p58 = por %p56, %p57
    %p60 = scmp.ne.s32.totalorder %s45, %s59
    %p61 = scmp.eq.s32.totalorder %s14, 0
    %p62 = por %p60, %p61
    %s63 = ssub.s32 %s8, %s15
    %p64 = scmp.eq.s32.totalorder %s63, 0
    %s66 = sadd.s32 %s65, 1
    %s67 = scalar_select %p64, %s65, %s66
    %p70 = pneg %p64
    %p71 = scmp.eq.s32.totalorder %s8, 1
    %p72 = por %p70, %p71
    %p73 = scmp.ne.s32.totalorder %s65, %s68
    %p74 = scmp.eq.s32.totalorder %s8, 0
    %p75 = por %p73, %p74
    %p76 = scmp.ne.s32.totalorder %s65, %s68
    %p77 = scmp.eq.s32.totalorder %s13, 1
    %p78 = por %p76, %p77
    %p79 = scmp.ne.s32.totalorder %s68, %s69
    %p80 = scmp.eq.s32.totalorder %s13, 0
    %p81 = por %p79, %p80
    %p82 = scmp.ne.s32.totalorder %s68, %s69
    %p83 = scmp.eq.s32.totalorder %s14, 1
    %p84 = por %p82, %p83
    %p86 = scmp.ne.s32.totalorder %s69, %s85
    %p87 = scmp.eq.s32.totalorder %s14, 0
    %p88 = por %p86, %p87
    %p89 = scmp.le.s32.totalorder 1, %s8
    %p90 = scmp.lt.s32.totalorder %s8, 3
    %p91 = pnand %p89, %p90
    %p92 = pneg %p91
    // Predicated region
    $region9: #{regressor_forward.3} parent=5 // pred_check
      _
    $region10: #{regressor_forward.3} parent=5 // pred_check_branch
      %94 = sbr.rel (%p91) target = $region12
    $region11: #{regressor_forward.3} parent=5 // pred_region
      %s95 = ssub.s32 %s8, 1
      // Predicated region
      $region13: #{regressor_forward.3} parent=11 // pred_check
        %p96 = pneg %p55
      $region14: #{regressor_forward.3} parent=11 // pred_check_branch
        %98 = sbr.rel (%p96) target = $region16
      $region15: #{regressor_forward.3} parent=11 // pred_region
        _
      $region16: #{regressor_forward.3} parent=11 // pred_fallthru
        _
    $region12: #{regressor_forward.3} parent=5 // pred_fallthru
      _
    %p99 = scmp.lt.s32.totalorder %s8, 2
    // Predicated region
    $region17: #{regressor_forward.3} parent=5 // pred_check
      %p100 = pneg %p99
    $region18: #{regressor_forward.3} parent=5 // pred_check_branch
      %102 = sbr.rel (%p100) target = $region20
    $region19: #{regressor_forward.3} parent=5 // pred_region
      // Predicated region
      $region21: #{regressor_forward.3} parent=19 // pred_check
        %p103 = pneg %p28
      $region22: #{regressor_forward.3} parent=19 // pred_check_branch
        %105 = sbr.rel (%p103) target = $region24
      $region23: #{regressor_forward.3} parent=19 // pred_region
        %p106 = scmp.lt.s32.totalorder %s8, 1
        %s107 = scalar_select %p106, %s8, 1
        %s108 = smul.addr %s107, 32
        %s109 = smul.addr %s108, 8
        %s110 = scalar_lea.vmem %s0, %s109
      $region24: #{regressor_forward.3} parent=19 // pred_fallthru
        _
    $region20: #{regressor_forward.3} parent=5 // pred_fallthru
      _
    %p111 = scmp.le.s32.totalorder 1, %s8
    %p112 = scmp.lt.s32.totalorder %s8, 3
    %p113 = pnand %p111, %p112
    %p114 = pneg %p113
    // Predicated region
    $region25: #{regressor_forward.3} parent=5 // pred_check
      _
    $region26: #{regressor_forward.3} parent=5 // pred_check_branch
      %116 = sbr.rel (%p113) target = $region28
    $region27: #{regressor_forward.3} parent=5 // pred_region
      %s117 = ssub.s32 %s8, 1
      %p118 = scmp.lt.s32.totalorder %s13, 1
      %s119 = scalar_select %p118, %s13, 1
      %s120 = smul.addr %s119, 32
      %s121 = smul.addr %s120, 8
      %s122 = scalar_lea.vmem %s0, %s121
      %p123 = pneg %p34
      %p124 = pneg %p31
      %p125 = pneg %p55
      %p126 = pneg %p52
      %p127 = pneg %p81
      %p128 = pneg %p78
      %p129 = scmp.lt.s32.totalorder %s13, 1
      %s130 = scalar_select %p129, %s13, 1
      %s131 = smul.addr %s130, 32
      %s132 = smul.addr %s131, 8
      %s133 = scalar_lea.vmem %s2, %s132
      %p134 = scmp.lt.s32.totalorder %s13, 1
      %s135 = scalar_select %p134, %s13, 1
      %s136 = smul.addr %s135, 32
      %s137 = smul.addr %s136, 8
      %s138 = scalar_lea.vmem %s0, %s137
      %p139 = scmp.lt.s32.totalorder %s13, 1
      %s140 = scalar_select %p139, %s13, 1
      %s141 = smul.addr %s140, 32
      %s142 = smul.addr %s141, 8
      %s143 = scalar_lea.vmem %s2, %s142
      %vm145 = vcmask 523264
      %146 = vst.msk [vmem:[#allocation2] sm:$0xff] %vm145, 0.0
      %147 = vst.msk [vmem:[#allocation2 + $0x8] sm:$0xff] %vm145, 0.0
      %vm148 = vcmask 517120
      %149 = vst.msk [vmem:[#allocation2 + $0x10] sm:$0x3] %vm148, 0.0
      %150 = vst.msk [vmem:[#allocation2 + $0x18] sm:$0xff] %vm145, 0.0
      %151 = vst.msk [vmem:[#allocation2 + $0x20] sm:$0xff] %vm145, 0.0
      %152 = vst.msk [vmem:[#allocation2 + $0x28] sm:$0x3] %vm148, 0.0
      %153 = vst.msk [vmem:[#allocation2 + $0x30] sm:$0xff] %vm145, 0.0
      %154 = vst.msk [vmem:[#allocation2 + $0x38] sm:$0xff] %vm145, 0.0
      %155 = vst.msk [vmem:[#allocation2 + $0x40] sm:$0x3] %vm148, 0.0
      %156 = vst.msk [vmem:[#allocation2 + $0x48] sm:$0xff] %vm145, 0.0
      %157 = vst.msk [vmem:[#allocation2 + $0x50] sm:$0xff] %vm145, 0.0
      %158 = vst.msk [vmem:[#allocation2 + $0x58] sm:$0x3] %vm148, 0.0
      %159 = vst.msk [vmem:[#allocation2 + $0x60] sm:$0xff] %vm145, 0.0
      %160 = vst.msk [vmem:[#allocation2 + $0x68] sm:$0xff] %vm145, 0.0
      %161 = vst.msk [vmem:[#allocation2 + $0x70] sm:$0x3] %vm148, 0.0
      %162 = vst.msk [vmem:[#allocation2 + $0x78] sm:$0xff] %vm145, 0.0
      %163 = vst.msk [vmem:[#allocation2 + $0x80] sm:$0xff] %vm145, 0.0
      %164 = vst.msk [vmem:[#allocation2 + $0x88] sm:$0x3] %vm148, 0.0
      %165 = vst.msk [vmem:[#allocation2 + $0x90] sm:$0xff] %vm145, 0.0
      %166 = vst.msk [vmem:[#allocation2 + $0x98] sm:$0xff] %vm145, 0.0
      %167 = vst.msk [vmem:[#allocation2 + $0xa0] sm:$0x3] %vm148, 0.0
      %168 = vst.msk [vmem:[#allocation2 + $0xa8] sm:$0xff] %vm145, 0.0
      %169 = vst.msk [vmem:[#allocation2 + $0xb0] sm:$0xff] %vm145, 0.0
      %170 = vst.msk [vmem:[#allocation2 + $0xb8] sm:$0x3] %vm148, 0.0
      %171 = vst.msk [vmem:[#allocation2 + $0xc0] sm:$0xff] %vm145, 0.0
      %172 = vst.msk [vmem:[#allocation2 + $0xc8] sm:$0xff] %vm145, 0.0
      %173 = vst.msk [vmem:[#allocation2 + $0xd0] sm:$0x3] %vm148, 0.0
      %174 = vst.msk [vmem:[#allocation2 + $0xd8] sm:$0xff] %vm145, 0.0
      %175 = vst.msk [vmem:[#allocation2 + $0xe0] sm:$0xff] %vm145, 0.0
      %176 = vst.msk [vmem:[#allocation2 + $0xe8] sm:$0x3] %vm148, 0.0
      %177 = vst.msk [vmem:[#allocation2 + $0xf0] sm:$0xff] %vm145, 0.0
      %178 = vst.msk [vmem:[#allocation2 + $0xf8] sm:$0xff] %vm145, 0.0
      %179 = vst.msk [vmem:[#allocation2 + $0x100] sm:$0x3] %vm148, 0.0
      %180 = vst.msk [vmem:[#allocation2 + $0x108] sm:$0xff] %vm145, 0.0
      %181 = vst.msk [vmem:[#allocation2 + $0x110] sm:$0xff] %vm145, 0.0
      %182 = vst.msk [vmem:[#allocation2 + $0x118] sm:$0x3] %vm148, 0.0
      %183 = vst.msk [vmem:[#allocation2 + $0x120] sm:$0xff] %vm145, 0.0
      %184 = vst.msk [vmem:[#allocation2 + $0x128] sm:$0xff] %vm145, 0.0
      %185 = vst.msk [vmem:[#allocation2 + $0x130] sm:$0x3] %vm148, 0.0
      %186 = vst.msk [vmem:[#allocation2 + $0x138] sm:$0xff] %vm145, 0.0
      %187 = vst.msk [vmem:[#allocation2 + $0x140] sm:$0xff] %vm145, 0.0
      %188 = vst.msk [vmem:[#allocation2 + $0x148] sm:$0x3] %vm148, 0.0
      %189 = vst.msk [vmem:[#allocation2 + $0x150] sm:$0xff] %vm145, 0.0
      %190 = vst.msk [vmem:[#allocation2 + $0x158] sm:$0xff] %vm145, 0.0
      %191 = vst.msk [vmem:[#allocation2 + $0x160] sm:$0x3] %vm148, 0.0
      %192 = vst.msk [vmem:[#allocation2 + $0x168] sm:$0xff] %vm145, 0.0
      %193 = vst.msk [vmem:[#allocation2 + $0x170] sm:$0xff] %vm145, 0.0
      %194 = vst.msk [vmem:[#allocation2 + $0x178] sm:$0x3] %vm148, 0.0
      %195 = vst.msk [vmem:[#allocation2 + $0x180] sm:$0xff] %vm145, 0.0
      %196 = vst.msk [vmem:[#allocation2 + $0x188] sm:$0xff] %vm145, 0.0
      %197 = vst.msk [vmem:[#allocation2 + $0x190] sm:$0x3] %vm148, 0.0
      %198 = vst.msk [vmem:[#allocation2 + $0x198] sm:$0xff] %vm145, 0.0
      %199 = vst.msk [vmem:[#allocation2 + $0x1a0] sm:$0xff] %vm145, 0.0
      %200 = vst.msk [vmem:[#allocation2 + $0x1a8] sm:$0x3] %vm148, 0.0
      %v201 = vld [vmem:[%s138] sm:$0xff]
      %v202 = vld [vmem:[%s138 + $0x8] sm:$0xff]
      %v203 = vld [vmem:[%s138 + $0x10] sm:$0xff]
      %v204 = vld [vmem:[%s138 + $0x18] sm:$0xff]
      %v205 = vld [vmem:[%s138 + $0x20] sm:$0xff]
      %v206 = vld [vmem:[%s138 + $0x28] sm:$0xff]
      %v207 = vld [vmem:[%s138 + $0x30] sm:$0xff]
      %v208 = vld [vmem:[%s138 + $0x38] sm:$0xff]
      %v209 = vld [vmem:[%s138 + $0x40] sm:$0xff]
      %v210 = vld [vmem:[%s138 + $0x48] sm:$0xff]
      %v211 = vld [vmem:[%s138 + $0x50] sm:$0xff]
      %v212 = vld [vmem:[%s138 + $0x58] sm:$0xff]
      %v213 = vld [vmem:[%s138 + $0x60] sm:$0xff]
      %v214 = vld [vmem:[%s138 + $0x68] sm:$0xff]
      %v215 = vld [vmem:[%s138 + $0x70] sm:$0xff]
      %v216 = vld [vmem:[%s138 + $0x78] sm:$0xff]
      %v217 = vld [vmem:[%s138 + $0x80] sm:$0xff]
      %v218 = vld [vmem:[%s138 + $0x88] sm:$0xff]
      %v219 = vld [vmem:[%s138 + $0x90] sm:$0xff]
      %v220 = vld [vmem:[%s138 + $0x98] sm:$0xff]
      %v221 = vld [vmem:[%s138 + $0xa0] sm:$0xff]
      %v222 = vld [vmem:[%s138 + $0xa8] sm:$0xff]
      %v223 = vld [vmem:[%s138 + $0xb0] sm:$0xff]
      %v224 = vld [vmem:[%s138 + $0xb8] sm:$0xff]
      %v225 = vld [vmem:[%s138 + $0xc0] sm:$0xff]
      %v226 = vld [vmem:[%s138 + $0xc8] sm:$0xff]
      %v227 = vld [vmem:[%s138 + $0xd0] sm:$0xff]
      %v228 = vld [vmem:[%s138 + $0xd8] sm:$0xff]
      %v229 = vld [vmem:[%s138 + $0xe0] sm:$0xff]
      %v230 = vld [vmem:[%s138 + $0xe8] sm:$0xff]
      %v231 = vld [vmem:[%s138 + $0xf0] sm:$0xff]
      %v232 = vld [vmem:[%s138 + $0xf8] sm:$0xff]
      %s233 = scalar_lea.vmem [#allocation2], 24
      %234 = vst.msk [vmem:[%s233 + $0x1] sm:$0xff] %vm145, %v201
      %235 = vst.msk [vmem:[%s233 + $0x9] sm:$0xff] %vm145, %v202
      %236 = vst.msk [vmem:[%s233 + $0x19] sm:$0xff] %vm145, %v203
      %237 = vst.msk [vmem:[%s233 + $0x21] sm:$0xff] %vm145, %v204
      %238 = vst.msk [vmem:[%s233 + $0x31] sm:$0xff] %vm145, %v205
      %239 = vst.msk [vmem:[%s233 + $0x39] sm:$0xff] %vm145, %v206
      %240 = vst.msk [vmem:[%s233 + $0x49] sm:$0xff] %vm145, %v207
      %241 = vst.msk [vmem:[%s233 + $0x51] sm:$0xff] %vm145, %v208
      %242 = vst.msk [vmem:[%s233 + $0x61] sm:$0xff] %vm145, %v209
      %243 = vst.msk [vmem:[%s233 + $0x69] sm:$0xff] %vm145, %v210
      %244 = vst.msk [vmem:[%s233 + $0x79] sm:$0xff] %vm145, %v211
      %245 = vst.msk [vmem:[%s233 + $0x81] sm:$0xff] %vm145, %v212
      %246 = vst.msk [vmem:[%s233 + $0x91] sm:$0xff] %vm145, %v213
      %247 = vst.msk [vmem:[%s233 + $0x99] sm:$0xff] %vm145, %v214
      %248 = vst.msk [vmem:[%s233 + $0xa9] sm:$0xff] %vm145, %v215
      %249 = vst.msk [vmem:[%s233 + $0xb1] sm:$0xff] %vm145, %v216
      %250 = vst.msk [vmem:[%s233 + $0xc1] sm:$0xff] %vm145, %v217
      %251 = vst.msk [vmem:[%s233 + $0xc9] sm:$0xff] %vm145, %v218
      %252 = vst.msk [vmem:[%s233 + $0xd9] sm:$0xff] %vm145, %v219
      %253 = vst.msk [vmem:[%s233 + $0xe1] sm:$0xff] %vm145, %v220
      %254 = vst.msk [vmem:[%s233 + $0xf1] sm:$0xff] %vm145, %v221
      %255 = vst.msk [vmem:[%s233 + $0xf9] sm:$0xff] %vm145, %v222
      %256 = vst.msk [vmem:[%s233 + $0x109] sm:$0xff] %vm145, %v223
      %257 = vst.msk [vmem:[%s233 + $0x111] sm:$0xff] %vm145, %v224
      %258 = vst.msk [vmem:[%s233 + $0x121] sm:$0xff] %vm145, %v225
      %259 = vst.msk [vmem:[%s233 + $0x129] sm:$0xff] %vm145, %v226
      %260 = vst.msk [vmem:[%s233 + $0x139] sm:$0xff] %vm145, %v227
      %261 = vst.msk [vmem:[%s233 + $0x141] sm:$0xff] %vm145, %v228
      %262 = vst.msk [vmem:[%s233 + $0x151] sm:$0xff] %vm145, %v229
      %263 = vst.msk [vmem:[%s233 + $0x159] sm:$0xff] %vm145, %v230
      %264 = vst.msk [vmem:[%s233 + $0x169] sm:$0xff] %vm145, %v231
      %265 = vst.msk [vmem:[%s233 + $0x171] sm:$0xff] %vm145, %v232
      %v266 = vld [vmem:[#allocation2] sm:$0xff]
      %v267 = vld [vmem:[#allocation2 + $0x8] sm:$0xff]
      %v268 = vld [vmem:[#allocation2 + $0x18] sm:$0xff]
      %v269 = vld [vmem:[#allocation2 + $0x20] sm:$0xff]
      %v270 = vld [vmem:[#allocation2 + $0x30] sm:$0xff]
      %v271 = vld [vmem:[#allocation2 + $0x38] sm:$0xff]
      %v272 = vld [vmem:[#allocation2 + $0x48] sm:$0xff]
      %v273 = vld [vmem:[#allocation2 + $0x50] sm:$0xff]
      %v274 = vld [vmem:[#allocation2 + $0x60] sm:$0xff]
      %v275 = vld [vmem:[#allocation2 + $0x68] sm:$0xff]
      %v276 = vld [vmem:[#allocation2 + $0x78] sm:$0xff]
      %v277 = vld [vmem:[#allocation2 + $0x80] sm:$0xff]
      %v278 = vld [vmem:[#allocation2 + $0x90] sm:$0xff]
      %v279 = vld [vmem:[#allocation2 + $0x98] sm:$0xff]
      %v280 = vld [vmem:[#allocation2 + $0xa8] sm:$0xff]
      %v281 = vld [vmem:[#allocation2 + $0xb0] sm:$0xff]
      %v282 = vld [vmem:[#allocation2 + $0xc0] sm:$0xff]
      %v283 = vld [vmem:[#allocation2 + $0xc8] sm:$0xff]
      %v284 = vld [vmem:[#allocation2 + $0xd8] sm:$0xff]
      %v285 = vld [vmem:[#allocation2 + $0xe0] sm:$0xff]
      %v286 = vld [vmem:[#allocation2 + $0xf0] sm:$0xff]
      %v287 = vld [vmem:[#allocation2 + $0xf8] sm:$0xff]
      %v288 = vld [vmem:[#allocation2 + $0x108] sm:$0xff]
      %v289 = vld [vmem:[#allocation2 + $0x110] sm:$0xff]
      %v290 = vld [vmem:[#allocation2 + $0x120] sm:$0xff]
      %v291 = vld [vmem:[#allocation2 + $0x128] sm:$0xff]
      %v292 = vld [vmem:[#allocation2 + $0x138] sm:$0xff]
      %v293 = vld [vmem:[#allocation2 + $0x140] sm:$0xff]
      %v294 = vld [vmem:[#allocation2 + $0x150] sm:$0xff]
      %v295 = vld [vmem:[#allocation2 + $0x158] sm:$0xff]
      %v296 = vld [vmem:[#allocation2 + $0x168] sm:$0xff]
      %v297 = vld [vmem:[#allocation2 + $0x170] sm:$0xff]
      %v298 = vpack.c.bf16 %v267, %v266
      %v299 = vpack.c.bf16 %v269, %v268
      %v300 = vpack.c.bf16 %v271, %v270
      %v301 = vpack.c.bf16 %v273, %v272
      %v302 = vpack.c.bf16 %v275, %v274
      %v303 = vpack.c.bf16 %v277, %v276
      %v304 = vpack.c.bf16 %v279, %v278
      %v305 = vpack.c.bf16 %v281, %v280
      %v306 = vpack.c.bf16 %v283, %v282
      %v307 = vpack.c.bf16 %v285, %v284
      %v308 = vpack.c.bf16 %v287, %v286
      %v309 = vpack.c.bf16 %v289, %v288
      %v310 = vpack.c.bf16 %v291, %v290
      %v311 = vpack.c.bf16 %v293, %v292
      %v312 = vpack.c.bf16 %v295, %v294
      %v313 = vpack.c.bf16 %v297, %v296
      %v314 = vld [vmem:[%s1] sm:$0xf]
      %v315 = vld [vmem:[%s1 + $0x4] sm:$0xf]
      %v316 = vld [vmem:[%s1 + $0x8] sm:$0xf]
      %v317 = vld [vmem:[%s1 + $0xc] sm:$0xf]
      %v318 = vld [vmem:[%s1 + $0x10] sm:$0xf]
      %v319 = vld [vmem:[%s1 + $0x14] sm:$0xf]
      %v320 = vld [vmem:[%s1 + $0x18] sm:$0xf]
      %v321 = vld [vmem:[%s1 + $0x1c] sm:$0xf]
      %v322 = vld [vmem:[#allocation2 + $0x1] sm:$0xff]
      %v323 = vld [vmem:[#allocation2 + $0x9] sm:$0xff]
      %v324 = vld [vmem:[#allocation2 + $0x19] sm:$0xff]
      %v325 = vld [vmem:[#allocation2 + $0x21] sm:$0xff]
      %v326 = vld [vmem:[#allocation2 + $0x31] sm:$0xff]
      %v327 = vld [vmem:[#allocation2 + $0x39] sm:$0xff]
      %v328 = vld [vmem:[#allocation2 + $0x49] sm:$0xff]
      %v329 = vld [vmem:[#allocation2 + $0x51] sm:$0xff]
      %v330 = vld [vmem:[#allocation2 + $0x61] sm:$0xff]
      %v331 = vld [vmem:[#allocation2 + $0x69] sm:$0xff]
      %v332 = vld [vmem:[#allocation2 + $0x79] sm:$0xff]
      %v333 = vld [vmem:[#allocation2 + $0x81] sm:$0xff]
      %v334 = vld [vmem:[#allocation2 + $0x91] sm:$0xff]
      %v335 = vld [vmem:[#allocation2 + $0x99] sm:$0xff]
      %v336 = vld [vmem:[#allocation2 + $0xa9] sm:$0xff]
      %v337 = vld [vmem:[#allocation2 + $0xb1] sm:$0xff]
      %v338 = vld [vmem:[#allocation2 + $0xc1] sm:$0xff]
      %v339 = vld [vmem:[#allocation2 + $0xc9] sm:$0xff]
      %v340 = vld [vmem:[#allocation2 + $0xd9] sm:$0xff]
      %v341 = vld [vmem:[#allocation2 + $0xe1] sm:$0xff]
      %v342 = vld [vmem:[#allocation2 + $0xf1] sm:$0xff]
      %v343 = vld [vmem:[#allocation2 + $0xf9] sm:$0xff]
      %v344 = vld [vmem:[#allocation2 + $0x109] sm:$0xff]
      %v345 = vld [vmem:[#allocation2 + $0x111] sm:$0xff]
      %v346 = vld [vmem:[#allocation2 + $0x121] sm:$0xff]
      %v347 = vld [vmem:[#allocation2 + $0x129] sm:$0xff]
      %v348 = vld [vmem:[#allocation2 + $0x139] sm:$0xff]
      %v349 = vld [vmem:[#allocation2 + $0x141] sm:$0xff]
      %v350 = vld [vmem:[#allocation2 + $0x151] sm:$0xff]
      %v351 = vld [vmem:[#allocation2 + $0x159] sm:$0xff]
      %v352 = vld [vmem:[#allocation2 + $0x169] sm:$0xff]
      %v353 = vld [vmem:[#allocation2 + $0x171] sm:$0xff]
      %v354 = vpack.c.bf16 %v323, %v322
      %v355 = vpack.c.bf16 %v325, %v324
      %v356 = vpack.c.bf16 %v327, %v326
      %v357 = vpack.c.bf16 %v329, %v328
      %v358 = vpack.c.bf16 %v331, %v330
      %v359 = vpack.c.bf16 %v333, %v332
      %v360 = vpack.c.bf16 %v335, %v334
      %v361 = vpack.c.bf16 %v337, %v336
      %v362 = vpack.c.bf16 %v339, %v338
      %v363 = vpack.c.bf16 %v341, %v340
      %v364 = vpack.c.bf16 %v343, %v342
      %v365 = vpack.c.bf16 %v345, %v344
      %v366 = vpack.c.bf16 %v347, %v346
      %v367 = vpack.c.bf16 %v349, %v348
      %v368 = vpack.c.bf16 %v351, %v350
      %v369 = vpack.c.bf16 %v353, %v352
      %s370 = scalar_lea.vmem %s1, 32
      %v371 = vld [vmem:[%s370] sm:$0xf]
      %v372 = vld [vmem:[%s370 + $0x4] sm:$0xf]
      %v373 = vld [vmem:[%s370 + $0x8] sm:$0xf]
      %v374 = vld [vmem:[%s370 + $0xc] sm:$0xf]
      %v375 = vld [vmem:[%s370 + $0x10] sm:$0xf]
      %v376 = vld [vmem:[%s370 + $0x14] sm:$0xf]
      %v377 = vld [vmem:[%s370 + $0x18] sm:$0xf]
      %v378 = vld [vmem:[%s370 + $0x1c] sm:$0xf]
      %v387 = vunpack.c.l.b16 %v371
      %v388 = vunpack.c.l.b16 %v372
      %v389 = vunpack.c.l.b16 %v373
      %v390 = vunpack.c.l.b16 %v374
      %v391 = vunpack.c.l.b16 %v375
      %v392 = vunpack.c.l.b16 %v376
      %v393 = vunpack.c.l.b16 %v377
      %v394 = vunpack.c.l.b16 %v378
      %v395 = vpack.c.b16 %v388, %v387
      %v396 = vpack.c.b16 %v390, %v389
      %v397 = vpack.c.b16 %v392, %v391
      %v398 = vpack.c.b16 %v394, %v393
      %v404 = vsel %vm145, %v354, 0
      %v407 = vsel %vm145, %v355, 0
      %v410 = vsel %vm145, %v356, 0
      %v413 = vsel %vm145, %v357, 0
      %v416 = vsel %vm145, %v358, 0
      %v419 = vsel %vm145, %v359, 0
      %v422 = vsel %vm145, %v360, 0
      %v425 = vsel %vm145, %v361, 0
      %v428 = vsel %vm145, %v362, 0
      %v431 = vsel %vm145, %v363, 0
      %v434 = vsel %vm145, %v364, 0
      %v437 = vsel %vm145, %v365, 0
      %v440 = vsel %vm145, %v366, 0
      %v443 = vsel %vm145, %v367, 0
      %v446 = vsel %vm145, %v368, 0
      %v449 = vsel %vm145, %v369, 0
      %451 = vmatprep.subr.bf16.mxu0 0
      %452 = vmatpush1.bf16.msra.mxu0 0
      %453 = vmatprep.subr.bf16.mxu0 0
      %454 = vmatpush1.bf16.msra.mxu0 0
      %455 = vmatprep.subr.bf16.mxu0 0
      %456 = vmatpush1.bf16.msra.mxu0 0
      %457 = vmatprep.subr.bf16.mxu0 0
      %458 = vmatpush1.bf16.msra.mxu0 0
      %459 = vmatprep.subr.bf16.mxu0 0
      %460 = vmatpush1.bf16.msra.mxu0 %v398
      %461 = vmatprep.subr.bf16.mxu0 0
      %462 = vmatpush1.bf16.msra.mxu0 %v397
      %463 = vmatprep.subr.bf16.mxu0 0
      %464 = vmatpush1.bf16.msra.mxu0 %v396
      %465 = vmatprep.subr.bf16.mxu0 0
      %466 = vmatpush1.bf16.msra.mxu0 %v395
      %467 = vmatprep.subr.bf16.mxu0 0
      %468 = vmatpush2.bf16.msra.mxu0 0
      %469 = vmatprep.subr.bf16.mxu0 0
      %470 = vmatpush2.bf16.msra.mxu0 0
      %471 = vmatprep.subr.bf16.mxu0 0
      %472 = vmatpush2.bf16.msra.mxu0 0
      %473 = vmatprep.subr.bf16.mxu0 0
      %474 = vmatpush2.bf16.msra.mxu0 0
      %475 = vmatprep.subr.bf16.mxu0 0
      %476 = vmatpush2.bf16.msra.mxu0 0
      %477 = vmatprep.subr.bf16.mxu0 0
      %478 = vmatpush2.bf16.msra.mxu0 0
      %479 = vmatprep.subr.bf16.mxu0 0
      %480 = vmatpush2.bf16.msra.mxu0 0
      %481 = vmatprep.subr.bf16.mxu0 0
      %482 = vmatpush2.bf16.msra.mxu0 0
      %483 = vmatprep.mubr.bf16.mxu0 0
      %484 = vmatmul.mubr.bf16.gmra.mxu0 %v404
      %v485 = vpop.f32.mrf.mxu0
      %v486 = vadd.f32 0.0, %v485
      %v487 = vpop.f32.mrf.mxu0
      %v488 = vpop.f32.mrf.mxu0
      %v489 = vadd.f32 0.0, %v488
      %v490 = vpop.f32.mrf.mxu0
      %491 = vmatprep.mubr.bf16.mxu0 0
      %492 = vmatmul.mubr.bf16.gmra.mxu0 %v407
      %v493 = vpop.f32.mrf.mxu0
      %v494 = vadd.f32 0.0, %v493
      %v495 = vpop.f32.mrf.mxu0
      %v496 = vpop.f32.mrf.mxu0
      %v497 = vadd.f32 0.0, %v496
      %v498 = vpop.f32.mrf.mxu0
      %499 = vmatprep.mubr.bf16.mxu0 0
      %500 = vmatmul.mubr.bf16.gmra.mxu0 %v410
      %v501 = vpop.f32.mrf.mxu0
      %v502 = vadd.f32 0.0, %v501
      %v503 = vpop.f32.mrf.mxu0
      %v504 = vpop.f32.mrf.mxu0
      %v505 = vadd.f32 0.0, %v504
      %v506 = vpop.f32.mrf.mxu0
      %507 = vmatprep.mubr.bf16.mxu0 0
      %508 = vmatmul.mubr.bf16.gmra.mxu0 %v413
      %v509 = vpop.f32.mrf.mxu0
      %v510 = vadd.f32 0.0, %v509
      %v511 = vpop.f32.mrf.mxu0
      %v512 = vpop.f32.mrf.mxu0
      %v513 = vadd.f32 0.0, %v512
      %v514 = vpop.f32.mrf.mxu0
      %515 = vmatprep.mubr.bf16.mxu0 0
      %516 = vmatmul.mubr.bf16.gmra.mxu0 %v416
      %v517 = vpop.f32.mrf.mxu0
      %v518 = vadd.f32 0.0, %v517
      %v519 = vpop.f32.mrf.mxu0
      %v520 = vpop.f32.mrf.mxu0
      %v521 = vadd.f32 0.0, %v520
      %v522 = vpop.f32.mrf.mxu0
      %523 = vmatprep.mubr.bf16.mxu0 0
      %524 = vmatmul.mubr.bf16.gmra.mxu0 %v419
      %v525 = vpop.f32.mrf.mxu0
      %v526 = vadd.f32 0.0, %v525
      %v527 = vpop.f32.mrf.mxu0
      %v528 = vpop.f32.mrf.mxu0
      %v529 = vadd.f32 0.0, %v528
      %v530 = vpop.f32.mrf.mxu0
      %531 = vmatprep.mubr.bf16.mxu0 0
      %532 = vmatmul.mubr.bf16.gmra.mxu0 %v422
      %v533 = vpop.f32.mrf.mxu0
      %v534 = vadd.f32 0.0, %v533
      %v535 = vpop.f32.mrf.mxu0
      %v536 = vpop.f32.mrf.mxu0
      %v537 = vadd.f32 0.0, %v536
      %v538 = vpop.f32.mrf.mxu0
      %539 = vmatprep.mubr.bf16.mxu0 0
      %540 = vmatmul.mubr.bf16.gmra.mxu0 %v425
      %v541 = vpop.f32.mrf.mxu0
      %v542 = vadd.f32 0.0, %v541
      %v543 = vpop.f32.mrf.mxu0
      %v544 = vpop.f32.mrf.mxu0
      %v545 = vadd.f32 0.0, %v544
      %v546 = vpop.f32.mrf.mxu0
      %547 = vmatprep.mubr.bf16.mxu0 0
      %548 = vmatmul.mubr.bf16.gmra.mxu0 %v428
      %v549 = vpop.f32.mrf.mxu0
      %v550 = vadd.f32 0.0, %v549
      %v551 = vpop.f32.mrf.mxu0
      %v552 = vpop.f32.mrf.mxu0
      %v553 = vadd.f32 0.0, %v552
      %v554 = vpop.f32.mrf.mxu0
      %555 = vmatprep.mubr.bf16.mxu0 0
      %556 = vmatmul.mubr.bf16.gmra.mxu0 %v431
      %v557 = vpop.f32.mrf.mxu0
      %v558 = vadd.f32 0.0, %v557
      %v559 = vpop.f32.mrf.mxu0
      %v560 = vpop.f32.mrf.mxu0
      %v561 = vadd.f32 0.0, %v560
      %v562 = vpop.f32.mrf.mxu0
      %563 = vmatprep.mubr.bf16.mxu0 0
      %564 = vmatmul.mubr.bf16.gmra.mxu0 %v434
      %v565 = vpop.f32.mrf.mxu0
      %v566 = vadd.f32 0.0, %v565
      %v567 = vpop.f32.mrf.mxu0
      %v568 = vpop.f32.mrf.mxu0
      %v569 = vadd.f32 0.0, %v568
      %v570 = vpop.f32.mrf.mxu0
      %571 = vmatprep.mubr.bf16.mxu0 0
      %572 = vmatmul.mubr.bf16.gmra.mxu0 %v437
      %v573 = vpop.f32.mrf.mxu0
      %v574 = vadd.f32 0.0, %v573
      %v575 = vpop.f32.mrf.mxu0
      %v576 = vpop.f32.mrf.mxu0
      %v577 = vadd.f32 0.0, %v576
      %v578 = vpop.f32.mrf.mxu0
      %579 = vmatprep.mubr.bf16.mxu0 0
      %580 = vmatmul.mubr.bf16.gmra.mxu0 %v440
      %v581 = vpop.f32.mrf.mxu0
      %v582 = vadd.f32 0.0, %v581
      %v583 = vpop.f32.mrf.mxu0
      %v584 = vpop.f32.mrf.mxu0
      %v585 = vadd.f32 0.0, %v584
      %v586 = vpop.f32.mrf.mxu0
      %587 = vmatprep.mubr.bf16.mxu0 0
      %588 = vmatmul.mubr.bf16.gmra.mxu0 %v443
      %v589 = vpop.f32.mrf.mxu0
      %v590 = vadd.f32 0.0, %v589
      %v591 = vpop.f32.mrf.mxu0
      %v592 = vpop.f32.mrf.mxu0
      %v593 = vadd.f32 0.0, %v592
      %v594 = vpop.f32.mrf.mxu0
      %595 = vmatprep.mubr.bf16.mxu0 0
      %596 = vmatmul.mubr.bf16.gmra.mxu0 %v446
      %v597 = vpop.f32.mrf.mxu0
      %v598 = vadd.f32 0.0, %v597
      %v599 = vpop.f32.mrf.mxu0
      %v600 = vpop.f32.mrf.mxu0
      %v601 = vadd.f32 0.0, %v600
      %v602 = vpop.f32.mrf.mxu0
      %603 = vmatprep.mubr.bf16.mxu0 0
      %604 = vmatmul.mubr.bf16.gmra.mxu0 %v449
      %v605 = vpop.f32.mrf.mxu0
      %v606 = vadd.f32 0.0, %v605
      %v607 = vpop.f32.mrf.mxu0
      %v608 = vpop.f32.mrf.mxu0
      %v609 = vadd.f32 0.0, %v608
      %v610 = vpop.f32.mrf.mxu0
      %611 = vdwg.mxu0
      %v620 = vunpack.c.l.b16 %v314
      %v621 = vunpack.c.l.b16 %v315
      %v622 = vunpack.c.l.b16 %v316
      %v623 = vunpack.c.l.b16 %v317
      %v624 = vunpack.c.l.b16 %v318
      %v625 = vunpack.c.l.b16 %v319
      %v626 = vunpack.c.l.b16 %v320
      %v627 = vunpack.c.l.b16 %v321
      %v628 = vpack.c.b16 %v621, %v620
      %v629 = vpack.c.b16 %v623, %v622
      %v630 = vpack.c.b16 %v625, %v624
      %v631 = vpack.c.b16 %v627, %v626
      %v637 = vsel %vm145, %v298, 0
      %v640 = vsel %vm145, %v299, 0
      %v643 = vsel %vm145, %v300, 0
      %v646 = vsel %vm145, %v301, 0
      %v649 = vsel %vm145, %v302, 0
      %v652 = vsel %vm145, %v303, 0
      %v655 = vsel %vm145, %v304, 0
      %v658 = vsel %vm145, %v305, 0
      %v661 = vsel %vm145, %v306, 0
      %v664 = vsel %vm145, %v307, 0
      %v667 = vsel %vm145, %v308, 0
      %v670 = vsel %vm145, %v309, 0
      %v673 = vsel %vm145, %v310, 0
      %v676 = vsel %vm145, %v311, 0
      %v679 = vsel %vm145, %v312, 0
      %v682 = vsel %vm145, %v313, 0
      %684 = vmatprep.subr.bf16.mxu0 0
      %685 = vmatpush1.bf16.msra.mxu0 0
      %686 = vmatprep.subr.bf16.mxu0 0
      %687 = vmatpush1.bf16.msra.mxu0 0
      %688 = vmatprep.subr.bf16.mxu0 0
      %689 = vmatpush1.bf16.msra.mxu0 0
      %690 = vmatprep.subr.bf16.mxu0 0
      %691 = vmatpush1.bf16.msra.mxu0 0
      %692 = vmatprep.subr.bf16.mxu0 0
      %693 = vmatpush1.bf16.msra.mxu0 %v631
      %694 = vmatprep.subr.bf16.mxu0 0
      %695 = vmatpush1.bf16.msra.mxu0 %v630
      %696 = vmatprep.subr.bf16.mxu0 0
      %697 = vmatpush1.bf16.msra.mxu0 %v629
      %698 = vmatprep.subr.bf16.mxu0 0
      %699 = vmatpush1.bf16.msra.mxu0 %v628
      %700 = vmatprep.subr.bf16.mxu0 0
      %701 = vmatpush2.bf16.msra.mxu0 0
      %702 = vmatprep.subr.bf16.mxu0 0
      %703 = vmatpush2.bf16.msra.mxu0 0
      %704 = vmatprep.subr.bf16.mxu0 0
      %705 = vmatpush2.bf16.msra.mxu0 0
      %706 = vmatprep.subr.bf16.mxu0 0
      %707 = vmatpush2.bf16.msra.mxu0 0
      %708 = vmatprep.subr.bf16.mxu0 0
      %709 = vmatpush2.bf16.msra.mxu0 0
      %710 = vmatprep.subr.bf16.mxu0 0
      %711 = vmatpush2.bf16.msra.mxu0 0
      %712 = vmatprep.subr.bf16.mxu0 0
      %713 = vmatpush2.bf16.msra.mxu0 0
      %714 = vmatprep.subr.bf16.mxu0 0
      %715 = vmatpush2.bf16.msra.mxu0 0
      %716 = vmatprep.mubr.bf16.mxu0 0
      %717 = vmatmul.mubr.bf16.gmra.mxu0 %v637
      %v718 = vpop.f32.mrf.mxu0
      %v719 = vadd.f32 %v486, %v718
      %v720 = vpop.f32.mrf.mxu0
      %v721 = vpop.f32.mrf.mxu0
      %v722 = vadd.f32 %v489, %v721
      %v723 = vpop.f32.mrf.mxu0
      %724 = vmatprep.mubr.bf16.mxu0 0
      %725 = vmatmul.mubr.bf16.gmra.mxu0 %v640
      %v726 = vpop.f32.mrf.mxu0
      %v727 = vadd.f32 %v494, %v726
      %v728 = vpop.f32.mrf.mxu0
      %v729 = vpop.f32.mrf.mxu0
      %v730 = vadd.f32 %v497, %v729
      %v731 = vpop.f32.mrf.mxu0
      %732 = vmatprep.mubr.bf16.mxu0 0
      %733 = vmatmul.mubr.bf16.gmra.mxu0 %v643
      %v734 = vpop.f32.mrf.mxu0
      %v735 = vadd.f32 %v502, %v734
      %v736 = vpop.f32.mrf.mxu0
      %v737 = vpop.f32.mrf.mxu0
      %v738 = vadd.f32 %v505, %v737
      %v739 = vpop.f32.mrf.mxu0
      %740 = vmatprep.mubr.bf16.mxu0 0
      %741 = vmatmul.mubr.bf16.gmra.mxu0 %v646
      %v742 = vpop.f32.mrf.mxu0
      %v743 = vadd.f32 %v510, %v742
      %v744 = vpop.f32.mrf.mxu0
      %v745 = vpop.f32.mrf.mxu0
      %v746 = vadd.f32 %v513, %v745
      %v747 = vpop.f32.mrf.mxu0
      %748 = vmatprep.mubr.bf16.mxu0 0
      %749 = vmatmul.mubr.bf16.gmra.mxu0 %v649
      %v750 = vpop.f32.mrf.mxu0
      %v751 = vadd.f32 %v518, %v750
      %v752 = vpop.f32.mrf.mxu0
      %v753 = vpop.f32.mrf.mxu0
      %v754 = vadd.f32 %v521, %v753
      %v755 = vpop.f32.mrf.mxu0
      %756 = vmatprep.mubr.bf16.mxu0 0
      %757 = vmatmul.mubr.bf16.gmra.mxu0 %v652
      %v758 = vpop.f32.mrf.mxu0
      %v759 = vadd.f32 %v526, %v758
      %v760 = vpop.f32.mrf.mxu0
      %v761 = vpop.f32.mrf.mxu0
      %v762 = vadd.f32 %v529, %v761
      %v763 = vpop.f32.mrf.mxu0
      %764 = vmatprep.mubr.bf16.mxu0 0
      %765 = vmatmul.mubr.bf16.gmra.mxu0 %v655
      %v766 = vpop.f32.mrf.mxu0
      %v767 = vadd.f32 %v534, %v766
      %v768 = vpop.f32.mrf.mxu0
      %v769 = vpop.f32.mrf.mxu0
      %v770 = vadd.f32 %v537, %v769
      %v771 = vpop.f32.mrf.mxu0
      %772 = vmatprep.mubr.bf16.mxu0 0
      %773 = vmatmul.mubr.bf16.gmra.mxu0 %v658
      %v774 = vpop.f32.mrf.mxu0
      %v775 = vadd.f32 %v542, %v774
      %v776 = vpop.f32.mrf.mxu0
      %v777 = vpop.f32.mrf.mxu0
      %v778 = vadd.f32 %v545, %v777
      %v779 = vpop.f32.mrf.mxu0
      %780 = vmatprep.mubr.bf16.mxu0 0
      %781 = vmatmul.mubr.bf16.gmra.mxu0 %v661
      %v782 = vpop.f32.mrf.mxu0
      %v783 = vadd.f32 %v550, %v782
      %v784 = vpop.f32.mrf.mxu0
      %v785 = vpop.f32.mrf.mxu0
      %v786 = vadd.f32 %v553, %v785
      %v787 = vpop.f32.mrf.mxu0
      %788 = vmatprep.mubr.bf16.mxu0 0
      %789 = vmatmul.mubr.bf16.gmra.mxu0 %v664
      %v790 = vpop.f32.mrf.mxu0
      %v791 = vadd.f32 %v558, %v790
      %v792 = vpop.f32.mrf.mxu0
      %v793 = vpop.f32.mrf.mxu0
      %v794 = vadd.f32 %v561, %v793
      %v795 = vpop.f32.mrf.mxu0
      %796 = vmatprep.mubr.bf16.mxu0 0
      %797 = vmatmul.mubr.bf16.gmra.mxu0 %v667
      %v798 = vpop.f32.mrf.mxu0
      %v799 = vadd.f32 %v566, %v798
      %v800 = vpop.f32.mrf.mxu0
      %v801 = vpop.f32.mrf.mxu0
      %v802 = vadd.f32 %v569, %v801
      %v803 = vpop.f32.mrf.mxu0
      %804 = vmatprep.mubr.bf16.mxu0 0
      %805 = vmatmul.mubr.bf16.gmra.mxu0 %v670
      %v806 = vpop.f32.mrf.mxu0
      %v807 = vadd.f32 %v574, %v806
      %v808 = vpop.f32.mrf.mxu0
      %v809 = vpop.f32.mrf.mxu0
      %v810 = vadd.f32 %v577, %v809
      %v811 = vpop.f32.mrf.mxu0
      %812 = vmatprep.mubr.bf16.mxu0 0
      %813 = vmatmul.mubr.bf16.gmra.mxu0 %v673
      %v814 = vpop.f32.mrf.mxu0
      %v815 = vadd.f32 %v582, %v814
      %v816 = vpop.f32.mrf.mxu0
      %v817 = vpop.f32.mrf.mxu0
      %v818 = vadd.f32 %v585, %v817
      %v819 = vpop.f32.mrf.mxu0
      %820 = vmatprep.mubr.bf16.mxu0 0
      %821 = vmatmul.mubr.bf16.gmra.mxu0 %v676
      %v822 = vpop.f32.mrf.mxu0
      %v823 = vadd.f32 %v590, %v822
      %v824 = vpop.f32.mrf.mxu0
      %v825 = vpop.f32.mrf.mxu0
      %v826 = vadd.f32 %v593, %v825
      %v827 = vpop.f32.mrf.mxu0
      %828 = vmatprep.mubr.bf16.mxu0 0
      %829 = vmatmul.mubr.bf16.gmra.mxu0 %v679
      %v830 = vpop.f32.mrf.mxu0
      %v831 = vadd.f32 %v598, %v830
      %v832 = vpop.f32.mrf.mxu0
      %v833 = vpop.f32.mrf.mxu0
      %v834 = vadd.f32 %v601, %v833
      %v835 = vpop.f32.mrf.mxu0
      %836 = vmatprep.mubr.bf16.mxu0 0
      %837 = vmatmul.mubr.bf16.gmra.mxu0 %v682
      %v838 = vpop.f32.mrf.mxu0
      %v839 = vadd.f32 %v606, %v838
      %v840 = vpop.f32.mrf.mxu0
      %v841 = vpop.f32.mrf.mxu0
      %v842 = vadd.f32 %v609, %v841
      %v843 = vpop.f32.mrf.mxu0
      %844 = vdwg.mxu0
      %v845 = vld [vmem:[#allocation2 + $0x2] sm:$0xff]
      %v846 = vld [vmem:[#allocation2 + $0xa] sm:$0xff]
      %v847 = vld [vmem:[#allocation2 + $0x1a] sm:$0xff]
      %v848 = vld [vmem:[#allocation2 + $0x22] sm:$0xff]
      %v849 = vld [vmem:[#allocation2 + $0x32] sm:$0xff]
      %v850 = vld [vmem:[#allocation2 + $0x3a] sm:$0xff]
      %v851 = vld [vmem:[#allocation2 + $0x4a] sm:$0xff]
      %v852 = vld [vmem:[#allocation2 + $0x52] sm:$0xff]
      %v853 = vld [vmem:[#allocation2 + $0x62] sm:$0xff]
      %v854 = vld [vmem:[#allocation2 + $0x6a] sm:$0xff]
      %v855 = vld [vmem:[#allocation2 + $0x7a] sm:$0xff]
      %v856 = vld [vmem:[#allocation2 + $0x82] sm:$0xff]
      %v857 = vld [vmem:[#allocation2 + $0x92] sm:$0xff]
      %v858 = vld [vmem:[#allocation2 + $0x9a] sm:$0xff]
      %v859 = vld [vmem:[#allocation2 + $0xaa] sm:$0xff]
      %v860 = vld [vmem:[#allocation2 + $0xb2] sm:$0xff]
      %v861 = vld [vmem:[#allocation2 + $0xc2] sm:$0xff]
      %v862 = vld [vmem:[#allocation2 + $0xca] sm:$0xff]
      %v863 = vld [vmem:[#allocation2 + $0xda] sm:$0xff]
      %v864 = vld [vmem:[#allocation2 + $0xe2] sm:$0xff]
      %v865 = vld [vmem:[#allocation2 + $0xf2] sm:$0xff]
      %v866 = vld [vmem:[#allocation2 + $0xfa] sm:$0xff]
      %v867 = vld [vmem:[#allocation2 + $0x10a] sm:$0xff]
      %v868 = vld [vmem:[#allocation2 + $0x112] sm:$0xff]
      %v869 = vld [vmem:[#allocation2 + $0x122] sm:$0xff]
      %v870 = vld [vmem:[#allocation2 + $0x12a] sm:$0xff]
      %v871 = vld [vmem:[#allocation2 + $0x13a] sm:$0xff]
      %v872 = vld [vmem:[#allocation2 + $0x142] sm:$0xff]
      %v873 = vld [vmem:[#allocation2 + $0x152] sm:$0xff]
      %v874 = vld [vmem:[#allocation2 + $0x15a] sm:$0xff]
      %v875 = vld [vmem:[#allocation2 + $0x16a] sm:$0xff]
      %v876 = vld [vmem:[#allocation2 + $0x172] sm:$0xff]
      %v877 = vpack.c.bf16 %v846, %v845
      %v878 = vpack.c.bf16 %v848, %v847
      %v879 = vpack.c.bf16 %v850, %v849
      %v880 = vpack.c.bf16 %v852, %v851
      %v881 = vpack.c.bf16 %v854, %v853
      %v882 = vpack.c.bf16 %v856, %v855
      %v883 = vpack.c.bf16 %v858, %v857
      %v884 = vpack.c.bf16 %v860, %v859
      %v885 = vpack.c.bf16 %v862, %v861
      %v886 = vpack.c.bf16 %v864, %v863
      %v887 = vpack.c.bf16 %v866, %v865
      %v888 = vpack.c.bf16 %v868, %v867
      %v889 = vpack.c.bf16 %v870, %v869
      %v890 = vpack.c.bf16 %v872, %v871
      %v891 = vpack.c.bf16 %v874, %v873
      %v892 = vpack.c.bf16 %v876, %v875
      %s893 = scalar_lea.vmem %s1, 64
      %v894 = vld [vmem:[%s893] sm:$0xf]
      %v895 = vld [vmem:[%s893 + $0x4] sm:$0xf]
      %v896 = vld [vmem:[%s893 + $0x8] sm:$0xf]
      %v897 = vld [vmem:[%s893 + $0xc] sm:$0xf]
      %v898 = vld [vmem:[%s893 + $0x10] sm:$0xf]
      %v899 = vld [vmem:[%s893 + $0x14] sm:$0xf]
      %v900 = vld [vmem:[%s893 + $0x18] sm:$0xf]
      %v901 = vld [vmem:[%s893 + $0x1c] sm:$0xf]
      %v910 = vunpack.c.l.b16 %v894
      %v911 = vunpack.c.l.b16 %v895
      %v912 = vunpack.c.l.b16 %v896
      %v913 = vunpack.c.l.b16 %v897
      %v914 = vunpack.c.l.b16 %v898
      %v915 = vunpack.c.l.b16 %v899
      %v916 = vunpack.c.l.b16 %v900
      %v917 = vunpack.c.l.b16 %v901
      %v918 = vpack.c.b16 %v911, %v910
      %v919 = vpack.c.b16 %v913, %v912
      %v920 = vpack.c.b16 %v915, %v914
      %v921 = vpack.c.b16 %v917, %v916
      %v927 = vsel %vm145, %v877, 0
      %v930 = vsel %vm145, %v878, 0
      %v933 = vsel %vm145, %v879, 0
      %v936 = vsel %vm145, %v880, 0
      %v939 = vsel %vm145, %v881, 0
      %v942 = vsel %vm145, %v882, 0
      %v945 = vsel %vm145, %v883, 0
      %v948 = vsel %vm145, %v884, 0
      %v951 = vsel %vm145, %v885, 0
      %v954 = vsel %vm145, %v886, 0
      %v957 = vsel %vm145, %v887, 0
      %v960 = vsel %vm145, %v888, 0
      %v963 = vsel %vm145, %v889, 0
      %v966 = vsel %vm145, %v890, 0
      %v969 = vsel %vm145, %v891, 0
      %v972 = vsel %vm145, %v892, 0
      %974 = vmatprep.subr.bf16.mxu0 0
      %975 = vmatpush1.bf16.msra.mxu0 0
      %976 = vmatprep.subr.bf16.mxu0 0
      %977 = vmatpush1.bf16.msra.mxu0 0
      %978 = vmatprep.subr.bf16.mxu0 0
      %979 = vmatpush1.bf16.msra.mxu0 0
      %980 = vmatprep.subr.bf16.mxu0 0
      %981 = vmatpush1.bf16.msra.mxu0 0
      %982 = vmatprep.subr.bf16.mxu0 0
      %983 = vmatpush1.bf16.msra.mxu0 %v921
      %984 = vmatprep.subr.bf16.mxu0 0
      %985 = vmatpush1.bf16.msra.mxu0 %v920
      %986 = vmatprep.subr.bf16.mxu0 0
      %987 = vmatpush1.bf16.msra.mxu0 %v919
      %988 = vmatprep.subr.bf16.mxu0 0
      %989 = vmatpush1.bf16.msra.mxu0 %v918
      %990 = vmatprep.subr.bf16.mxu0 0
      %991 = vmatpush2.bf16.msra.mxu0 0
      %992 = vmatprep.subr.bf16.mxu0 0
      %993 = vmatpush2.bf16.msra.mxu0 0
      %994 = vmatprep.subr.bf16.mxu0 0
      %995 = vmatpush2.bf16.msra.mxu0 0
      %996 = vmatprep.subr.bf16.mxu0 0
      %997 = vmatpush2.bf16.msra.mxu0 0
      %998 = vmatprep.subr.bf16.mxu0 0
      %999 = vmatpush2.bf16.msra.mxu0 0
      %1000 = vmatprep.subr.bf16.mxu0 0
      %1001 = vmatpush2.bf16.msra.mxu0 0
      %1002 = vmatprep.subr.bf16.mxu0 0
      %1003 = vmatpush2.bf16.msra.mxu0 0
      %1004 = vmatprep.subr.bf16.mxu0 0
      %1005 = vmatpush2.bf16.msra.mxu0 0
      %1006 = vmatprep.mubr.bf16.mxu0 0
      %1007 = vmatmul.mubr.bf16.gmra.mxu0 %v927
      %v1008 = vpop.f32.mrf.mxu0
      %v1009 = vadd.f32 0.0, %v1008
      %v1010 = vpop.f32.mrf.mxu0
      %v1011 = vpop.f32.mrf.mxu0
      %v1012 = vadd.f32 0.0, %v1011
      %v1013 = vpop.f32.mrf.mxu0
      %1014 = vmatprep.mubr.bf16.mxu0 0
      %1015 = vmatmul.mubr.bf16.gmra.mxu0 %v930
      %v1016 = vpop.f32.mrf.mxu0
      %v1017 = vadd.f32 0.0, %v1016
      %v1018 = vpop.f32.mrf.mxu0
      %v1019 = vpop.f32.mrf.mxu0
      %v1020 = vadd.f32 0.0, %v1019
      %v1021 = vpop.f32.mrf.mxu0
      %1022 = vmatprep.mubr.bf16.mxu0 0
      %1023 = vmatmul.mubr.bf16.gmra.mxu0 %v933
      %v1024 = vpop.f32.mrf.mxu0
      %v1025 = vadd.f32 0.0, %v1024
      %v1026 = vpop.f32.mrf.mxu0
      %v1027 = vpop.f32.mrf.mxu0
      %v1028 = vadd.f32 0.0, %v1027
      %v1029 = vpop.f32.mrf.mxu0
      %1030 = vmatprep.mubr.bf16.mxu0 0
      %1031 = vmatmul.mubr.bf16.gmra.mxu0 %v936
      %v1032 = vpop.f32.mrf.mxu0
      %v1033 = vadd.f32 0.0, %v1032
      %v1034 = vpop.f32.mrf.mxu0
      %v1035 = vpop.f32.mrf.mxu0
      %v1036 = vadd.f32 0.0, %v1035
      %v1037 = vpop.f32.mrf.mxu0
      %1038 = vmatprep.mubr.bf16.mxu0 0
      %1039 = vmatmul.mubr.bf16.gmra.mxu0 %v939
      %v1040 = vpop.f32.mrf.mxu0
      %v1041 = vadd.f32 0.0, %v1040
      %v1042 = vpop.f32.mrf.mxu0
      %v1043 = vpop.f32.mrf.mxu0
      %v1044 = vadd.f32 0.0, %v1043
      %v1045 = vpop.f32.mrf.mxu0
      %1046 = vmatprep.mubr.bf16.mxu0 0
      %1047 = vmatmul.mubr.bf16.gmra.mxu0 %v942
      %v1048 = vpop.f32.mrf.mxu0
      %v1049 = vadd.f32 0.0, %v1048
      %v1050 = vpop.f32.mrf.mxu0
      %v1051 = vpop.f32.mrf.mxu0
      %v1052 = vadd.f32 0.0, %v1051
      %v1053 = vpop.f32.mrf.mxu0
      %1054 = vmatprep.mubr.bf16.mxu0 0
      %1055 = vmatmul.mubr.bf16.gmra.mxu0 %v945
      %v1056 = vpop.f32.mrf.mxu0
      %v1057 = vadd.f32 0.0, %v1056
      %v1058 = vpop.f32.mrf.mxu0
      %v1059 = vpop.f32.mrf.mxu0
      %v1060 = vadd.f32 0.0, %v1059
      %v1061 = vpop.f32.mrf.mxu0
      %1062 = vmatprep.mubr.bf16.mxu0 0
      %1063 = vmatmul.mubr.bf16.gmra.mxu0 %v948
      %v1064 = vpop.f32.mrf.mxu0
      %v1065 = vadd.f32 0.0, %v1064
      %v1066 = vpop.f32.mrf.mxu0
      %v1067 = vpop.f32.mrf.mxu0
      %v1068 = vadd.f32 0.0, %v1067
      %v1069 = vpop.f32.mrf.mxu0
      %1070 = vmatprep.mubr.bf16.mxu0 0
      %1071 = vmatmul.mubr.bf16.gmra.mxu0 %v951
      %v1072 = vpop.f32.mrf.mxu0
      %v1073 = vadd.f32 0.0, %v1072
      %v1074 = vpop.f32.mrf.mxu0
      %v1075 = vpop.f32.mrf.mxu0
      %v1076 = vadd.f32 0.0, %v1075
      %v1077 = vpop.f32.mrf.mxu0
      %1078 = vmatprep.mubr.bf16.mxu0 0
      %1079 = vmatmul.mubr.bf16.gmra.mxu0 %v954
      %v1080 = vpop.f32.mrf.mxu0
      %v1081 = vadd.f32 0.0, %v1080
      %v1082 = vpop.f32.mrf.mxu0
      %v1083 = vpop.f32.mrf.mxu0
      %v1084 = vadd.f32 0.0, %v1083
      %v1085 = vpop.f32.mrf.mxu0
      %1086 = vmatprep.mubr.bf16.mxu0 0
      %1087 = vmatmul.mubr.bf16.gmra.mxu0 %v957
      %v1088 = vpop.f32.mrf.mxu0
      %v1089 = vadd.f32 0.0, %v1088
      %v1090 = vpop.f32.mrf.mxu0
      %v1091 = vpop.f32.mrf.mxu0
      %v1092 = vadd.f32 0.0, %v1091
      %v1093 = vpop.f32.mrf.mxu0
      %1094 = vmatprep.mubr.bf16.mxu0 0
      %1095 = vmatmul.mubr.bf16.gmra.mxu0 %v960
      %v1096 = vpop.f32.mrf.mxu0
      %v1097 = vadd.f32 0.0, %v1096
      %v1098 = vpop.f32.mrf.mxu0
      %v1099 = vpop.f32.mrf.mxu0
      %v1100 = vadd.f32 0.0, %v1099
      %v1101 = vpop.f32.mrf.mxu0
      %1102 = vmatprep.mubr.bf16.mxu0 0
      %1103 = vmatmul.mubr.bf16.gmra.mxu0 %v963
      %v1104 = vpop.f32.mrf.mxu0
      %v1105 = vadd.f32 0.0, %v1104
      %v1106 = vpop.f32.mrf.mxu0
      %v1107 = vpop.f32.mrf.mxu0
      %v1108 = vadd.f32 0.0, %v1107
      %v1109 = vpop.f32.mrf.mxu0
      %1110 = vmatprep.mubr.bf16.mxu0 0
      %1111 = vmatmul.mubr.bf16.gmra.mxu0 %v966
      %v1112 = vpop.f32.mrf.mxu0
      %v1113 = vadd.f32 0.0, %v1112
      %v1114 = vpop.f32.mrf.mxu0
      %v1115 = vpop.f32.mrf.mxu0
      %v1116 = vadd.f32 0.0, %v1115
      %v1117 = vpop.f32.mrf.mxu0
      %1118 = vmatprep.mubr.bf16.mxu0 0
      %1119 = vmatmul.mubr.bf16.gmra.mxu0 %v969
      %v1120 = vpop.f32.mrf.mxu0
      %v1121 = vadd.f32 0.0, %v1120
      %v1122 = vpop.f32.mrf.mxu0
      %v1123 = vpop.f32.mrf.mxu0
      %v1124 = vadd.f32 0.0, %v1123
      %v1125 = vpop.f32.mrf.mxu0
      %1126 = vmatprep.mubr.bf16.mxu0 0
      %1127 = vmatmul.mubr.bf16.gmra.mxu0 %v972
      %v1128 = vpop.f32.mrf.mxu0
      %v1129 = vadd.f32 0.0, %v1128
      %v1130 = vpop.f32.mrf.mxu0
      %v1131 = vpop.f32.mrf.mxu0
      %v1132 = vadd.f32 0.0, %v1131
      %v1133 = vpop.f32.mrf.mxu0
      %1134 = vdwg.mxu0
      %v1135 = vadd.f32 %v719, %v1009
      %v1136 = vadd.f32 %v722, %v1012
      %v1137 = vadd.f32 %v727, %v1017
      %v1138 = vadd.f32 %v730, %v1020
      %v1139 = vadd.f32 %v735, %v1025
      %v1140 = vadd.f32 %v738, %v1028
      %v1141 = vadd.f32 %v743, %v1033
      %v1142 = vadd.f32 %v746, %v1036
      %v1143 = vadd.f32 %v751, %v1041
      %v1144 = vadd.f32 %v754, %v1044
      %v1145 = vadd.f32 %v759, %v1049
      %v1146 = vadd.f32 %v762, %v1052
      %v1147 = vadd.f32 %v767, %v1057
      %v1148 = vadd.f32 %v770, %v1060
      %v1149 = vadd.f32 %v775, %v1065
      %v1150 = vadd.f32 %v778, %v1068
      %v1151 = vadd.f32 %v783, %v1073
      %v1152 = vadd.f32 %v786, %v1076
      %v1153 = vadd.f32 %v791, %v1081
      %v1154 = vadd.f32 %v794, %v1084
      %v1155 = vadd.f32 %v799, %v1089
      %v1156 = vadd.f32 %v802, %v1092
      %v1157 = vadd.f32 %v807, %v1097
      %v1158 = vadd.f32 %v810, %v1100
      %v1159 = vadd.f32 %v815, %v1105
      %v1160 = vadd.f32 %v818, %v1108
      %v1161 = vadd.f32 %v823, %v1113
      %v1162 = vadd.f32 %v826, %v1116
      %v1163 = vadd.f32 %v831, %v1121
      %v1164 = vadd.f32 %v834, %v1124
      %v1165 = vadd.f32 %v839, %v1129
      %v1166 = vadd.f32 %v842, %v1132
      %v1167 = vld [vmem:[%s233] sm:$0xff]
      %v1168 = vld [vmem:[%s233 + $0x8] sm:$0xff]
      %v1169 = vld [vmem:[%s233 + $0x18] sm:$0xff]
      %v1170 = vld [vmem:[%s233 + $0x20] sm:$0xff]
      %v1171 = vld [vmem:[%s233 + $0x30] sm:$0xff]
      %v1172 = vld [vmem:[%s233 + $0x38] sm:$0xff]
      %v1173 = vld [vmem:[%s233 + $0x48] sm:$0xff]
      %v1174 = vld [vmem:[%s233 + $0x50] sm:$0xff]
      %v1175 = vld [vmem:[%s233 + $0x60] sm:$0xff]
      %v1176 = vld [vmem:[%s233 + $0x68] sm:$0xff]
      %v1177 = vld [vmem:[%s233 + $0x78] sm:$0xff]
      %v1178 = vld [vmem:[%s233 + $0x80] sm:$0xff]
      %v1179 = vld [vmem:[%s233 + $0x90] sm:$0xff]
      %v1180 = vld [vmem:[%s233 + $0x98] sm:$0xff]
      %v1181 = vld [vmem:[%s233 + $0xa8] sm:$0xff]
      %v1182 = vld [vmem:[%s233 + $0xb0] sm:$0xff]
      %v1183 = vld [vmem:[%s233 + $0xc0] sm:$0xff]
      %v1184 = vld [vmem:[%s233 + $0xc8] sm:$0xff]
      %v1185 = vld [vmem:[%s233 + $0xd8] sm:$0xff]
      %v1186 = vld [vmem:[%s233 + $0xe0] sm:$0xff]
      %v1187 = vld [vmem:[%s233 + $0xf0] sm:$0xff]
      %v1188 = vld [vmem:[%s233 + $0xf8] sm:$0xff]
      %v1189 = vld [vmem:[%s233 + $0x108] sm:$0xff]
      %v1190 = vld [vmem:[%s233 + $0x110] sm:$0xff]
      %v1191 = vld [vmem:[%s233 + $0x120] sm:$0xff]
      %v1192 = vld [vmem:[%s233 + $0x128] sm:$0xff]
      %v1193 = vld [vmem:[%s233 + $0x138] sm:$0xff]
      %v1194 = vld [vmem:[%s233 + $0x140] sm:$0xff]
      %v1195 = vld [vmem:[%s233 + $0x150] sm:$0xff]
      %v1196 = vld [vmem:[%s233 + $0x158] sm:$0xff]
      %v1197 = vld [vmem:[%s233 + $0x168] sm:$0xff]
      %v1198 = vld [vmem:[%s233 + $0x170] sm:$0xff]
      %v1199 = vpack.c.bf16 %v1168, %v1167
      %v1200 = vpack.c.bf16 %v1170, %v1169
      %v1201 = vpack.c.bf16 %v1172, %v1171
      %v1202 = vpack.c.bf16 %v1174, %v1173
      %v1203 = vpack.c.bf16 %v1176, %v1175
      %v1204 = vpack.c.bf16 %v1178, %v1177
      %v1205 = vpack.c.bf16 %v1180, %v1179
      %v1206 = vpack.c.bf16 %v1182, %v1181
      %v1207 = vpack.c.bf16 %v1184, %v1183
      %v1208 = vpack.c.bf16 %v1186, %v1185
      %v1209 = vpack.c.bf16 %v1188, %v1187
      %v1210 = vpack.c.bf16 %v1190, %v1189
      %v1211 = vpack.c.bf16 %v1192, %v1191
      %v1212 = vpack.c.bf16 %v1194, %v1193
      %v1213 = vpack.c.bf16 %v1196, %v1195
      %v1214 = vpack.c.bf16 %v1198, %v1197
      %s1215 = scalar_lea.vmem %s1, 96
      %v1216 = vld [vmem:[%s1215] sm:$0xf]
      %v1217 = vld [vmem:[%s1215 + $0x4] sm:$0xf]
      %v1218 = vld [vmem:[%s1215 + $0x8] sm:$0xf]
      %v1219 = vld [vmem:[%s1215 + $0xc] sm:$0xf]
      %v1220 = vld [vmem:[%s1215 + $0x10] sm:$0xf]
      %v1221 = vld [vmem:[%s1215 + $0x14] sm:$0xf]
      %v1222 = vld [vmem:[%s1215 + $0x18] sm:$0xf]
      %v1223 = vld [vmem:[%s1215 + $0x1c] sm:$0xf]
      %v1232 = vunpack.c.l.b16 %v1216
      %v1233 = vunpack.c.l.b16 %v1217
      %v1234 = vunpack.c.l.b16 %v1218
      %v1235 = vunpack.c.l.b16 %v1219
      %v1236 = vunpack.c.l.b16 %v1220
      %v1237 = vunpack.c.l.b16 %v1221
      %v1238 = vunpack.c.l.b16 %v1222
      %v1239 = vunpack.c.l.b16 %v1223
      %v1240 = vpack.c.b16 %v1233, %v1232
      %v1241 = vpack.c.b16 %v1235, %v1234
      %v1242 = vpack.c.b16 %v1237, %v1236
      %v1243 = vpack.c.b16 %v1239, %v1238
      %v1249 = vsel %vm145, %v1199, 0
      %v1252 = vsel %vm145, %v1200, 0
      %v1255 = vsel %vm145, %v1201, 0
      %v1258 = vsel %vm145, %v1202, 0
      %v1261 = vsel %vm145, %v1203, 0
      %v1264 = vsel %vm145, %v1204, 0
      %v1267 = vsel %vm145, %v1205, 0
      %v1270 = vsel %vm145, %v1206, 0
      %v1273 = vsel %vm145, %v1207, 0
      %v1276 = vsel %vm145, %v1208, 0
      %v1279 = vsel %vm145, %v1209, 0
      %v1282 = vsel %vm145, %v1210, 0
      %v1285 = vsel %vm145, %v1211, 0
      %v1288 = vsel %vm145, %v1212, 0
      %v1291 = vsel %vm145, %v1213, 0
      %v1294 = vsel %vm145, %v1214, 0
      %1296 = vmatprep.subr.bf16.mxu0 0
      %1297 = vmatpush1.bf16.msra.mxu0 0
      %1298 = vmatprep.subr.bf16.mxu0 0
      %1299 = vmatpush1.bf16.msra.mxu0 0
      %1300 = vmatprep.subr.bf16.mxu0 0
      %1301 = vmatpush1.bf16.msra.mxu0 0
      %1302 = vmatprep.subr.bf16.mxu0 0
      %1303 = vmatpush1.bf16.msra.mxu0 0
      %1304 = vmatprep.subr.bf16.mxu0 0
      %1305 = vmatpush1.bf16.msra.mxu0 %v1243
      %1306 = vmatprep.subr.bf16.mxu0 0
      %1307 = vmatpush1.bf16.msra.mxu0 %v1242
      %1308 = vmatprep.subr.bf16.mxu0 0
      %1309 = vmatpush1.bf16.msra.mxu0 %v1241
      %1310 = vmatprep.subr.bf16.mxu0 0
      %1311 = vmatpush1.bf16.msra.mxu0 %v1240
      %1312 = vmatprep.subr.bf16.mxu0 0
      %1313 = vmatpush2.bf16.msra.mxu0 0
      %1314 = vmatprep.subr.bf16.mxu0 0
      %1315 = vmatpush2.bf16.msra.mxu0 0
      %1316 = vmatprep.subr.bf16.mxu0 0
      %1317 = vmatpush2.bf16.msra.mxu0 0
      %1318 = vmatprep.subr.bf16.mxu0 0
      %1319 = vmatpush2.bf16.msra.mxu0 0
      %1320 = vmatprep.subr.bf16.mxu0 0
      %1321 = vmatpush2.bf16.msra.mxu0 0
      %1322 = vmatprep.subr.bf16.mxu0 0
      %1323 = vmatpush2.bf16.msra.mxu0 0
      %1324 = vmatprep.subr.bf16.mxu0 0
      %1325 = vmatpush2.bf16.msra.mxu0 0
      %1326 = vmatprep.subr.bf16.mxu0 0
      %1327 = vmatpush2.bf16.msra.mxu0 0
      %1328 = vmatprep.mubr.bf16.mxu0 0
      %1329 = vmatmul.mubr.bf16.gmra.mxu0 %v1249
      %v1330 = vpop.f32.mrf.mxu0
      %v1331 = vadd.f32 0.0, %v1330
      %v1332 = vpop.f32.mrf.mxu0
      %v1333 = vpop.f32.mrf.mxu0
      %v1334 = vadd.f32 0.0, %v1333
      %v1335 = vpop.f32.mrf.mxu0
      %1336 = vmatprep.mubr.bf16.mxu0 0
      %1337 = vmatmul.mubr.bf16.gmra.mxu0 %v1252
      %v1338 = vpop.f32.mrf.mxu0
      %v1339 = vadd.f32 0.0, %v1338
      %v1340 = vpop.f32.mrf.mxu0
      %v1341 = vpop.f32.mrf.mxu0
      %v1342 = vadd.f32 0.0, %v1341
      %v1343 = vpop.f32.mrf.mxu0
      %1344 = vmatprep.mubr.bf16.mxu0 0
      %1345 = vmatmul.mubr.bf16.gmra.mxu0 %v1255
      %v1346 = vpop.f32.mrf.mxu0
      %v1347 = vadd.f32 0.0, %v1346
      %v1348 = vpop.f32.mrf.mxu0
      %v1349 = vpop.f32.mrf.mxu0
      %v1350 = vadd.f32 0.0, %v1349
      %v1351 = vpop.f32.mrf.mxu0
      %1352 = vmatprep.mubr.bf16.mxu0 0
      %1353 = vmatmul.mubr.bf16.gmra.mxu0 %v1258
      %v1354 = vpop.f32.mrf.mxu0
      %v1355 = vadd.f32 0.0, %v1354
      %v1356 = vpop.f32.mrf.mxu0
      %v1357 = vpop.f32.mrf.mxu0
      %v1358 = vadd.f32 0.0, %v1357
      %v1359 = vpop.f32.mrf.mxu0
      %1360 = vmatprep.mubr.bf16.mxu0 0
      %1361 = vmatmul.mubr.bf16.gmra.mxu0 %v1261
      %v1362 = vpop.f32.mrf.mxu0
      %v1363 = vadd.f32 0.0, %v1362
      %v1364 = vpop.f32.mrf.mxu0
      %v1365 = vpop.f32.mrf.mxu0
      %v1366 = vadd.f32 0.0, %v1365
      %v1367 = vpop.f32.mrf.mxu0
      %1368 = vmatprep.mubr.bf16.mxu0 0
      %1369 = vmatmul.mubr.bf16.gmra.mxu0 %v1264
      %v1370 = vpop.f32.mrf.mxu0
      %v1371 = vadd.f32 0.0, %v1370
      %v1372 = vpop.f32.mrf.mxu0
      %v1373 = vpop.f32.mrf.mxu0
      %v1374 = vadd.f32 0.0, %v1373
      %v1375 = vpop.f32.mrf.mxu0
      %1376 = vmatprep.mubr.bf16.mxu0 0
      %1377 = vmatmul.mubr.bf16.gmra.mxu0 %v1267
      %v1378 = vpop.f32.mrf.mxu0
      %v1379 = vadd.f32 0.0, %v1378
      %v1380 = vpop.f32.mrf.mxu0
      %v1381 = vpop.f32.mrf.mxu0
      %v1382 = vadd.f32 0.0, %v1381
      %v1383 = vpop.f32.mrf.mxu0
      %1384 = vmatprep.mubr.bf16.mxu0 0
      %1385 = vmatmul.mubr.bf16.gmra.mxu0 %v1270
      %v1386 = vpop.f32.mrf.mxu0
      %v1387 = vadd.f32 0.0, %v1386
      %v1388 = vpop.f32.mrf.mxu0
      %v1389 = vpop.f32.mrf.mxu0
      %v1390 = vadd.f32 0.0, %v1389
      %v1391 = vpop.f32.mrf.mxu0
      %1392 = vmatprep.mubr.bf16.mxu0 0
      %1393 = vmatmul.mubr.bf16.gmra.mxu0 %v1273
      %v1394 = vpop.f32.mrf.mxu0
      %v1395 = vadd.f32 0.0, %v1394
      %v1396 = vpop.f32.mrf.mxu0
      %v1397 = vpop.f32.mrf.mxu0
      %v1398 = vadd.f32 0.0, %v1397
      %v1399 = vpop.f32.mrf.mxu0
      %1400 = vmatprep.mubr.bf16.mxu0 0
      %1401 = vmatmul.mubr.bf16.gmra.mxu0 %v1276
      %v1402 = vpop.f32.mrf.mxu0
      %v1403 = vadd.f32 0.0, %v1402
      %v1404 = vpop.f32.mrf.mxu0
      %v1405 = vpop.f32.mrf.mxu0
      %v1406 = vadd.f32 0.0, %v1405
      %v1407 = vpop.f32.mrf.mxu0
      %1408 = vmatprep.mubr.bf16.mxu0 0
      %1409 = vmatmul.mubr.bf16.gmra.mxu0 %v1279
      %v1410 = vpop.f32.mrf.mxu0
      %v1411 = vadd.f32 0.0, %v1410
      %v1412 = vpop.f32.mrf.mxu0
      %v1413 = vpop.f32.mrf.mxu0
      %v1414 = vadd.f32 0.0, %v1413
      %v1415 = vpop.f32.mrf.mxu0
      %1416 = vmatprep.mubr.bf16.mxu0 0
      %1417 = vmatmul.mubr.bf16.gmra.mxu0 %v1282
      %v1418 = vpop.f32.mrf.mxu0
      %v1419 = vadd.f32 0.0, %v1418
      %v1420 = vpop.f32.mrf.mxu0
      %v1421 = vpop.f32.mrf.mxu0
      %v1422 = vadd.f32 0.0, %v1421
      %v1423 = vpop.f32.mrf.mxu0
      %1424 = vmatprep.mubr.bf16.mxu0 0
      %1425 = vmatmul.mubr.bf16.gmra.mxu0 %v1285
      %v1426 = vpop.f32.mrf.mxu0
      %v1427 = vadd.f32 0.0, %v1426
      %v1428 = vpop.f32.mrf.mxu0
      %v1429 = vpop.f32.mrf.mxu0
      %v1430 = vadd.f32 0.0, %v1429
      %v1431 = vpop.f32.mrf.mxu0
      %1432 = vmatprep.mubr.bf16.mxu0 0
      %1433 = vmatmul.mubr.bf16.gmra.mxu0 %v1288
      %v1434 = vpop.f32.mrf.mxu0
      %v1435 = vadd.f32 0.0, %v1434
      %v1436 = vpop.f32.mrf.mxu0
      %v1437 = vpop.f32.mrf.mxu0
      %v1438 = vadd.f32 0.0, %v1437
      %v1439 = vpop.f32.mrf.mxu0
      %1440 = vmatprep.mubr.bf16.mxu0 0
      %1441 = vmatmul.mubr.bf16.gmra.mxu0 %v1291
      %v1442 = vpop.f32.mrf.mxu0
      %v1443 = vadd.f32 0.0, %v1442
      %v1444 = vpop.f32.mrf.mxu0
      %v1445 = vpop.f32.mrf.mxu0
      %v1446 = vadd.f32 0.0, %v1445
      %v1447 = vpop.f32.mrf.mxu0
      %1448 = vmatprep.mubr.bf16.mxu0 0
      %1449 = vmatmul.mubr.bf16.gmra.mxu0 %v1294
      %v1450 = vpop.f32.mrf.mxu0
      %v1451 = vadd.f32 0.0, %v1450
      %v1452 = vpop.f32.mrf.mxu0
      %v1453 = vpop.f32.mrf.mxu0
      %v1454 = vadd.f32 0.0, %v1453
      %v1455 = vpop.f32.mrf.mxu0
      %1456 = vdwg.mxu0
      %v1457 = vadd.f32 %v1135, %v1331
      %v1458 = vadd.f32 %v1136, %v1334
      %v1459 = vadd.f32 %v1137, %v1339
      %v1460 = vadd.f32 %v1138, %v1342
      %v1461 = vadd.f32 %v1139, %v1347
      %v1462 = vadd.f32 %v1140, %v1350
      %v1463 = vadd.f32 %v1141, %v1355
      %v1464 = vadd.f32 %v1142, %v1358
      %v1465 = vadd.f32 %v1143, %v1363
      %v1466 = vadd.f32 %v1144, %v1366
      %v1467 = vadd.f32 %v1145, %v1371
      %v1468 = vadd.f32 %v1146, %v1374
      %v1469 = vadd.f32 %v1147, %v1379
      %v1470 = vadd.f32 %v1148, %v1382
      %v1471 = vadd.f32 %v1149, %v1387
      %v1472 = vadd.f32 %v1150, %v1390
      %v1473 = vadd.f32 %v1151, %v1395
      %v1474 = vadd.f32 %v1152, %v1398
      %v1475 = vadd.f32 %v1153, %v1403
      %v1476 = vadd.f32 %v1154, %v1406
      %v1477 = vadd.f32 %v1155, %v1411
      %v1478 = vadd.f32 %v1156, %v1414
      %v1479 = vadd.f32 %v1157, %v1419
      %v1480 = vadd.f32 %v1158, %v1422
      %v1481 = vadd.f32 %v1159, %v1427
      %v1482 = vadd.f32 %v1160, %v1430
      %v1483 = vadd.f32 %v1161, %v1435
      %v1484 = vadd.f32 %v1162, %v1438
      %v1485 = vadd.f32 %v1163, %v1443
      %v1486 = vadd.f32 %v1164, %v1446
      %v1487 = vadd.f32 %v1165, %v1451
      %v1488 = vadd.f32 %v1166, %v1454
      %v1489 = vld [vmem:[%s233 + $0x1] sm:$0xff]
      %v1490 = vld [vmem:[%s233 + $0x9] sm:$0xff]
      %v1491 = vld [vmem:[%s233 + $0x19] sm:$0xff]
      %v1492 = vld [vmem:[%s233 + $0x21] sm:$0xff]
      %v1493 = vld [vmem:[%s233 + $0x31] sm:$0xff]
      %v1494 = vld [vmem:[%s233 + $0x39] sm:$0xff]
      %v1495 = vld [vmem:[%s233 + $0x49] sm:$0xff]
      %v1496 = vld [vmem:[%s233 + $0x51] sm:$0xff]
      %v1497 = vld [vmem:[%s233 + $0x61] sm:$0xff]
      %v1498 = vld [vmem:[%s233 + $0x69] sm:$0xff]
      %v1499 = vld [vmem:[%s233 + $0x79] sm:$0xff]
      %v1500 = vld [vmem:[%s233 + $0x81] sm:$0xff]
      %v1501 = vld [vmem:[%s233 + $0x91] sm:$0xff]
      %v1502 = vld [vmem:[%s233 + $0x99] sm:$0xff]
      %v1503 = vld [vmem:[%s233 + $0xa9] sm:$0xff]
      %v1504 = vld [vmem:[%s233 + $0xb1] sm:$0xff]
      %v1505 = vld [vmem:[%s233 + $0xc1] sm:$0xff]
      %v1506 = vld [vmem:[%s233 + $0xc9] sm:$0xff]
      %v1507 = vld [vmem:[%s233 + $0xd9] sm:$0xff]
      %v1508 = vld [vmem:[%s233 + $0xe1] sm:$0xff]
      %v1509 = vld [vmem:[%s233 + $0xf1] sm:$0xff]
      %v1510 = vld [vmem:[%s233 + $0xf9] sm:$0xff]
      %v1511 = vld [vmem:[%s233 + $0x109] sm:$0xff]
      %v1512 = vld [vmem:[%s233 + $0x111] sm:$0xff]
      %v1513 = vld [vmem:[%s233 + $0x121] sm:$0xff]
      %v1514 = vld [vmem:[%s233 + $0x129] sm:$0xff]
      %v1515 = vld [vmem:[%s233 + $0x139] sm:$0xff]
      %v1516 = vld [vmem:[%s233 + $0x141] sm:$0xff]
      %v1517 = vld [vmem:[%s233 + $0x151] sm:$0xff]
      %v1518 = vld [vmem:[%s233 + $0x159] sm:$0xff]
      %v1519 = vld [vmem:[%s233 + $0x169] sm:$0xff]
      %v1520 = vld [vmem:[%s233 + $0x171] sm:$0xff]
      %v1521 = vpack.c.bf16 %v1490, %v1489
      %v1522 = vpack.c.bf16 %v1492, %v1491
      %v1523 = vpack.c.bf16 %v1494, %v1493
      %v1524 = vpack.c.bf16 %v1496, %v1495
      %v1525 = vpack.c.bf16 %v1498, %v1497
      %v1526 = vpack.c.bf16 %v1500, %v1499
      %v1527 = vpack.c.bf16 %v1502, %v1501
      %v1528 = vpack.c.bf16 %v1504, %v1503
      %v1529 = vpack.c.bf16 %v1506, %v1505
      %v1530 = vpack.c.bf16 %v1508, %v1507
      %v1531 = vpack.c.bf16 %v1510, %v1509
      %v1532 = vpack.c.bf16 %v1512, %v1511
      %v1533 = vpack.c.bf16 %v1514, %v1513
      %v1534 = vpack.c.bf16 %v1516, %v1515
      %v1535 = vpack.c.bf16 %v1518, %v1517
      %v1536 = vpack.c.bf16 %v1520, %v1519
      %s1537 = scalar_lea.vmem %s1, 128
      %v1538 = vld [vmem:[%s1537] sm:$0xf]
      %v1539 = vld [vmem:[%s1537 + $0x4] sm:$0xf]
      %v1540 = vld [vmem:[%s1537 + $0x8] sm:$0xf]
      %v1541 = vld [vmem:[%s1537 + $0xc] sm:$0xf]
      %v1542 = vld [vmem:[%s1537 + $0x10] sm:$0xf]
      %v1543 = vld [vmem:[%s1537 + $0x14] sm:$0xf]
      %v1544 = vld [vmem:[%s1537 + $0x18] sm:$0xf]
      %v1545 = vld [vmem:[%s1537 + $0x1c] sm:$0xf]
      %v1554 = vunpack.c.l.b16 %v1538
      %v1555 = vunpack.c.l.b16 %v1539
      %v1556 = vunpack.c.l.b16 %v1540
      %v1557 = vunpack.c.l.b16 %v1541
      %v1558 = vunpack.c.l.b16 %v1542
      %v1559 = vunpack.c.l.b16 %v1543
      %v1560 = vunpack.c.l.b16 %v1544
      %v1561 = vunpack.c.l.b16 %v1545
      %v1562 = vpack.c.b16 %v1555, %v1554
      %v1563 = vpack.c.b16 %v1557, %v1556
      %v1564 = vpack.c.b16 %v1559, %v1558
      %v1565 = vpack.c.b16 %v1561, %v1560
      %v1571 = vsel %vm145, %v1521, 0
      %v1574 = vsel %vm145, %v1522, 0
      %v1577 = vsel %vm145, %v1523, 0
      %v1580 = vsel %vm145, %v1524, 0
      %v1583 = vsel %vm145, %v1525, 0
      %v1586 = vsel %vm145, %v1526, 0
      %v1589 = vsel %vm145, %v1527, 0
      %v1592 = vsel %vm145, %v1528, 0
      %v1595 = vsel %vm145, %v1529, 0
      %v1598 = vsel %vm145, %v1530, 0
      %v1601 = vsel %vm145, %v1531, 0
      %v1604 = vsel %vm145, %v1532, 0
      %v1607 = vsel %vm145, %v1533, 0
      %v1610 = vsel %vm145, %v1534, 0
      %v1613 = vsel %vm145, %v1535, 0
      %v1616 = vsel %vm145, %v1536, 0
      %1618 = vmatprep.subr.bf16.mxu0 0
      %1619 = vmatpush1.bf16.msra.mxu0 0
      %1620 = vmatprep.subr.bf16.mxu0 0
      %1621 = vmatpush1.bf16.msra.mxu0 0
      %1622 = vmatprep.subr.bf16.mxu0 0
      %1623 = vmatpush1.bf16.msra.mxu0 0
      %1624 = vmatprep.subr.bf16.mxu0 0
      %1625 = vmatpush1.bf16.msra.mxu0 0
      %1626 = vmatprep.subr.bf16.mxu0 0
      %1627 = vmatpush1.bf16.msra.mxu0 %v1565
      %1628 = vmatprep.subr.bf16.mxu0 0
      %1629 = vmatpush1.bf16.msra.mxu0 %v1564
      %1630 = vmatprep.subr.bf16.mxu0 0
      %1631 = vmatpush1.bf16.msra.mxu0 %v1563
      %1632 = vmatprep.subr.bf16.mxu0 0
      %1633 = vmatpush1.bf16.msra.mxu0 %v1562
      %1634 = vmatprep.subr.bf16.mxu0 0
      %1635 = vmatpush2.bf16.msra.mxu0 0
      %1636 = vmatprep.subr.bf16.mxu0 0
      %1637 = vmatpush2.bf16.msra.mxu0 0
      %1638 = vmatprep.subr.bf16.mxu0 0
      %1639 = vmatpush2.bf16.msra.mxu0 0
      %1640 = vmatprep.subr.bf16.mxu0 0
      %1641 = vmatpush2.bf16.msra.mxu0 0
      %1642 = vmatprep.subr.bf16.mxu0 0
      %1643 = vmatpush2.bf16.msra.mxu0 0
      %1644 = vmatprep.subr.bf16.mxu0 0
      %1645 = vmatpush2.bf16.msra.mxu0 0
      %1646 = vmatprep.subr.bf16.mxu0 0
      %1647 = vmatpush2.bf16.msra.mxu0 0
      %1648 = vmatprep.subr.bf16.mxu0 0
      %1649 = vmatpush2.bf16.msra.mxu0 0
      %1650 = vmatprep.mubr.bf16.mxu0 0
      %1651 = vmatmul.mubr.bf16.gmra.mxu0 %v1571
      %v1652 = vpop.f32.mrf.mxu0
      %v1653 = vadd.f32 0.0, %v1652
      %v1654 = vpop.f32.mrf.mxu0
      %v1655 = vpop.f32.mrf.mxu0
      %v1656 = vadd.f32 0.0, %v1655
      %v1657 = vpop.f32.mrf.mxu0
      %1658 = vmatprep.mubr.bf16.mxu0 0
      %1659 = vmatmul.mubr.bf16.gmra.mxu0 %v1574
      %v1660 = vpop.f32.mrf.mxu0
      %v1661 = vadd.f32 0.0, %v1660
      %v1662 = vpop.f32.mrf.mxu0
      %v1663 = vpop.f32.mrf.mxu0
      %v1664 = vadd.f32 0.0, %v1663
      %v1665 = vpop.f32.mrf.mxu0
      %1666 = vmatprep.mubr.bf16.mxu0 0
      %1667 = vmatmul.mubr.bf16.gmra.mxu0 %v1577
      %v1668 = vpop.f32.mrf.mxu0
      %v1669 = vadd.f32 0.0, %v1668
      %v1670 = vpop.f32.mrf.mxu0
      %v1671 = vpop.f32.mrf.mxu0
      %v1672 = vadd.f32 0.0, %v1671
      %v1673 = vpop.f32.mrf.mxu0
      %1674 = vmatprep.mubr.bf16.mxu0 0
      %1675 = vmatmul.mubr.bf16.gmra.mxu0 %v1580
      %v1676 = vpop.f32.mrf.mxu0
      %v1677 = vadd.f32 0.0, %v1676
      %v1678 = vpop.f32.mrf.mxu0
      %v1679 = vpop.f32.mrf.mxu0
      %v1680 = vadd.f32 0.0, %v1679
      %v1681 = vpop.f32.mrf.mxu0
      %1682 = vmatprep.mubr.bf16.mxu0 0
      %1683 = vmatmul.mubr.bf16.gmra.mxu0 %v1583
      %v1684 = vpop.f32.mrf.mxu0
      %v1685 = vadd.f32 0.0, %v1684
      %v1686 = vpop.f32.mrf.mxu0
      %v1687 = vpop.f32.mrf.mxu0
      %v1688 = vadd.f32 0.0, %v1687
      %v1689 = vpop.f32.mrf.mxu0
      %1690 = vmatprep.mubr.bf16.mxu0 0
      %1691 = vmatmul.mubr.bf16.gmra.mxu0 %v1586
      %v1692 = vpop.f32.mrf.mxu0
      %v1693 = vadd.f32 0.0, %v1692
      %v1694 = vpop.f32.mrf.mxu0
      %v1695 = vpop.f32.mrf.mxu0
      %v1696 = vadd.f32 0.0, %v1695
      %v1697 = vpop.f32.mrf.mxu0
      %1698 = vmatprep.mubr.bf16.mxu0 0
      %1699 = vmatmul.mubr.bf16.gmra.mxu0 %v1589
      %v1700 = vpop.f32.mrf.mxu0
      %v1701 = vadd.f32 0.0, %v1700
      %v1702 = vpop.f32.mrf.mxu0
      %v1703 = vpop.f32.mrf.mxu0
      %v1704 = vadd.f32 0.0, %v1703
      %v1705 = vpop.f32.mrf.mxu0
      %1706 = vmatprep.mubr.bf16.mxu0 0
      %1707 = vmatmul.mubr.bf16.gmra.mxu0 %v1592
      %v1708 = vpop.f32.mrf.mxu0
      %v1709 = vadd.f32 0.0, %v1708
      %v1710 = vpop.f32.mrf.mxu0
      %v1711 = vpop.f32.mrf.mxu0
      %v1712 = vadd.f32 0.0, %v1711
      %v1713 = vpop.f32.mrf.mxu0
      %1714 = vmatprep.mubr.bf16.mxu0 0
      %1715 = vmatmul.mubr.bf16.gmra.mxu0 %v1595
      %v1716 = vpop.f32.mrf.mxu0
      %v1717 = vadd.f32 0.0, %v1716
      %v1718 = vpop.f32.mrf.mxu0
      %v1719 = vpop.f32.mrf.mxu0
      %v1720 = vadd.f32 0.0, %v1719
      %v1721 = vpop.f32.mrf.mxu0
      %1722 = vmatprep.mubr.bf16.mxu0 0
      %1723 = vmatmul.mubr.bf16.gmra.mxu0 %v1598
      %v1724 = vpop.f32.mrf.mxu0
      %v1725 = vadd.f32 0.0, %v1724
      %v1726 = vpop.f32.mrf.mxu0
      %v1727 = vpop.f32.mrf.mxu0
      %v1728 = vadd.f32 0.0, %v1727
      %v1729 = vpop.f32.mrf.mxu0
      %1730 = vmatprep.mubr.bf16.mxu0 0
      %1731 = vmatmul.mubr.bf16.gmra.mxu0 %v1601
      %v1732 = vpop.f32.mrf.mxu0
      %v1733 = vadd.f32 0.0, %v1732
      %v1734 = vpop.f32.mrf.mxu0
      %v1735 = vpop.f32.mrf.mxu0
      %v1736 = vadd.f32 0.0, %v1735
      %v1737 = vpop.f32.mrf.mxu0
      %1738 = vmatprep.mubr.bf16.mxu0 0
      %1739 = vmatmul.mubr.bf16.gmra.mxu0 %v1604
      %v1740 = vpop.f32.mrf.mxu0
      %v1741 = vadd.f32 0.0, %v1740
      %v1742 = vpop.f32.mrf.mxu0
      %v1743 = vpop.f32.mrf.mxu0
      %v1744 = vadd.f32 0.0, %v1743
      %v1745 = vpop.f32.mrf.mxu0
      %1746 = vmatprep.mubr.bf16.mxu0 0
      %1747 = vmatmul.mubr.bf16.gmra.mxu0 %v1607
      %v1748 = vpop.f32.mrf.mxu0
      %v1749 = vadd.f32 0.0, %v1748
      %v1750 = vpop.f32.mrf.mxu0
      %v1751 = vpop.f32.mrf.mxu0
      %v1752 = vadd.f32 0.0, %v1751
      %v1753 = vpop.f32.mrf.mxu0
      %1754 = vmatprep.mubr.bf16.mxu0 0
      %1755 = vmatmul.mubr.bf16.gmra.mxu0 %v1610
      %v1756 = vpop.f32.mrf.mxu0
      %v1757 = vadd.f32 0.0, %v1756
      %v1758 = vpop.f32.mrf.mxu0
      %v1759 = vpop.f32.mrf.mxu0
      %v1760 = vadd.f32 0.0, %v1759
      %v1761 = vpop.f32.mrf.mxu0
      %1762 = vmatprep.mubr.bf16.mxu0 0
      %1763 = vmatmul.mubr.bf16.gmra.mxu0 %v1613
      %v1764 = vpop.f32.mrf.mxu0
      %v1765 = vadd.f32 0.0, %v1764
      %v1766 = vpop.f32.mrf.mxu0
      %v1767 = vpop.f32.mrf.mxu0
      %v1768 = vadd.f32 0.0, %v1767
      %v1769 = vpop.f32.mrf.mxu0
      %1770 = vmatprep.mubr.bf16.mxu0 0
      %1771 = vmatmul.mubr.bf16.gmra.mxu0 %v1616
      %v1772 = vpop.f32.mrf.mxu0
      %v1773 = vadd.f32 0.0, %v1772
      %v1774 = vpop.f32.mrf.mxu0
      %v1775 = vpop.f32.mrf.mxu0
      %v1776 = vadd.f32 0.0, %v1775
      %v1777 = vpop.f32.mrf.mxu0
      %1778 = vdwg.mxu0
      %v1779 = vadd.f32 %v1457, %v1653
      %v1780 = vadd.f32 %v1458, %v1656
      %v1781 = vadd.f32 %v1459, %v1661
      %v1782 = vadd.f32 %v1460, %v1664
      %v1783 = vadd.f32 %v1461, %v1669
      %v1784 = vadd.f32 %v1462, %v1672
      %v1785 = vadd.f32 %v1463, %v1677
      %v1786 = vadd.f32 %v1464, %v1680
      %v1787 = vadd.f32 %v1465, %v1685
      %v1788 = vadd.f32 %v1466, %v1688
      %v1789 = vadd.f32 %v1467, %v1693
      %v1790 = vadd.f32 %v1468, %v1696
      %v1791 = vadd.f32 %v1469, %v1701
      %v1792 = vadd.f32 %v1470, %v1704
      %v1793 = vadd.f32 %v1471, %v1709
      %v1794 = vadd.f32 %v1472, %v1712
      %v1795 = vadd.f32 %v1473, %v1717
      %v1796 = vadd.f32 %v1474, %v1720
      %v1797 = vadd.f32 %v1475, %v1725
      %v1798 = vadd.f32 %v1476, %v1728
      %v1799 = vadd.f32 %v1477, %v1733
      %v1800 = vadd.f32 %v1478, %v1736
      %v1801 = vadd.f32 %v1479, %v1741
      %v1802 = vadd.f32 %v1480, %v1744
      %v1803 = vadd.f32 %v1481, %v1749
      %v1804 = vadd.f32 %v1482, %v1752
      %v1805 = vadd.f32 %v1483, %v1757
      %v1806 = vadd.f32 %v1484, %v1760
      %v1807 = vadd.f32 %v1485, %v1765
      %v1808 = vadd.f32 %v1486, %v1768
      %v1809 = vadd.f32 %v1487, %v1773
      %v1810 = vadd.f32 %v1488, %v1776
      %v1811 = vld [vmem:[%s233 + $0x2] sm:$0xff]
      %v1812 = vld [vmem:[%s233 + $0xa] sm:$0xff]
      %v1813 = vld [vmem:[%s233 + $0x1a] sm:$0xff]
      %v1814 = vld [vmem:[%s233 + $0x22] sm:$0xff]
      %v1815 = vld [vmem:[%s233 + $0x32] sm:$0xff]
      %v1816 = vld [vmem:[%s233 + $0x3a] sm:$0xff]
      %v1817 = vld [vmem:[%s233 + $0x4a] sm:$0xff]
      %v1818 = vld [vmem:[%s233 + $0x52] sm:$0xff]
      %v1819 = vld [vmem:[%s233 + $0x62] sm:$0xff]
      %v1820 = vld [vmem:[%s233 + $0x6a] sm:$0xff]
      %v1821 = vld [vmem:[%s233 + $0x7a] sm:$0xff]
      %v1822 = vld [vmem:[%s233 + $0x82] sm:$0xff]
      %v1823 = vld [vmem:[%s233 + $0x92] sm:$0xff]
      %v1824 = vld [vmem:[%s233 + $0x9a] sm:$0xff]
      %v1825 = vld [vmem:[%s233 + $0xaa] sm:$0xff]
      %v1826 = vld [vmem:[%s233 + $0xb2] sm:$0xff]
      %v1827 = vld [vmem:[%s233 + $0xc2] sm:$0xff]
      %v1828 = vld [vmem:[%s233 + $0xca] sm:$0xff]
      %v1829 = vld [vmem:[%s233 + $0xda] sm:$0xff]
      %v1830 = vld [vmem:[%s233 + $0xe2] sm:$0xff]
      %v1831 = vld [vmem:[%s233 + $0xf2] sm:$0xff]
      %v1832 = vld [vmem:[%s233 + $0xfa] sm:$0xff]
      %v1833 = vld [vmem:[%s233 + $0x10a] sm:$0xff]
      %v1834 = vld [vmem:[%s233 + $0x112] sm:$0xff]
      %v1835 = vld [vmem:[%s233 + $0x122] sm:$0xff]
      %v1836 = vld [vmem:[%s233 + $0x12a] sm:$0xff]
      %v1837 = vld [vmem:[%s233 + $0x13a] sm:$0xff]
      %v1838 = vld [vmem:[%s233 + $0x142] sm:$0xff]
      %v1839 = vld [vmem:[%s233 + $0x152] sm:$0xff]
      %v1840 = vld [vmem:[%s233 + $0x15a] sm:$0xff]
      %v1841 = vld [vmem:[%s233 + $0x16a] sm:$0xff]
      %v1842 = vld [vmem:[%s233 + $0x172] sm:$0xff]
      %v1843 = vpack.c.bf16 %v1812, %v1811
      %v1844 = vpack.c.bf16 %v1814, %v1813
      %v1845 = vpack.c.bf16 %v1816, %v1815
      %v1846 = vpack.c.bf16 %v1818, %v1817
      %v1847 = vpack.c.bf16 %v1820, %v1819
      %v1848 = vpack.c.bf16 %v1822, %v1821
      %v1849 = vpack.c.bf16 %v1824, %v1823
      %v1850 = vpack.c.bf16 %v1826, %v1825
      %v1851 = vpack.c.bf16 %v1828, %v1827
      %v1852 = vpack.c.bf16 %v1830, %v1829
      %v1853 = vpack.c.bf16 %v1832, %v1831
      %v1854 = vpack.c.bf16 %v1834, %v1833
      %v1855 = vpack.c.bf16 %v1836, %v1835
      %v1856 = vpack.c.bf16 %v1838, %v1837
      %v1857 = vpack.c.bf16 %v1840, %v1839
      %v1858 = vpack.c.bf16 %v1842, %v1841
      %s1859 = scalar_lea.vmem %s1, 160
      %v1860 = vld [vmem:[%s1859] sm:$0xf]
      %v1861 = vld [vmem:[%s1859 + $0x4] sm:$0xf]
      %v1862 = vld [vmem:[%s1859 + $0x8] sm:$0xf]
      %v1863 = vld [vmem:[%s1859 + $0xc] sm:$0xf]
      %v1864 = vld [vmem:[%s1859 + $0x10] sm:$0xf]
      %v1865 = vld [vmem:[%s1859 + $0x14] sm:$0xf]
      %v1866 = vld [vmem:[%s1859 + $0x18] sm:$0xf]
      %v1867 = vld [vmem:[%s1859 + $0x1c] sm:$0xf]
      %v1876 = vunpack.c.l.b16 %v1860
      %v1877 = vunpack.c.l.b16 %v1861
      %v1878 = vunpack.c.l.b16 %v1862
      %v1879 = vunpack.c.l.b16 %v1863
      %v1880 = vunpack.c.l.b16 %v1864
      %v1881 = vunpack.c.l.b16 %v1865
      %v1882 = vunpack.c.l.b16 %v1866
      %v1883 = vunpack.c.l.b16 %v1867
      %v1884 = vpack.c.b16 %v1877, %v1876
      %v1885 = vpack.c.b16 %v1879, %v1878
      %v1886 = vpack.c.b16 %v1881, %v1880
      %v1887 = vpack.c.b16 %v1883, %v1882
      %v1893 = vsel %vm145, %v1843, 0
      %v1896 = vsel %vm145, %v1844, 0
      %v1899 = vsel %vm145, %v1845, 0
      %v1902 = vsel %vm145, %v1846, 0
      %v1905 = vsel %vm145, %v1847, 0
      %v1908 = vsel %vm145, %v1848, 0
      %v1911 = vsel %vm145, %v1849, 0
      %v1914 = vsel %vm145, %v1850, 0
      %v1917 = vsel %vm145, %v1851, 0
      %v1920 = vsel %vm145, %v1852, 0
      %v1923 = vsel %vm145, %v1853, 0
      %v1926 = vsel %vm145, %v1854, 0
      %v1929 = vsel %vm145, %v1855, 0
      %v1932 = vsel %vm145, %v1856, 0
      %v1935 = vsel %vm145, %v1857, 0
      %v1938 = vsel %vm145, %v1858, 0
      %1940 = vmatprep.subr.bf16.mxu0 0
      %1941 = vmatpush1.bf16.msra.mxu0 0
      %1942 = vmatprep.subr.bf16.mxu0 0
      %1943 = vmatpush1.bf16.msra.mxu0 0
      %1944 = vmatprep.subr.bf16.mxu0 0
      %1945 = vmatpush1.bf16.msra.mxu0 0
      %1946 = vmatprep.subr.bf16.mxu0 0
      %1947 = vmatpush1.bf16.msra.mxu0 0
      %1948 = vmatprep.subr.bf16.mxu0 0
      %1949 = vmatpush1.bf16.msra.mxu0 %v1887
      %1950 = vmatprep.subr.bf16.mxu0 0
      %1951 = vmatpush1.bf16.msra.mxu0 %v1886
      %1952 = vmatprep.subr.bf16.mxu0 0
      %1953 = vmatpush1.bf16.msra.mxu0 %v1885
      %1954 = vmatprep.subr.bf16.mxu0 0
      %1955 = vmatpush1.bf16.msra.mxu0 %v1884
      %1956 = vmatprep.subr.bf16.mxu0 0
      %1957 = vmatpush2.bf16.msra.mxu0 0
      %1958 = vmatprep.subr.bf16.mxu0 0
      %1959 = vmatpush2.bf16.msra.mxu0 0
      %1960 = vmatprep.subr.bf16.mxu0 0
      %1961 = vmatpush2.bf16.msra.mxu0 0
      %1962 = vmatprep.subr.bf16.mxu0 0
      %1963 = vmatpush2.bf16.msra.mxu0 0
      %1964 = vmatprep.subr.bf16.mxu0 0
      %1965 = vmatpush2.bf16.msra.mxu0 0
      %1966 = vmatprep.subr.bf16.mxu0 0
      %1967 = vmatpush2.bf16.msra.mxu0 0
      %1968 = vmatprep.subr.bf16.mxu0 0
      %1969 = vmatpush2.bf16.msra.mxu0 0
      %1970 = vmatprep.subr.bf16.mxu0 0
      %1971 = vmatpush2.bf16.msra.mxu0 0
      %1972 = vmatprep.mubr.bf16.mxu0 0
      %1973 = vmatmul.mubr.bf16.gmra.mxu0 %v1893
      %v1974 = vpop.f32.mrf.mxu0
      %v1975 = vadd.f32 0.0, %v1974
      %v1976 = vpop.f32.mrf.mxu0
      %v1977 = vpop.f32.mrf.mxu0
      %v1978 = vadd.f32 0.0, %v1977
      %v1979 = vpop.f32.mrf.mxu0
      %1980 = vmatprep.mubr.bf16.mxu0 0
      %1981 = vmatmul.mubr.bf16.gmra.mxu0 %v1896
      %v1982 = vpop.f32.mrf.mxu0
      %v1983 = vadd.f32 0.0, %v1982
      %v1984 = vpop.f32.mrf.mxu0
      %v1985 = vpop.f32.mrf.mxu0
      %v1986 = vadd.f32 0.0, %v1985
      %v1987 = vpop.f32.mrf.mxu0
      %1988 = vmatprep.mubr.bf16.mxu0 0
      %1989 = vmatmul.mubr.bf16.gmra.mxu0 %v1899
      %v1990 = vpop.f32.mrf.mxu0
      %v1991 = vadd.f32 0.0, %v1990
      %v1992 = vpop.f32.mrf.mxu0
      %v1993 = vpop.f32.mrf.mxu0
      %v1994 = vadd.f32 0.0, %v1993
      %v1995 = vpop.f32.mrf.mxu0
      %1996 = vmatprep.mubr.bf16.mxu0 0
      %1997 = vmatmul.mubr.bf16.gmra.mxu0 %v1902
      %v1998 = vpop.f32.mrf.mxu0
      %v1999 = vadd.f32 0.0, %v1998
      %v2000 = vpop.f32.mrf.mxu0
      %v2001 = vpop.f32.mrf.mxu0
      %v2002 = vadd.f32 0.0, %v2001
      %v2003 = vpop.f32.mrf.mxu0
      %2004 = vmatprep.mubr.bf16.mxu0 0
      %2005 = vmatmul.mubr.bf16.gmra.mxu0 %v1905
      %v2006 = vpop.f32.mrf.mxu0
      %v2007 = vadd.f32 0.0, %v2006
      %v2008 = vpop.f32.mrf.mxu0
      %v2009 = vpop.f32.mrf.mxu0
      %v2010 = vadd.f32 0.0, %v2009
      %v2011 = vpop.f32.mrf.mxu0
      %2012 = vmatprep.mubr.bf16.mxu0 0
      %2013 = vmatmul.mubr.bf16.gmra.mxu0 %v1908
      %v2014 = vpop.f32.mrf.mxu0
      %v2015 = vadd.f32 0.0, %v2014
      %v2016 = vpop.f32.mrf.mxu0
      %v2017 = vpop.f32.mrf.mxu0
      %v2018 = vadd.f32 0.0, %v2017
      %v2019 = vpop.f32.mrf.mxu0
      %2020 = vmatprep.mubr.bf16.mxu0 0
      %2021 = vmatmul.mubr.bf16.gmra.mxu0 %v1911
      %v2022 = vpop.f32.mrf.mxu0
      %v2023 = vadd.f32 0.0, %v2022
      %v2024 = vpop.f32.mrf.mxu0
      %v2025 = vpop.f32.mrf.mxu0
      %v2026 = vadd.f32 0.0, %v2025
      %v2027 = vpop.f32.mrf.mxu0
      %2028 = vmatprep.mubr.bf16.mxu0 0
      %2029 = vmatmul.mubr.bf16.gmra.mxu0 %v1914
      %v2030 = vpop.f32.mrf.mxu0
      %v2031 = vadd.f32 0.0, %v2030
      %v2032 = vpop.f32.mrf.mxu0
      %v2033 = vpop.f32.mrf.mxu0
      %v2034 = vadd.f32 0.0, %v2033
      %v2035 = vpop.f32.mrf.mxu0
      %2036 = vmatprep.mubr.bf16.mxu0 0
      %2037 = vmatmul.mubr.bf16.gmra.mxu0 %v1917
      %v2038 = vpop.f32.mrf.mxu0
      %v2039 = vadd.f32 0.0, %v2038
      %v2040 = vpop.f32.mrf.mxu0
      %v2041 = vpop.f32.mrf.mxu0
      %v2042 = vadd.f32 0.0, %v2041
      %v2043 = vpop.f32.mrf.mxu0
      %2044 = vmatprep.mubr.bf16.mxu0 0
      %2045 = vmatmul.mubr.bf16.gmra.mxu0 %v1920
      %v2046 = vpop.f32.mrf.mxu0
      %v2047 = vadd.f32 0.0, %v2046
      %v2048 = vpop.f32.mrf.mxu0
      %v2049 = vpop.f32.mrf.mxu0
      %v2050 = vadd.f32 0.0, %v2049
      %v2051 = vpop.f32.mrf.mxu0
      %2052 = vmatprep.mubr.bf16.mxu0 0
      %2053 = vmatmul.mubr.bf16.gmra.mxu0 %v1923
      %v2054 = vpop.f32.mrf.mxu0
      %v2055 = vadd.f32 0.0, %v2054
      %v2056 = vpop.f32.mrf.mxu0
      %v2057 = vpop.f32.mrf.mxu0
      %v2058 = vadd.f32 0.0, %v2057
      %v2059 = vpop.f32.mrf.mxu0
      %2060 = vmatprep.mubr.bf16.mxu0 0
      %2061 = vmatmul.mubr.bf16.gmra.mxu0 %v1926
      %v2062 = vpop.f32.mrf.mxu0
      %v2063 = vadd.f32 0.0, %v2062
      %v2064 = vpop.f32.mrf.mxu0
      %v2065 = vpop.f32.mrf.mxu0
      %v2066 = vadd.f32 0.0, %v2065
      %v2067 = vpop.f32.mrf.mxu0
      %2068 = vmatprep.mubr.bf16.mxu0 0
      %2069 = vmatmul.mubr.bf16.gmra.mxu0 %v1929
      %v2070 = vpop.f32.mrf.mxu0
      %v2071 = vadd.f32 0.0, %v2070
      %v2072 = vpop.f32.mrf.mxu0
      %v2073 = vpop.f32.mrf.mxu0
      %v2074 = vadd.f32 0.0, %v2073
      %v2075 = vpop.f32.mrf.mxu0
      %2076 = vmatprep.mubr.bf16.mxu0 0
      %2077 = vmatmul.mubr.bf16.gmra.mxu0 %v1932
      %v2078 = vpop.f32.mrf.mxu0
      %v2079 = vadd.f32 0.0, %v2078
      %v2080 = vpop.f32.mrf.mxu0
      %v2081 = vpop.f32.mrf.mxu0
      %v2082 = vadd.f32 0.0, %v2081
      %v2083 = vpop.f32.mrf.mxu0
      %2084 = vmatprep.mubr.bf16.mxu0 0
      %2085 = vmatmul.mubr.bf16.gmra.mxu0 %v1935
      %v2086 = vpop.f32.mrf.mxu0
      %v2087 = vadd.f32 0.0, %v2086
      %v2088 = vpop.f32.mrf.mxu0
      %v2089 = vpop.f32.mrf.mxu0
      %v2090 = vadd.f32 0.0, %v2089
      %v2091 = vpop.f32.mrf.mxu0
      %2092 = vmatprep.mubr.bf16.mxu0 0
      %2093 = vmatmul.mubr.bf16.gmra.mxu0 %v1938
      %v2094 = vpop.f32.mrf.mxu0
      %v2095 = vadd.f32 0.0, %v2094
      %v2096 = vpop.f32.mrf.mxu0
      %v2097 = vpop.f32.mrf.mxu0
      %v2098 = vadd.f32 0.0, %v2097
      %v2099 = vpop.f32.mrf.mxu0
      %2100 = vdwg.mxu0
      %v2101 = vadd.f32 %v1779, %v1975
      %v2102 = vadd.f32 %v1780, %v1978
      %v2103 = vadd.f32 %v1781, %v1983
      %v2104 = vadd.f32 %v1782, %v1986
      %v2105 = vadd.f32 %v1783, %v1991
      %v2106 = vadd.f32 %v1784, %v1994
      %v2107 = vadd.f32 %v1785, %v1999
      %v2108 = vadd.f32 %v1786, %v2002
      %v2109 = vadd.f32 %v1787, %v2007
      %v2110 = vadd.f32 %v1788, %v2010
      %v2111 = vadd.f32 %v1789, %v2015
      %v2112 = vadd.f32 %v1790, %v2018
      %v2113 = vadd.f32 %v1791, %v2023
      %v2114 = vadd.f32 %v1792, %v2026
      %v2115 = vadd.f32 %v1793, %v2031
      %v2116 = vadd.f32 %v1794, %v2034
      %v2117 = vadd.f32 %v1795, %v2039
      %v2118 = vadd.f32 %v1796, %v2042
      %v2119 = vadd.f32 %v1797, %v2047
      %v2120 = vadd.f32 %v1798, %v2050
      %v2121 = vadd.f32 %v1799, %v2055
      %v2122 = vadd.f32 %v1800, %v2058
      %v2123 = vadd.f32 %v1801, %v2063
      %v2124 = vadd.f32 %v1802, %v2066
      %v2125 = vadd.f32 %v1803, %v2071
      %v2126 = vadd.f32 %v1804, %v2074
      %v2127 = vadd.f32 %v1805, %v2079
      %v2128 = vadd.f32 %v1806, %v2082
      %v2129 = vadd.f32 %v1807, %v2087
      %v2130 = vadd.f32 %v1808, %v2090
      %v2131 = vadd.f32 %v1809, %v2095
      %v2132 = vadd.f32 %v1810, %v2098
      %s2133 = scalar_lea.vmem [#allocation2], 48
      %v2134 = vld [vmem:[%s2133] sm:$0xff]
      %v2135 = vld [vmem:[%s2133 + $0x8] sm:$0xff]
      %v2136 = vld [vmem:[%s2133 + $0x18] sm:$0xff]
      %v2137 = vld [vmem:[%s2133 + $0x20] sm:$0xff]
      %v2138 = vld [vmem:[%s2133 + $0x30] sm:$0xff]
      %v2139 = vld [vmem:[%s2133 + $0x38] sm:$0xff]
      %v2140 = vld [vmem:[%s2133 + $0x48] sm:$0xff]
      %v2141 = vld [vmem:[%s2133 + $0x50] sm:$0xff]
      %v2142 = vld [vmem:[%s2133 + $0x60] sm:$0xff]
      %v2143 = vld [vmem:[%s2133 + $0x68] sm:$0xff]
      %v2144 = vld [vmem:[%s2133 + $0x78] sm:$0xff]
      %v2145 = vld [vmem:[%s2133 + $0x80] sm:$0xff]
      %v2146 = vld [vmem:[%s2133 + $0x90] sm:$0xff]
      %v2147 = vld [vmem:[%s2133 + $0x98] sm:$0xff]
      %v2148 = vld [vmem:[%s2133 + $0xa8] sm:$0xff]
      %v2149 = vld [vmem:[%s2133 + $0xb0] sm:$0xff]
      %v2150 = vld [vmem:[%s2133 + $0xc0] sm:$0xff]
      %v2151 = vld [vmem:[%s2133 + $0xc8] sm:$0xff]
      %v2152 = vld [vmem:[%s2133 + $0xd8] sm:$0xff]
      %v2153 = vld [vmem:[%s2133 + $0xe0] sm:$0xff]
      %v2154 = vld [vmem:[%s2133 + $0xf0] sm:$0xff]
      %v2155 = vld [vmem:[%s2133 + $0xf8] sm:$0xff]
      %v2156 = vld [vmem:[%s2133 + $0x108] sm:$0xff]
      %v2157 = vld [vmem:[%s2133 + $0x110] sm:$0xff]
      %v2158 = vld [vmem:[%s2133 + $0x120] sm:$0xff]
      %v2159 = vld [vmem:[%s2133 + $0x128] sm:$0xff]
      %v2160 = vld [vmem:[%s2133 + $0x138] sm:$0xff]
      %v2161 = vld [vmem:[%s2133 + $0x140] sm:$0xff]
      %v2162 = vld [vmem:[%s2133 + $0x150] sm:$0xff]
      %v2163 = vld [vmem:[%s2133 + $0x158] sm:$0xff]
      %v2164 = vld [vmem:[%s2133 + $0x168] sm:$0xff]
      %v2165 = vld [vmem:[%s2133 + $0x170] sm:$0xff]
      %v2166 = vpack.c.bf16 %v2135, %v2134
      %v2167 = vpack.c.bf16 %v2137, %v2136
      %v2168 = vpack.c.bf16 %v2139, %v2138
      %v2169 = vpack.c.bf16 %v2141, %v2140
      %v2170 = vpack.c.bf16 %v2143, %v2142
      %v2171 = vpack.c.bf16 %v2145, %v2144
      %v2172 = vpack.c.bf16 %v2147, %v2146
      %v2173 = vpack.c.bf16 %v2149, %v2148
      %v2174 = vpack.c.bf16 %v2151, %v2150
      %v2175 = vpack.c.bf16 %v2153, %v2152
      %v2176 = vpack.c.bf16 %v2155, %v2154
      %v2177 = vpack.c.bf16 %v2157, %v2156
      %v2178 = vpack.c.bf16 %v2159, %v2158
      %v2179 = vpack.c.bf16 %v2161, %v2160
      %v2180 = vpack.c.bf16 %v2163, %v2162
      %v2181 = vpack.c.bf16 %v2165, %v2164
      %s2182 = scalar_lea.vmem %s1, 192
      %v2183 = vld [vmem:[%s2182] sm:$0xf]
      %v2184 = vld [vmem:[%s2182 + $0x4] sm:$0xf]
      %v2185 = vld [vmem:[%s2182 + $0x8] sm:$0xf]
      %v2186 = vld [vmem:[%s2182 + $0xc] sm:$0xf]
      %v2187 = vld [vmem:[%s2182 + $0x10] sm:$0xf]
      %v2188 = vld [vmem:[%s2182 + $0x14] sm:$0xf]
      %v2189 = vld [vmem:[%s2182 + $0x18] sm:$0xf]
      %v2190 = vld [vmem:[%s2182 + $0x1c] sm:$0xf]
      %v2199 = vunpack.c.l.b16 %v2183
      %v2200 = vunpack.c.l.b16 %v2184
      %v2201 = vunpack.c.l.b16 %v2185
      %v2202 = vunpack.c.l.b16 %v2186
      %v2203 = vunpack.c.l.b16 %v2187
      %v2204 = vunpack.c.l.b16 %v2188
      %v2205 = vunpack.c.l.b16 %v2189
      %v2206 = vunpack.c.l.b16 %v2190
      %v2207 = vpack.c.b16 %v2200, %v2199
      %v2208 = vpack.c.b16 %v2202, %v2201
      %v2209 = vpack.c.b16 %v2204, %v2203
      %v2210 = vpack.c.b16 %v2206, %v2205
      %v2216 = vsel %vm145, %v2166, 0
      %v2219 = vsel %vm145, %v2167, 0
      %v2222 = vsel %vm145, %v2168, 0
      %v2225 = vsel %vm145, %v2169, 0
      %v2228 = vsel %vm145, %v2170, 0
      %v2231 = vsel %vm145, %v2171, 0
      %v2234 = vsel %vm145, %v2172, 0
      %v2237 = vsel %vm145, %v2173, 0
      %v2240 = vsel %vm145, %v2174, 0
      %v2243 = vsel %vm145, %v2175, 0
      %v2246 = vsel %vm145, %v2176, 0
      %v2249 = vsel %vm145, %v2177, 0
      %v2252 = vsel %vm145, %v2178, 0
      %v2255 = vsel %vm145, %v2179, 0
      %v2258 = vsel %vm145, %v2180, 0
      %v2261 = vsel %vm145, %v2181, 0
      %2263 = vmatprep.subr.bf16.mxu0 0
      %2264 = vmatpush1.bf16.msra.mxu0 0
      %2265 = vmatprep.subr.bf16.mxu0 0
      %2266 = vmatpush1.bf16.msra.mxu0 0
      %2267 = vmatprep.subr.bf16.mxu0 0
      %2268 = vmatpush1.bf16.msra.mxu0 0
      %2269 = vmatprep.subr.bf16.mxu0 0
      %2270 = vmatpush1.bf16.msra.mxu0 0
      %2271 = vmatprep.subr.bf16.mxu0 0
      %2272 = vmatpush1.bf16.msra.mxu0 %v2210
      %2273 = vmatprep.subr.bf16.mxu0 0
      %2274 = vmatpush1.bf16.msra.mxu0 %v2209
      %2275 = vmatprep.subr.bf16.mxu0 0
      %2276 = vmatpush1.bf16.msra.mxu0 %v2208
      %2277 = vmatprep.subr.bf16.mxu0 0
      %2278 = vmatpush1.bf16.msra.mxu0 %v2207
      %2279 = vmatprep.subr.bf16.mxu0 0
      %2280 = vmatpush2.bf16.msra.mxu0 0
      %2281 = vmatprep.subr.bf16.mxu0 0
      %2282 = vmatpush2.bf16.msra.mxu0 0
      %2283 = vmatprep.subr.bf16.mxu0 0
      %2284 = vmatpush2.bf16.msra.mxu0 0
      %2285 = vmatprep.subr.bf16.mxu0 0
      %2286 = vmatpush2.bf16.msra.mxu0 0
      %2287 = vmatprep.subr.bf16.mxu0 0
      %2288 = vmatpush2.bf16.msra.mxu0 0
      %2289 = vmatprep.subr.bf16.mxu0 0
      %2290 = vmatpush2.bf16.msra.mxu0 0
      %2291 = vmatprep.subr.bf16.mxu0 0
      %2292 = vmatpush2.bf16.msra.mxu0 0
      %2293 = vmatprep.subr.bf16.mxu0 0
      %2294 = vmatpush2.bf16.msra.mxu0 0
      %2295 = vmatprep.mubr.bf16.mxu0 0
      %2296 = vmatmul.mubr.bf16.gmra.mxu0 %v2216
      %v2297 = vpop.f32.mrf.mxu0
      %v2298 = vadd.f32 0.0, %v2297
      %v2299 = vpop.f32.mrf.mxu0
      %v2300 = vpop.f32.mrf.mxu0
      %v2301 = vadd.f32 0.0, %v2300
      %v2302 = vpop.f32.mrf.mxu0
      %2303 = vmatprep.mubr.bf16.mxu0 0
      %2304 = vmatmul.mubr.bf16.gmra.mxu0 %v2219
      %v2305 = vpop.f32.mrf.mxu0
      %v2306 = vadd.f32 0.0, %v2305
      %v2307 = vpop.f32.mrf.mxu0
      %v2308 = vpop.f32.mrf.mxu0
      %v2309 = vadd.f32 0.0, %v2308
      %v2310 = vpop.f32.mrf.mxu0
      %2311 = vmatprep.mubr.bf16.mxu0 0
      %2312 = vmatmul.mubr.bf16.gmra.mxu0 %v2222
      %v2313 = vpop.f32.mrf.mxu0
      %v2314 = vadd.f32 0.0, %v2313
      %v2315 = vpop.f32.mrf.mxu0
      %v2316 = vpop.f32.mrf.mxu0
      %v2317 = vadd.f32 0.0, %v2316
      %v2318 = vpop.f32.mrf.mxu0
      %2319 = vmatprep.mubr.bf16.mxu0 0
      %2320 = vmatmul.mubr.bf16.gmra.mxu0 %v2225
      %v2321 = vpop.f32.mrf.mxu0
      %v2322 = vadd.f32 0.0, %v2321
      %v2323 = vpop.f32.mrf.mxu0
      %v2324 = vpop.f32.mrf.mxu0
      %v2325 = vadd.f32 0.0, %v2324
      %v2326 = vpop.f32.mrf.mxu0
      %2327 = vmatprep.mubr.bf16.mxu0 0
      %2328 = vmatmul.mubr.bf16.gmra.mxu0 %v2228
      %v2329 = vpop.f32.mrf.mxu0
      %v2330 = vadd.f32 0.0, %v2329
      %v2331 = vpop.f32.mrf.mxu0
      %v2332 = vpop.f32.mrf.mxu0
      %v2333 = vadd.f32 0.0, %v2332
      %v2334 = vpop.f32.mrf.mxu0
      %2335 = vmatprep.mubr.bf16.mxu0 0
      %2336 = vmatmul.mubr.bf16.gmra.mxu0 %v2231
      %v2337 = vpop.f32.mrf.mxu0
      %v2338 = vadd.f32 0.0, %v2337
      %v2339 = vpop.f32.mrf.mxu0
      %v2340 = vpop.f32.mrf.mxu0
      %v2341 = vadd.f32 0.0, %v2340
      %v2342 = vpop.f32.mrf.mxu0
      %2343 = vmatprep.mubr.bf16.mxu0 0
      %2344 = vmatmul.mubr.bf16.gmra.mxu0 %v2234
      %v2345 = vpop.f32.mrf.mxu0
      %v2346 = vadd.f32 0.0, %v2345
      %v2347 = vpop.f32.mrf.mxu0
      %v2348 = vpop.f32.mrf.mxu0
      %v2349 = vadd.f32 0.0, %v2348
      %v2350 = vpop.f32.mrf.mxu0
      %2351 = vmatprep.mubr.bf16.mxu0 0
      %2352 = vmatmul.mubr.bf16.gmra.mxu0 %v2237
      %v2353 = vpop.f32.mrf.mxu0
      %v2354 = vadd.f32 0.0, %v2353
      %v2355 = vpop.f32.mrf.mxu0
      %v2356 = vpop.f32.mrf.mxu0
      %v2357 = vadd.f32 0.0, %v2356
      %v2358 = vpop.f32.mrf.mxu0
      %2359 = vmatprep.mubr.bf16.mxu0 0
      %2360 = vmatmul.mubr.bf16.gmra.mxu0 %v2240
      %v2361 = vpop.f32.mrf.mxu0
      %v2362 = vadd.f32 0.0, %v2361
      %v2363 = vpop.f32.mrf.mxu0
      %v2364 = vpop.f32.mrf.mxu0
      %v2365 = vadd.f32 0.0, %v2364
      %v2366 = vpop.f32.mrf.mxu0
      %2367 = vmatprep.mubr.bf16.mxu0 0
      %2368 = vmatmul.mubr.bf16.gmra.mxu0 %v2243
      %v2369 = vpop.f32.mrf.mxu0
      %v2370 = vadd.f32 0.0, %v2369
      %v2371 = vpop.f32.mrf.mxu0
      %v2372 = vpop.f32.mrf.mxu0
      %v2373 = vadd.f32 0.0, %v2372
      %v2374 = vpop.f32.mrf.mxu0
      %2375 = vmatprep.mubr.bf16.mxu0 0
      %2376 = vmatmul.mubr.bf16.gmra.mxu0 %v2246
      %v2377 = vpop.f32.mrf.mxu0
      %v2378 = vadd.f32 0.0, %v2377
      %v2379 = vpop.f32.mrf.mxu0
      %v2380 = vpop.f32.mrf.mxu0
      %v2381 = vadd.f32 0.0, %v2380
      %v2382 = vpop.f32.mrf.mxu0
      %2383 = vmatprep.mubr.bf16.mxu0 0
      %2384 = vmatmul.mubr.bf16.gmra.mxu0 %v2249
      %v2385 = vpop.f32.mrf.mxu0
      %v2386 = vadd.f32 0.0, %v2385
      %v2387 = vpop.f32.mrf.mxu0
      %v2388 = vpop.f32.mrf.mxu0
      %v2389 = vadd.f32 0.0, %v2388
      %v2390 = vpop.f32.mrf.mxu0
      %2391 = vmatprep.mubr.bf16.mxu0 0
      %2392 = vmatmul.mubr.bf16.gmra.mxu0 %v2252
      %v2393 = vpop.f32.mrf.mxu0
      %v2394 = vadd.f32 0.0, %v2393
      %v2395 = vpop.f32.mrf.mxu0
      %v2396 = vpop.f32.mrf.mxu0
      %v2397 = vadd.f32 0.0, %v2396
      %v2398 = vpop.f32.mrf.mxu0
      %2399 = vmatprep.mubr.bf16.mxu0 0
      %2400 = vmatmul.mubr.bf16.gmra.mxu0 %v2255
      %v2401 = vpop.f32.mrf.mxu0
      %v2402 = vadd.f32 0.0, %v2401
      %v2403 = vpop.f32.mrf.mxu0
      %v2404 = vpop.f32.mrf.mxu0
      %v2405 = vadd.f32 0.0, %v2404
      %v2406 = vpop.f32.mrf.mxu0
      %2407 = vmatprep.mubr.bf16.mxu0 0
      %2408 = vmatmul.mubr.bf16.gmra.mxu0 %v2258
      %v2409 = vpop.f32.mrf.mxu0
      %v2410 = vadd.f32 0.0, %v2409
      %v2411 = vpop.f32.mrf.mxu0
      %v2412 = vpop.f32.mrf.mxu0
      %v2413 = vadd.f32 0.0, %v2412
      %v2414 = vpop.f32.mrf.mxu0
      %2415 = vmatprep.mubr.bf16.mxu0 0
      %2416 = vmatmul.mubr.bf16.gmra.mxu0 %v2261
      %v2417 = vpop.f32.mrf.mxu0
      %v2418 = vadd.f32 0.0, %v2417
      %v2419 = vpop.f32.mrf.mxu0
      %v2420 = vpop.f32.mrf.mxu0
      %v2421 = vadd.f32 0.0, %v2420
      %v2422 = vpop.f32.mrf.mxu0
      %2423 = vdwg.mxu0
      %v2424 = vadd.f32 %v2101, %v2298
      %v2425 = vadd.f32 %v2102, %v2301
      %v2426 = vadd.f32 %v2103, %v2306
      %v2427 = vadd.f32 %v2104, %v2309
      %v2428 = vadd.f32 %v2105, %v2314
      %v2429 = vadd.f32 %v2106, %v2317
      %v2430 = vadd.f32 %v2107, %v2322
      %v2431 = vadd.f32 %v2108, %v2325
      %v2432 = vadd.f32 %v2109, %v2330
      %v2433 = vadd.f32 %v2110, %v2333
      %v2434 = vadd.f32 %v2111, %v2338
      %v2435 = vadd.f32 %v2112, %v2341
      %v2436 = vadd.f32 %v2113, %v2346
      %v2437 = vadd.f32 %v2114, %v2349
      %v2438 = vadd.f32 %v2115, %v2354
      %v2439 = vadd.f32 %v2116, %v2357
      %v2440 = vadd.f32 %v2117, %v2362
      %v2441 = vadd.f32 %v2118, %v2365
      %v2442 = vadd.f32 %v2119, %v2370
      %v2443 = vadd.f32 %v2120, %v2373
      %v2444 = vadd.f32 %v2121, %v2378
      %v2445 = vadd.f32 %v2122, %v2381
      %v2446 = vadd.f32 %v2123, %v2386
      %v2447 = vadd.f32 %v2124, %v2389
      %v2448 = vadd.f32 %v2125, %v2394
      %v2449 = vadd.f32 %v2126, %v2397
      %v2450 = vadd.f32 %v2127, %v2402
      %v2451 = vadd.f32 %v2128, %v2405
      %v2452 = vadd.f32 %v2129, %v2410
      %v2453 = vadd.f32 %v2130, %v2413
      %v2454 = vadd.f32 %v2131, %v2418
      %v2455 = vadd.f32 %v2132, %v2421
      %v2456 = vld [vmem:[%s2133 + $0x1] sm:$0xff]
      %v2457 = vld [vmem:[%s2133 + $0x9] sm:$0xff]
      %v2458 = vld [vmem:[%s2133 + $0x19] sm:$0xff]
      %v2459 = vld [vmem:[%s2133 + $0x21] sm:$0xff]
      %v2460 = vld [vmem:[%s2133 + $0x31] sm:$0xff]
      %v2461 = vld [vmem:[%s2133 + $0x39] sm:$0xff]
      %v2462 = vld [vmem:[%s2133 + $0x49] sm:$0xff]
      %v2463 = vld [vmem:[%s2133 + $0x51] sm:$0xff]
      %v2464 = vld [vmem:[%s2133 + $0x61] sm:$0xff]
      %v2465 = vld [vmem:[%s2133 + $0x69] sm:$0xff]
      %v2466 = vld [vmem:[%s2133 + $0x79] sm:$0xff]
      %v2467 = vld [vmem:[%s2133 + $0x81] sm:$0xff]
      %v2468 = vld [vmem:[%s2133 + $0x91] sm:$0xff]
      %v2469 = vld [vmem:[%s2133 + $0x99] sm:$0xff]
      %v2470 = vld [vmem:[%s2133 + $0xa9] sm:$0xff]
      %v2471 = vld [vmem:[%s2133 + $0xb1] sm:$0xff]
      %v2472 = vld [vmem:[%s2133 + $0xc1] sm:$0xff]
      %v2473 = vld [vmem:[%s2133 + $0xc9] sm:$0xff]
      %v2474 = vld [vmem:[%s2133 + $0xd9] sm:$0xff]
      %v2475 = vld [vmem:[%s2133 + $0xe1] sm:$0xff]
      %v2476 = vld [vmem:[%s2133 + $0xf1] sm:$0xff]
      %v2477 = vld [vmem:[%s2133 + $0xf9] sm:$0xff]
      %v2478 = vld [vmem:[%s2133 + $0x109] sm:$0xff]
      %v2479 = vld [vmem:[%s2133 + $0x111] sm:$0xff]
      %v2480 = vld [vmem:[%s2133 + $0x121] sm:$0xff]
      %v2481 = vld [vmem:[%s2133 + $0x129] sm:$0xff]
      %v2482 = vld [vmem:[%s2133 + $0x139] sm:$0xff]
      %v2483 = vld [vmem:[%s2133 + $0x141] sm:$0xff]
      %v2484 = vld [vmem:[%s2133 + $0x151] sm:$0xff]
      %v2485 = vld [vmem:[%s2133 + $0x159] sm:$0xff]
      %v2486 = vld [vmem:[%s2133 + $0x169] sm:$0xff]
      %v2487 = vld [vmem:[%s2133 + $0x171] sm:$0xff]
      %v2488 = vpack.c.bf16 %v2457, %v2456
      %v2489 = vpack.c.bf16 %v2459, %v2458
      %v2490 = vpack.c.bf16 %v2461, %v2460
      %v2491 = vpack.c.bf16 %v2463, %v2462
      %v2492 = vpack.c.bf16 %v2465, %v2464
      %v2493 = vpack.c.bf16 %v2467, %v2466
      %v2494 = vpack.c.bf16 %v2469, %v2468
      %v2495 = vpack.c.bf16 %v2471, %v2470
      %v2496 = vpack.c.bf16 %v2473, %v2472
      %v2497 = vpack.c.bf16 %v2475, %v2474
      %v2498 = vpack.c.bf16 %v2477, %v2476
      %v2499 = vpack.c.bf16 %v2479, %v2478
      %v2500 = vpack.c.bf16 %v2481, %v2480
      %v2501 = vpack.c.bf16 %v2483, %v2482
      %v2502 = vpack.c.bf16 %v2485, %v2484
      %v2503 = vpack.c.bf16 %v2487, %v2486
      %s2504 = scalar_lea.vmem %s1, 224
      %v2505 = vld [vmem:[%s2504] sm:$0xf]
      %v2506 = vld [vmem:[%s2504 + $0x4] sm:$0xf]
      %v2507 = vld [vmem:[%s2504 + $0x8] sm:$0xf]
      %v2508 = vld [vmem:[%s2504 + $0xc] sm:$0xf]
      %v2509 = vld [vmem:[%s2504 + $0x10] sm:$0xf]
      %v2510 = vld [vmem:[%s2504 + $0x14] sm:$0xf]
      %v2511 = vld [vmem:[%s2504 + $0x18] sm:$0xf]
      %v2512 = vld [vmem:[%s2504 + $0x1c] sm:$0xf]
      %v2521 = vunpack.c.l.b16 %v2505
      %v2522 = vunpack.c.l.b16 %v2506
      %v2523 = vunpack.c.l.b16 %v2507
      %v2524 = vunpack.c.l.b16 %v2508
      %v2525 = vunpack.c.l.b16 %v2509
      %v2526 = vunpack.c.l.b16 %v2510
      %v2527 = vunpack.c.l.b16 %v2511
      %v2528 = vunpack.c.l.b16 %v2512
      %v2529 = vpack.c.b16 %v2522, %v2521
      %v2530 = vpack.c.b16 %v2524, %v2523
      %v2531 = vpack.c.b16 %v2526, %v2525
      %v2532 = vpack.c.b16 %v2528, %v2527
      %v2538 = vsel %vm145, %v2488, 0
      %v2541 = vsel %vm145, %v2489, 0
      %v2544 = vsel %vm145, %v2490, 0
      %v2547 = vsel %vm145, %v2491, 0
      %v2550 = vsel %vm145, %v2492, 0
      %v2553 = vsel %vm145, %v2493, 0
      %v2556 = vsel %vm145, %v2494, 0
      %v2559 = vsel %vm145, %v2495, 0
      %v2562 = vsel %vm145, %v2496, 0
      %v2565 = vsel %vm145, %v2497, 0
      %v2568 = vsel %vm145, %v2498, 0
      %v2571 = vsel %vm145, %v2499, 0
      %v2574 = vsel %vm145, %v2500, 0
      %v2577 = vsel %vm145, %v2501, 0
      %v2580 = vsel %vm145, %v2502, 0
      %v2583 = vsel %vm145, %v2503, 0
      %2585 = vmatprep.subr.bf16.mxu0 0
      %2586 = vmatpush1.bf16.msra.mxu0 0
      %2587 = vmatprep.subr.bf16.mxu0 0
      %2588 = vmatpush1.bf16.msra.mxu0 0
      %2589 = vmatprep.subr.bf16.mxu0 0
      %2590 = vmatpush1.bf16.msra.mxu0 0
      %2591 = vmatprep.subr.bf16.mxu0 0
      %2592 = vmatpush1.bf16.msra.mxu0 0
      %2593 = vmatprep.subr.bf16.mxu0 0
      %2594 = vmatpush1.bf16.msra.mxu0 %v2532
      %2595 = vmatprep.subr.bf16.mxu0 0
      %2596 = vmatpush1.bf16.msra.mxu0 %v2531
      %2597 = vmatprep.subr.bf16.mxu0 0
      %2598 = vmatpush1.bf16.msra.mxu0 %v2530
      %2599 = vmatprep.subr.bf16.mxu0 0
      %2600 = vmatpush1.bf16.msra.mxu0 %v2529
      %2601 = vmatprep.subr.bf16.mxu0 0
      %2602 = vmatpush2.bf16.msra.mxu0 0
      %2603 = vmatprep.subr.bf16.mxu0 0
      %2604 = vmatpush2.bf16.msra.mxu0 0
      %2605 = vmatprep.subr.bf16.mxu0 0
      %2606 = vmatpush2.bf16.msra.mxu0 0
      %2607 = vmatprep.subr.bf16.mxu0 0
      %2608 = vmatpush2.bf16.msra.mxu0 0
      %2609 = vmatprep.subr.bf16.mxu0 0
      %2610 = vmatpush2.bf16.msra.mxu0 0
      %2611 = vmatprep.subr.bf16.mxu0 0
      %2612 = vmatpush2.bf16.msra.mxu0 0
      %2613 = vmatprep.subr.bf16.mxu0 0
      %2614 = vmatpush2.bf16.msra.mxu0 0
      %2615 = vmatprep.subr.bf16.mxu0 0
      %2616 = vmatpush2.bf16.msra.mxu0 0
      %2617 = vmatprep.mubr.bf16.mxu0 0
      %2618 = vmatmul.mubr.bf16.gmra.mxu0 %v2538
      %v2619 = vpop.f32.mrf.mxu0
      %v2620 = vadd.f32 0.0, %v2619
      %v2621 = vpop.f32.mrf.mxu0
      %v2622 = vpop.f32.mrf.mxu0
      %v2623 = vadd.f32 0.0, %v2622
      %v2624 = vpop.f32.mrf.mxu0
      %2625 = vmatprep.mubr.bf16.mxu0 0
      %2626 = vmatmul.mubr.bf16.gmra.mxu0 %v2541
      %v2627 = vpop.f32.mrf.mxu0
      %v2628 = vadd.f32 0.0, %v2627
      %v2629 = vpop.f32.mrf.mxu0
      %v2630 = vpop.f32.mrf.mxu0
      %v2631 = vadd.f32 0.0, %v2630
      %v2632 = vpop.f32.mrf.mxu0
      %2633 = vmatprep.mubr.bf16.mxu0 0
      %2634 = vmatmul.mubr.bf16.gmra.mxu0 %v2544
      %v2635 = vpop.f32.mrf.mxu0
      %v2636 = vadd.f32 0.0, %v2635
      %v2637 = vpop.f32.mrf.mxu0
      %v2638 = vpop.f32.mrf.mxu0
      %v2639 = vadd.f32 0.0, %v2638
      %v2640 = vpop.f32.mrf.mxu0
      %2641 = vmatprep.mubr.bf16.mxu0 0
      %2642 = vmatmul.mubr.bf16.gmra.mxu0 %v2547
      %v2643 = vpop.f32.mrf.mxu0
      %v2644 = vadd.f32 0.0, %v2643
      %v2645 = vpop.f32.mrf.mxu0
      %v2646 = vpop.f32.mrf.mxu0
      %v2647 = vadd.f32 0.0, %v2646
      %v2648 = vpop.f32.mrf.mxu0
      %2649 = vmatprep.mubr.bf16.mxu0 0
      %2650 = vmatmul.mubr.bf16.gmra.mxu0 %v2550
      %v2651 = vpop.f32.mrf.mxu0
      %v2652 = vadd.f32 0.0, %v2651
      %v2653 = vpop.f32.mrf.mxu0
      %v2654 = vpop.f32.mrf.mxu0
      %v2655 = vadd.f32 0.0, %v2654
      %v2656 = vpop.f32.mrf.mxu0
      %2657 = vmatprep.mubr.bf16.mxu0 0
      %2658 = vmatmul.mubr.bf16.gmra.mxu0 %v2553
      %v2659 = vpop.f32.mrf.mxu0
      %v2660 = vadd.f32 0.0, %v2659
      %v2661 = vpop.f32.mrf.mxu0
      %v2662 = vpop.f32.mrf.mxu0
      %v2663 = vadd.f32 0.0, %v2662
      %v2664 = vpop.f32.mrf.mxu0
      %2665 = vmatprep.mubr.bf16.mxu0 0
      %2666 = vmatmul.mubr.bf16.gmra.mxu0 %v2556
      %v2667 = vpop.f32.mrf.mxu0
      %v2668 = vadd.f32 0.0, %v2667
      %v2669 = vpop.f32.mrf.mxu0
      %v2670 = vpop.f32.mrf.mxu0
      %v2671 = vadd.f32 0.0, %v2670
      %v2672 = vpop.f32.mrf.mxu0
      %2673 = vmatprep.mubr.bf16.mxu0 0
      %2674 = vmatmul.mubr.bf16.gmra.mxu0 %v2559
      %v2675 = vpop.f32.mrf.mxu0
      %v2676 = vadd.f32 0.0, %v2675
      %v2677 = vpop.f32.mrf.mxu0
      %v2678 = vpop.f32.mrf.mxu0
      %v2679 = vadd.f32 0.0, %v2678
      %v2680 = vpop.f32.mrf.mxu0
      %2681 = vmatprep.mubr.bf16.mxu0 0
      %2682 = vmatmul.mubr.bf16.gmra.mxu0 %v2562
      %v2683 = vpop.f32.mrf.mxu0
      %v2684 = vadd.f32 0.0, %v2683
      %v2685 = vpop.f32.mrf.mxu0
      %v2686 = vpop.f32.mrf.mxu0
      %v2687 = vadd.f32 0.0, %v2686
      %v2688 = vpop.f32.mrf.mxu0
      %2689 = vmatprep.mubr.bf16.mxu0 0
      %2690 = vmatmul.mubr.bf16.gmra.mxu0 %v2565
      %v2691 = vpop.f32.mrf.mxu0
      %v2692 = vadd.f32 0.0, %v2691
      %v2693 = vpop.f32.mrf.mxu0
      %v2694 = vpop.f32.mrf.mxu0
      %v2695 = vadd.f32 0.0, %v2694
      %v2696 = vpop.f32.mrf.mxu0
      %2697 = vmatprep.mubr.bf16.mxu0 0
      %2698 = vmatmul.mubr.bf16.gmra.mxu0 %v2568
      %v2699 = vpop.f32.mrf.mxu0
      %v2700 = vadd.f32 0.0, %v2699
      %v2701 = vpop.f32.mrf.mxu0
      %v2702 = vpop.f32.mrf.mxu0
      %v2703 = vadd.f32 0.0, %v2702
      %v2704 = vpop.f32.mrf.mxu0
      %2705 = vmatprep.mubr.bf16.mxu0 0
      %2706 = vmatmul.mubr.bf16.gmra.mxu0 %v2571
      %v2707 = vpop.f32.mrf.mxu0
      %v2708 = vadd.f32 0.0, %v2707
      %v2709 = vpop.f32.mrf.mxu0
      %v2710 = vpop.f32.mrf.mxu0
      %v2711 = vadd.f32 0.0, %v2710
      %v2712 = vpop.f32.mrf.mxu0
      %2713 = vmatprep.mubr.bf16.mxu0 0
      %2714 = vmatmul.mubr.bf16.gmra.mxu0 %v2574
      %v2715 = vpop.f32.mrf.mxu0
      %v2716 = vadd.f32 0.0, %v2715
      %v2717 = vpop.f32.mrf.mxu0
      %v2718 = vpop.f32.mrf.mxu0
      %v2719 = vadd.f32 0.0, %v2718
      %v2720 = vpop.f32.mrf.mxu0
      %2721 = vmatprep.mubr.bf16.mxu0 0
      %2722 = vmatmul.mubr.bf16.gmra.mxu0 %v2577
      %v2723 = vpop.f32.mrf.mxu0
      %v2724 = vadd.f32 0.0, %v2723
      %v2725 = vpop.f32.mrf.mxu0
      %v2726 = vpop.f32.mrf.mxu0
      %v2727 = vadd.f32 0.0, %v2726
      %v2728 = vpop.f32.mrf.mxu0
      %2729 = vmatprep.mubr.bf16.mxu0 0
      %2730 = vmatmul.mubr.bf16.gmra.mxu0 %v2580
      %v2731 = vpop.f32.mrf.mxu0
      %v2732 = vadd.f32 0.0, %v2731
      %v2733 = vpop.f32.mrf.mxu0
      %v2734 = vpop.f32.mrf.mxu0
      %v2735 = vadd.f32 0.0, %v2734
      %v2736 = vpop.f32.mrf.mxu0
      %2737 = vmatprep.mubr.bf16.mxu0 0
      %2738 = vmatmul.mubr.bf16.gmra.mxu0 %v2583
      %v2739 = vpop.f32.mrf.mxu0
      %v2740 = vadd.f32 0.0, %v2739
      %v2741 = vpop.f32.mrf.mxu0
      %v2742 = vpop.f32.mrf.mxu0
      %v2743 = vadd.f32 0.0, %v2742
      %v2744 = vpop.f32.mrf.mxu0
      %2745 = vdwg.mxu0
      %v2746 = vadd.f32 %v2424, %v2620
      %v2747 = vadd.f32 %v2425, %v2623
      %v2748 = vadd.f32 %v2426, %v2628
      %v2749 = vadd.f32 %v2427, %v2631
      %v2750 = vadd.f32 %v2428, %v2636
      %v2751 = vadd.f32 %v2429, %v2639
      %v2752 = vadd.f32 %v2430, %v2644
      %v2753 = vadd.f32 %v2431, %v2647
      %v2754 = vadd.f32 %v2432, %v2652
      %v2755 = vadd.f32 %v2433, %v2655
      %v2756 = vadd.f32 %v2434, %v2660
      %v2757 = vadd.f32 %v2435, %v2663
      %v2758 = vadd.f32 %v2436, %v2668
      %v2759 = vadd.f32 %v2437, %v2671
      %v2760 = vadd.f32 %v2438, %v2676
      %v2761 = vadd.f32 %v2439, %v2679
      %v2762 = vadd.f32 %v2440, %v2684
      %v2763 = vadd.f32 %v2441, %v2687
      %v2764 = vadd.f32 %v2442, %v2692
      %v2765 = vadd.f32 %v2443, %v2695
      %v2766 = vadd.f32 %v2444, %v2700
      %v2767 = vadd.f32 %v2445, %v2703
      %v2768 = vadd.f32 %v2446, %v2708
      %v2769 = vadd.f32 %v2447, %v2711
      %v2770 = vadd.f32 %v2448, %v2716
      %v2771 = vadd.f32 %v2449, %v2719
      %v2772 = vadd.f32 %v2450, %v2724
      %v2773 = vadd.f32 %v2451, %v2727
      %v2774 = vadd.f32 %v2452, %v2732
      %v2775 = vadd.f32 %v2453, %v2735
      %v2776 = vadd.f32 %v2454, %v2740
      %v2777 = vadd.f32 %v2455, %v2743
      %v2778 = vld [vmem:[%s2133 + $0x2] sm:$0xff]
      %v2779 = vld [vmem:[%s2133 + $0xa] sm:$0xff]
      %v2780 = vld [vmem:[%s2133 + $0x1a] sm:$0xff]
      %v2781 = vld [vmem:[%s2133 + $0x22] sm:$0xff]
      %v2782 = vld [vmem:[%s2133 + $0x32] sm:$0xff]
      %v2783 = vld [vmem:[%s2133 + $0x3a] sm:$0xff]
      %v2784 = vld [vmem:[%s2133 + $0x4a] sm:$0xff]
      %v2785 = vld [vmem:[%s2133 + $0x52] sm:$0xff]
      %v2786 = vld [vmem:[%s2133 + $0x62] sm:$0xff]
      %v2787 = vld [vmem:[%s2133 + $0x6a] sm:$0xff]
      %v2788 = vld [vmem:[%s2133 + $0x7a] sm:$0xff]
      %v2789 = vld [vmem:[%s2133 + $0x82] sm:$0xff]
      %v2790 = vld [vmem:[%s2133 + $0x92] sm:$0xff]
      %v2791 = vld [vmem:[%s2133 + $0x9a] sm:$0xff]
      %v2792 = vld [vmem:[%s2133 + $0xaa] sm:$0xff]
      %v2793 = vld [vmem:[%s2133 + $0xb2] sm:$0xff]
      %v2794 = vld [vmem:[%s2133 + $0xc2] sm:$0xff]
      %v2795 = vld [vmem:[%s2133 + $0xca] sm:$0xff]
      %v2796 = vld [vmem:[%s2133 + $0xda] sm:$0xff]
      %v2797 = vld [vmem:[%s2133 + $0xe2] sm:$0xff]
      %v2798 = vld [vmem:[%s2133 + $0xf2] sm:$0xff]
      %v2799 = vld [vmem:[%s2133 + $0xfa] sm:$0xff]
      %v2800 = vld [vmem:[%s2133 + $0x10a] sm:$0xff]
      %v2801 = vld [vmem:[%s2133 + $0x112] sm:$0xff]
      %v2802 = vld [vmem:[%s2133 + $0x122] sm:$0xff]
      %v2803 = vld [vmem:[%s2133 + $0x12a] sm:$0xff]
      %v2804 = vld [vmem:[%s2133 + $0x13a] sm:$0xff]
      %v2805 = vld [vmem:[%s2133 + $0x142] sm:$0xff]
      %v2806 = vld [vmem:[%s2133 + $0x152] sm:$0xff]
      %v2807 = vld [vmem:[%s2133 + $0x15a] sm:$0xff]
      %v2808 = vld [vmem:[%s2133 + $0x16a] sm:$0xff]
      %v2809 = vld [vmem:[%s2133 + $0x172] sm:$0xff]
      %v2810 = vpack.c.bf16 %v2779, %v2778
      %v2811 = vpack.c.bf16 %v2781, %v2780
      %v2812 = vpack.c.bf16 %v2783, %v2782
      %v2813 = vpack.c.bf16 %v2785, %v2784
      %v2814 = vpack.c.bf16 %v2787, %v2786
      %v2815 = vpack.c.bf16 %v2789, %v2788
      %v2816 = vpack.c.bf16 %v2791, %v2790
      %v2817 = vpack.c.bf16 %v2793, %v2792
      %v2818 = vpack.c.bf16 %v2795, %v2794
      %v2819 = vpack.c.bf16 %v2797, %v2796
      %v2820 = vpack.c.bf16 %v2799, %v2798
      %v2821 = vpack.c.bf16 %v2801, %v2800
      %v2822 = vpack.c.bf16 %v2803, %v2802
      %v2823 = vpack.c.bf16 %v2805, %v2804
      %v2824 = vpack.c.bf16 %v2807, %v2806
      %v2825 = vpack.c.bf16 %v2809, %v2808
      %s2826 = scalar_lea.vmem %s1, 256
      %v2827 = vld [vmem:[%s2826] sm:$0xf]
      %v2828 = vld [vmem:[%s2826 + $0x4] sm:$0xf]
      %v2829 = vld [vmem:[%s2826 + $0x8] sm:$0xf]
      %v2830 = vld [vmem:[%s2826 + $0xc] sm:$0xf]
      %v2831 = vld [vmem:[%s2826 + $0x10] sm:$0xf]
      %v2832 = vld [vmem:[%s2826 + $0x14] sm:$0xf]
      %v2833 = vld [vmem:[%s2826 + $0x18] sm:$0xf]
      %v2834 = vld [vmem:[%s2826 + $0x1c] sm:$0xf]
      %v2843 = vunpack.c.l.b16 %v2827
      %v2844 = vunpack.c.l.b16 %v2828
      %v2845 = vunpack.c.l.b16 %v2829
      %v2846 = vunpack.c.l.b16 %v2830
      %v2847 = vunpack.c.l.b16 %v2831
      %v2848 = vunpack.c.l.b16 %v2832
      %v2849 = vunpack.c.l.b16 %v2833
      %v2850 = vunpack.c.l.b16 %v2834
      %v2851 = vpack.c.b16 %v2844, %v2843
      %v2852 = vpack.c.b16 %v2846, %v2845
      %v2853 = vpack.c.b16 %v2848, %v2847
      %v2854 = vpack.c.b16 %v2850, %v2849
      %v2860 = vsel %vm145, %v2810, 0
      %v2863 = vsel %vm145, %v2811, 0
      %v2866 = vsel %vm145, %v2812, 0
      %v2869 = vsel %vm145, %v2813, 0
      %v2872 = vsel %vm145, %v2814, 0
      %v2875 = vsel %vm145, %v2815, 0
      %v2878 = vsel %vm145, %v2816, 0
      %v2881 = vsel %vm145, %v2817, 0
      %v2884 = vsel %vm145, %v2818, 0
      %v2887 = vsel %vm145, %v2819, 0
      %v2890 = vsel %vm145, %v2820, 0
      %v2893 = vsel %vm145, %v2821, 0
      %v2896 = vsel %vm145, %v2822, 0
      %v2899 = vsel %vm145, %v2823, 0
      %v2902 = vsel %vm145, %v2824, 0
      %v2905 = vsel %vm145, %v2825, 0
      %2907 = vmatprep.subr.bf16.mxu0 0
      %2908 = vmatpush1.bf16.msra.mxu0 0
      %2909 = vmatprep.subr.bf16.mxu0 0
      %2910 = vmatpush1.bf16.msra.mxu0 0
      %2911 = vmatprep.subr.bf16.mxu0 0
      %2912 = vmatpush1.bf16.msra.mxu0 0
      %2913 = vmatprep.subr.bf16.mxu0 0
      %2914 = vmatpush1.bf16.msra.mxu0 0
      %2915 = vmatprep.subr.bf16.mxu0 0
      %2916 = vmatpush1.bf16.msra.mxu0 %v2854
      %2917 = vmatprep.subr.bf16.mxu0 0
      %2918 = vmatpush1.bf16.msra.mxu0 %v2853
      %2919 = vmatprep.subr.bf16.mxu0 0
      %2920 = vmatpush1.bf16.msra.mxu0 %v2852
      %2921 = vmatprep.subr.bf16.mxu0 0
      %2922 = vmatpush1.bf16.msra.mxu0 %v2851
      %2923 = vmatprep.subr.bf16.mxu0 0
      %2924 = vmatpush2.bf16.msra.mxu0 0
      %2925 = vmatprep.subr.bf16.mxu0 0
      %2926 = vmatpush2.bf16.msra.mxu0 0
      %2927 = vmatprep.subr.bf16.mxu0 0
      %2928 = vmatpush2.bf16.msra.mxu0 0
      %2929 = vmatprep.subr.bf16.mxu0 0
      %2930 = vmatpush2.bf16.msra.mxu0 0
      %2931 = vmatprep.subr.bf16.mxu0 0
      %2932 = vmatpush2.bf16.msra.mxu0 0
      %2933 = vmatprep.subr.bf16.mxu0 0
      %2934 = vmatpush2.bf16.msra.mxu0 0
      %2935 = vmatprep.subr.bf16.mxu0 0
      %2936 = vmatpush2.bf16.msra.mxu0 0
      %2937 = vmatprep.subr.bf16.mxu0 0
      %2938 = vmatpush2.bf16.msra.mxu0 0
      %2939 = vmatprep.mubr.bf16.mxu0 0
      %2940 = vmatmul.mubr.bf16.gmra.mxu0 %v2860
      %v2941 = vpop.f32.mrf.mxu0
      %v2942 = vadd.f32 0.0, %v2941
      %v2943 = vpop.f32.mrf.mxu0
      %v2944 = vpop.f32.mrf.mxu0
      %v2945 = vadd.f32 0.0, %v2944
      %v2946 = vpop.f32.mrf.mxu0
      %2947 = vmatprep.mubr.bf16.mxu0 0
      %2948 = vmatmul.mubr.bf16.gmra.mxu0 %v2863
      %v2949 = vpop.f32.mrf.mxu0
      %v2950 = vadd.f32 0.0, %v2949
      %v2951 = vpop.f32.mrf.mxu0
      %v2952 = vpop.f32.mrf.mxu0
      %v2953 = vadd.f32 0.0, %v2952
      %v2954 = vpop.f32.mrf.mxu0
      %2955 = vmatprep.mubr.bf16.mxu0 0
      %2956 = vmatmul.mubr.bf16.gmra.mxu0 %v2866
      %v2957 = vpop.f32.mrf.mxu0
      %v2958 = vadd.f32 0.0, %v2957
      %v2959 = vpop.f32.mrf.mxu0
      %v2960 = vpop.f32.mrf.mxu0
      %v2961 = vadd.f32 0.0, %v2960
      %v2962 = vpop.f32.mrf.mxu0
      %2963 = vmatprep.mubr.bf16.mxu0 0
      %2964 = vmatmul.mubr.bf16.gmra.mxu0 %v2869
      %v2965 = vpop.f32.mrf.mxu0
      %v2966 = vadd.f32 0.0, %v2965
      %v2967 = vpop.f32.mrf.mxu0
      %v2968 = vpop.f32.mrf.mxu0
      %v2969 = vadd.f32 0.0, %v2968
      %v2970 = vpop.f32.mrf.mxu0
      %2971 = vmatprep.mubr.bf16.mxu0 0
      %2972 = vmatmul.mubr.bf16.gmra.mxu0 %v2872
      %v2973 = vpop.f32.mrf.mxu0
      %v2974 = vadd.f32 0.0, %v2973
      %v2975 = vpop.f32.mrf.mxu0
      %v2976 = vpop.f32.mrf.mxu0
      %v2977 = vadd.f32 0.0, %v2976
      %v2978 = vpop.f32.mrf.mxu0
      %2979 = vmatprep.mubr.bf16.mxu0 0
      %2980 = vmatmul.mubr.bf16.gmra.mxu0 %v2875
      %v2981 = vpop.f32.mrf.mxu0
      %v2982 = vadd.f32 0.0, %v2981
      %v2983 = vpop.f32.mrf.mxu0
      %v2984 = vpop.f32.mrf.mxu0
      %v2985 = vadd.f32 0.0, %v2984
      %v2986 = vpop.f32.mrf.mxu0
      %2987 = vmatprep.mubr.bf16.mxu0 0
      %2988 = vmatmul.mubr.bf16.gmra.mxu0 %v2878
      %v2989 = vpop.f32.mrf.mxu0
      %v2990 = vadd.f32 0.0, %v2989
      %v2991 = vpop.f32.mrf.mxu0
      %v2992 = vpop.f32.mrf.mxu0
      %v2993 = vadd.f32 0.0, %v2992
      %v2994 = vpop.f32.mrf.mxu0
      %2995 = vmatprep.mubr.bf16.mxu0 0
      %2996 = vmatmul.mubr.bf16.gmra.mxu0 %v2881
      %v2997 = vpop.f32.mrf.mxu0
      %v2998 = vadd.f32 0.0, %v2997
      %v2999 = vpop.f32.mrf.mxu0
      %v3000 = vpop.f32.mrf.mxu0
      %v3001 = vadd.f32 0.0, %v3000
      %v3002 = vpop.f32.mrf.mxu0
      %3003 = vmatprep.mubr.bf16.mxu0 0
      %3004 = vmatmul.mubr.bf16.gmra.mxu0 %v2884
      %v3005 = vpop.f32.mrf.mxu0
      %v3006 = vadd.f32 0.0, %v3005
      %v3007 = vpop.f32.mrf.mxu0
      %v3008 = vpop.f32.mrf.mxu0
      %v3009 = vadd.f32 0.0, %v3008
      %v3010 = vpop.f32.mrf.mxu0
      %3011 = vmatprep.mubr.bf16.mxu0 0
      %3012 = vmatmul.mubr.bf16.gmra.mxu0 %v2887
      %v3013 = vpop.f32.mrf.mxu0
      %v3014 = vadd.f32 0.0, %v3013
      %v3015 = vpop.f32.mrf.mxu0
      %v3016 = vpop.f32.mrf.mxu0
      %v3017 = vadd.f32 0.0, %v3016
      %v3018 = vpop.f32.mrf.mxu0
      %3019 = vmatprep.mubr.bf16.mxu0 0
      %3020 = vmatmul.mubr.bf16.gmra.mxu0 %v2890
      %v3021 = vpop.f32.mrf.mxu0
      %v3022 = vadd.f32 0.0, %v3021
      %v3023 = vpop.f32.mrf.mxu0
      %v3024 = vpop.f32.mrf.mxu0
      %v3025 = vadd.f32 0.0, %v3024
      %v3026 = vpop.f32.mrf.mxu0
      %3027 = vmatprep.mubr.bf16.mxu0 0
      %3028 = vmatmul.mubr.bf16.gmra.mxu0 %v2893
      %v3029 = vpop.f32.mrf.mxu0
      %v3030 = vadd.f32 0.0, %v3029
      %v3031 = vpop.f32.mrf.mxu0
      %v3032 = vpop.f32.mrf.mxu0
      %v3033 = vadd.f32 0.0, %v3032
      %v3034 = vpop.f32.mrf.mxu0
      %3035 = vmatprep.mubr.bf16.mxu0 0
      %3036 = vmatmul.mubr.bf16.gmra.mxu0 %v2896
      %v3037 = vpop.f32.mrf.mxu0
      %v3038 = vadd.f32 0.0, %v3037
      %v3039 = vpop.f32.mrf.mxu0
      %v3040 = vpop.f32.mrf.mxu0
      %v3041 = vadd.f32 0.0, %v3040
      %v3042 = vpop.f32.mrf.mxu0
      %3043 = vmatprep.mubr.bf16.mxu0 0
      %3044 = vmatmul.mubr.bf16.gmra.mxu0 %v2899
      %v3045 = vpop.f32.mrf.mxu0
      %v3046 = vadd.f32 0.0, %v3045
      %v3047 = vpop.f32.mrf.mxu0
      %v3048 = vpop.f32.mrf.mxu0
      %v3049 = vadd.f32 0.0, %v3048
      %v3050 = vpop.f32.mrf.mxu0
      %3051 = vmatprep.mubr.bf16.mxu0 0
      %3052 = vmatmul.mubr.bf16.gmra.mxu0 %v2902
      %v3053 = vpop.f32.mrf.mxu0
      %v3054 = vadd.f32 0.0, %v3053
      %v3055 = vpop.f32.mrf.mxu0
      %v3056 = vpop.f32.mrf.mxu0
      %v3057 = vadd.f32 0.0, %v3056
      %v3058 = vpop.f32.mrf.mxu0
      %3059 = vmatprep.mubr.bf16.mxu0 0
      %3060 = vmatmul.mubr.bf16.gmra.mxu0 %v2905
      %v3061 = vpop.f32.mrf.mxu0
      %v3062 = vadd.f32 0.0, %v3061
      %v3063 = vpop.f32.mrf.mxu0
      %v3064 = vpop.f32.mrf.mxu0
      %v3065 = vadd.f32 0.0, %v3064
      %v3066 = vpop.f32.mrf.mxu0
      %3067 = vdwg.mxu0
      %v3068 = vadd.f32 %v2746, %v2942
      %v3069 = vadd.f32 %v2747, %v2945
      %v3070 = vadd.f32 %v2748, %v2950
      %v3071 = vadd.f32 %v2749, %v2953
      %v3072 = vadd.f32 %v2750, %v2958
      %v3073 = vadd.f32 %v2751, %v2961
      %v3074 = vadd.f32 %v2752, %v2966
      %v3075 = vadd.f32 %v2753, %v2969
      %v3076 = vadd.f32 %v2754, %v2974
      %v3077 = vadd.f32 %v2755, %v2977
      %v3078 = vadd.f32 %v2756, %v2982
      %v3079 = vadd.f32 %v2757, %v2985
      %v3080 = vadd.f32 %v2758, %v2990
      %v3081 = vadd.f32 %v2759, %v2993
      %v3082 = vadd.f32 %v2760, %v2998
      %v3083 = vadd.f32 %v2761, %v3001
      %v3084 = vadd.f32 %v2762, %v3006
      %v3085 = vadd.f32 %v2763, %v3009
      %v3086 = vadd.f32 %v2764, %v3014
      %v3087 = vadd.f32 %v2765, %v3017
      %v3088 = vadd.f32 %v2766, %v3022
      %v3089 = vadd.f32 %v2767, %v3025
      %v3090 = vadd.f32 %v2768, %v3030
      %v3091 = vadd.f32 %v2769, %v3033
      %v3092 = vadd.f32 %v2770, %v3038
      %v3093 = vadd.f32 %v2771, %v3041
      %v3094 = vadd.f32 %v2772, %v3046
      %v3095 = vadd.f32 %v2773, %v3049
      %v3096 = vadd.f32 %v2774, %v3054
      %v3097 = vadd.f32 %v2775, %v3057
      %v3098 = vadd.f32 %v2776, %v3062
      %v3099 = vadd.f32 %v2777, %v3065
      %v3100 = vmul.f32 %v3068, %v3068
      %v3101 = vmul.f32 %v3069, %v3069
      %v3102 = vmul.f32 %v3070, %v3070
      %v3103 = vmul.f32 %v3071, %v3071
      %v3104 = vmul.f32 %v3072, %v3072
      %v3105 = vmul.f32 %v3073, %v3073
      %v3106 = vmul.f32 %v3074, %v3074
      %v3107 = vmul.f32 %v3075, %v3075
      %v3108 = vmul.f32 %v3076, %v3076
      %v3109 = vmul.f32 %v3077, %v3077
      %v3110 = vmul.f32 %v3078, %v3078
      %v3111 = vmul.f32 %v3079, %v3079
      %v3112 = vmul.f32 %v3080, %v3080
      %v3113 = vmul.f32 %v3081, %v3081
      %v3114 = vmul.f32 %v3082, %v3082
      %v3115 = vmul.f32 %v3083, %v3083
      %v3116 = vmul.f32 %v3084, %v3084
      %v3117 = vmul.f32 %v3085, %v3085
      %v3118 = vmul.f32 %v3086, %v3086
      %v3119 = vmul.f32 %v3087, %v3087
      %v3120 = vmul.f32 %v3088, %v3088
      %v3121 = vmul.f32 %v3089, %v3089
      %v3122 = vmul.f32 %v3090, %v3090
      %v3123 = vmul.f32 %v3091, %v3091
      %v3124 = vmul.f32 %v3092, %v3092
      %v3125 = vmul.f32 %v3093, %v3093
      %v3126 = vmul.f32 %v3094, %v3094
      %v3127 = vmul.f32 %v3095, %v3095
      %v3128 = vmul.f32 %v3096, %v3096
      %v3129 = vmul.f32 %v3097, %v3097
      %v3130 = vmul.f32 %v3098, %v3098
      %v3131 = vmul.f32 %v3099, %v3099
      %3132 = vadd.xlane.f32.xlu0 %v3100
      %v3133 = vpop.xlane.xlu0 %3132
      %3134 = vadd.xlane.f32.xlu0 %v3101
      %v3135 = vpop.xlane.xlu0 %3134
      %3136 = vadd.xlane.f32.xlu0 %v3102
      %v3137 = vpop.xlane.xlu0 %3136
      %3138 = vadd.xlane.f32.xlu0 %v3103
      %v3139 = vpop.xlane.xlu0 %3138
      %3140 = vadd.xlane.f32.xlu0 %v3104
      %v3141 = vpop.xlane.xlu0 %3140
      %3142 = vadd.xlane.f32.xlu0 %v3105
      %v3143 = vpop.xlane.xlu0 %3142
      %3144 = vadd.xlane.f32.xlu0 %v3106
      %v3145 = vpop.xlane.xlu0 %3144
      %3146 = vadd.xlane.f32.xlu0 %v3107
      %v3147 = vpop.xlane.xlu0 %3146
      %3148 = vadd.xlane.f32.xlu0 %v3108
      %v3149 = vpop.xlane.xlu0 %3148
      %3150 = vadd.xlane.f32.xlu0 %v3109
      %v3151 = vpop.xlane.xlu0 %3150
      %3152 = vadd.xlane.f32.xlu0 %v3110
      %v3153 = vpop.xlane.xlu0 %3152
      %3154 = vadd.xlane.f32.xlu0 %v3111
      %v3155 = vpop.xlane.xlu0 %3154
      %3156 = vadd.xlane.f32.xlu0 %v3112
      %v3157 = vpop.xlane.xlu0 %3156
      %3158 = vadd.xlane.f32.xlu0 %v3113
      %v3159 = vpop.xlane.xlu0 %3158
      %3160 = vadd.xlane.f32.xlu0 %v3114
      %v3161 = vpop.xlane.xlu0 %3160
      %3162 = vadd.xlane.f32.xlu0 %v3115
      %v3163 = vpop.xlane.xlu0 %3162
      %3164 = vadd.xlane.f32.xlu0 %v3116
      %v3165 = vpop.xlane.xlu0 %3164
      %3166 = vadd.xlane.f32.xlu0 %v3117
      %v3167 = vpop.xlane.xlu0 %3166
      %3168 = vadd.xlane.f32.xlu0 %v3118
      %v3169 = vpop.xlane.xlu0 %3168
      %3170 = vadd.xlane.f32.xlu0 %v3119
      %v3171 = vpop.xlane.xlu0 %3170
      %3172 = vadd.xlane.f32.xlu0 %v3120
      %v3173 = vpop.xlane.xlu0 %3172
      %3174 = vadd.xlane.f32.xlu0 %v3121
      %v3175 = vpop.xlane.xlu0 %3174
      %3176 = vadd.xlane.f32.xlu0 %v3122
      %v3177 = vpop.xlane.xlu0 %3176
      %3178 = vadd.xlane.f32.xlu0 %v3123
      %v3179 = vpop.xlane.xlu0 %3178
      %3180 = vadd.xlane.f32.xlu0 %v3124
      %v3181 = vpop.xlane.xlu0 %3180
      %3182 = vadd.xlane.f32.xlu0 %v3125
      %v3183 = vpop.xlane.xlu0 %3182
      %3184 = vadd.xlane.f32.xlu0 %v3126
      %v3185 = vpop.xlane.xlu0 %3184
      %3186 = vadd.xlane.f32.xlu0 %v3127
      %v3187 = vpop.xlane.xlu0 %3186
      %3188 = vadd.xlane.f32.xlu0 %v3128
      %v3189 = vpop.xlane.xlu0 %3188
      %3190 = vadd.xlane.f32.xlu0 %v3129
      %v3191 = vpop.xlane.xlu0 %3190
      %3192 = vadd.xlane.f32.xlu0 %v3130
      %v3193 = vpop.xlane.xlu0 %3192
      %3194 = vadd.xlane.f32.xlu0 %v3131
      %v3195 = vpop.xlane.xlu0 %3194
      %v3196 = vmax.f32 %v3133, 1e-24
      %v3197 = vmax.f32 %v3135, 1e-24
      %v3198 = vmax.f32 %v3137, 1e-24
      %v3199 = vmax.f32 %v3139, 1e-24
      %v3200 = vmax.f32 %v3141, 1e-24
      %v3201 = vmax.f32 %v3143, 1e-24
      %v3202 = vmax.f32 %v3145, 1e-24
      %v3203 = vmax.f32 %v3147, 1e-24
      %v3204 = vmax.f32 %v3149, 1e-24
      %v3205 = vmax.f32 %v3151, 1e-24
      %v3206 = vmax.f32 %v3153, 1e-24
      %v3207 = vmax.f32 %v3155, 1e-24
      %v3208 = vmax.f32 %v3157, 1e-24
      %v3209 = vmax.f32 %v3159, 1e-24
      %v3210 = vmax.f32 %v3161, 1e-24
      %v3211 = vmax.f32 %v3163, 1e-24
      %v3212 = vmax.f32 %v3165, 1e-24
      %v3213 = vmax.f32 %v3167, 1e-24
      %v3214 = vmax.f32 %v3169, 1e-24
      %v3215 = vmax.f32 %v3171, 1e-24
      %v3216 = vmax.f32 %v3173, 1e-24
      %v3217 = vmax.f32 %v3175, 1e-24
      %v3218 = vmax.f32 %v3177, 1e-24
      %v3219 = vmax.f32 %v3179, 1e-24
      %v3220 = vmax.f32 %v3181, 1e-24
      %v3221 = vmax.f32 %v3183, 1e-24
      %v3222 = vmax.f32 %v3185, 1e-24
      %v3223 = vmax.f32 %v3187, 1e-24
      %v3224 = vmax.f32 %v3189, 1e-24
      %v3225 = vmax.f32 %v3191, 1e-24
      %v3226 = vmax.f32 %v3193, 1e-24
      %v3227 = vmax.f32 %v3195, 1e-24
      %v3228 = vrsqrt.pop %v3196
      %v3229 = vrsqrt.pop %v3197
      %v3230 = vrsqrt.pop %v3198
      %v3231 = vrsqrt.pop %v3199
      %v3232 = vrsqrt.pop %v3200
      %v3233 = vrsqrt.pop %v3201
      %v3234 = vrsqrt.pop %v3202
      %v3235 = vrsqrt.pop %v3203
      %v3236 = vrsqrt.pop %v3204
      %v3237 = vrsqrt.pop %v3205
      %v3238 = vrsqrt.pop %v3206
      %v3239 = vrsqrt.pop %v3207
      %v3240 = vrsqrt.pop %v3208
      %v3241 = vrsqrt.pop %v3209
      %v3242 = vrsqrt.pop %v3210
      %v3243 = vrsqrt.pop %v3211
      %v3244 = vrsqrt.pop %v3212
      %v3245 = vrsqrt.pop %v3213
      %v3246 = vrsqrt.pop %v3214
      %v3247 = vrsqrt.pop %v3215
      %v3248 = vrsqrt.pop %v3216
      %v3249 = vrsqrt.pop %v3217
      %v3250 = vrsqrt.pop %v3218
      %v3251 = vrsqrt.pop %v3219
      %v3252 = vrsqrt.pop %v3220
      %v3253 = vrsqrt.pop %v3221
      %v3254 = vrsqrt.pop %v3222
      %v3255 = vrsqrt.pop %v3223
      %v3256 = vrsqrt.pop %v3224
      %v3257 = vrsqrt.pop %v3225
      %v3258 = vrsqrt.pop %v3226
      %v3259 = vrsqrt.pop %v3227
      %v3260 = vmul.f32 %v3068, %v3228
      %v3261 = vmul.f32 %v3069, %v3229
      %v3262 = vmul.f32 %v3070, %v3230
      %v3263 = vmul.f32 %v3071, %v3231
      %v3264 = vmul.f32 %v3072, %v3232
      %v3265 = vmul.f32 %v3073, %v3233
      %v3266 = vmul.f32 %v3074, %v3234
      %v3267 = vmul.f32 %v3075, %v3235
      %v3268 = vmul.f32 %v3076, %v3236
      %v3269 = vmul.f32 %v3077, %v3237
      %v3270 = vmul.f32 %v3078, %v3238
      %v3271 = vmul.f32 %v3079, %v3239
      %v3272 = vmul.f32 %v3080, %v3240
      %v3273 = vmul.f32 %v3081, %v3241
      %v3274 = vmul.f32 %v3082, %v3242
      %v3275 = vmul.f32 %v3083, %v3243
      %v3276 = vmul.f32 %v3084, %v3244
      %v3277 = vmul.f32 %v3085, %v3245
      %v3278 = vmul.f32 %v3086, %v3246
      %v3279 = vmul.f32 %v3087, %v3247
      %v3280 = vmul.f32 %v3088, %v3248
      %v3281 = vmul.f32 %v3089, %v3249
      %v3282 = vmul.f32 %v3090, %v3250
      %v3283 = vmul.f32 %v3091, %v3251
      %v3284 = vmul.f32 %v3092, %v3252
      %v3285 = vmul.f32 %v3093, %v3253
      %v3286 = vmul.f32 %v3094, %v3254
      %v3287 = vmul.f32 %v3095, %v3255
      %v3288 = vmul.f32 %v3096, %v3256
      %v3289 = vmul.f32 %v3097, %v3257
      %v3290 = vmul.f32 %v3098, %v3258
      %v3291 = vmul.f32 %v3099, %v3259
      %3292 = vst [vmem:[%s143] sm:$0xff] %v3260
      %3293 = vst [vmem:[%s143 + $0x8] sm:$0xff] %v3261
      %3294 = vst [vmem:[%s143 + $0x10] sm:$0xff] %v3262
      %3295 = vst [vmem:[%s143 + $0x18] sm:$0xff] %v3263
      %3296 = vst [vmem:[%s143 + $0x20] sm:$0xff] %v3264
      %3297 = vst [vmem:[%s143 + $0x28] sm:$0xff] %v3265
      %3298 = vst [vmem:[%s143 + $0x30] sm:$0xff] %v3266
      %3299 = vst [vmem:[%s143 + $0x38] sm:$0xff] %v3267
      %3300 = vst [vmem:[%s143 + $0x40] sm:$0xff] %v3268
      %3301 = vst [vmem:[%s143 + $0x48] sm:$0xff] %v3269
      %3302 = vst [vmem:[%s143 + $0x50] sm:$0xff] %v3270
      %3303 = vst [vmem:[%s143 + $0x58] sm:$0xff] %v3271
      %3304 = vst [vmem:[%s143 + $0x60] sm:$0xff] %v3272
      %3305 = vst [vmem:[%s143 + $0x68] sm:$0xff] %v3273
      %3306 = vst [vmem:[%s143 + $0x70] sm:$0xff] %v3274
      %3307 = vst [vmem:[%s143 + $0x78] sm:$0xff] %v3275
      %3308 = vst [vmem:[%s143 + $0x80] sm:$0xff] %v3276
      %3309 = vst [vmem:[%s143 + $0x88] sm:$0xff] %v3277
      %3310 = vst [vmem:[%s143 + $0x90] sm:$0xff] %v3278
      %3311 = vst [vmem:[%s143 + $0x98] sm:$0xff] %v3279
      %3312 = vst [vmem:[%s143 + $0xa0] sm:$0xff] %v3280
      %3313 = vst [vmem:[%s143 + $0xa8] sm:$0xff] %v3281
      %3314 = vst [vmem:[%s143 + $0xb0] sm:$0xff] %v3282
      %3315 = vst [vmem:[%s143 + $0xb8] sm:$0xff] %v3283
      %3316 = vst [vmem:[%s143 + $0xc0] sm:$0xff] %v3284
      %3317 = vst [vmem:[%s143 + $0xc8] sm:$0xff] %v3285
      %3318 = vst [vmem:[%s143 + $0xd0] sm:$0xff] %v3286
      %3319 = vst [vmem:[%s143 + $0xd8] sm:$0xff] %v3287
      %3320 = vst [vmem:[%s143 + $0xe0] sm:$0xff] %v3288
      %3321 = vst [vmem:[%s143 + $0xe8] sm:$0xff] %v3289
      %3322 = vst [vmem:[%s143 + $0xf0] sm:$0xff] %v3290
      %3323 = vst [vmem:[%s143 + $0xf8] sm:$0xff] %v3291
      %p3324 = scmp.lt.s32.totalorder %s13, 1
      %s3325 = scalar_select %p3324, %s13, 1
      %s3326 = smul.addr %s3325, 32
      %s3327 = smul.addr %s3326, 8
      %s3328 = scalar_lea.vmem %s2, %s3327
      // Predicated region
      $region29: #{regressor_forward.3} parent=27 // pred_check
        %p3329 = pneg %p78
      $region30: #{regressor_forward.3} parent=27 // pred_check_branch
        %3331 = sbr.rel (%p3329) target = $region32
      $region31: #{regressor_forward.3} parent=27 // pred_region
        _
      $region32: #{regressor_forward.3} parent=27 // pred_fallthru
        _
    $region28: #{regressor_forward.3} parent=5 // pred_fallthru
      _
    %p3332 = scmp.le.s32.totalorder 2, %s8
    // Predicated region
    $region33: #{regressor_forward.3} parent=5 // pred_check
      %p3333 = pneg %p3332
    $region34: #{regressor_forward.3} parent=5 // pred_check_branch
      %3335 = sbr.rel (%p3333) target = $region36
    $region35: #{regressor_forward.3} parent=5 // pred_region
      %s3336 = ssub.s32 %s8, 2
      // Predicated region
      $region37: #{regressor_forward.3} parent=35 // pred_check
        %p3337 = pneg %p84
      $region38: #{regressor_forward.3} parent=35 // pred_check_branch
        %3339 = sbr.rel (%p3337) target = $region40
      $region39: #{regressor_forward.3} parent=35 // pred_region
        %p3340 = scmp.lt.s32.totalorder %s14, 1
        %s3341 = scalar_select %p3340, %s14, 1
        %s3342 = smul.addr %s3341, 32
        %s3343 = smul.addr %s3342, 8
        %s3344 = scalar_lea.vmem %s2, %s3343
      $region40: #{regressor_forward.3} parent=35 // pred_fallthru
        _
    $region36: #{regressor_forward.3} parent=5 // pred_fallthru
      _
  $region6: #{regressor_forward.3} parent=0 // loop_footer
    %s12 = sadd.s32 1, %s8
  $region7: #{regressor_forward.3} parent=0 // loop_footer_branch
    %7 = sbr.rel target = $region3
  $region8: #{regressor_forward.3} parent=0 // loop_exit
    _

// kernel: regressor_forward.2
$region0: #{regressor_forward.2}
  #allocation0 [shape = 'u32[]', space=smem, size = 0x4, offset = 0x4, fixed_abs, tag = 'smem constant byte address 0x4 - core index']
  #allocation1 [shape = 'u32[144,128]{1,0:T(1,128)}', space=vmem, size = 0x12000, scoped, tag = 'internal scratch']
  #allocation2 [shape = 'f32[10,10,256]{2,1,0:T(8,128)}', space=vmem, size = 0x28000, scoped, tag = 'scratch operand']
  #allocation3 [shape = 'f32[10,10,128]{2,1,0:T(8,128)}', space=vmem, size = 0x14000, scoped, tag = 'scratch operand']
  %s0 = inlined_call_operand.vmem [shape: f32[2,8,8,256], index: 0, kind: input, shape index: {}]
  %s1 = inlined_call_operand.vmem [shape: bf16[9,256,128], index: 1, kind: input, shape index: {}]
  %s2 = inlined_call_operand.vmem [shape: f32[1,128], index: 2, kind: input, shape index: {}]
  %s3 = inlined_call_operand.vmem [shape: bf16[9,128,128], index: 3, kind: input, shape index: {}]
  %s4 = inlined_call_operand.vmem [shape: f32[1,128], index: 4, kind: input, shape index: {}]
  %s5 = inlined_call_operand.vmem [shape: bf16[4,4,128,64], index: 5, kind: input, shape index: {}]
  %s6 = inlined_call_operand.vmem [shape: f32[2,4,64,64], index: 6, kind: output, shape index: {}]
  %s7 = sld [smem:[#allocation0]]
  $region57: #{regressor_forward.2} parent=0
    _
  %s9 = ssub.s32 1, %s7
  %s10 = scalar_select 0, %s9, %s7
  loop: start=0, step=1, limit=4
  $region2: #{regressor_forward.2} parent=0 // loop_pre_header
    _
  $region3: #{regressor_forward.2} parent=0 // loop_header
    %s12 = sphi 0, %s16
    %p13 = scmp.ge.s32.totalorder %s12, 4
    %s22 = sphi 0, %s24
    %s25 = sphi 0, %s22
    %s26 = sphi 0, %s25
    %s42 = sphi 0, %s26
    %s46 = sphi 0, %s46
    %s48 = sphi 0, %s46
    %s49 = sphi 0, %s48
    %s63 = sphi 0, %s49
    %s67 = sphi 0, %s67
    %s69 = sphi 0, %s67
    %s70 = sphi 0, %s69
    %s84 = sphi 0, %s70
    %s88 = sphi 0, %s88
    %s90 = sphi 0, %s88
    %s91 = sphi 0, %s90
    %s105 = sphi 0, %s91
    %s109 = sphi 0, %s109
    %s111 = sphi 0, %s109
    %s112 = sphi 0, %s111
    %s126 = sphi 0, %s112
    %s130 = sphi 0, %s130
    %s132 = sphi 0, %s130
    %s133 = sphi 0, %s132
    %s147 = sphi 0, %s133
    %s153 = sphi 0, %s155
    %s156 = sphi 0, %s153
    %s157 = sphi 0, %s156
    %s173 = sphi 0, %s157
  $region4: #{regressor_forward.2} parent=0 // loop_header_branch
    %15 = sbr.rel (%p13) target = $region8
  $region5: #{regressor_forward.2} parent=0 // loop_body
    %s17 = ssub.s32 %s12, 1
    %s18 = ssub.s32 %s12, 2
    %s19 = sadd.s32 %s12, 1
    %s20 = ssub.s32 %s12, %s19
    %p21 = scmp.eq.s32.totalorder %s20, 0
    %s23 = sadd.s32 %s22, 1
    %s24 = scalar_select %p21, %s22, %s23
    %p27 = pneg %p21
    %p28 = scmp.eq.s32.totalorder %s12, 1
    %p29 = por %p27, %p28
    %p30 = scmp.ne.s32.totalorder %s22, %s25
    %p31 = scmp.eq.s32.totalorder %s12, 0
    %p32 = por %p30, %p31
    %p33 = scmp.ne.s32.totalorder %s22, %s25
    %p34 = scmp.eq.s32.totalorder %s17, 1
    %p35 = por %p33, %p34
    %p36 = scmp.ne.s32.totalorder %s25, %s26
    %p37 = scmp.eq.s32.totalorder %s17, 0
    %p38 = por %p36, %p37
    %p39 = scmp.ne.s32.totalorder %s25, %s26
    %p40 = scmp.eq.s32.totalorder %s18, 1
    %p41 = por %p39, %p40
    %p43 = scmp.ne.s32.totalorder %s26, %s42
    %p44 = scmp.eq.s32.totalorder %s18, 0
    %p45 = por %p43, %p44
    %s47 = sadd.s32 %s46, 1
    %p50 = scmp.eq.s32.totalorder %s12, 1
    %p51 = scmp.ne.s32.totalorder %s46, %s48
    %p52 = scmp.eq.s32.totalorder %s12, 0
    %p53 = por %p51, %p52
    %p54 = scmp.ne.s32.totalorder %s46, %s48
    %p55 = scmp.eq.s32.totalorder %s17, 1
    %p56 = por %p54, %p55
    %p57 = scmp.ne.s32.totalorder %s48, %s49
    %p58 = scmp.eq.s32.totalorder %s17, 0
    %p59 = por %p57, %p58
    %p60 = scmp.ne.s32.totalorder %s48, %s49
    %p61 = scmp.eq.s32.totalorder %s18, 1
    %p62 = por %p60, %p61
    %p64 = scmp.ne.s32.totalorder %s49, %s63
    %p65 = scmp.eq.s32.totalorder %s18, 0
    %p66 = por %p64, %p65
    %s68 = sadd.s32 %s67, 1
    %p71 = scmp.eq.s32.totalorder %s12, 1
    %p72 = scmp.ne.s32.totalorder %s67, %s69
    %p73 = scmp.eq.s32.totalorder %s12, 0
    %p74 = por %p72, %p73
    %p75 = scmp.ne.s32.totalorder %s67, %s69
    %p76 = scmp.eq.s32.totalorder %s17, 1
    %p77 = por %p75, %p76
    %p78 = scmp.ne.s32.totalorder %s69, %s70
    %p79 = scmp.eq.s32.totalorder %s17, 0
    %p80 = por %p78, %p79
    %p81 = scmp.ne.s32.totalorder %s69, %s70
    %p82 = scmp.eq.s32.totalorder %s18, 1
    %p83 = por %p81, %p82
    %p85 = scmp.ne.s32.totalorder %s70, %s84
    %p86 = scmp.eq.s32.totalorder %s18, 0
    %p87 = por %p85, %p86
    %s89 = sadd.s32 %s88, 1
    %p92 = scmp.eq.s32.totalorder %s12, 1
    %p93 = scmp.ne.s32.totalorder %s88, %s90
    %p94 = scmp.eq.s32.totalorder %s12, 0
    %p95 = por %p93, %p94
    %p96 = scmp.ne.s32.totalorder %s88, %s90
    %p97 = scmp.eq.s32.totalorder %s17, 1
    %p98 = por %p96, %p97
    %p99 = scmp.ne.s32.totalorder %s90, %s91
    %p100 = scmp.eq.s32.totalorder %s17, 0
    %p101 = por %p99, %p100
    %p102 = scmp.ne.s32.totalorder %s90, %s91
    %p103 = scmp.eq.s32.totalorder %s18, 1
    %p104 = por %p102, %p103
    %p106 = scmp.ne.s32.totalorder %s91, %s105
    %p107 = scmp.eq.s32.totalorder %s18, 0
    %p108 = por %p106, %p107
    %s110 = sadd.s32 %s109, 1
    %p113 = scmp.eq.s32.totalorder %s12, 1
    %p114 = scmp.ne.s32.totalorder %s109, %s111
    %p115 = scmp.eq.s32.totalorder %s12, 0
    %p116 = por %p114, %p115
    %p117 = scmp.ne.s32.totalorder %s109, %s111
    %p118 = scmp.eq.s32.totalorder %s17, 1
    %p119 = por %p117, %p118
    %p120 = scmp.ne.s32.totalorder %s111, %s112
    %p121 = scmp.eq.s32.totalorder %s17, 0
    %p122 = por %p120, %p121
    %p123 = scmp.ne.s32.totalorder %s111, %s112
    %p124 = scmp.eq.s32.totalorder %s18, 1
    %p125 = por %p123, %p124
    %p127 = scmp.ne.s32.totalorder %s112, %s126
    %p128 = scmp.eq.s32.totalorder %s18, 0
    %p129 = por %p127, %p128
    %s131 = sadd.s32 %s130, 1
    %p134 = scmp.eq.s32.totalorder %s12, 1
    %p135 = scmp.ne.s32.totalorder %s130, %s132
    %p136 = scmp.eq.s32.totalorder %s12, 0
    %p137 = por %p135, %p136
    %p138 = scmp.ne.s32.totalorder %s130, %s132
    %p139 = scmp.eq.s32.totalorder %s17, 1
    %p140 = por %p138, %p139
    %p141 = scmp.ne.s32.totalorder %s132, %s133
    %p142 = scmp.eq.s32.totalorder %s17, 0
    %p143 = por %p141, %p142
    %p144 = scmp.ne.s32.totalorder %s132, %s133
    %p145 = scmp.eq.s32.totalorder %s18, 1
    %p146 = por %p144, %p145
    %p148 = scmp.ne.s32.totalorder %s133, %s147
    %p149 = scmp.eq.s32.totalorder %s18, 0
    %p150 = por %p148, %p149
    %s151 = ssub.s32 %s12, %s19
    %p152 = scmp.eq.s32.totalorder %s151, 0
    %s154 = sadd.s32 %s153, 1
    %s155 = scalar_select %p152, %s153, %s154
    %p158 = pneg %p152
    %p159 = scmp.eq.s32.totalorder %s12, 1
    %p160 = por %p158, %p159
    %p161 = scmp.ne.s32.totalorder %s153, %s156
    %p162 = scmp.eq.s32.totalorder %s12, 0
    %p163 = por %p161, %p162
    %p164 = scmp.ne.s32.totalorder %s153, %s156
    %p165 = scmp.eq.s32.totalorder %s17, 1
    %p166 = por %p164, %p165
    %p167 = scmp.ne.s32.totalorder %s156, %s157
    %p168 = scmp.eq.s32.totalorder %s17, 0
    %p169 = por %p167, %p168
    %p170 = scmp.ne.s32.totalorder %s156, %s157
    %p171 = scmp.eq.s32.totalorder %s18, 1
    %p172 = por %p170, %p171
    %p174 = scmp.ne.s32.totalorder %s157, %s173
    %p175 = scmp.eq.s32.totalorder %s18, 0
    %p176 = por %p174, %p175
    %p177 = scmp.le.s32.totalorder 1, %s12
    %p178 = scmp.lt.s32.totalorder %s12, 3
    %p179 = pnand %p177, %p178
    %p180 = pneg %p179
    // Predicated region
    $region9: #{regressor_forward.2} parent=5 // pred_check
      _
    $region10: #{regressor_forward.2} parent=5 // pred_check_branch
      %182 = sbr.rel (%p179) target = $region12
    $region11: #{regressor_forward.2} parent=5 // pred_region
      %s183 = ssub.s32 %s12, 1
      // Predicated region
      $region13: #{regressor_forward.2} parent=11 // pred_check
        %p184 = pneg %p59
      $region14: #{regressor_forward.2} parent=11 // pred_check_branch
        %186 = sbr.rel (%p184) target = $region16
      $region15: #{regressor_forward.2} parent=11 // pred_region
        _
      $region16: #{regressor_forward.2} parent=11 // pred_fallthru
        _
      // Predicated region
      $region17: #{regressor_forward.2} parent=11 // pred_check
        %p187 = pneg %p80
      $region18: #{regressor_forward.2} parent=11 // pred_check_branch
        %189 = sbr.rel (%p187) target = $region20
      $region19: #{regressor_forward.2} parent=11 // pred_region
        _
      $region20: #{regressor_forward.2} parent=11 // pred_fallthru
        _
      // Predicated region
      $region21: #{regressor_forward.2} parent=11 // pred_check
        %p190 = pneg %p101
      $region22: #{regressor_forward.2} parent=11 // pred_check_branch
        %192 = sbr.rel (%p190) target = $region24
      $region23: #{regressor_forward.2} parent=11 // pred_region
        _
      $region24: #{regressor_forward.2} parent=11 // pred_fallthru
        _
      // Predicated region
      $region25: #{regressor_forward.2} parent=11 // pred_check
        %p193 = pneg %p122
      $region26: #{regressor_forward.2} parent=11 // pred_check_branch
        %195 = sbr.rel (%p193) target = $region28
      $region27: #{regressor_forward.2} parent=11 // pred_region
        _
      $region28: #{regressor_forward.2} parent=11 // pred_fallthru
        _
      // Predicated region
      $region29: #{regressor_forward.2} parent=11 // pred_check
        %p196 = pneg %p143
      $region30: #{regressor_forward.2} parent=11 // pred_check_branch
        %198 = sbr.rel (%p196) target = $region32
      $region31: #{regressor_forward.2} parent=11 // pred_region
        _
      $region32: #{regressor_forward.2} parent=11 // pred_fallthru
        _
    $region12: #{regressor_forward.2} parent=5 // pred_fallthru
      _
    %p199 = scmp.lt.s32.totalorder %s12, 2
    // Predicated region
    $region33: #{regressor_forward.2} parent=5 // pred_check
      %p200 = pneg %p199
    $region34: #{regressor_forward.2} parent=5 // pred_check_branch
      %202 = sbr.rel (%p200) target = $region36
    $region35: #{regressor_forward.2} parent=5 // pred_region
      // Predicated region
      $region37: #{regressor_forward.2} parent=35 // pred_check
        %p203 = pneg %p32
      $region38: #{regressor_forward.2} parent=35 // pred_check_branch
        %205 = sbr.rel (%p203) target = $region40
      $region39: #{regressor_forward.2} parent=35 // pred_region
        %p206 = scmp.lt.s32.totalorder %s12, 1
        %s207 = scalar_select %p206, %s12, 1
        %s208 = smul.addr %s207, 16
        %s209 = smul.addr %s208, 8
        %s210 = scalar_lea.vmem %s0, %s209
      $region40: #{regressor_forward.2} parent=35 // pred_fallthru
        _
    $region36: #{regressor_forward.2} parent=5 // pred_fallthru
      _
    %p211 = scmp.le.s32.totalorder 1, %s12
    %p212 = scmp.lt.s32.totalorder %s12, 3
    %p213 = pnand %p211, %p212
    %p214 = pneg %p213
    // Predicated region
    $region41: #{regressor_forward.2} parent=5 // pred_check
      _
    $region42: #{regressor_forward.2} parent=5 // pred_check_branch
      %216 = sbr.rel (%p213) target = $region44
    $region43: #{regressor_forward.2} parent=5 // pred_region
      %s217 = ssub.s32 %s12, 1
      %p218 = scmp.lt.s32.totalorder %s17, 1
      %s219 = scalar_select %p218, %s17, 1
      %s220 = smul.addr %s219, 16
      %s221 = smul.addr %s220, 8
      %s222 = scalar_lea.vmem %s0, %s221
      %p223 = pneg %p38
      %p224 = pneg %p35
      %p225 = pneg %p59
      %p226 = pneg %p56
      %p227 = pneg %p80
      %p228 = pneg %p77
      %p229 = pneg %p101
      %p230 = pneg %p98
      %p231 = pneg %p122
      %p232 = pneg %p119
      %p233 = pneg %p143
      %p234 = pneg %p140
      %p235 = pneg %p169
      %p236 = pneg %p166
      %p237 = scmp.lt.s32.totalorder %s17, 1
      %s238 = scalar_select %p237, %s17, 1
      %s239 = smul.addr %s238, 32
      %s240 = smul.addr %s239, 8
      %s241 = scalar_lea.vmem %s6, %s240
      %p242 = scmp.lt.s32.totalorder %s17, 1
      %s243 = scalar_select %p242, %s17, 1
      %s244 = smul.addr %s243, 16
      %s245 = smul.addr %s244, 8
      %s246 = scalar_lea.vmem %s0, %s245
      %p247 = scmp.lt.s32.totalorder %s17, 1
      %s248 = scalar_select %p247, %s17, 1
      %s249 = smul.addr %s248, 32
      %s250 = smul.addr %s249, 8
      %s251 = scalar_lea.vmem %s6, %s250
      %253 = vst [vmem:[#allocation2] sm:$0xff] 0.0
      %254 = vst [vmem:[#allocation2 + $0x8] sm:$0xff] 0.0
      %255 = vst [vmem:[#allocation2 + $0x10] sm:$0x3] 0.0
      %256 = vst [vmem:[#allocation2 + $0x18] sm:$0x3] 0.0
      %257 = vst [vmem:[#allocation2 + $0x20] sm:$0xff] 0.0
      %258 = vst [vmem:[#allocation2 + $0x28] sm:$0xff] 0.0
      %259 = vst [vmem:[#allocation2 + $0x30] sm:$0x3] 0.0
      %260 = vst [vmem:[#allocation2 + $0x38] sm:$0x3] 0.0
      %261 = vst [vmem:[#allocation2 + $0x40] sm:$0xff] 0.0
      %262 = vst [vmem:[#allocation2 + $0x48] sm:$0xff] 0.0
      %263 = vst [vmem:[#allocation2 + $0x50] sm:$0x3] 0.0
      %264 = vst [vmem:[#allocation2 + $0x58] sm:$0x3] 0.0
      %265 = vst [vmem:[#allocation2 + $0x60] sm:$0xff] 0.0
      %266 = vst [vmem:[#allocation2 + $0x68] sm:$0xff] 0.0
      %267 = vst [vmem:[#allocation2 + $0x70] sm:$0x3] 0.0
      %268 = vst [vmem:[#allocation2 + $0x78] sm:$0x3] 0.0
      %269 = vst [vmem:[#allocation2 + $0x80] sm:$0xff] 0.0
      %270 = vst [vmem:[#allocation2 + $0x88] sm:$0xff] 0.0
      %271 = vst [vmem:[#allocation2 + $0x90] sm:$0x3] 0.0
      %272 = vst [vmem:[#allocation2 + $0x98] sm:$0x3] 0.0
      %273 = vst [vmem:[#allocation2 + $0xa0] sm:$0xff] 0.0
      %274 = vst [vmem:[#allocation2 + $0xa8] sm:$0xff] 0.0
      %275 = vst [vmem:[#allocation2 + $0xb0] sm:$0x3] 0.0
      %276 = vst [vmem:[#allocation2 + $0xb8] sm:$0x3] 0.0
      %277 = vst [vmem:[#allocation2 + $0xc0] sm:$0xff] 0.0
      %278 = vst [vmem:[#allocation2 + $0xc8] sm:$0xff] 0.0
      %279 = vst [vmem:[#allocation2 + $0xd0] sm:$0x3] 0.0
      %280 = vst [vmem:[#allocation2 + $0xd8] sm:$0x3] 0.0
      %281 = vst [vmem:[#allocation2 + $0xe0] sm:$0xff] 0.0
      %282 = vst [vmem:[#allocation2 + $0xe8] sm:$0xff] 0.0
      %283 = vst [vmem:[#allocation2 + $0xf0] sm:$0x3] 0.0
      %284 = vst [vmem:[#allocation2 + $0xf8] sm:$0x3] 0.0
      %285 = vst [vmem:[#allocation2 + $0x100] sm:$0xff] 0.0
      %286 = vst [vmem:[#allocation2 + $0x108] sm:$0xff] 0.0
      %287 = vst [vmem:[#allocation2 + $0x110] sm:$0x3] 0.0
      %288 = vst [vmem:[#allocation2 + $0x118] sm:$0x3] 0.0
      %289 = vst [vmem:[#allocation2 + $0x120] sm:$0xff] 0.0
      %290 = vst [vmem:[#allocation2 + $0x128] sm:$0xff] 0.0
      %291 = vst [vmem:[#allocation2 + $0x130] sm:$0x3] 0.0
      %292 = vst [vmem:[#allocation2 + $0x138] sm:$0x3] 0.0
      %v293 = vld [vmem:[%s246] sm:$0xff]
      %v294 = vld [vmem:[%s246 + $0x8] sm:$0xff]
      %v295 = vld [vmem:[%s246 + $0x10] sm:$0xff]
      %v296 = vld [vmem:[%s246 + $0x18] sm:$0xff]
      %v297 = vld [vmem:[%s246 + $0x20] sm:$0xff]
      %v298 = vld [vmem:[%s246 + $0x28] sm:$0xff]
      %v299 = vld [vmem:[%s246 + $0x30] sm:$0xff]
      %v300 = vld [vmem:[%s246 + $0x38] sm:$0xff]
      %v301 = vld [vmem:[%s246 + $0x40] sm:$0xff]
      %v302 = vld [vmem:[%s246 + $0x48] sm:$0xff]
      %v303 = vld [vmem:[%s246 + $0x50] sm:$0xff]
      %v304 = vld [vmem:[%s246 + $0x58] sm:$0xff]
      %v305 = vld [vmem:[%s246 + $0x60] sm:$0xff]
      %v306 = vld [vmem:[%s246 + $0x68] sm:$0xff]
      %v307 = vld [vmem:[%s246 + $0x70] sm:$0xff]
      %v308 = vld [vmem:[%s246 + $0x78] sm:$0xff]
      %v325 = vrot.slane %v293, 7
      %v326 = vrot.slane %v294, 7
      %v327 = vrot.slane %v295, 7
      %v328 = vrot.slane %v296, 7
      %v329 = vrot.slane %v297, 7
      %v330 = vrot.slane %v298, 7
      %v331 = vrot.slane %v299, 7
      %v332 = vrot.slane %v300, 7
      %v333 = vrot.slane %v301, 7
      %v334 = vrot.slane %v302, 7
      %v335 = vrot.slane %v303, 7
      %v336 = vrot.slane %v304, 7
      %v337 = vrot.slane %v305, 7
      %v338 = vrot.slane %v306, 7
      %v339 = vrot.slane %v307, 7
      %v340 = vrot.slane %v308, 7
      %s357 = scalar_lea.vmem [#allocation2], 32
      %358 = vst [vmem:[%s357] sm:$0xfe] %v325
      %359 = vst [vmem:[%s357 + $0x8] sm:$0xfe] %v326
      %360 = vst [vmem:[%s357 + $0x10] sm:$0x1] %v325
      %361 = vst [vmem:[%s357 + $0x18] sm:$0x1] %v326
      %362 = vst [vmem:[%s357 + $0x20] sm:$0xfe] %v327
      %363 = vst [vmem:[%s357 + $0x28] sm:$0xfe] %v328
      %364 = vst [vmem:[%s357 + $0x30] sm:$0x1] %v327
      %365 = vst [vmem:[%s357 + $0x38] sm:$0x1] %v328
      %366 = vst [vmem:[%s357 + $0x40] sm:$0xfe] %v329
      %367 = vst [vmem:[%s357 + $0x48] sm:$0xfe] %v330
      %368 = vst [vmem:[%s357 + $0x50] sm:$0x1] %v329
      %369 = vst [vmem:[%s357 + $0x58] sm:$0x1] %v330
      %370 = vst [vmem:[%s357 + $0x60] sm:$0xfe] %v331
      %371 = vst [vmem:[%s357 + $0x68] sm:$0xfe] %v332
      %372 = vst [vmem:[%s357 + $0x70] sm:$0x1] %v331
      %373 = vst [vmem:[%s357 + $0x78] sm:$0x1] %v332
      %374 = vst [vmem:[%s357 + $0x80] sm:$0xfe] %v333
      %375 = vst [vmem:[%s357 + $0x88] sm:$0xfe] %v334
      %376 = vst [vmem:[%s357 + $0x90] sm:$0x1] %v333
      %377 = vst [vmem:[%s357 + $0x98] sm:$0x1] %v334
      %378 = vst [vmem:[%s357 + $0xa0] sm:$0xfe] %v335
      %379 = vst [vmem:[%s357 + $0xa8] sm:$0xfe] %v336
      %380 = vst [vmem:[%s357 + $0xb0] sm:$0x1] %v335
      %381 = vst [vmem:[%s357 + $0xb8] sm:$0x1] %v336
      %382 = vst [vmem:[%s357 + $0xc0] sm:$0xfe] %v337
      %383 = vst [vmem:[%s357 + $0xc8] sm:$0xfe] %v338
      %384 = vst [vmem:[%s357 + $0xd0] sm:$0x1] %v337
      %385 = vst [vmem:[%s357 + $0xd8] sm:$0x1] %v338
      %386 = vst [vmem:[%s357 + $0xe0] sm:$0xfe] %v339
      %387 = vst [vmem:[%s357 + $0xe8] sm:$0xfe] %v340
      %388 = vst [vmem:[%s357 + $0xf0] sm:$0x1] %v339
      %389 = vst [vmem:[%s357 + $0xf8] sm:$0x1] %v340
      %v390 = vld [vmem:[#allocation2] sm:$0xff]
      %v391 = vld [vmem:[#allocation2 + $0x8] sm:$0xff]
      %v392 = vld [vmem:[#allocation2 + $0x20] sm:$0xff]
      %v393 = vld [vmem:[#allocation2 + $0x28] sm:$0xff]
      %v394 = vld [vmem:[#allocation2 + $0x40] sm:$0xff]
      %v395 = vld [vmem:[#allocation2 + $0x48] sm:$0xff]
      %v396 = vld [vmem:[#allocation2 + $0x60] sm:$0xff]
      %v397 = vld [vmem:[#allocation2 + $0x68] sm:$0xff]
      %v398 = vld [vmem:[#allocation2 + $0x80] sm:$0xff]
      %v399 = vld [vmem:[#allocation2 + $0x88] sm:$0xff]
      %v400 = vld [vmem:[#allocation2 + $0xa0] sm:$0xff]
      %v401 = vld [vmem:[#allocation2 + $0xa8] sm:$0xff]
      %v402 = vld [vmem:[#allocation2 + $0xc0] sm:$0xff]
      %v403 = vld [vmem:[#allocation2 + $0xc8] sm:$0xff]
      %v404 = vld [vmem:[#allocation2 + $0xe0] sm:$0xff]
      %v405 = vld [vmem:[#allocation2 + $0xe8] sm:$0xff]
      %v406 = vpack.c.bf16 %v392, %v390
      %v407 = vpack.c.bf16 %v393, %v391
      %v408 = vpack.c.bf16 %v396, %v394
      %v409 = vpack.c.bf16 %v397, %v395
      %v410 = vpack.c.bf16 %v400, %v398
      %v411 = vpack.c.bf16 %v401, %v399
      %v412 = vpack.c.bf16 %v404, %v402
      %v413 = vpack.c.bf16 %v405, %v403
      %v414 = vld [vmem:[%s1] sm:$0xf]
      %v415 = vld [vmem:[%s1 + $0x4] sm:$0xf]
      %v416 = vld [vmem:[%s1 + $0x8] sm:$0xf]
      %v417 = vld [vmem:[%s1 + $0xc] sm:$0xf]
      %v418 = vld [vmem:[%s1 + $0x10] sm:$0xf]
      %v419 = vld [vmem:[%s1 + $0x14] sm:$0xf]
      %v420 = vld [vmem:[%s1 + $0x18] sm:$0xf]
      %v421 = vld [vmem:[%s1 + $0x1c] sm:$0xf]
      %v422 = vld [vmem:[%s1 + $0x20] sm:$0xf]
      %v423 = vld [vmem:[%s1 + $0x24] sm:$0xf]
      %v424 = vld [vmem:[%s1 + $0x28] sm:$0xf]
      %v425 = vld [vmem:[%s1 + $0x2c] sm:$0xf]
      %v426 = vld [vmem:[%s1 + $0x30] sm:$0xf]
      %v427 = vld [vmem:[%s1 + $0x34] sm:$0xf]
      %v428 = vld [vmem:[%s1 + $0x38] sm:$0xf]
      %v429 = vld [vmem:[%s1 + $0x3c] sm:$0xf]
      %v430 = vld [vmem:[%s1 + $0x40] sm:$0xf]
      %v431 = vld [vmem:[%s1 + $0x44] sm:$0xf]
      %v432 = vld [vmem:[%s1 + $0x48] sm:$0xf]
      %v433 = vld [vmem:[%s1 + $0x4c] sm:$0xf]
      %v434 = vld [vmem:[%s1 + $0x50] sm:$0xf]
      %v435 = vld [vmem:[%s1 + $0x54] sm:$0xf]
      %v436 = vld [vmem:[%s1 + $0x58] sm:$0xf]
      %v437 = vld [vmem:[%s1 + $0x5c] sm:$0xf]
      %v438 = vld [vmem:[%s1 + $0x60] sm:$0xf]
      %v439 = vld [vmem:[%s1 + $0x64] sm:$0xf]
      %v440 = vld [vmem:[%s1 + $0x68] sm:$0xf]
      %v441 = vld [vmem:[%s1 + $0x6c] sm:$0xf]
      %v442 = vld [vmem:[%s1 + $0x70] sm:$0xf]
      %v443 = vld [vmem:[%s1 + $0x74] sm:$0xf]
      %v444 = vld [vmem:[%s1 + $0x78] sm:$0xf]
      %v445 = vld [vmem:[%s1 + $0x7c] sm:$0xf]
      %v446 = vld [vmem:[#allocation2] sm:$0xfe]
      %v447 = vld [vmem:[#allocation2 + $0x8] sm:$0xfe]
      %v448 = vld [vmem:[#allocation2 + $0x10] sm:$0x1]
      %v449 = vld [vmem:[#allocation2 + $0x18] sm:$0x1]
      %v450 = vld [vmem:[#allocation2 + $0x20] sm:$0xfe]
      %v451 = vld [vmem:[#allocation2 + $0x28] sm:$0xfe]
      %v452 = vld [vmem:[#allocation2 + $0x30] sm:$0x1]
      %v453 = vld [vmem:[#allocation2 + $0x38] sm:$0x1]
      %v454 = vld [vmem:[#allocation2 + $0x40] sm:$0xfe]
      %v455 = vld [vmem:[#allocation2 + $0x48] sm:$0xfe]
      %v456 = vld [vmem:[#allocation2 + $0x50] sm:$0x1]
      %v457 = vld [vmem:[#allocation2 + $0x58] sm:$0x1]
      %v458 = vld [vmem:[#allocation2 + $0x60] sm:$0xfe]
      %v459 = vld [vmem:[#allocation2 + $0x68] sm:$0xfe]
      %v460 = vld [vmem:[#allocation2 + $0x70] sm:$0x1]
      %v461 = vld [vmem:[#allocation2 + $0x78] sm:$0x1]
      %v462 = vld [vmem:[#allocation2 + $0x80] sm:$0xfe]
      %v463 = vld [vmem:[#allocation2 + $0x88] sm:$0xfe]
      %v464 = vld [vmem:[#allocation2 + $0x90] sm:$0x1]
      %v465 = vld [vmem:[#allocation2 + $0x98] sm:$0x1]
      %v466 = vld [vmem:[#allocation2 + $0xa0] sm:$0xfe]
      %v467 = vld [vmem:[#allocation2 + $0xa8] sm:$0xfe]
      %v468 = vld [vmem:[#allocation2 + $0xb0] sm:$0x1]
      %v469 = vld [vmem:[#allocation2 + $0xb8] sm:$0x1]
      %v470 = vld [vmem:[#allocation2 + $0xc0] sm:$0xfe]
      %v471 = vld [vmem:[#allocation2 + $0xc8] sm:$0xfe]
      %v472 = vld [vmem:[#allocation2 + $0xd0] sm:$0x1]
      %v473 = vld [vmem:[#allocation2 + $0xd8] sm:$0x1]
      %v474 = vld [vmem:[#allocation2 + $0xe0] sm:$0xfe]
      %v475 = vld [vmem:[#allocation2 + $0xe8] sm:$0xfe]
      %v476 = vld [vmem:[#allocation2 + $0xf0] sm:$0x1]
      %v477 = vld [vmem:[#allocation2 + $0xf8] sm:$0x1]
      %vm510 = vcmask 1046528
      %v511 = vrot.slane %v446, 1
      %v512 = vrot.slane %v448, 1
      %v513 = vsel %vm510, %v511, %v512
      %v514 = vrot.slane %v447, 1
      %v515 = vrot.slane %v449, 1
      %v516 = vsel %vm510, %v514, %v515
      %v517 = vrot.slane %v450, 1
      %v518 = vrot.slane %v452, 1
      %v519 = vsel %vm510, %v517, %v518
      %v520 = vrot.slane %v451, 1
      %v521 = vrot.slane %v453, 1
      %v522 = vsel %vm510, %v520, %v521
      %v523 = vrot.slane %v454, 1
      %v524 = vrot.slane %v456, 1
      %v525 = vsel %vm510, %v523, %v524
      %v526 = vrot.slane %v455, 1
      %v527 = vrot.slane %v457, 1
      %v528 = vsel %vm510, %v526, %v527
      %v529 = vrot.slane %v458, 1
      %v530 = vrot.slane %v460, 1
      %v531 = vsel %vm510, %v529, %v530
      %v532 = vrot.slane %v459, 1
      %v533 = vrot.slane %v461, 1
      %v534 = vsel %vm510, %v532, %v533
      %v535 = vrot.slane %v462, 1
      %v536 = vrot.slane %v464, 1
      %v537 = vsel %vm510, %v535, %v536
      %v538 = vrot.slane %v463, 1
      %v539 = vrot.slane %v465, 1
      %v540 = vsel %vm510, %v538, %v539
      %v541 = vrot.slane %v466, 1
      %v542 = vrot.slane %v468, 1
      %v543 = vsel %vm510, %v541, %v542
      %v544 = vrot.slane %v467, 1
      %v545 = vrot.slane %v469, 1
      %v546 = vsel %vm510, %v544, %v545
      %v547 = vrot.slane %v470, 1
      %v548 = vrot.slane %v472, 1
      %v549 = vsel %vm510, %v547, %v548
      %v550 = vrot.slane %v471, 1
      %v551 = vrot.slane %v473, 1
      %v552 = vsel %vm510, %v550, %v551
      %v553 = vrot.slane %v474, 1
      %v554 = vrot.slane %v476, 1
      %v555 = vsel %vm510, %v553, %v554
      %v556 = vrot.slane %v475, 1
      %v557 = vrot.slane %v477, 1
      %v558 = vsel %vm510, %v556, %v557
      %v575 = vpack.c.bf16 %v519, %v513
      %v576 = vpack.c.bf16 %v522, %v516
      %v577 = vpack.c.bf16 %v531, %v525
      %v578 = vpack.c.bf16 %v534, %v528
      %v579 = vpack.c.bf16 %v543, %v537
      %v580 = vpack.c.bf16 %v546, %v540
      %v581 = vpack.c.bf16 %v555, %v549
      %v582 = vpack.c.bf16 %v558, %v552
      %s583 = scalar_lea.vmem %s1, 128
      %v584 = vld [vmem:[%s583] sm:$0xf]
      %v585 = vld [vmem:[%s583 + $0x4] sm:$0xf]
      %v586 = vld [vmem:[%s583 + $0x8] sm:$0xf]
      %v587 = vld [vmem:[%s583 + $0xc] sm:$0xf]
      %v588 = vld [vmem:[%s583 + $0x10] sm:$0xf]
      %v589 = vld [vmem:[%s583 + $0x14] sm:$0xf]
      %v590 = vld [vmem:[%s583 + $0x18] sm:$0xf]
      %v591 = vld [vmem:[%s583 + $0x1c] sm:$0xf]
      %v592 = vld [vmem:[%s583 + $0x20] sm:$0xf]
      %v593 = vld [vmem:[%s583 + $0x24] sm:$0xf]
      %v594 = vld [vmem:[%s583 + $0x28] sm:$0xf]
      %v595 = vld [vmem:[%s583 + $0x2c] sm:$0xf]
      %v596 = vld [vmem:[%s583 + $0x30] sm:$0xf]
      %v597 = vld [vmem:[%s583 + $0x34] sm:$0xf]
      %v598 = vld [vmem:[%s583 + $0x38] sm:$0xf]
      %v599 = vld [vmem:[%s583 + $0x3c] sm:$0xf]
      %v600 = vld [vmem:[%s583 + $0x40] sm:$0xf]
      %v601 = vld [vmem:[%s583 + $0x44] sm:$0xf]
      %v602 = vld [vmem:[%s583 + $0x48] sm:$0xf]
      %v603 = vld [vmem:[%s583 + $0x4c] sm:$0xf]
      %v604 = vld [vmem:[%s583 + $0x50] sm:$0xf]
      %v605 = vld [vmem:[%s583 + $0x54] sm:$0xf]
      %v606 = vld [vmem:[%s583 + $0x58] sm:$0xf]
      %v607 = vld [vmem:[%s583 + $0x5c] sm:$0xf]
      %v608 = vld [vmem:[%s583 + $0x60] sm:$0xf]
      %v609 = vld [vmem:[%s583 + $0x64] sm:$0xf]
      %v610 = vld [vmem:[%s583 + $0x68] sm:$0xf]
      %v611 = vld [vmem:[%s583 + $0x6c] sm:$0xf]
      %v612 = vld [vmem:[%s583 + $0x70] sm:$0xf]
      %v613 = vld [vmem:[%s583 + $0x74] sm:$0xf]
      %v614 = vld [vmem:[%s583 + $0x78] sm:$0xf]
      %v615 = vld [vmem:[%s583 + $0x7c] sm:$0xf]
      %v648 = vunpack.c.l.b16 %v584
      %v649 = vunpack.c.l.b16 %v585
      %v650 = vunpack.c.l.b16 %v586
      %v651 = vunpack.c.l.b16 %v587
      %v652 = vunpack.c.l.b16 %v588
      %v653 = vunpack.c.l.b16 %v589
      %v654 = vunpack.c.l.b16 %v590
      %v655 = vunpack.c.l.b16 %v591
      %v656 = vunpack.c.l.b16 %v592
      %v657 = vunpack.c.l.b16 %v593
      %v658 = vunpack.c.l.b16 %v594
      %v659 = vunpack.c.l.b16 %v595
      %v660 = vunpack.c.l.b16 %v596
      %v661 = vunpack.c.l.b16 %v597
      %v662 = vunpack.c.l.b16 %v598
      %v663 = vunpack.c.l.b16 %v599
      %v664 = vunpack.c.l.b16 %v600
      %v665 = vunpack.c.l.b16 %v601
      %v666 = vunpack.c.l.b16 %v602
      %v667 = vunpack.c.l.b16 %v603
      %v668 = vunpack.c.l.b16 %v604
      %v669 = vunpack.c.l.b16 %v605
      %v670 = vunpack.c.l.b16 %v606
      %v671 = vunpack.c.l.b16 %v607
      %v672 = vunpack.c.l.b16 %v608
      %v673 = vunpack.c.l.b16 %v609
      %v674 = vunpack.c.l.b16 %v610
      %v675 = vunpack.c.l.b16 %v611
      %v676 = vunpack.c.l.b16 %v612
      %v677 = vunpack.c.l.b16 %v613
      %v678 = vunpack.c.l.b16 %v614
      %v679 = vunpack.c.l.b16 %v615
      %v680 = vpack.c.b16 %v649, %v648
      %v681 = vpack.c.b16 %v651, %v650
      %v682 = vpack.c.b16 %v653, %v652
      %v683 = vpack.c.b16 %v655, %v654
      %v684 = vpack.c.b16 %v657, %v656
      %v685 = vpack.c.b16 %v659, %v658
      %v686 = vpack.c.b16 %v661, %v660
      %v687 = vpack.c.b16 %v663, %v662
      %v688 = vpack.c.b16 %v665, %v664
      %v689 = vpack.c.b16 %v667, %v666
      %v690 = vpack.c.b16 %v669, %v668
      %v691 = vpack.c.b16 %v671, %v670
      %v692 = vpack.c.b16 %v673, %v672
      %v693 = vpack.c.b16 %v675, %v674
      %v694 = vpack.c.b16 %v677, %v676
      %v695 = vpack.c.b16 %v679, %v678
      %712 = vmatprep.subr.bf16.mxu0 0
      %713 = vmatpush1.bf16.msra.mxu0 %v687
      %714 = vmatprep.subr.bf16.mxu0 0
      %715 = vmatpush1.bf16.msra.mxu0 %v686
      %716 = vmatprep.subr.bf16.mxu0 0
      %717 = vmatpush1.bf16.msra.mxu0 %v685
      %718 = vmatprep.subr.bf16.mxu0 0
      %719 = vmatpush1.bf16.msra.mxu0 %v684
      %720 = vmatprep.subr.bf16.mxu0 0
      %721 = vmatpush1.bf16.msra.mxu0 %v683
      %722 = vmatprep.subr.bf16.mxu0 0
      %723 = vmatpush1.bf16.msra.mxu0 %v682
      %724 = vmatprep.subr.bf16.mxu0 0
      %725 = vmatpush1.bf16.msra.mxu0 %v681
      %726 = vmatprep.subr.bf16.mxu0 0
      %727 = vmatpush1.bf16.msra.mxu0 %v680
      %728 = vmatprep.subr.bf16.mxu0 0
      %729 = vmatpush2.bf16.msra.mxu0 %v695
      %730 = vmatprep.subr.bf16.mxu0 0
      %731 = vmatpush2.bf16.msra.mxu0 %v694
      %732 = vmatprep.subr.bf16.mxu0 0
      %733 = vmatpush2.bf16.msra.mxu0 %v693
      %734 = vmatprep.subr.bf16.mxu0 0
      %735 = vmatpush2.bf16.msra.mxu0 %v692
      %736 = vmatprep.subr.bf16.mxu0 0
      %737 = vmatpush2.bf16.msra.mxu0 %v691
      %738 = vmatprep.subr.bf16.mxu0 0
      %739 = vmatpush2.bf16.msra.mxu0 %v690
      %740 = vmatprep.subr.bf16.mxu0 0
      %741 = vmatpush2.bf16.msra.mxu0 %v689
      %742 = vmatprep.subr.bf16.mxu0 0
      %743 = vmatpush2.bf16.msra.mxu0 %v688
      %744 = vmatprep.mubr.bf16.mxu0 %v576
      %745 = vmatmul.mubr.bf16.gmra.mxu0 %v575
      %v746 = vpop.f32.mrf.mxu0
      %v747 = vadd.f32 0.0, %v746
      %v748 = vpop.f32.mrf.mxu0
      %v749 = vpop.f32.mrf.mxu0
      %v750 = vadd.f32 0.0, %v749
      %v751 = vpop.f32.mrf.mxu0
      %752 = vmatprep.mubr.bf16.mxu0 %v578
      %753 = vmatmul.mubr.bf16.gmra.mxu0 %v577
      %v754 = vpop.f32.mrf.mxu0
      %v755 = vadd.f32 0.0, %v754
      %v756 = vpop.f32.mrf.mxu0
      %v757 = vpop.f32.mrf.mxu0
      %v758 = vadd.f32 0.0, %v757
      %v759 = vpop.f32.mrf.mxu0
      %760 = vmatprep.mubr.bf16.mxu0 %v580
      %761 = vmatmul.mubr.bf16.gmra.mxu0 %v579
      %v762 = vpop.f32.mrf.mxu0
      %v763 = vadd.f32 0.0, %v762
      %v764 = vpop.f32.mrf.mxu0
      %v765 = vpop.f32.mrf.mxu0
      %v766 = vadd.f32 0.0, %v765
      %v767 = vpop.f32.mrf.mxu0
      %768 = vmatprep.mubr.bf16.mxu0 %v582
      %769 = vmatmul.mubr.bf16.gmra.mxu0 %v581
      %v770 = vpop.f32.mrf.mxu0
      %v771 = vadd.f32 0.0, %v770
      %v772 = vpop.f32.mrf.mxu0
      %v773 = vpop.f32.mrf.mxu0
      %v774 = vadd.f32 0.0, %v773
      %v775 = vpop.f32.mrf.mxu0
      %776 = vdwg.mxu0
      %v809 = vunpack.c.l.b16 %v414
      %v810 = vunpack.c.l.b16 %v415
      %v811 = vunpack.c.l.b16 %v416
      %v812 = vunpack.c.l.b16 %v417
      %v813 = vunpack.c.l.b16 %v418
      %v814 = vunpack.c.l.b16 %v419
      %v815 = vunpack.c.l.b16 %v420
      %v816 = vunpack.c.l.b16 %v421
      %v817 = vunpack.c.l.b16 %v422
      %v818 = vunpack.c.l.b16 %v423
      %v819 = vunpack.c.l.b16 %v424
      %v820 = vunpack.c.l.b16 %v425
      %v821 = vunpack.c.l.b16 %v426
      %v822 = vunpack.c.l.b16 %v427
      %v823 = vunpack.c.l.b16 %v428
      %v824 = vunpack.c.l.b16 %v429
      %v825 = vunpack.c.l.b16 %v430
      %v826 = vunpack.c.l.b16 %v431
      %v827 = vunpack.c.l.b16 %v432
      %v828 = vunpack.c.l.b16 %v433
      %v829 = vunpack.c.l.b16 %v434
      %v830 = vunpack.c.l.b16 %v435
      %v831 = vunpack.c.l.b16 %v436
      %v832 = vunpack.c.l.b16 %v437
      %v833 = vunpack.c.l.b16 %v438
      %v834 = vunpack.c.l.b16 %v439
      %v835 = vunpack.c.l.b16 %v440
      %v836 = vunpack.c.l.b16 %v441
      %v837 = vunpack.c.l.b16 %v442
      %v838 = vunpack.c.l.b16 %v443
      %v839 = vunpack.c.l.b16 %v444
      %v840 = vunpack.c.l.b16 %v445
      %v841 = vpack.c.b16 %v810, %v809
      %v842 = vpack.c.b16 %v812, %v811
      %v843 = vpack.c.b16 %v814, %v813
      %v844 = vpack.c.b16 %v816, %v815
      %v845 = vpack.c.b16 %v818, %v817
      %v846 = vpack.c.b16 %v820, %v819
      %v847 = vpack.c.b16 %v822, %v821
      %v848 = vpack.c.b16 %v824, %v823
      %v849 = vpack.c.b16 %v826, %v825
      %v850 = vpack.c.b16 %v828, %v827
      %v851 = vpack.c.b16 %v830, %v829
      %v852 = vpack.c.b16 %v832, %v831
      %v853 = vpack.c.b16 %v834, %v833
      %v854 = vpack.c.b16 %v836, %v835
      %v855 = vpack.c.b16 %v838, %v837
      %v856 = vpack.c.b16 %v840, %v839
      %873 = vmatprep.subr.bf16.mxu0 0
      %874 = vmatpush1.bf16.msra.mxu0 %v848
      %875 = vmatprep.subr.bf16.mxu0 0
      %876 = vmatpush1.bf16.msra.mxu0 %v847
      %877 = vmatprep.subr.bf16.mxu0 0
      %878 = vmatpush1.bf16.msra.mxu0 %v846
      %879 = vmatprep.subr.bf16.mxu0 0
      %880 = vmatpush1.bf16.msra.mxu0 %v845
      %881 = vmatprep.subr.bf16.mxu0 0
      %882 = vmatpush1.bf16.msra.mxu0 %v844
      %883 = vmatprep.subr.bf16.mxu0 0
      %884 = vmatpush1.bf16.msra.mxu0 %v843
      %885 = vmatprep.subr.bf16.mxu0 0
      %886 = vmatpush1.bf16.msra.mxu0 %v842
      %887 = vmatprep.subr.bf16.mxu0 0
      %888 = vmatpush1.bf16.msra.mxu0 %v841
      %889 = vmatprep.subr.bf16.mxu0 0
      %890 = vmatpush2.bf16.msra.mxu0 %v856
      %891 = vmatprep.subr.bf16.mxu0 0
      %892 = vmatpush2.bf16.msra.mxu0 %v855
      %893 = vmatprep.subr.bf16.mxu0 0
      %894 = vmatpush2.bf16.msra.mxu0 %v854
      %895 = vmatprep.subr.bf16.mxu0 0
      %896 = vmatpush2.bf16.msra.mxu0 %v853
      %897 = vmatprep.subr.bf16.mxu0 0
      %898 = vmatpush2.bf16.msra.mxu0 %v852
      %899 = vmatprep.subr.bf16.mxu0 0
      %900 = vmatpush2.bf16.msra.mxu0 %v851
      %901 = vmatprep.subr.bf16.mxu0 0
      %902 = vmatpush2.bf16.msra.mxu0 %v850
      %903 = vmatprep.subr.bf16.mxu0 0
      %904 = vmatpush2.bf16.msra.mxu0 %v849
      %905 = vmatprep.mubr.bf16.mxu0 %v407
      %906 = vmatmul.mubr.bf16.gmra.mxu0 %v406
      %v907 = vpop.f32.mrf.mxu0
      %v908 = vadd.f32 %v747, %v907
      %v909 = vpop.f32.mrf.mxu0
      %v910 = vpop.f32.mrf.mxu0
      %v911 = vadd.f32 %v750, %v910
      %v912 = vpop.f32.mrf.mxu0
      %913 = vmatprep.mubr.bf16.mxu0 %v409
      %914 = vmatmul.mubr.bf16.gmra.mxu0 %v408
      %v915 = vpop.f32.mrf.mxu0
      %v916 = vadd.f32 %v755, %v915
      %v917 = vpop.f32.mrf.mxu0
      %v918 = vpop.f32.mrf.mxu0
      %v919 = vadd.f32 %v758, %v918
      %v920 = vpop.f32.mrf.mxu0
      %921 = vmatprep.mubr.bf16.mxu0 %v411
      %922 = vmatmul.mubr.bf16.gmra.mxu0 %v410
      %v923 = vpop.f32.mrf.mxu0
      %v924 = vadd.f32 %v763, %v923
      %v925 = vpop.f32.mrf.mxu0
      %v926 = vpop.f32.mrf.mxu0
      %v927 = vadd.f32 %v766, %v926
      %v928 = vpop.f32.mrf.mxu0
      %929 = vmatprep.mubr.bf16.mxu0 %v413
      %930 = vmatmul.mubr.bf16.gmra.mxu0 %v412
      %v931 = vpop.f32.mrf.mxu0
      %v932 = vadd.f32 %v771, %v931
      %v933 = vpop.f32.mrf.mxu0
      %v934 = vpop.f32.mrf.mxu0
      %v935 = vadd.f32 %v774, %v934
      %v936 = vpop.f32.mrf.mxu0
      %937 = vdwg.mxu0
      %v938 = vld [vmem:[#allocation2] sm:$0xfc]
      %v939 = vld [vmem:[#allocation2 + $0x8] sm:$0xfc]
      %v940 = vld [vmem:[#allocation2 + $0x10] sm:$0x3]
      %v941 = vld [vmem:[#allocation2 + $0x18] sm:$0x3]
      %v942 = vld [vmem:[#allocation2 + $0x20] sm:$0xfc]
      %v943 = vld [vmem:[#allocation2 + $0x28] sm:$0xfc]
      %v944 = vld [vmem:[#allocation2 + $0x30] sm:$0x3]
      %v945 = vld [vmem:[#allocation2 + $0x38] sm:$0x3]
      %v946 = vld [vmem:[#allocation2 + $0x40] sm:$0xfc]
      %v947 = vld [vmem:[#allocation2 + $0x48] sm:$0xfc]
      %v948 = vld [vmem:[#allocation2 + $0x50] sm:$0x3]
      %v949 = vld [vmem:[#allocation2 + $0x58] sm:$0x3]
      %v950 = vld [vmem:[#allocation2 + $0x60] sm:$0xfc]
      %v951 = vld [vmem:[#allocation2 + $0x68] sm:$0xfc]
      %v952 = vld [vmem:[#allocation2 + $0x70] sm:$0x3]
      %v953 = vld [vmem:[#allocation2 + $0x78] sm:$0x3]
      %v954 = vld [vmem:[#allocation2 + $0x80] sm:$0xfc]
      %v955 = vld [vmem:[#allocation2 + $0x88] sm:$0xfc]
      %v956 = vld [vmem:[#allocation2 + $0x90] sm:$0x3]
      %v957 = vld [vmem:[#allocation2 + $0x98] sm:$0x3]
      %v958 = vld [vmem:[#allocation2 + $0xa0] sm:$0xfc]
      %v959 = vld [vmem:[#allocation2 + $0xa8] sm:$0xfc]
      %v960 = vld [vmem:[#allocation2 + $0xb0] sm:$0x3]
      %v961 = vld [vmem:[#allocation2 + $0xb8] sm:$0x3]
      %v962 = vld [vmem:[#allocation2 + $0xc0] sm:$0xfc]
      %v963 = vld [vmem:[#allocation2 + $0xc8] sm:$0xfc]
      %v964 = vld [vmem:[#allocation2 + $0xd0] sm:$0x3]
      %v965 = vld [vmem:[#allocation2 + $0xd8] sm:$0x3]
      %v966 = vld [vmem:[#allocation2 + $0xe0] sm:$0xfc]
      %v967 = vld [vmem:[#allocation2 + $0xe8] sm:$0xfc]
      %v968 = vld [vmem:[#allocation2 + $0xf0] sm:$0x3]
      %v969 = vld [vmem:[#allocation2 + $0xf8] sm:$0x3]
      %vm1002 = vcmask 1045504
      %v1003 = vrot.slane %v938, 2
      %v1004 = vrot.slane %v940, 2
      %v1005 = vsel %vm1002, %v1003, %v1004
      %v1006 = vrot.slane %v939, 2
      %v1007 = vrot.slane %v941, 2
      %v1008 = vsel %vm1002, %v1006, %v1007
      %v1009 = vrot.slane %v942, 2
      %v1010 = vrot.slane %v944, 2
      %v1011 = vsel %vm1002, %v1009, %v1010
      %v1012 = vrot.slane %v943, 2
      %v1013 = vrot.slane %v945, 2
      %v1014 = vsel %vm1002, %v1012, %v1013
      %v1015 = vrot.slane %v946, 2
      %v1016 = vrot.slane %v948, 2
      %v1017 = vsel %vm1002, %v1015, %v1016
      %v1018 = vrot.slane %v947, 2
      %v1019 = vrot.slane %v949, 2
      %v1020 = vsel %vm1002, %v1018, %v1019
      %v1021 = vrot.slane %v950, 2
      %v1022 = vrot.slane %v952, 2
      %v1023 = vsel %vm1002, %v1021, %v1022
      %v1024 = vrot.slane %v951, 2
      %v1025 = vrot.slane %v953, 2
      %v1026 = vsel %vm1002, %v1024, %v1025
      %v1027 = vrot.slane %v954, 2
      %v1028 = vrot.slane %v956, 2
      %v1029 = vsel %vm1002, %v1027, %v1028
      %v1030 = vrot.slane %v955, 2
      %v1031 = vrot.slane %v957, 2
      %v1032 = vsel %vm1002, %v1030, %v1031
      %v1033 = vrot.slane %v958, 2
      %v1034 = vrot.slane %v960, 2
      %v1035 = vsel %vm1002, %v1033, %v1034
      %v1036 = vrot.slane %v959, 2
      %v1037 = vrot.slane %v961, 2
      %v1038 = vsel %vm1002, %v1036, %v1037
      %v1039 = vrot.slane %v962, 2
      %v1040 = vrot.slane %v964, 2
      %v1041 = vsel %vm1002, %v1039, %v1040
      %v1042 = vrot.slane %v963, 2
      %v1043 = vrot.slane %v965, 2
      %v1044 = vsel %vm1002, %v1042, %v1043
      %v1045 = vrot.slane %v966, 2
      %v1046 = vrot.slane %v968, 2
      %v1047 = vsel %vm1002, %v1045, %v1046
      %v1048 = vrot.slane %v967, 2
      %v1049 = vrot.slane %v969, 2
      %v1050 = vsel %vm1002, %v1048, %v1049
      %v1067 = vpack.c.bf16 %v1011, %v1005
      %v1068 = vpack.c.bf16 %v1014, %v1008
      %v1069 = vpack.c.bf16 %v1023, %v1017
      %v1070 = vpack.c.bf16 %v1026, %v1020
      %v1071 = vpack.c.bf16 %v1035, %v1029
      %v1072 = vpack.c.bf16 %v1038, %v1032
      %v1073 = vpack.c.bf16 %v1047, %v1041
      %v1074 = vpack.c.bf16 %v1050, %v1044
      %s1075 = scalar_lea.vmem %s1, 256
      %v1076 = vld [vmem:[%s1075] sm:$0xf]
      %v1077 = vld [vmem:[%s1075 + $0x4] sm:$0xf]
      %v1078 = vld [vmem:[%s1075 + $0x8] sm:$0xf]
      %v1079 = vld [vmem:[%s1075 + $0xc] sm:$0xf]
      %v1080 = vld [vmem:[%s1075 + $0x10] sm:$0xf]
      %v1081 = vld [vmem:[%s1075 + $0x14] sm:$0xf]
      %v1082 = vld [vmem:[%s1075 + $0x18] sm:$0xf]
      %v1083 = vld [vmem:[%s1075 + $0x1c] sm:$0xf]
      %v1084 = vld [vmem:[%s1075 + $0x20] sm:$0xf]
      %v1085 = vld [vmem:[%s1075 + $0x24] sm:$0xf]
      %v1086 = vld [vmem:[%s1075 + $0x28] sm:$0xf]
      %v1087 = vld [vmem:[%s1075 + $0x2c] sm:$0xf]
      %v1088 = vld [vmem:[%s1075 + $0x30] sm:$0xf]
      %v1089 = vld [vmem:[%s1075 + $0x34] sm:$0xf]
      %v1090 = vld [vmem:[%s1075 + $0x38] sm:$0xf]
      %v1091 = vld [vmem:[%s1075 + $0x3c] sm:$0xf]
      %v1092 = vld [vmem:[%s1075 + $0x40] sm:$0xf]
      %v1093 = vld [vmem:[%s1075 + $0x44] sm:$0xf]
      %v1094 = vld [vmem:[%s1075 + $0x48] sm:$0xf]
      %v1095 = vld [vmem:[%s1075 + $0x4c] sm:$0xf]
      %v1096 = vld [vmem:[%s1075 + $0x50] sm:$0xf]
      %v1097 = vld [vmem:[%s1075 + $0x54] sm:$0xf]
      %v1098 = vld [vmem:[%s1075 + $0x58] sm:$0xf]
      %v1099 = vld [vmem:[%s1075 + $0x5c] sm:$0xf]
      %v1100 = vld [vmem:[%s1075 + $0x60] sm:$0xf]
      %v1101 = vld [vmem:[%s1075 + $0x64] sm:$0xf]
      %v1102 = vld [vmem:[%s1075 + $0x68] sm:$0xf]
      %v1103 = vld [vmem:[%s1075 + $0x6c] sm:$0xf]
      %v1104 = vld [vmem:[%s1075 + $0x70] sm:$0xf]
      %v1105 = vld [vmem:[%s1075 + $0x74] sm:$0xf]
      %v1106 = vld [vmem:[%s1075 + $0x78] sm:$0xf]
      %v1107 = vld [vmem:[%s1075 + $0x7c] sm:$0xf]
      %v1140 = vunpack.c.l.b16 %v1076
      %v1141 = vunpack.c.l.b16 %v1077
      %v1142 = vunpack.c.l.b16 %v1078
      %v1143 = vunpack.c.l.b16 %v1079
      %v1144 = vunpack.c.l.b16 %v1080
      %v1145 = vunpack.c.l.b16 %v1081
      %v1146 = vunpack.c.l.b16 %v1082
      %v1147 = vunpack.c.l.b16 %v1083
      %v1148 = vunpack.c.l.b16 %v1084
      %v1149 = vunpack.c.l.b16 %v1085
      %v1150 = vunpack.c.l.b16 %v1086
      %v1151 = vunpack.c.l.b16 %v1087
      %v1152 = vunpack.c.l.b16 %v1088
      %v1153 = vunpack.c.l.b16 %v1089
      %v1154 = vunpack.c.l.b16 %v1090
      %v1155 = vunpack.c.l.b16 %v1091
      %v1156 = vunpack.c.l.b16 %v1092
      %v1157 = vunpack.c.l.b16 %v1093
      %v1158 = vunpack.c.l.b16 %v1094
      %v1159 = vunpack.c.l.b16 %v1095
      %v1160 = vunpack.c.l.b16 %v1096
      %v1161 = vunpack.c.l.b16 %v1097
      %v1162 = vunpack.c.l.b16 %v1098
      %v1163 = vunpack.c.l.b16 %v1099
      %v1164 = vunpack.c.l.b16 %v1100
      %v1165 = vunpack.c.l.b16 %v1101
      %v1166 = vunpack.c.l.b16 %v1102
      %v1167 = vunpack.c.l.b16 %v1103
      %v1168 = vunpack.c.l.b16 %v1104
      %v1169 = vunpack.c.l.b16 %v1105
      %v1170 = vunpack.c.l.b16 %v1106
      %v1171 = vunpack.c.l.b16 %v1107
      %v1172 = vpack.c.b16 %v1141, %v1140
      %v1173 = vpack.c.b16 %v1143, %v1142
      %v1174 = vpack.c.b16 %v1145, %v1144
      %v1175 = vpack.c.b16 %v1147, %v1146
      %v1176 = vpack.c.b16 %v1149, %v1148
      %v1177 = vpack.c.b16 %v1151, %v1150
      %v1178 = vpack.c.b16 %v1153, %v1152
      %v1179 = vpack.c.b16 %v1155, %v1154
      %v1180 = vpack.c.b16 %v1157, %v1156
      %v1181 = vpack.c.b16 %v1159, %v1158
      %v1182 = vpack.c.b16 %v1161, %v1160
      %v1183 = vpack.c.b16 %v1163, %v1162
      %v1184 = vpack.c.b16 %v1165, %v1164
      %v1185 = vpack.c.b16 %v1167, %v1166
      %v1186 = vpack.c.b16 %v1169, %v1168
      %v1187 = vpack.c.b16 %v1171, %v1170
      %1204 = vmatprep.subr.bf16.mxu0 0
      %1205 = vmatpush1.bf16.msra.mxu0 %v1179
      %1206 = vmatprep.subr.bf16.mxu0 0
      %1207 = vmatpush1.bf16.msra.mxu0 %v1178
      %1208 = vmatprep.subr.bf16.mxu0 0
      %1209 = vmatpush1.bf16.msra.mxu0 %v1177
      %1210 = vmatprep.subr.bf16.mxu0 0
      %1211 = vmatpush1.bf16.msra.mxu0 %v1176
      %1212 = vmatprep.subr.bf16.mxu0 0
      %1213 = vmatpush1.bf16.msra.mxu0 %v1175
      %1214 = vmatprep.subr.bf16.mxu0 0
      %1215 = vmatpush1.bf16.msra.mxu0 %v1174
      %1216 = vmatprep.subr.bf16.mxu0 0
      %1217 = vmatpush1.bf16.msra.mxu0 %v1173
      %1218 = vmatprep.subr.bf16.mxu0 0
      %1219 = vmatpush1.bf16.msra.mxu0 %v1172
      %1220 = vmatprep.subr.bf16.mxu0 0
      %1221 = vmatpush2.bf16.msra.mxu0 %v1187
      %1222 = vmatprep.subr.bf16.mxu0 0
      %1223 = vmatpush2.bf16.msra.mxu0 %v1186
      %1224 = vmatprep.subr.bf16.mxu0 0
      %1225 = vmatpush2.bf16.msra.mxu0 %v1185
      %1226 = vmatprep.subr.bf16.mxu0 0
      %1227 = vmatpush2.bf16.msra.mxu0 %v1184
      %1228 = vmatprep.subr.bf16.mxu0 0
      %1229 = vmatpush2.bf16.msra.mxu0 %v1183
      %1230 = vmatprep.subr.bf16.mxu0 0
      %1231 = vmatpush2.bf16.msra.mxu0 %v1182
      %1232 = vmatprep.subr.bf16.mxu0 0
      %1233 = vmatpush2.bf16.msra.mxu0 %v1181
      %1234 = vmatprep.subr.bf16.mxu0 0
      %1235 = vmatpush2.bf16.msra.mxu0 %v1180
      %1236 = vmatprep.mubr.bf16.mxu0 %v1068
      %1237 = vmatmul.mubr.bf16.gmra.mxu0 %v1067
      %v1238 = vpop.f32.mrf.mxu0
      %v1239 = vadd.f32 0.0, %v1238
      %v1240 = vpop.f32.mrf.mxu0
      %v1241 = vpop.f32.mrf.mxu0
      %v1242 = vadd.f32 0.0, %v1241
      %v1243 = vpop.f32.mrf.mxu0
      %1244 = vmatprep.mubr.bf16.mxu0 %v1070
      %1245 = vmatmul.mubr.bf16.gmra.mxu0 %v1069
      %v1246 = vpop.f32.mrf.mxu0
      %v1247 = vadd.f32 0.0, %v1246
      %v1248 = vpop.f32.mrf.mxu0
      %v1249 = vpop.f32.mrf.mxu0
      %v1250 = vadd.f32 0.0, %v1249
      %v1251 = vpop.f32.mrf.mxu0
      %1252 = vmatprep.mubr.bf16.mxu0 %v1072
      %1253 = vmatmul.mubr.bf16.gmra.mxu0 %v1071
      %v1254 = vpop.f32.mrf.mxu0
      %v1255 = vadd.f32 0.0, %v1254
      %v1256 = vpop.f32.mrf.mxu0
      %v1257 = vpop.f32.mrf.mxu0
      %v1258 = vadd.f32 0.0, %v1257
      %v1259 = vpop.f32.mrf.mxu0
      %1260 = vmatprep.mubr.bf16.mxu0 %v1074
      %1261 = vmatmul.mubr.bf16.gmra.mxu0 %v1073
      %v1262 = vpop.f32.mrf.mxu0
      %v1263 = vadd.f32 0.0, %v1262
      %v1264 = vpop.f32.mrf.mxu0
      %v1265 = vpop.f32.mrf.mxu0
      %v1266 = vadd.f32 0.0, %v1265
      %v1267 = vpop.f32.mrf.mxu0
      %1268 = vdwg.mxu0
      %v1269 = vadd.f32 %v908, %v1239
      %v1270 = vadd.f32 %v911, %v1242
      %v1271 = vadd.f32 %v916, %v1247
      %v1272 = vadd.f32 %v919, %v1250
      %v1273 = vadd.f32 %v924, %v1255
      %v1274 = vadd.f32 %v927, %v1258
      %v1275 = vadd.f32 %v932, %v1263
      %v1276 = vadd.f32 %v935, %v1266
      %v1277 = vld [vmem:[%s357] sm:$0xff]
      %v1278 = vld [vmem:[%s357 + $0x8] sm:$0xff]
      %v1279 = vld [vmem:[%s357 + $0x20] sm:$0xff]
      %v1280 = vld [vmem:[%s357 + $0x28] sm:$0xff]
      %v1281 = vld [vmem:[%s357 + $0x40] sm:$0xff]
      %v1282 = vld [vmem:[%s357 + $0x48] sm:$0xff]
      %v1283 = vld [vmem:[%s357 + $0x60] sm:$0xff]
      %v1284 = vld [vmem:[%s357 + $0x68] sm:$0xff]
      %v1285 = vld [vmem:[%s357 + $0x80] sm:$0xff]
      %v1286 = vld [vmem:[%s357 + $0x88] sm:$0xff]
      %v1287 = vld [vmem:[%s357 + $0xa0] sm:$0xff]
      %v1288 = vld [vmem:[%s357 + $0xa8] sm:$0xff]
      %v1289 = vld [vmem:[%s357 + $0xc0] sm:$0xff]
      %v1290 = vld [vmem:[%s357 + $0xc8] sm:$0xff]
      %v1291 = vld [vmem:[%s357 + $0xe0] sm:$0xff]
      %v1292 = vld [vmem:[%s357 + $0xe8] sm:$0xff]
      %v1293 = vpack.c.bf16 %v1279, %v1277
      %v1294 = vpack.c.bf16 %v1280, %v1278
      %v1295 = vpack.c.bf16 %v1283, %v1281
      %v1296 = vpack.c.bf16 %v1284, %v1282
      %v1297 = vpack.c.bf16 %v1287, %v1285
      %v1298 = vpack.c.bf16 %v1288, %v1286
      %v1299 = vpack.c.bf16 %v1291, %v1289
      %v1300 = vpack.c.bf16 %v1292, %v1290
      %s1301 = scalar_lea.vmem %s1, 384
      %v1302 = vld [vmem:[%s1301] sm:$0xf]
      %v1303 = vld [vmem:[%s1301 + $0x4] sm:$0xf]
      %v1304 = vld [vmem:[%s1301 + $0x8] sm:$0xf]
      %v1305 = vld [vmem:[%s1301 + $0xc] sm:$0xf]
      %v1306 = vld [vmem:[%s1301 + $0x10] sm:$0xf]
      %v1307 = vld [vmem:[%s1301 + $0x14] sm:$0xf]
      %v1308 = vld [vmem:[%s1301 + $0x18] sm:$0xf]
      %v1309 = vld [vmem:[%s1301 + $0x1c] sm:$0xf]
      %v1310 = vld [vmem:[%s1301 + $0x20] sm:$0xf]
      %v1311 = vld [vmem:[%s1301 + $0x24] sm:$0xf]
      %v1312 = vld [vmem:[%s1301 + $0x28] sm:$0xf]
      %v1313 = vld [vmem:[%s1301 + $0x2c] sm:$0xf]
      %v1314 = vld [vmem:[%s1301 + $0x30] sm:$0xf]
      %v1315 = vld [vmem:[%s1301 + $0x34] sm:$0xf]
      %v1316 = vld [vmem:[%s1301 + $0x38] sm:$0xf]
      %v1317 = vld [vmem:[%s1301 + $0x3c] sm:$0xf]
      %v1318 = vld [vmem:[%s1301 + $0x40] sm:$0xf]
      %v1319 = vld [vmem:[%s1301 + $0x44] sm:$0xf]
      %v1320 = vld [vmem:[%s1301 + $0x48] sm:$0xf]
      %v1321 = vld [vmem:[%s1301 + $0x4c] sm:$0xf]
      %v1322 = vld [vmem:[%s1301 + $0x50] sm:$0xf]
      %v1323 = vld [vmem:[%s1301 + $0x54] sm:$0xf]
      %v1324 = vld [vmem:[%s1301 + $0x58] sm:$0xf]
      %v1325 = vld [vmem:[%s1301 + $0x5c] sm:$0xf]
      %v1326 = vld [vmem:[%s1301 + $0x60] sm:$0xf]
      %v1327 = vld [vmem:[%s1301 + $0x64] sm:$0xf]
      %v1328 = vld [vmem:[%s1301 + $0x68] sm:$0xf]
      %v1329 = vld [vmem:[%s1301 + $0x6c] sm:$0xf]
      %v1330 = vld [vmem:[%s1301 + $0x70] sm:$0xf]
      %v1331 = vld [vmem:[%s1301 + $0x74] sm:$0xf]
      %v1332 = vld [vmem:[%s1301 + $0x78] sm:$0xf]
      %v1333 = vld [vmem:[%s1301 + $0x7c] sm:$0xf]
      %v1366 = vunpack.c.l.b16 %v1302
      %v1367 = vunpack.c.l.b16 %v1303
      %v1368 = vunpack.c.l.b16 %v1304
      %v1369 = vunpack.c.l.b16 %v1305
      %v1370 = vunpack.c.l.b16 %v1306
      %v1371 = vunpack.c.l.b16 %v1307
      %v1372 = vunpack.c.l.b16 %v1308
      %v1373 = vunpack.c.l.b16 %v1309
      %v1374 = vunpack.c.l.b16 %v1310
      %v1375 = vunpack.c.l.b16 %v1311
      %v1376 = vunpack.c.l.b16 %v1312
      %v1377 = vunpack.c.l.b16 %v1313
      %v1378 = vunpack.c.l.b16 %v1314
      %v1379 = vunpack.c.l.b16 %v1315
      %v1380 = vunpack.c.l.b16 %v1316
      %v1381 = vunpack.c.l.b16 %v1317
      %v1382 = vunpack.c.l.b16 %v1318
      %v1383 = vunpack.c.l.b16 %v1319
      %v1384 = vunpack.c.l.b16 %v1320
      %v1385 = vunpack.c.l.b16 %v1321
      %v1386 = vunpack.c.l.b16 %v1322
      %v1387 = vunpack.c.l.b16 %v1323
      %v1388 = vunpack.c.l.b16 %v1324
      %v1389 = vunpack.c.l.b16 %v1325
      %v1390 = vunpack.c.l.b16 %v1326
      %v1391 = vunpack.c.l.b16 %v1327
      %v1392 = vunpack.c.l.b16 %v1328
      %v1393 = vunpack.c.l.b16 %v1329
      %v1394 = vunpack.c.l.b16 %v1330
      %v1395 = vunpack.c.l.b16 %v1331
      %v1396 = vunpack.c.l.b16 %v1332
      %v1397 = vunpack.c.l.b16 %v1333
      %v1398 = vpack.c.b16 %v1367, %v1366
      %v1399 = vpack.c.b16 %v1369, %v1368
      %v1400 = vpack.c.b16 %v1371, %v1370
      %v1401 = vpack.c.b16 %v1373, %v1372
      %v1402 = vpack.c.b16 %v1375, %v1374
      %v1403 = vpack.c.b16 %v1377, %v1376
      %v1404 = vpack.c.b16 %v1379, %v1378
      %v1405 = vpack.c.b16 %v1381, %v1380
      %v1406 = vpack.c.b16 %v1383, %v1382
      %v1407 = vpack.c.b16 %v1385, %v1384
      %v1408 = vpack.c.b16 %v1387, %v1386
      %v1409 = vpack.c.b16 %v1389, %v1388
      %v1410 = vpack.c.b16 %v1391, %v1390
      %v1411 = vpack.c.b16 %v1393, %v1392
      %v1412 = vpack.c.b16 %v1395, %v1394
      %v1413 = vpack.c.b16 %v1397, %v1396
      %1430 = vmatprep.subr.bf16.mxu0 0
      %1431 = vmatpush1.bf16.msra.mxu0 %v1405
      %1432 = vmatprep.subr.bf16.mxu0 0
      %1433 = vmatpush1.bf16.msra.mxu0 %v1404
      %1434 = vmatprep.subr.bf16.mxu0 0
      %1435 = vmatpush1.bf16.msra.mxu0 %v1403
      %1436 = vmatprep.subr.bf16.mxu0 0
      %1437 = vmatpush1.bf16.msra.mxu0 %v1402
      %1438 = vmatprep.subr.bf16.mxu0 0
      %1439 = vmatpush1.bf16.msra.mxu0 %v1401
      %1440 = vmatprep.subr.bf16.mxu0 0
      %1441 = vmatpush1.bf16.msra.mxu0 %v1400
      %1442 = vmatprep.subr.bf16.mxu0 0
      %1443 = vmatpush1.bf16.msra.mxu0 %v1399
      %1444 = vmatprep.subr.bf16.mxu0 0
      %1445 = vmatpush1.bf16.msra.mxu0 %v1398
      %1446 = vmatprep.subr.bf16.mxu0 0
      %1447 = vmatpush2.bf16.msra.mxu0 %v1413
      %1448 = vmatprep.subr.bf16.mxu0 0
      %1449 = vmatpush2.bf16.msra.mxu0 %v1412
      %1450 = vmatprep.subr.bf16.mxu0 0
      %1451 = vmatpush2.bf16.msra.mxu0 %v1411
      %1452 = vmatprep.subr.bf16.mxu0 0
      %1453 = vmatpush2.bf16.msra.mxu0 %v1410
      %1454 = vmatprep.subr.bf16.mxu0 0
      %1455 = vmatpush2.bf16.msra.mxu0 %v1409
      %1456 = vmatprep.subr.bf16.mxu0 0
      %1457 = vmatpush2.bf16.msra.mxu0 %v1408
      %1458 = vmatprep.subr.bf16.mxu0 0
      %1459 = vmatpush2.bf16.msra.mxu0 %v1407
      %1460 = vmatprep.subr.bf16.mxu0 0
      %1461 = vmatpush2.bf16.msra.mxu0 %v1406
      %1462 = vmatprep.mubr.bf16.mxu0 %v1294
      %1463 = vmatmul.mubr.bf16.gmra.mxu0 %v1293
      %v1464 = vpop.f32.mrf.mxu0
      %v1465 = vadd.f32 0.0, %v1464
      %v1466 = vpop.f32.mrf.mxu0
      %v1467 = vpop.f32.mrf.mxu0
      %v1468 = vadd.f32 0.0, %v1467
      %v1469 = vpop.f32.mrf.mxu0
      %1470 = vmatprep.mubr.bf16.mxu0 %v1296
      %1471 = vmatmul.mubr.bf16.gmra.mxu0 %v1295
      %v1472 = vpop.f32.mrf.mxu0
      %v1473 = vadd.f32 0.0, %v1472
      %v1474 = vpop.f32.mrf.mxu0
      %v1475 = vpop.f32.mrf.mxu0
      %v1476 = vadd.f32 0.0, %v1475
      %v1477 = vpop.f32.mrf.mxu0
      %1478 = vmatprep.mubr.bf16.mxu0 %v1298
      %1479 = vmatmul.mubr.bf16.gmra.mxu0 %v1297
      %v1480 = vpop.f32.mrf.mxu0
      %v1481 = vadd.f32 0.0, %v1480
      %v1482 = vpop.f32.mrf.mxu0
      %v1483 = vpop.f32.mrf.mxu0
      %v1484 = vadd.f32 0.0, %v1483
      %v1485 = vpop.f32.mrf.mxu0
      %1486 = vmatprep.mubr.bf16.mxu0 %v1300
      %1487 = vmatmul.mubr.bf16.gmra.mxu0 %v1299
      %v1488 = vpop.f32.mrf.mxu0
      %v1489 = vadd.f32 0.0, %v1488
      %v1490 = vpop.f32.mrf.mxu0
      %v1491 = vpop.f32.mrf.mxu0
      %v1492 = vadd.f32 0.0, %v1491
      %v1493 = vpop.f32.mrf.mxu0
      %1494 = vdwg.mxu0
      %v1495 = vadd.f32 %v1269, %v1465
      %v1496 = vadd.f32 %v1270, %v1468
      %v1497 = vadd.f32 %v1271, %v1473
      %v1498 = vadd.f32 %v1272, %v1476
      %v1499 = vadd.f32 %v1273, %v1481
      %v1500 = vadd.f32 %v1274, %v1484
      %v1501 = vadd.f32 %v1275, %v1489
      %v1502 = vadd.f32 %v1276, %v1492
      %v1503 = vld [vmem:[%s357] sm:$0xfe]
      %v1504 = vld [vmem:[%s357 + $0x8] sm:$0xfe]
      %v1505 = vld [vmem:[%s357 + $0x10] sm:$0x1]
      %v1506 = vld [vmem:[%s357 + $0x18] sm:$0x1]
      %v1507 = vld [vmem:[%s357 + $0x20] sm:$0xfe]
      %v1508 = vld [vmem:[%s357 + $0x28] sm:$0xfe]
      %v1509 = vld [vmem:[%s357 + $0x30] sm:$0x1]
      %v1510 = vld [vmem:[%s357 + $0x38] sm:$0x1]
      %v1511 = vld [vmem:[%s357 + $0x40] sm:$0xfe]
      %v1512 = vld [vmem:[%s357 + $0x48] sm:$0xfe]
      %v1513 = vld [vmem:[%s357 + $0x50] sm:$0x1]
      %v1514 = vld [vmem:[%s357 + $0x58] sm:$0x1]
      %v1515 = vld [vmem:[%s357 + $0x60] sm:$0xfe]
      %v1516 = vld [vmem:[%s357 + $0x68] sm:$0xfe]
      %v1517 = vld [vmem:[%s357 + $0x70] sm:$0x1]
      %v1518 = vld [vmem:[%s357 + $0x78] sm:$0x1]
      %v1519 = vld [vmem:[%s357 + $0x80] sm:$0xfe]
      %v1520 = vld [vmem:[%s357 + $0x88] sm:$0xfe]
      %v1521 = vld [vmem:[%s357 + $0x90] sm:$0x1]
      %v1522 = vld [vmem:[%s357 + $0x98] sm:$0x1]
      %v1523 = vld [vmem:[%s357 + $0xa0] sm:$0xfe]
      %v1524 = vld [vmem:[%s357 + $0xa8] sm:$0xfe]
      %v1525 = vld [vmem:[%s357 + $0xb0] sm:$0x1]
      %v1526 = vld [vmem:[%s357 + $0xb8] sm:$0x1]
      %v1527 = vld [vmem:[%s357 + $0xc0] sm:$0xfe]
      %v1528 = vld [vmem:[%s357 + $0xc8] sm:$0xfe]
      %v1529 = vld [vmem:[%s357 + $0xd0] sm:$0x1]
      %v1530 = vld [vmem:[%s357 + $0xd8] sm:$0x1]
      %v1531 = vld [vmem:[%s357 + $0xe0] sm:$0xfe]
      %v1532 = vld [vmem:[%s357 + $0xe8] sm:$0xfe]
      %v1533 = vld [vmem:[%s357 + $0xf0] sm:$0x1]
      %v1534 = vld [vmem:[%s357 + $0xf8] sm:$0x1]
      %v1567 = vrot.slane %v1503, 1
      %v1568 = vrot.slane %v1505, 1
      %v1569 = vsel %vm510, %v1567, %v1568
      %v1570 = vrot.slane %v1504, 1
      %v1571 = vrot.slane %v1506, 1
      %v1572 = vsel %vm510, %v1570, %v1571
      %v1573 = vrot.slane %v1507, 1
      %v1574 = vrot.slane %v1509, 1
      %v1575 = vsel %vm510, %v1573, %v1574
      %v1576 = vrot.slane %v1508, 1
      %v1577 = vrot.slane %v1510, 1
      %v1578 = vsel %vm510, %v1576, %v1577
      %v1579 = vrot.slane %v1511, 1
      %v1580 = vrot.slane %v1513, 1
      %v1581 = vsel %vm510, %v1579, %v1580
      %v1582 = vrot.slane %v1512, 1
      %v1583 = vrot.slane %v1514, 1
      %v1584 = vsel %vm510, %v1582, %v1583
      %v1585 = vrot.slane %v1515, 1
      %v1586 = vrot.slane %v1517, 1
      %v1587 = vsel %vm510, %v1585, %v1586
      %v1588 = vrot.slane %v1516, 1
      %v1589 = vrot.slane %v1518, 1
      %v1590 = vsel %vm510, %v1588, %v1589
      %v1591 = vrot.slane %v1519, 1
      %v1592 = vrot.slane %v1521, 1
      %v1593 = vsel %vm510, %v1591, %v1592
      %v1594 = vrot.slane %v1520, 1
      %v1595 = vrot.slane %v1522, 1
      %v1596 = vsel %vm510, %v1594, %v1595
      %v1597 = vrot.slane %v1523, 1
      %v1598 = vrot.slane %v1525, 1
      %v1599 = vsel %vm510, %v1597, %v1598
      %v1600 = vrot.slane %v1524, 1
      %v1601 = vrot.slane %v1526, 1
      %v1602 = vsel %vm510, %v1600, %v1601
      %v1603 = vrot.slane %v1527, 1
      %v1604 = vrot.slane %v1529, 1
      %v1605 = vsel %vm510, %v1603, %v1604
      %v1606 = vrot.slane %v1528, 1
      %v1607 = vrot.slane %v1530, 1
      %v1608 = vsel %vm510, %v1606, %v1607
      %v1609 = vrot.slane %v1531, 1
      %v1610 = vrot.slane %v1533, 1
      %v1611 = vsel %vm510, %v1609, %v1610
      %v1612 = vrot.slane %v1532, 1
      %v1613 = vrot.slane %v1534, 1
      %v1614 = vsel %vm510, %v1612, %v1613
      %v1631 = vpack.c.bf16 %v1575, %v1569
      %v1632 = vpack.c.bf16 %v1578, %v1572
      %v1633 = vpack.c.bf16 %v1587, %v1581
      %v1634 = vpack.c.bf16 %v1590, %v1584
      %v1635 = vpack.c.bf16 %v1599, %v1593
      %v1636 = vpack.c.bf16 %v1602, %v1596
      %v1637 = vpack.c.bf16 %v1611, %v1605
      %v1638 = vpack.c.bf16 %v1614, %v1608
      %s1639 = scalar_lea.vmem %s1, 512
      %v1640 = vld [vmem:[%s1639] sm:$0xf]
      %v1641 = vld [vmem:[%s1639 + $0x4] sm:$0xf]
      %v1642 = vld [vmem:[%s1639 + $0x8] sm:$0xf]
      %v1643 = vld [vmem:[%s1639 + $0xc] sm:$0xf]
      %v1644 = vld [vmem:[%s1639 + $0x10] sm:$0xf]
      %v1645 = vld [vmem:[%s1639 + $0x14] sm:$0xf]
      %v1646 = vld [vmem:[%s1639 + $0x18] sm:$0xf]
      %v1647 = vld [vmem:[%s1639 + $0x1c] sm:$0xf]
      %v1648 = vld [vmem:[%s1639 + $0x20] sm:$0xf]
      %v1649 = vld [vmem:[%s1639 + $0x24] sm:$0xf]
      %v1650 = vld [vmem:[%s1639 + $0x28] sm:$0xf]
      %v1651 = vld [vmem:[%s1639 + $0x2c] sm:$0xf]
      %v1652 = vld [vmem:[%s1639 + $0x30] sm:$0xf]
      %v1653 = vld [vmem:[%s1639 + $0x34] sm:$0xf]
      %v1654 = vld [vmem:[%s1639 + $0x38] sm:$0xf]
      %v1655 = vld [vmem:[%s1639 + $0x3c] sm:$0xf]
      %v1656 = vld [vmem:[%s1639 + $0x40] sm:$0xf]
      %v1657 = vld [vmem:[%s1639 + $0x44] sm:$0xf]
      %v1658 = vld [vmem:[%s1639 + $0x48] sm:$0xf]
      %v1659 = vld [vmem:[%s1639 + $0x4c] sm:$0xf]
      %v1660 = vld [vmem:[%s1639 + $0x50] sm:$0xf]
      %v1661 = vld [vmem:[%s1639 + $0x54] sm:$0xf]
      %v1662 = vld [vmem:[%s1639 + $0x58] sm:$0xf]
      %v1663 = vld [vmem:[%s1639 + $0x5c] sm:$0xf]
      %v1664 = vld [vmem:[%s1639 + $0x60] sm:$0xf]
      %v1665 = vld [vmem:[%s1639 + $0x64] sm:$0xf]
      %v1666 = vld [vmem:[%s1639 + $0x68] sm:$0xf]
      %v1667 = vld [vmem:[%s1639 + $0x6c] sm:$0xf]
      %v1668 = vld [vmem:[%s1639 + $0x70] sm:$0xf]
      %v1669 = vld [vmem:[%s1639 + $0x74] sm:$0xf]
      %v1670 = vld [vmem:[%s1639 + $0x78] sm:$0xf]
      %v1671 = vld [vmem:[%s1639 + $0x7c] sm:$0xf]
      %v1704 = vunpack.c.l.b16 %v1640
      %v1705 = vunpack.c.l.b16 %v1641
      %v1706 = vunpack.c.l.b16 %v1642
      %v1707 = vunpack.c.l.b16 %v1643
      %v1708 = vunpack.c.l.b16 %v1644
      %v1709 = vunpack.c.l.b16 %v1645
      %v1710 = vunpack.c.l.b16 %v1646
      %v1711 = vunpack.c.l.b16 %v1647
      %v1712 = vunpack.c.l.b16 %v1648
      %v1713 = vunpack.c.l.b16 %v1649
      %v1714 = vunpack.c.l.b16 %v1650
      %v1715 = vunpack.c.l.b16 %v1651
      %v1716 = vunpack.c.l.b16 %v1652
      %v1717 = vunpack.c.l.b16 %v1653
      %v1718 = vunpack.c.l.b16 %v1654
      %v1719 = vunpack.c.l.b16 %v1655
      %v1720 = vunpack.c.l.b16 %v1656
      %v1721 = vunpack.c.l.b16 %v1657
      %v1722 = vunpack.c.l.b16 %v1658
      %v1723 = vunpack.c.l.b16 %v1659
      %v1724 = vunpack.c.l.b16 %v1660
      %v1725 = vunpack.c.l.b16 %v1661
      %v1726 = vunpack.c.l.b16 %v1662
      %v1727 = vunpack.c.l.b16 %v1663
      %v1728 = vunpack.c.l.b16 %v1664
      %v1729 = vunpack.c.l.b16 %v1665
      %v1730 = vunpack.c.l.b16 %v1666
      %v1731 = vunpack.c.l.b16 %v1667
      %v1732 = vunpack.c.l.b16 %v1668
      %v1733 = vunpack.c.l.b16 %v1669
      %v1734 = vunpack.c.l.b16 %v1670
      %v1735 = vunpack.c.l.b16 %v1671
      %v1736 = vpack.c.b16 %v1705, %v1704
      %v1737 = vpack.c.b16 %v1707, %v1706
      %v1738 = vpack.c.b16 %v1709, %v1708
      %v1739 = vpack.c.b16 %v1711, %v1710
      %v1740 = vpack.c.b16 %v1713, %v1712
      %v1741 = vpack.c.b16 %v1715, %v1714
      %v1742 = vpack.c.b16 %v1717, %v1716
      %v1743 = vpack.c.b16 %v1719, %v1718
      %v1744 = vpack.c.b16 %v1721, %v1720
      %v1745 = vpack.c.b16 %v1723, %v1722
      %v1746 = vpack.c.b16 %v1725, %v1724
      %v1747 = vpack.c.b16 %v1727, %v1726
      %v1748 = vpack.c.b16 %v1729, %v1728
      %v1749 = vpack.c.b16 %v1731, %v1730
      %v1750 = vpack.c.b16 %v1733, %v1732
      %v1751 = vpack.c.b16 %v1735, %v1734
      %1768 = vmatprep.subr.bf16.mxu0 0
      %1769 = vmatpush1.bf16.msra.mxu0 %v1743
      %1770 = vmatprep.subr.bf16.mxu0 0
      %1771 = vmatpush1.bf16.msra.mxu0 %v1742
      %1772 = vmatprep.subr.bf16.mxu0 0
      %1773 = vmatpush1.bf16.msra.mxu0 %v1741
      %1774 = vmatprep.subr.bf16.mxu0 0
      %1775 = vmatpush1.bf16.msra.mxu0 %v1740
      %1776 = vmatprep.subr.bf16.mxu0 0
      %1777 = vmatpush1.bf16.msra.mxu0 %v1739
      %1778 = vmatprep.subr.bf16.mxu0 0
      %1779 = vmatpush1.bf16.msra.mxu0 %v1738
      %1780 = vmatprep.subr.bf16.mxu0 0
      %1781 = vmatpush1.bf16.msra.mxu0 %v1737
      %1782 = vmatprep.subr.bf16.mxu0 0
      %1783 = vmatpush1.bf16.msra.mxu0 %v1736
      %1784 = vmatprep.subr.bf16.mxu0 0
      %1785 = vmatpush2.bf16.msra.mxu0 %v1751
      %1786 = vmatprep.subr.bf16.mxu0 0
      %1787 = vmatpush2.bf16.msra.mxu0 %v1750
      %1788 = vmatprep.subr.bf16.mxu0 0
      %1789 = vmatpush2.bf16.msra.mxu0 %v1749
      %1790 = vmatprep.subr.bf16.mxu0 0
      %1791 = vmatpush2.bf16.msra.mxu0 %v1748
      %1792 = vmatprep.subr.bf16.mxu0 0
      %1793 = vmatpush2.bf16.msra.mxu0 %v1747
      %1794 = vmatprep.subr.bf16.mxu0 0
      %1795 = vmatpush2.bf16.msra.mxu0 %v1746
      %1796 = vmatprep.subr.bf16.mxu0 0
      %1797 = vmatpush2.bf16.msra.mxu0 %v1745
      %1798 = vmatprep.subr.bf16.mxu0 0
      %1799 = vmatpush2.bf16.msra.mxu0 %v1744
      %1800 = vmatprep.mubr.bf16.mxu0 %v1632
      %1801 = vmatmul.mubr.bf16.gmra.mxu0 %v1631
      %v1802 = vpop.f32.mrf.mxu0
      %v1803 = vadd.f32 0.0, %v1802
      %v1804 = vpop.f32.mrf.mxu0
      %v1805 = vpop.f32.mrf.mxu0
      %v1806 = vadd.f32 0.0, %v1805
      %v1807 = vpop.f32.mrf.mxu0
      %1808 = vmatprep.mubr.bf16.mxu0 %v1634
      %1809 = vmatmul.mubr.bf16.gmra.mxu0 %v1633
      %v1810 = vpop.f32.mrf.mxu0
      %v1811 = vadd.f32 0.0, %v1810
      %v1812 = vpop.f32.mrf.mxu0
      %v1813 = vpop.f32.mrf.mxu0
      %v1814 = vadd.f32 0.0, %v1813
      %v1815 = vpop.f32.mrf.mxu0
      %1816 = vmatprep.mubr.bf16.mxu0 %v1636
      %1817 = vmatmul.mubr.bf16.gmra.mxu0 %v1635
      %v1818 = vpop.f32.mrf.mxu0
      %v1819 = vadd.f32 0.0, %v1818
      %v1820 = vpop.f32.mrf.mxu0
      %v1821 = vpop.f32.mrf.mxu0
      %v1822 = vadd.f32 0.0, %v1821
      %v1823 = vpop.f32.mrf.mxu0
      %1824 = vmatprep.mubr.bf16.mxu0 %v1638
      %1825 = vmatmul.mubr.bf16.gmra.mxu0 %v1637
      %v1826 = vpop.f32.mrf.mxu0
      %v1827 = vadd.f32 0.0, %v1826
      %v1828 = vpop.f32.mrf.mxu0
      %v1829 = vpop.f32.mrf.mxu0
      %v1830 = vadd.f32 0.0, %v1829
      %v1831 = vpop.f32.mrf.mxu0
      %1832 = vdwg.mxu0
      %v1833 = vadd.f32 %v1495, %v1803
      %v1834 = vadd.f32 %v1496, %v1806
      %v1835 = vadd.f32 %v1497, %v1811
      %v1836 = vadd.f32 %v1498, %v1814
      %v1837 = vadd.f32 %v1499, %v1819
      %v1838 = vadd.f32 %v1500, %v1822
      %v1839 = vadd.f32 %v1501, %v1827
      %v1840 = vadd.f32 %v1502, %v1830
      %v1841 = vld [vmem:[%s357] sm:$0xfc]
      %v1842 = vld [vmem:[%s357 + $0x8] sm:$0xfc]
      %v1843 = vld [vmem:[%s357 + $0x10] sm:$0x3]
      %v1844 = vld [vmem:[%s357 + $0x18] sm:$0x3]
      %v1845 = vld [vmem:[%s357 + $0x20] sm:$0xfc]
      %v1846 = vld [vmem:[%s357 + $0x28] sm:$0xfc]
      %v1847 = vld [vmem:[%s357 + $0x30] sm:$0x3]
      %v1848 = vld [vmem:[%s357 + $0x38] sm:$0x3]
      %v1849 = vld [vmem:[%s357 + $0x40] sm:$0xfc]
      %v1850 = vld [vmem:[%s357 + $0x48] sm:$0xfc]
      %v1851 = vld [vmem:[%s357 + $0x50] sm:$0x3]
      %v1852 = vld [vmem:[%s357 + $0x58] sm:$0x3]
      %v1853 = vld [vmem:[%s357 + $0x60] sm:$0xfc]
      %v1854 = vld [vmem:[%s357 + $0x68] sm:$0xfc]
      %v1855 = vld [vmem:[%s357 + $0x70] sm:$0x3]
      %v1856 = vld [vmem:[%s357 + $0x78] sm:$0x3]
      %v1857 = vld [vmem:[%s357 + $0x80] sm:$0xfc]
      %v1858 = vld [vmem:[%s357 + $0x88] sm:$0xfc]
      %v1859 = vld [vmem:[%s357 + $0x90] sm:$0x3]
      %v1860 = vld [vmem:[%s357 + $0x98] sm:$0x3]
      %v1861 = vld [vmem:[%s357 + $0xa0] sm:$0xfc]
      %v1862 = vld [vmem:[%s357 + $0xa8] sm:$0xfc]
      %v1863 = vld [vmem:[%s357 + $0xb0] sm:$0x3]
      %v1864 = vld [vmem:[%s357 + $0xb8] sm:$0x3]
      %v1865 = vld [vmem:[%s357 + $0xc0] sm:$0xfc]
      %v1866 = vld [vmem:[%s357 + $0xc8] sm:$0xfc]
      %v1867 = vld [vmem:[%s357 + $0xd0] sm:$0x3]
      %v1868 = vld [vmem:[%s357 + $0xd8] sm:$0x3]
      %v1869 = vld [vmem:[%s357 + $0xe0] sm:$0xfc]
      %v1870 = vld [vmem:[%s357 + $0xe8] sm:$0xfc]
      %v1871 = vld [vmem:[%s357 + $0xf0] sm:$0x3]
      %v1872 = vld [vmem:[%s357 + $0xf8] sm:$0x3]
      %v1905 = vrot.slane %v1841, 2
      %v1906 = vrot.slane %v1843, 2
      %v1907 = vsel %vm1002, %v1905, %v1906
      %v1908 = vrot.slane %v1842, 2
      %v1909 = vrot.slane %v1844, 2
      %v1910 = vsel %vm1002, %v1908, %v1909
      %v1911 = vrot.slane %v1845, 2
      %v1912 = vrot.slane %v1847, 2
      %v1913 = vsel %vm1002, %v1911, %v1912
      %v1914 = vrot.slane %v1846, 2
      %v1915 = vrot.slane %v1848, 2
      %v1916 = vsel %vm1002, %v1914, %v1915
      %v1917 = vrot.slane %v1849, 2
      %v1918 = vrot.slane %v1851, 2
      %v1919 = vsel %vm1002, %v1917, %v1918
      %v1920 = vrot.slane %v1850, 2
      %v1921 = vrot.slane %v1852, 2
      %v1922 = vsel %vm1002, %v1920, %v1921
      %v1923 = vrot.slane %v1853, 2
      %v1924 = vrot.slane %v1855, 2
      %v1925 = vsel %vm1002, %v1923, %v1924
      %v1926 = vrot.slane %v1854, 2
      %v1927 = vrot.slane %v1856, 2
      %v1928 = vsel %vm1002, %v1926, %v1927
      %v1929 = vrot.slane %v1857, 2
      %v1930 = vrot.slane %v1859, 2
      %v1931 = vsel %vm1002, %v1929, %v1930
      %v1932 = vrot.slane %v1858, 2
      %v1933 = vrot.slane %v1860, 2
      %v1934 = vsel %vm1002, %v1932, %v1933
      %v1935 = vrot.slane %v1861, 2
      %v1936 = vrot.slane %v1863, 2
      %v1937 = vsel %vm1002, %v1935, %v1936
      %v1938 = vrot.slane %v1862, 2
      %v1939 = vrot.slane %v1864, 2
      %v1940 = vsel %vm1002, %v1938, %v1939
      %v1941 = vrot.slane %v1865, 2
      %v1942 = vrot.slane %v1867, 2
      %v1943 = vsel %vm1002, %v1941, %v1942
      %v1944 = vrot.slane %v1866, 2
      %v1945 = vrot.slane %v1868, 2
      %v1946 = vsel %vm1002, %v1944, %v1945
      %v1947 = vrot.slane %v1869, 2
      %v1948 = vrot.slane %v1871, 2
      %v1949 = vsel %vm1002, %v1947, %v1948
      %v1950 = vrot.slane %v1870, 2
      %v1951 = vrot.slane %v1872, 2
      %v1952 = vsel %vm1002, %v1950, %v1951
      %v1969 = vpack.c.bf16 %v1913, %v1907
      %v1970 = vpack.c.bf16 %v1916, %v1910
      %v1971 = vpack.c.bf16 %v1925, %v1919
      %v1972 = vpack.c.bf16 %v1928, %v1922
      %v1973 = vpack.c.bf16 %v1937, %v1931
      %v1974 = vpack.c.bf16 %v1940, %v1934
      %v1975 = vpack.c.bf16 %v1949, %v1943
      %v1976 = vpack.c.bf16 %v1952, %v1946
      %s1977 = scalar_lea.vmem %s1, 640
      %v1978 = vld [vmem:[%s1977] sm:$0xf]
      %v1979 = vld [vmem:[%s1977 + $0x4] sm:$0xf]
      %v1980 = vld [vmem:[%s1977 + $0x8] sm:$0xf]
      %v1981 = vld [vmem:[%s1977 + $0xc] sm:$0xf]
      %v1982 = vld [vmem:[%s1977 + $0x10] sm:$0xf]
      %v1983 = vld [vmem:[%s1977 + $0x14] sm:$0xf]
      %v1984 = vld [vmem:[%s1977 + $0x18] sm:$0xf]
      %v1985 = vld [vmem:[%s1977 + $0x1c] sm:$0xf]
      %v1986 = vld [vmem:[%s1977 + $0x20] sm:$0xf]
      %v1987 = vld [vmem:[%s1977 + $0x24] sm:$0xf]
      %v1988 = vld [vmem:[%s1977 + $0x28] sm:$0xf]
      %v1989 = vld [vmem:[%s1977 + $0x2c] sm:$0xf]
      %v1990 = vld [vmem:[%s1977 + $0x30] sm:$0xf]
      %v1991 = vld [vmem:[%s1977 + $0x34] sm:$0xf]
      %v1992 = vld [vmem:[%s1977 + $0x38] sm:$0xf]
      %v1993 = vld [vmem:[%s1977 + $0x3c] sm:$0xf]
      %v1994 = vld [vmem:[%s1977 + $0x40] sm:$0xf]
      %v1995 = vld [vmem:[%s1977 + $0x44] sm:$0xf]
      %v1996 = vld [vmem:[%s1977 + $0x48] sm:$0xf]
      %v1997 = vld [vmem:[%s1977 + $0x4c] sm:$0xf]
      %v1998 = vld [vmem:[%s1977 + $0x50] sm:$0xf]
      %v1999 = vld [vmem:[%s1977 + $0x54] sm:$0xf]
      %v2000 = vld [vmem:[%s1977 + $0x58] sm:$0xf]
      %v2001 = vld [vmem:[%s1977 + $0x5c] sm:$0xf]
      %v2002 = vld [vmem:[%s1977 + $0x60] sm:$0xf]
      %v2003 = vld [vmem:[%s1977 + $0x64] sm:$0xf]
      %v2004 = vld [vmem:[%s1977 + $0x68] sm:$0xf]
      %v2005 = vld [vmem:[%s1977 + $0x6c] sm:$0xf]
      %v2006 = vld [vmem:[%s1977 + $0x70] sm:$0xf]
      %v2007 = vld [vmem:[%s1977 + $0x74] sm:$0xf]
      %v2008 = vld [vmem:[%s1977 + $0x78] sm:$0xf]
      %v2009 = vld [vmem:[%s1977 + $0x7c] sm:$0xf]
      %v2042 = vunpack.c.l.b16 %v1978
      %v2043 = vunpack.c.l.b16 %v1979
      %v2044 = vunpack.c.l.b16 %v1980
      %v2045 = vunpack.c.l.b16 %v1981
      %v2046 = vunpack.c.l.b16 %v1982
      %v2047 = vunpack.c.l.b16 %v1983
      %v2048 = vunpack.c.l.b16 %v1984
      %v2049 = vunpack.c.l.b16 %v1985
      %v2050 = vunpack.c.l.b16 %v1986
      %v2051 = vunpack.c.l.b16 %v1987
      %v2052 = vunpack.c.l.b16 %v1988
      %v2053 = vunpack.c.l.b16 %v1989
      %v2054 = vunpack.c.l.b16 %v1990
      %v2055 = vunpack.c.l.b16 %v1991
      %v2056 = vunpack.c.l.b16 %v1992
      %v2057 = vunpack.c.l.b16 %v1993
      %v2058 = vunpack.c.l.b16 %v1994
      %v2059 = vunpack.c.l.b16 %v1995
      %v2060 = vunpack.c.l.b16 %v1996
      %v2061 = vunpack.c.l.b16 %v1997
      %v2062 = vunpack.c.l.b16 %v1998
      %v2063 = vunpack.c.l.b16 %v1999
      %v2064 = vunpack.c.l.b16 %v2000
      %v2065 = vunpack.c.l.b16 %v2001
      %v2066 = vunpack.c.l.b16 %v2002
      %v2067 = vunpack.c.l.b16 %v2003
      %v2068 = vunpack.c.l.b16 %v2004
      %v2069 = vunpack.c.l.b16 %v2005
      %v2070 = vunpack.c.l.b16 %v2006
      %v2071 = vunpack.c.l.b16 %v2007
      %v2072 = vunpack.c.l.b16 %v2008
      %v2073 = vunpack.c.l.b16 %v2009
      %v2074 = vpack.c.b16 %v2043, %v2042
      %v2075 = vpack.c.b16 %v2045, %v2044
      %v2076 = vpack.c.b16 %v2047, %v2046
      %v2077 = vpack.c.b16 %v2049, %v2048
      %v2078 = vpack.c.b16 %v2051, %v2050
      %v2079 = vpack.c.b16 %v2053, %v2052
      %v2080 = vpack.c.b16 %v2055, %v2054
      %v2081 = vpack.c.b16 %v2057, %v2056
      %v2082 = vpack.c.b16 %v2059, %v2058
      %v2083 = vpack.c.b16 %v2061, %v2060
      %v2084 = vpack.c.b16 %v2063, %v2062
      %v2085 = vpack.c.b16 %v2065, %v2064
      %v2086 = vpack.c.b16 %v2067, %v2066
      %v2087 = vpack.c.b16 %v2069, %v2068
      %v2088 = vpack.c.b16 %v2071, %v2070
      %v2089 = vpack.c.b16 %v2073, %v2072
      %2106 = vmatprep.subr.bf16.mxu0 0
      %2107 = vmatpush1.bf16.msra.mxu0 %v2081
      %2108 = vmatprep.subr.bf16.mxu0 0
      %2109 = vmatpush1.bf16.msra.mxu0 %v2080
      %2110 = vmatprep.subr.bf16.mxu0 0
      %2111 = vmatpush1.bf16.msra.mxu0 %v2079
      %2112 = vmatprep.subr.bf16.mxu0 0
      %2113 = vmatpush1.bf16.msra.mxu0 %v2078
      %2114 = vmatprep.subr.bf16.mxu0 0
      %2115 = vmatpush1.bf16.msra.mxu0 %v2077
      %2116 = vmatprep.subr.bf16.mxu0 0
      %2117 = vmatpush1.bf16.msra.mxu0 %v2076
      %2118 = vmatprep.subr.bf16.mxu0 0
      %2119 = vmatpush1.bf16.msra.mxu0 %v2075
      %2120 = vmatprep.subr.bf16.mxu0 0
      %2121 = vmatpush1.bf16.msra.mxu0 %v2074
      %2122 = vmatprep.subr.bf16.mxu0 0
      %2123 = vmatpush2.bf16.msra.mxu0 %v2089
      %2124 = vmatprep.subr.bf16.mxu0 0
      %2125 = vmatpush2.bf16.msra.mxu0 %v2088
      %2126 = vmatprep.subr.bf16.mxu0 0
      %2127 = vmatpush2.bf16.msra.mxu0 %v2087
      %2128 = vmatprep.subr.bf16.mxu0 0
      %2129 = vmatpush2.bf16.msra.mxu0 %v2086
      %2130 = vmatprep.subr.bf16.mxu0 0
      %2131 = vmatpush2.bf16.msra.mxu0 %v2085
      %2132 = vmatprep.subr.bf16.mxu0 0
      %2133 = vmatpush2.bf16.msra.mxu0 %v2084
      %2134 = vmatprep.subr.bf16.mxu0 0
      %2135 = vmatpush2.bf16.msra.mxu0 %v2083
      %2136 = vmatprep.subr.bf16.mxu0 0
      %2137 = vmatpush2.bf16.msra.mxu0 %v2082
      %2138 = vmatprep.mubr.bf16.mxu0 %v1970
      %2139 = vmatmul.mubr.bf16.gmra.mxu0 %v1969
      %v2140 = vpop.f32.mrf.mxu0
      %v2141 = vadd.f32 0.0, %v2140
      %v2142 = vpop.f32.mrf.mxu0
      %v2143 = vpop.f32.mrf.mxu0
      %v2144 = vadd.f32 0.0, %v2143
      %v2145 = vpop.f32.mrf.mxu0
      %2146 = vmatprep.mubr.bf16.mxu0 %v1972
      %2147 = vmatmul.mubr.bf16.gmra.mxu0 %v1971
      %v2148 = vpop.f32.mrf.mxu0
      %v2149 = vadd.f32 0.0, %v2148
      %v2150 = vpop.f32.mrf.mxu0
      %v2151 = vpop.f32.mrf.mxu0
      %v2152 = vadd.f32 0.0, %v2151
      %v2153 = vpop.f32.mrf.mxu0
      %2154 = vmatprep.mubr.bf16.mxu0 %v1974
      %2155 = vmatmul.mubr.bf16.gmra.mxu0 %v1973
      %v2156 = vpop.f32.mrf.mxu0
      %v2157 = vadd.f32 0.0, %v2156
      %v2158 = vpop.f32.mrf.mxu0
      %v2159 = vpop.f32.mrf.mxu0
      %v2160 = vadd.f32 0.0, %v2159
      %v2161 = vpop.f32.mrf.mxu0
      %2162 = vmatprep.mubr.bf16.mxu0 %v1976
      %2163 = vmatmul.mubr.bf16.gmra.mxu0 %v1975
      %v2164 = vpop.f32.mrf.mxu0
      %v2165 = vadd.f32 0.0, %v2164
      %v2166 = vpop.f32.mrf.mxu0
      %v2167 = vpop.f32.mrf.mxu0
      %v2168 = vadd.f32 0.0, %v2167
      %v2169 = vpop.f32.mrf.mxu0
      %2170 = vdwg.mxu0
      %v2171 = vadd.f32 %v1833, %v2141
      %v2172 = vadd.f32 %v1834, %v2144
      %v2173 = vadd.f32 %v1835, %v2149
      %v2174 = vadd.f32 %v1836, %v2152
      %v2175 = vadd.f32 %v1837, %v2157
      %v2176 = vadd.f32 %v1838, %v2160
      %v2177 = vadd.f32 %v1839, %v2165
      %v2178 = vadd.f32 %v1840, %v2168
      %s2179 = scalar_lea.vmem [#allocation2], 64
      %v2180 = vld [vmem:[%s2179] sm:$0xff]
      %v2181 = vld [vmem:[%s2179 + $0x8] sm:$0xff]
      %v2182 = vld [vmem:[%s2179 + $0x20] sm:$0xff]
      %v2183 = vld [vmem:[%s2179 + $0x28] sm:$0xff]
      %v2184 = vld [vmem:[%s2179 + $0x40] sm:$0xff]
      %v2185 = vld [vmem:[%s2179 + $0x48] sm:$0xff]
      %v2186 = vld [vmem:[%s2179 + $0x60] sm:$0xff]
      %v2187 = vld [vmem:[%s2179 + $0x68] sm:$0xff]
      %v2188 = vld [vmem:[%s2179 + $0x80] sm:$0xff]
      %v2189 = vld [vmem:[%s2179 + $0x88] sm:$0xff]
      %v2190 = vld [vmem:[%s2179 + $0xa0] sm:$0xff]
      %v2191 = vld [vmem:[%s2179 + $0xa8] sm:$0xff]
      %v2192 = vld [vmem:[%s2179 + $0xc0] sm:$0xff]
      %v2193 = vld [vmem:[%s2179 + $0xc8] sm:$0xff]
      %v2194 = vld [vmem:[%s2179 + $0xe0] sm:$0xff]
      %v2195 = vld [vmem:[%s2179 + $0xe8] sm:$0xff]
      %v2196 = vpack.c.bf16 %v2182, %v2180
      %v2197 = vpack.c.bf16 %v2183, %v2181
      %v2198 = vpack.c.bf16 %v2186, %v2184
      %v2199 = vpack.c.bf16 %v2187, %v2185
      %v2200 = vpack.c.bf16 %v2190, %v2188
      %v2201 = vpack.c.bf16 %v2191, %v2189
      %v2202 = vpack.c.bf16 %v2194, %v2192
      %v2203 = vpack.c.bf16 %v2195, %v2193
      %s2204 = scalar_lea.vmem %s1, 768
      %v2205 = vld [vmem:[%s2204] sm:$0xf]
      %v2206 = vld [vmem:[%s2204 + $0x4] sm:$0xf]
      %v2207 = vld [vmem:[%s2204 + $0x8] sm:$0xf]
      %v2208 = vld [vmem:[%s2204 + $0xc] sm:$0xf]
      %v2209 = vld [vmem:[%s2204 + $0x10] sm:$0xf]
      %v2210 = vld [vmem:[%s2204 + $0x14] sm:$0xf]
      %v2211 = vld [vmem:[%s2204 + $0x18] sm:$0xf]
      %v2212 = vld [vmem:[%s2204 + $0x1c] sm:$0xf]
      %v2213 = vld [vmem:[%s2204 + $0x20] sm:$0xf]
      %v2214 = vld [vmem:[%s2204 + $0x24] sm:$0xf]
      %v2215 = vld [vmem:[%s2204 + $0x28] sm:$0xf]
      %v2216 = vld [vmem:[%s2204 + $0x2c] sm:$0xf]
      %v2217 = vld [vmem:[%s2204 + $0x30] sm:$0xf]
      %v2218 = vld [vmem:[%s2204 + $0x34] sm:$0xf]
      %v2219 = vld [vmem:[%s2204 + $0x38] sm:$0xf]
      %v2220 = vld [vmem:[%s2204 + $0x3c] sm:$0xf]
      %v2221 = vld [vmem:[%s2204 + $0x40] sm:$0xf]
      %v2222 = vld [vmem:[%s2204 + $0x44] sm:$0xf]
      %v2223 = vld [vmem:[%s2204 + $0x48] sm:$0xf]
      %v2224 = vld [vmem:[%s2204 + $0x4c] sm:$0xf]
      %v2225 = vld [vmem:[%s2204 + $0x50] sm:$0xf]
      %v2226 = vld [vmem:[%s2204 + $0x54] sm:$0xf]
      %v2227 = vld [vmem:[%s2204 + $0x58] sm:$0xf]
      %v2228 = vld [vmem:[%s2204 + $0x5c] sm:$0xf]
      %v2229 = vld [vmem:[%s2204 + $0x60] sm:$0xf]
      %v2230 = vld [vmem:[%s2204 + $0x64] sm:$0xf]
      %v2231 = vld [vmem:[%s2204 + $0x68] sm:$0xf]
      %v2232 = vld [vmem:[%s2204 + $0x6c] sm:$0xf]
      %v2233 = vld [vmem:[%s2204 + $0x70] sm:$0xf]
      %v2234 = vld [vmem:[%s2204 + $0x74] sm:$0xf]
      %v2235 = vld [vmem:[%s2204 + $0x78] sm:$0xf]
      %v2236 = vld [vmem:[%s2204 + $0x7c] sm:$0xf]
      %v2269 = vunpack.c.l.b16 %v2205
      %v2270 = vunpack.c.l.b16 %v2206
      %v2271 = vunpack.c.l.b16 %v2207
      %v2272 = vunpack.c.l.b16 %v2208
      %v2273 = vunpack.c.l.b16 %v2209
      %v2274 = vunpack.c.l.b16 %v2210
      %v2275 = vunpack.c.l.b16 %v2211
      %v2276 = vunpack.c.l.b16 %v2212
      %v2277 = vunpack.c.l.b16 %v2213
      %v2278 = vunpack.c.l.b16 %v2214
      %v2279 = vunpack.c.l.b16 %v2215
      %v2280 = vunpack.c.l.b16 %v2216
      %v2281 = vunpack.c.l.b16 %v2217
      %v2282 = vunpack.c.l.b16 %v2218
      %v2283 = vunpack.c.l.b16 %v2219
      %v2284 = vunpack.c.l.b16 %v2220
      %v2285 = vunpack.c.l.b16 %v2221
      %v2286 = vunpack.c.l.b16 %v2222
      %v2287 = vunpack.c.l.b16 %v2223
      %v2288 = vunpack.c.l.b16 %v2224
      %v2289 = vunpack.c.l.b16 %v2225
      %v2290 = vunpack.c.l.b16 %v2226
      %v2291 = vunpack.c.l.b16 %v2227
      %v2292 = vunpack.c.l.b16 %v2228
      %v2293 = vunpack.c.l.b16 %v2229
      %v2294 = vunpack.c.l.b16 %v2230
      %v2295 = vunpack.c.l.b16 %v2231
      %v2296 = vunpack.c.l.b16 %v2232
      %v2297 = vunpack.c.l.b16 %v2233
      %v2298 = vunpack.c.l.b16 %v2234
      %v2299 = vunpack.c.l.b16 %v2235
      %v2300 = vunpack.c.l.b16 %v2236
      %v2301 = vpack.c.b16 %v2270, %v2269
      %v2302 = vpack.c.b16 %v2272, %v2271
      %v2303 = vpack.c.b16 %v2274, %v2273
      %v2304 = vpack.c.b16 %v2276, %v2275
      %v2305 = vpack.c.b16 %v2278, %v2277
      %v2306 = vpack.c.b16 %v2280, %v2279
      %v2307 = vpack.c.b16 %v2282, %v2281
      %v2308 = vpack.c.b16 %v2284, %v2283
      %v2309 = vpack.c.b16 %v2286, %v2285
      %v2310 = vpack.c.b16 %v2288, %v2287
      %v2311 = vpack.c.b16 %v2290, %v2289
      %v2312 = vpack.c.b16 %v2292, %v2291
      %v2313 = vpack.c.b16 %v2294, %v2293
      %v2314 = vpack.c.b16 %v2296, %v2295
      %v2315 = vpack.c.b16 %v2298, %v2297
      %v2316 = vpack.c.b16 %v2300, %v2299
      %2333 = vmatprep.subr.bf16.mxu0 0
      %2334 = vmatpush1.bf16.msra.mxu0 %v2308
      %2335 = vmatprep.subr.bf16.mxu0 0
      %2336 = vmatpush1.bf16.msra.mxu0 %v2307
      %2337 = vmatprep.subr.bf16.mxu0 0
      %2338 = vmatpush1.bf16.msra.mxu0 %v2306
      %2339 = vmatprep.subr.bf16.mxu0 0
      %2340 = vmatpush1.bf16.msra.mxu0 %v2305
      %2341 = vmatprep.subr.bf16.mxu0 0
      %2342 = vmatpush1.bf16.msra.mxu0 %v2304
      %2343 = vmatprep.subr.bf16.mxu0 0
      %2344 = vmatpush1.bf16.msra.mxu0 %v2303
      %2345 = vmatprep.subr.bf16.mxu0 0
      %2346 = vmatpush1.bf16.msra.mxu0 %v2302
      %2347 = vmatprep.subr.bf16.mxu0 0
      %2348 = vmatpush1.bf16.msra.mxu0 %v2301
      %2349 = vmatprep.subr.bf16.mxu0 0
      %2350 = vmatpush2.bf16.msra.mxu0 %v2316
      %2351 = vmatprep.subr.bf16.mxu0 0
      %2352 = vmatpush2.bf16.msra.mxu0 %v2315
      %2353 = vmatprep.subr.bf16.mxu0 0
      %2354 = vmatpush2.bf16.msra.mxu0 %v2314
      %2355 = vmatprep.subr.bf16.mxu0 0
      %2356 = vmatpush2.bf16.msra.mxu0 %v2313
      %2357 = vmatprep.subr.bf16.mxu0 0
      %2358 = vmatpush2.bf16.msra.mxu0 %v2312
      %2359 = vmatprep.subr.bf16.mxu0 0
      %2360 = vmatpush2.bf16.msra.mxu0 %v2311
      %2361 = vmatprep.subr.bf16.mxu0 0
      %2362 = vmatpush2.bf16.msra.mxu0 %v2310
      %2363 = vmatprep.subr.bf16.mxu0 0
      %2364 = vmatpush2.bf16.msra.mxu0 %v2309
      %2365 = vmatprep.mubr.bf16.mxu0 %v2197
      %2366 = vmatmul.mubr.bf16.gmra.mxu0 %v2196
      %v2367 = vpop.f32.mrf.mxu0
      %v2368 = vadd.f32 0.0, %v2367
      %v2369 = vpop.f32.mrf.mxu0
      %v2370 = vpop.f32.mrf.mxu0
      %v2371 = vadd.f32 0.0, %v2370
      %v2372 = vpop.f32.mrf.mxu0
      %2373 = vmatprep.mubr.bf16.mxu0 %v2199
      %2374 = vmatmul.mubr.bf16.gmra.mxu0 %v2198
      %v2375 = vpop.f32.mrf.mxu0
      %v2376 = vadd.f32 0.0, %v2375
      %v2377 = vpop.f32.mrf.mxu0
      %v2378 = vpop.f32.mrf.mxu0
      %v2379 = vadd.f32 0.0, %v2378
      %v2380 = vpop.f32.mrf.mxu0
      %2381 = vmatprep.mubr.bf16.mxu0 %v2201
      %2382 = vmatmul.mubr.bf16.gmra.mxu0 %v2200
      %v2383 = vpop.f32.mrf.mxu0
      %v2384 = vadd.f32 0.0, %v2383
      %v2385 = vpop.f32.mrf.mxu0
      %v2386 = vpop.f32.mrf.mxu0
      %v2387 = vadd.f32 0.0, %v2386
      %v2388 = vpop.f32.mrf.mxu0
      %2389 = vmatprep.mubr.bf16.mxu0 %v2203
      %2390 = vmatmul.mubr.bf16.gmra.mxu0 %v2202
      %v2391 = vpop.f32.mrf.mxu0
      %v2392 = vadd.f32 0.0, %v2391
      %v2393 = vpop.f32.mrf.mxu0
      %v2394 = vpop.f32.mrf.mxu0
      %v2395 = vadd.f32 0.0, %v2394
      %v2396 = vpop.f32.mrf.mxu0
      %2397 = vdwg.mxu0
      %v2398 = vadd.f32 %v2171, %v2368
      %v2399 = vadd.f32 %v2172, %v2371
      %v2400 = vadd.f32 %v2173, %v2376
      %v2401 = vadd.f32 %v2174, %v2379
      %v2402 = vadd.f32 %v2175, %v2384
      %v2403 = vadd.f32 %v2176, %v2387
      %v2404 = vadd.f32 %v2177, %v2392
      %v2405 = vadd.f32 %v2178, %v2395
      %v2406 = vld [vmem:[%s2179] sm:$0xfe]
      %v2407 = vld [vmem:[%s2179 + $0x8] sm:$0xfe]
      %v2408 = vld [vmem:[%s2179 + $0x10] sm:$0x1]
      %v2409 = vld [vmem:[%s2179 + $0x18] sm:$0x1]
      %v2410 = vld [vmem:[%s2179 + $0x20] sm:$0xfe]
      %v2411 = vld [vmem:[%s2179 + $0x28] sm:$0xfe]
      %v2412 = vld [vmem:[%s2179 + $0x30] sm:$0x1]
      %v2413 = vld [vmem:[%s2179 + $0x38] sm:$0x1]
      %v2414 = vld [vmem:[%s2179 + $0x40] sm:$0xfe]
      %v2415 = vld [vmem:[%s2179 + $0x48] sm:$0xfe]
      %v2416 = vld [vmem:[%s2179 + $0x50] sm:$0x1]
      %v2417 = vld [vmem:[%s2179 + $0x58] sm:$0x1]
      %v2418 = vld [vmem:[%s2179 + $0x60] sm:$0xfe]
      %v2419 = vld [vmem:[%s2179 + $0x68] sm:$0xfe]
      %v2420 = vld [vmem:[%s2179 + $0x70] sm:$0x1]
      %v2421 = vld [vmem:[%s2179 + $0x78] sm:$0x1]
      %v2422 = vld [vmem:[%s2179 + $0x80] sm:$0xfe]
      %v2423 = vld [vmem:[%s2179 + $0x88] sm:$0xfe]
      %v2424 = vld [vmem:[%s2179 + $0x90] sm:$0x1]
      %v2425 = vld [vmem:[%s2179 + $0x98] sm:$0x1]
      %v2426 = vld [vmem:[%s2179 + $0xa0] sm:$0xfe]
      %v2427 = vld [vmem:[%s2179 + $0xa8] sm:$0xfe]
      %v2428 = vld [vmem:[%s2179 + $0xb0] sm:$0x1]
      %v2429 = vld [vmem:[%s2179 + $0xb8] sm:$0x1]
      %v2430 = vld [vmem:[%s2179 + $0xc0] sm:$0xfe]
      %v2431 = vld [vmem:[%s2179 + $0xc8] sm:$0xfe]
      %v2432 = vld [vmem:[%s2179 + $0xd0] sm:$0x1]
      %v2433 = vld [vmem:[%s2179 + $0xd8] sm:$0x1]
      %v2434 = vld [vmem:[%s2179 + $0xe0] sm:$0xfe]
      %v2435 = vld [vmem:[%s2179 + $0xe8] sm:$0xfe]
      %v2436 = vld [vmem:[%s2179 + $0xf0] sm:$0x1]
      %v2437 = vld [vmem:[%s2179 + $0xf8] sm:$0x1]
      %v2470 = vrot.slane %v2406, 1
      %v2471 = vrot.slane %v2408, 1
      %v2472 = vsel %vm510, %v2470, %v2471
      %v2473 = vrot.slane %v2407, 1
      %v2474 = vrot.slane %v2409, 1
      %v2475 = vsel %vm510, %v2473, %v2474
      %v2476 = vrot.slane %v2410, 1
      %v2477 = vrot.slane %v2412, 1
      %v2478 = vsel %vm510, %v2476, %v2477
      %v2479 = vrot.slane %v2411, 1
      %v2480 = vrot.slane %v2413, 1
      %v2481 = vsel %vm510, %v2479, %v2480
      %v2482 = vrot.slane %v2414, 1
      %v2483 = vrot.slane %v2416, 1
      %v2484 = vsel %vm510, %v2482, %v2483
      %v2485 = vrot.slane %v2415, 1
      %v2486 = vrot.slane %v2417, 1
      %v2487 = vsel %vm510, %v2485, %v2486
      %v2488 = vrot.slane %v2418, 1
      %v2489 = vrot.slane %v2420, 1
      %v2490 = vsel %vm510, %v2488, %v2489
      %v2491 = vrot.slane %v2419, 1
      %v2492 = vrot.slane %v2421, 1
      %v2493 = vsel %vm510, %v2491, %v2492
      %v2494 = vrot.slane %v2422, 1
      %v2495 = vrot.slane %v2424, 1
      %v2496 = vsel %vm510, %v2494, %v2495
      %v2497 = vrot.slane %v2423, 1
      %v2498 = vrot.slane %v2425, 1
      %v2499 = vsel %vm510, %v2497, %v2498
      %v2500 = vrot.slane %v2426, 1
      %v2501 = vrot.slane %v2428, 1
      %v2502 = vsel %vm510, %v2500, %v2501
      %v2503 = vrot.slane %v2427, 1
      %v2504 = vrot.slane %v2429, 1
      %v2505 = vsel %vm510, %v2503, %v2504
      %v2506 = vrot.slane %v2430, 1
      %v2507 = vrot.slane %v2432, 1
      %v2508 = vsel %vm510, %v2506, %v2507
      %v2509 = vrot.slane %v2431, 1
      %v2510 = vrot.slane %v2433, 1
      %v2511 = vsel %vm510, %v2509, %v2510
      %v2512 = vrot.slane %v2434, 1
      %v2513 = vrot.slane %v2436, 1
      %v2514 = vsel %vm510, %v2512, %v2513
      %v2515 = vrot.slane %v2435, 1
      %v2516 = vrot.slane %v2437, 1
      %v2517 = vsel %vm510, %v2515, %v2516
      %v2534 = vpack.c.bf16 %v2478, %v2472
      %v2535 = vpack.c.bf16 %v2481, %v2475
      %v2536 = vpack.c.bf16 %v2490, %v2484
      %v2537 = vpack.c.bf16 %v2493, %v2487
      %v2538 = vpack.c.bf16 %v2502, %v2496
      %v2539 = vpack.c.bf16 %v2505, %v2499
      %v2540 = vpack.c.bf16 %v2514, %v2508
      %v2541 = vpack.c.bf16 %v2517, %v2511
      %s2542 = scalar_lea.vmem %s1, 896
      %v2543 = vld [vmem:[%s2542] sm:$0xf]
      %v2544 = vld [vmem:[%s2542 + $0x4] sm:$0xf]
      %v2545 = vld [vmem:[%s2542 + $0x8] sm:$0xf]
      %v2546 = vld [vmem:[%s2542 + $0xc] sm:$0xf]
      %v2547 = vld [vmem:[%s2542 + $0x10] sm:$0xf]
      %v2548 = vld [vmem:[%s2542 + $0x14] sm:$0xf]
      %v2549 = vld [vmem:[%s2542 + $0x18] sm:$0xf]
      %v2550 = vld [vmem:[%s2542 + $0x1c] sm:$0xf]
      %v2551 = vld [vmem:[%s2542 + $0x20] sm:$0xf]
      %v2552 = vld [vmem:[%s2542 + $0x24] sm:$0xf]
      %v2553 = vld [vmem:[%s2542 + $0x28] sm:$0xf]
      %v2554 = vld [vmem:[%s2542 + $0x2c] sm:$0xf]
      %v2555 = vld [vmem:[%s2542 + $0x30] sm:$0xf]
      %v2556 = vld [vmem:[%s2542 + $0x34] sm:$0xf]
      %v2557 = vld [vmem:[%s2542 + $0x38] sm:$0xf]
      %v2558 = vld [vmem:[%s2542 + $0x3c] sm:$0xf]
      %v2559 = vld [vmem:[%s2542 + $0x40] sm:$0xf]
      %v2560 = vld [vmem:[%s2542 + $0x44] sm:$0xf]
      %v2561 = vld [vmem:[%s2542 + $0x48] sm:$0xf]
      %v2562 = vld [vmem:[%s2542 + $0x4c] sm:$0xf]
      %v2563 = vld [vmem:[%s2542 + $0x50] sm:$0xf]
      %v2564 = vld [vmem:[%s2542 + $0x54] sm:$0xf]
      %v2565 = vld [vmem:[%s2542 + $0x58] sm:$0xf]
      %v2566 = vld [vmem:[%s2542 + $0x5c] sm:$0xf]
      %v2567 = vld [vmem:[%s2542 + $0x60] sm:$0xf]
      %v2568 = vld [vmem:[%s2542 + $0x64] sm:$0xf]
      %v2569 = vld [vmem:[%s2542 + $0x68] sm:$0xf]
      %v2570 = vld [vmem:[%s2542 + $0x6c] sm:$0xf]
      %v2571 = vld [vmem:[%s2542 + $0x70] sm:$0xf]
      %v2572 = vld [vmem:[%s2542 + $0x74] sm:$0xf]
      %v2573 = vld [vmem:[%s2542 + $0x78] sm:$0xf]
      %v2574 = vld [vmem:[%s2542 + $0x7c] sm:$0xf]
      %v2607 = vunpack.c.l.b16 %v2543
      %v2608 = vunpack.c.l.b16 %v2544
      %v2609 = vunpack.c.l.b16 %v2545
      %v2610 = vunpack.c.l.b16 %v2546
      %v2611 = vunpack.c.l.b16 %v2547
      %v2612 = vunpack.c.l.b16 %v2548
      %v2613 = vunpack.c.l.b16 %v2549
      %v2614 = vunpack.c.l.b16 %v2550
      %v2615 = vunpack.c.l.b16 %v2551
      %v2616 = vunpack.c.l.b16 %v2552
      %v2617 = vunpack.c.l.b16 %v2553
      %v2618 = vunpack.c.l.b16 %v2554
      %v2619 = vunpack.c.l.b16 %v2555
      %v2620 = vunpack.c.l.b16 %v2556
      %v2621 = vunpack.c.l.b16 %v2557
      %v2622 = vunpack.c.l.b16 %v2558
      %v2623 = vunpack.c.l.b16 %v2559
      %v2624 = vunpack.c.l.b16 %v2560
      %v2625 = vunpack.c.l.b16 %v2561
      %v2626 = vunpack.c.l.b16 %v2562
      %v2627 = vunpack.c.l.b16 %v2563
      %v2628 = vunpack.c.l.b16 %v2564
      %v2629 = vunpack.c.l.b16 %v2565
      %v2630 = vunpack.c.l.b16 %v2566
      %v2631 = vunpack.c.l.b16 %v2567
      %v2632 = vunpack.c.l.b16 %v2568
      %v2633 = vunpack.c.l.b16 %v2569
      %v2634 = vunpack.c.l.b16 %v2570
      %v2635 = vunpack.c.l.b16 %v2571
      %v2636 = vunpack.c.l.b16 %v2572
      %v2637 = vunpack.c.l.b16 %v2573
      %v2638 = vunpack.c.l.b16 %v2574
      %v2639 = vpack.c.b16 %v2608, %v2607
      %v2640 = vpack.c.b16 %v2610, %v2609
      %v2641 = vpack.c.b16 %v2612, %v2611
      %v2642 = vpack.c.b16 %v2614, %v2613
      %v2643 = vpack.c.b16 %v2616, %v2615
      %v2644 = vpack.c.b16 %v2618, %v2617
      %v2645 = vpack.c.b16 %v2620, %v2619
      %v2646 = vpack.c.b16 %v2622, %v2621
      %v2647 = vpack.c.b16 %v2624, %v2623
      %v2648 = vpack.c.b16 %v2626, %v2625
      %v2649 = vpack.c.b16 %v2628, %v2627
      %v2650 = vpack.c.b16 %v2630, %v2629
      %v2651 = vpack.c.b16 %v2632, %v2631
      %v2652 = vpack.c.b16 %v2634, %v2633
      %v2653 = vpack.c.b16 %v2636, %v2635
      %v2654 = vpack.c.b16 %v2638, %v2637
      %2671 = vmatprep.subr.bf16.mxu0 0
      %2672 = vmatpush1.bf16.msra.mxu0 %v2646
      %2673 = vmatprep.subr.bf16.mxu0 0
      %2674 = vmatpush1.bf16.msra.mxu0 %v2645
      %2675 = vmatprep.subr.bf16.mxu0 0
      %2676 = vmatpush1.bf16.msra.mxu0 %v2644
      %2677 = vmatprep.subr.bf16.mxu0 0
      %2678 = vmatpush1.bf16.msra.mxu0 %v2643
      %2679 = vmatprep.subr.bf16.mxu0 0
      %2680 = vmatpush1.bf16.msra.mxu0 %v2642
      %2681 = vmatprep.subr.bf16.mxu0 0
      %2682 = vmatpush1.bf16.msra.mxu0 %v2641
      %2683 = vmatprep.subr.bf16.mxu0 0
      %2684 = vmatpush1.bf16.msra.mxu0 %v2640
      %2685 = vmatprep.subr.bf16.mxu0 0
      %2686 = vmatpush1.bf16.msra.mxu0 %v2639
      %2687 = vmatprep.subr.bf16.mxu0 0
      %2688 = vmatpush2.bf16.msra.mxu0 %v2654
      %2689 = vmatprep.subr.bf16.mxu0 0
      %2690 = vmatpush2.bf16.msra.mxu0 %v2653
      %2691 = vmatprep.subr.bf16.mxu0 0
      %2692 = vmatpush2.bf16.msra.mxu0 %v2652
      %2693 = vmatprep.subr.bf16.mxu0 0
      %2694 = vmatpush2.bf16.msra.mxu0 %v2651
      %2695 = vmatprep.subr.bf16.mxu0 0
      %2696 = vmatpush2.bf16.msra.mxu0 %v2650
      %2697 = vmatprep.subr.bf16.mxu0 0
      %2698 = vmatpush2.bf16.msra.mxu0 %v2649
      %2699 = vmatprep.subr.bf16.mxu0 0
      %2700 = vmatpush2.bf16.msra.mxu0 %v2648
      %2701 = vmatprep.subr.bf16.mxu0 0
      %2702 = vmatpush2.bf16.msra.mxu0 %v2647
      %2703 = vmatprep.mubr.bf16.mxu0 %v2535
      %2704 = vmatmul.mubr.bf16.gmra.mxu0 %v2534
      %v2705 = vpop.f32.mrf.mxu0
      %v2706 = vadd.f32 0.0, %v2705
      %v2707 = vpop.f32.mrf.mxu0
      %v2708 = vpop.f32.mrf.mxu0
      %v2709 = vadd.f32 0.0, %v2708
      %v2710 = vpop.f32.mrf.mxu0
      %2711 = vmatprep.mubr.bf16.mxu0 %v2537
      %2712 = vmatmul.mubr.bf16.gmra.mxu0 %v2536
      %v2713 = vpop.f32.mrf.mxu0
      %v2714 = vadd.f32 0.0, %v2713
      %v2715 = vpop.f32.mrf.mxu0
      %v2716 = vpop.f32.mrf.mxu0
      %v2717 = vadd.f32 0.0, %v2716
      %v2718 = vpop.f32.mrf.mxu0
      %2719 = vmatprep.mubr.bf16.mxu0 %v2539
      %2720 = vmatmul.mubr.bf16.gmra.mxu0 %v2538
      %v2721 = vpop.f32.mrf.mxu0
      %v2722 = vadd.f32 0.0, %v2721
      %v2723 = vpop.f32.mrf.mxu0
      %v2724 = vpop.f32.mrf.mxu0
      %v2725 = vadd.f32 0.0, %v2724
      %v2726 = vpop.f32.mrf.mxu0
      %2727 = vmatprep.mubr.bf16.mxu0 %v2541
      %2728 = vmatmul.mubr.bf16.gmra.mxu0 %v2540
      %v2729 = vpop.f32.mrf.mxu0
      %v2730 = vadd.f32 0.0, %v2729
      %v2731 = vpop.f32.mrf.mxu0
      %v2732 = vpop.f32.mrf.mxu0
      %v2733 = vadd.f32 0.0, %v2732
      %v2734 = vpop.f32.mrf.mxu0
      %2735 = vdwg.mxu0
      %v2736 = vadd.f32 %v2398, %v2706
      %v2737 = vadd.f32 %v2399, %v2709
      %v2738 = vadd.f32 %v2400, %v2714
      %v2739 = vadd.f32 %v2401, %v2717
      %v2740 = vadd.f32 %v2402, %v2722
      %v2741 = vadd.f32 %v2403, %v2725
      %v2742 = vadd.f32 %v2404, %v2730
      %v2743 = vadd.f32 %v2405, %v2733
      %v2744 = vld [vmem:[%s2179] sm:$0xfc]
      %v2745 = vld [vmem:[%s2179 + $0x8] sm:$0xfc]
      %v2746 = vld [vmem:[%s2179 + $0x10] sm:$0x3]
      %v2747 = vld [vmem:[%s2179 + $0x18] sm:$0x3]
      %v2748 = vld [vmem:[%s2179 + $0x20] sm:$0xfc]
      %v2749 = vld [vmem:[%s2179 + $0x28] sm:$0xfc]
      %v2750 = vld [vmem:[%s2179 + $0x30] sm:$0x3]
      %v2751 = vld [vmem:[%s2179 + $0x38] sm:$0x3]
      %v2752 = vld [vmem:[%s2179 + $0x40] sm:$0xfc]
      %v2753 = vld [vmem:[%s2179 + $0x48] sm:$0xfc]
      %v2754 = vld [vmem:[%s2179 + $0x50] sm:$0x3]
      %v2755 = vld [vmem:[%s2179 + $0x58] sm:$0x3]
      %v2756 = vld [vmem:[%s2179 + $0x60] sm:$0xfc]
      %v2757 = vld [vmem:[%s2179 + $0x68] sm:$0xfc]
      %v2758 = vld [vmem:[%s2179 + $0x70] sm:$0x3]
      %v2759 = vld [vmem:[%s2179 + $0x78] sm:$0x3]
      %v2760 = vld [vmem:[%s2179 + $0x80] sm:$0xfc]
      %v2761 = vld [vmem:[%s2179 + $0x88] sm:$0xfc]
      %v2762 = vld [vmem:[%s2179 + $0x90] sm:$0x3]
      %v2763 = vld [vmem:[%s2179 + $0x98] sm:$0x3]
      %v2764 = vld [vmem:[%s2179 + $0xa0] sm:$0xfc]
      %v2765 = vld [vmem:[%s2179 + $0xa8] sm:$0xfc]
      %v2766 = vld [vmem:[%s2179 + $0xb0] sm:$0x3]
      %v2767 = vld [vmem:[%s2179 + $0xb8] sm:$0x3]
      %v2768 = vld [vmem:[%s2179 + $0xc0] sm:$0xfc]
      %v2769 = vld [vmem:[%s2179 + $0xc8] sm:$0xfc]
      %v2770 = vld [vmem:[%s2179 + $0xd0] sm:$0x3]
      %v2771 = vld [vmem:[%s2179 + $0xd8] sm:$0x3]
      %v2772 = vld [vmem:[%s2179 + $0xe0] sm:$0xfc]
      %v2773 = vld [vmem:[%s2179 + $0xe8] sm:$0xfc]
      %v2774 = vld [vmem:[%s2179 + $0xf0] sm:$0x3]
      %v2775 = vld [vmem:[%s2179 + $0xf8] sm:$0x3]
      %v2808 = vrot.slane %v2744, 2
      %v2809 = vrot.slane %v2746, 2
      %v2810 = vsel %vm1002, %v2808, %v2809
      %v2811 = vrot.slane %v2745, 2
      %v2812 = vrot.slane %v2747, 2
      %v2813 = vsel %vm1002, %v2811, %v2812
      %v2814 = vrot.slane %v2748, 2
      %v2815 = vrot.slane %v2750, 2
      %v2816 = vsel %vm1002, %v2814, %v2815
      %v2817 = vrot.slane %v2749, 2
      %v2818 = vrot.slane %v2751, 2
      %v2819 = vsel %vm1002, %v2817, %v2818
      %v2820 = vrot.slane %v2752, 2
      %v2821 = vrot.slane %v2754, 2
      %v2822 = vsel %vm1002, %v2820, %v2821
      %v2823 = vrot.slane %v2753, 2
      %v2824 = vrot.slane %v2755, 2
      %v2825 = vsel %vm1002, %v2823, %v2824
      %v2826 = vrot.slane %v2756, 2
      %v2827 = vrot.slane %v2758, 2
      %v2828 = vsel %vm1002, %v2826, %v2827
      %v2829 = vrot.slane %v2757, 2
      %v2830 = vrot.slane %v2759, 2
      %v2831 = vsel %vm1002, %v2829, %v2830
      %v2832 = vrot.slane %v2760, 2
      %v2833 = vrot.slane %v2762, 2
      %v2834 = vsel %vm1002, %v2832, %v2833
      %v2835 = vrot.slane %v2761, 2
      %v2836 = vrot.slane %v2763, 2
      %v2837 = vsel %vm1002, %v2835, %v2836
      %v2838 = vrot.slane %v2764, 2
      %v2839 = vrot.slane %v2766, 2
      %v2840 = vsel %vm1002, %v2838, %v2839
      %v2841 = vrot.slane %v2765, 2
      %v2842 = vrot.slane %v2767, 2
      %v2843 = vsel %vm1002, %v2841, %v2842
      %v2844 = vrot.slane %v2768, 2
      %v2845 = vrot.slane %v2770, 2
      %v2846 = vsel %vm1002, %v2844, %v2845
      %v2847 = vrot.slane %v2769, 2
      %v2848 = vrot.slane %v2771, 2
      %v2849 = vsel %vm1002, %v2847, %v2848
      %v2850 = vrot.slane %v2772, 2
      %v2851 = vrot.slane %v2774, 2
      %v2852 = vsel %vm1002, %v2850, %v2851
      %v2853 = vrot.slane %v2773, 2
      %v2854 = vrot.slane %v2775, 2
      %v2855 = vsel %vm1002, %v2853, %v2854
      %v2872 = vpack.c.bf16 %v2816, %v2810
      %v2873 = vpack.c.bf16 %v2819, %v2813
      %v2874 = vpack.c.bf16 %v2828, %v2822
      %v2875 = vpack.c.bf16 %v2831, %v2825
      %v2876 = vpack.c.bf16 %v2840, %v2834
      %v2877 = vpack.c.bf16 %v2843, %v2837
      %v2878 = vpack.c.bf16 %v2852, %v2846
      %v2879 = vpack.c.bf16 %v2855, %v2849
      %s2880 = scalar_lea.vmem %s1, 1024
      %v2881 = vld [vmem:[%s2880] sm:$0xf]
      %v2882 = vld [vmem:[%s2880 + $0x4] sm:$0xf]
      %v2883 = vld [vmem:[%s2880 + $0x8] sm:$0xf]
      %v2884 = vld [vmem:[%s2880 + $0xc] sm:$0xf]
      %v2885 = vld [vmem:[%s2880 + $0x10] sm:$0xf]
      %v2886 = vld [vmem:[%s2880 + $0x14] sm:$0xf]
      %v2887 = vld [vmem:[%s2880 + $0x18] sm:$0xf]
      %v2888 = vld [vmem:[%s2880 + $0x1c] sm:$0xf]
      %v2889 = vld [vmem:[%s2880 + $0x20] sm:$0xf]
      %v2890 = vld [vmem:[%s2880 + $0x24] sm:$0xf]
      %v2891 = vld [vmem:[%s2880 + $0x28] sm:$0xf]
      %v2892 = vld [vmem:[%s2880 + $0x2c] sm:$0xf]
      %v2893 = vld [vmem:[%s2880 + $0x30] sm:$0xf]
      %v2894 = vld [vmem:[%s2880 + $0x34] sm:$0xf]
      %v2895 = vld [vmem:[%s2880 + $0x38] sm:$0xf]
      %v2896 = vld [vmem:[%s2880 + $0x3c] sm:$0xf]
      %v2897 = vld [vmem:[%s2880 + $0x40] sm:$0xf]
      %v2898 = vld [vmem:[%s2880 + $0x44] sm:$0xf]
      %v2899 = vld [vmem:[%s2880 + $0x48] sm:$0xf]
      %v2900 = vld [vmem:[%s2880 + $0x4c] sm:$0xf]
      %v2901 = vld [vmem:[%s2880 + $0x50] sm:$0xf]
      %v2902 = vld [vmem:[%s2880 + $0x54] sm:$0xf]
      %v2903 = vld [vmem:[%s2880 + $0x58] sm:$0xf]
      %v2904 = vld [vmem:[%s2880 + $0x5c] sm:$0xf]
      %v2905 = vld [vmem:[%s2880 + $0x60] sm:$0xf]
      %v2906 = vld [vmem:[%s2880 + $0x64] sm:$0xf]
      %v2907 = vld [vmem:[%s2880 + $0x68] sm:$0xf]
      %v2908 = vld [vmem:[%s2880 + $0x6c] sm:$0xf]
      %v2909 = vld [vmem:[%s2880 + $0x70] sm:$0xf]
      %v2910 = vld [vmem:[%s2880 + $0x74] sm:$0xf]
      %v2911 = vld [vmem:[%s2880 + $0x78] sm:$0xf]
      %v2912 = vld [vmem:[%s2880 + $0x7c] sm:$0xf]
      %v2945 = vunpack.c.l.b16 %v2881
      %v2946 = vunpack.c.l.b16 %v2882
      %v2947 = vunpack.c.l.b16 %v2883
      %v2948 = vunpack.c.l.b16 %v2884
      %v2949 = vunpack.c.l.b16 %v2885
      %v2950 = vunpack.c.l.b16 %v2886
      %v2951 = vunpack.c.l.b16 %v2887
      %v2952 = vunpack.c.l.b16 %v2888
      %v2953 = vunpack.c.l.b16 %v2889
      %v2954 = vunpack.c.l.b16 %v2890
      %v2955 = vunpack.c.l.b16 %v2891
      %v2956 = vunpack.c.l.b16 %v2892
      %v2957 = vunpack.c.l.b16 %v2893
      %v2958 = vunpack.c.l.b16 %v2894
      %v2959 = vunpack.c.l.b16 %v2895
      %v2960 = vunpack.c.l.b16 %v2896
      %v2961 = vunpack.c.l.b16 %v2897
      %v2962 = vunpack.c.l.b16 %v2898
      %v2963 = vunpack.c.l.b16 %v2899
      %v2964 = vunpack.c.l.b16 %v2900
      %v2965 = vunpack.c.l.b16 %v2901
      %v2966 = vunpack.c.l.b16 %v2902
      %v2967 = vunpack.c.l.b16 %v2903
      %v2968 = vunpack.c.l.b16 %v2904
      %v2969 = vunpack.c.l.b16 %v2905
      %v2970 = vunpack.c.l.b16 %v2906
      %v2971 = vunpack.c.l.b16 %v2907
      %v2972 = vunpack.c.l.b16 %v2908
      %v2973 = vunpack.c.l.b16 %v2909
      %v2974 = vunpack.c.l.b16 %v2910
      %v2975 = vunpack.c.l.b16 %v2911
      %v2976 = vunpack.c.l.b16 %v2912
      %v2977 = vpack.c.b16 %v2946, %v2945
      %v2978 = vpack.c.b16 %v2948, %v2947
      %v2979 = vpack.c.b16 %v2950, %v2949
      %v2980 = vpack.c.b16 %v2952, %v2951
      %v2981 = vpack.c.b16 %v2954, %v2953
      %v2982 = vpack.c.b16 %v2956, %v2955
      %v2983 = vpack.c.b16 %v2958, %v2957
      %v2984 = vpack.c.b16 %v2960, %v2959
      %v2985 = vpack.c.b16 %v2962, %v2961
      %v2986 = vpack.c.b16 %v2964, %v2963
      %v2987 = vpack.c.b16 %v2966, %v2965
      %v2988 = vpack.c.b16 %v2968, %v2967
      %v2989 = vpack.c.b16 %v2970, %v2969
      %v2990 = vpack.c.b16 %v2972, %v2971
      %v2991 = vpack.c.b16 %v2974, %v2973
      %v2992 = vpack.c.b16 %v2976, %v2975
      %3009 = vmatprep.subr.bf16.mxu0 0
      %3010 = vmatpush1.bf16.msra.mxu0 %v2984
      %3011 = vmatprep.subr.bf16.mxu0 0
      %3012 = vmatpush1.bf16.msra.mxu0 %v2983
      %3013 = vmatprep.subr.bf16.mxu0 0
      %3014 = vmatpush1.bf16.msra.mxu0 %v2982
      %3015 = vmatprep.subr.bf16.mxu0 0
      %3016 = vmatpush1.bf16.msra.mxu0 %v2981
      %3017 = vmatprep.subr.bf16.mxu0 0
      %3018 = vmatpush1.bf16.msra.mxu0 %v2980
      %3019 = vmatprep.subr.bf16.mxu0 0
      %3020 = vmatpush1.bf16.msra.mxu0 %v2979
      %3021 = vmatprep.subr.bf16.mxu0 0
      %3022 = vmatpush1.bf16.msra.mxu0 %v2978
      %3023 = vmatprep.subr.bf16.mxu0 0
      %3024 = vmatpush1.bf16.msra.mxu0 %v2977
      %3025 = vmatprep.subr.bf16.mxu0 0
      %3026 = vmatpush2.bf16.msra.mxu0 %v2992
      %3027 = vmatprep.subr.bf16.mxu0 0
      %3028 = vmatpush2.bf16.msra.mxu0 %v2991
      %3029 = vmatprep.subr.bf16.mxu0 0
      %3030 = vmatpush2.bf16.msra.mxu0 %v2990
      %3031 = vmatprep.subr.bf16.mxu0 0
      %3032 = vmatpush2.bf16.msra.mxu0 %v2989
      %3033 = vmatprep.subr.bf16.mxu0 0
      %3034 = vmatpush2.bf16.msra.mxu0 %v2988
      %3035 = vmatprep.subr.bf16.mxu0 0
      %3036 = vmatpush2.bf16.msra.mxu0 %v2987
      %3037 = vmatprep.subr.bf16.mxu0 0
      %3038 = vmatpush2.bf16.msra.mxu0 %v2986
      %3039 = vmatprep.subr.bf16.mxu0 0
      %3040 = vmatpush2.bf16.msra.mxu0 %v2985
      %3041 = vmatprep.mubr.bf16.mxu0 %v2873
      %3042 = vmatmul.mubr.bf16.gmra.mxu0 %v2872
      %v3043 = vpop.f32.mrf.mxu0
      %v3044 = vadd.f32 0.0, %v3043
      %v3045 = vpop.f32.mrf.mxu0
      %v3046 = vpop.f32.mrf.mxu0
      %v3047 = vadd.f32 0.0, %v3046
      %v3048 = vpop.f32.mrf.mxu0
      %3049 = vmatprep.mubr.bf16.mxu0 %v2875
      %3050 = vmatmul.mubr.bf16.gmra.mxu0 %v2874
      %v3051 = vpop.f32.mrf.mxu0
      %v3052 = vadd.f32 0.0, %v3051
      %v3053 = vpop.f32.mrf.mxu0
      %v3054 = vpop.f32.mrf.mxu0
      %v3055 = vadd.f32 0.0, %v3054
      %v3056 = vpop.f32.mrf.mxu0
      %3057 = vmatprep.mubr.bf16.mxu0 %v2877
      %3058 = vmatmul.mubr.bf16.gmra.mxu0 %v2876
      %v3059 = vpop.f32.mrf.mxu0
      %v3060 = vadd.f32 0.0, %v3059
      %v3061 = vpop.f32.mrf.mxu0
      %v3062 = vpop.f32.mrf.mxu0
      %v3063 = vadd.f32 0.0, %v3062
      %v3064 = vpop.f32.mrf.mxu0
      %3065 = vmatprep.mubr.bf16.mxu0 %v2879
      %3066 = vmatmul.mubr.bf16.gmra.mxu0 %v2878
      %v3067 = vpop.f32.mrf.mxu0
      %v3068 = vadd.f32 0.0, %v3067
      %v3069 = vpop.f32.mrf.mxu0
      %v3070 = vpop.f32.mrf.mxu0
      %v3071 = vadd.f32 0.0, %v3070
      %v3072 = vpop.f32.mrf.mxu0
      %3073 = vdwg.mxu0
      %v3074 = vadd.f32 %v2736, %v3044
      %v3075 = vadd.f32 %v2737, %v3047
      %v3076 = vadd.f32 %v2738, %v3052
      %v3077 = vadd.f32 %v2739, %v3055
      %v3078 = vadd.f32 %v2740, %v3060
      %v3079 = vadd.f32 %v2741, %v3063
      %v3080 = vadd.f32 %v2742, %v3068
      %v3081 = vadd.f32 %v2743, %v3071
      %v3082 = vld [vmem:[%s2] sm:$0x1]
      %v3084 = vlaneseq
      %v3085 = vshrl.u32 %v3084, 7
      %v3086 = vsub.s32 0, %v3085
      %v3087 = vrot.slane %v3082, %v3086
      %v3089 = vadd.f32 %v3074, %v3087
      %v3090 = vadd.f32 %v3075, %v3087
      %v3091 = vadd.f32 %v3076, %v3087
      %v3092 = vadd.f32 %v3077, %v3087
      %v3093 = vadd.f32 %v3078, %v3087
      %v3094 = vadd.f32 %v3079, %v3087
      %v3095 = vadd.f32 %v3080, %v3087
      %v3096 = vadd.f32 %v3081, %v3087
      %vm3097 = vcmp.ge.f32.partialorder %v3089, 0.0
      %vm3098 = vcmp.ge.f32.partialorder %v3090, 0.0
      %vm3099 = vcmp.ge.f32.partialorder %v3091, 0.0
      %vm3100 = vcmp.ge.f32.partialorder %v3092, 0.0
      %vm3101 = vcmp.ge.f32.partialorder %v3093, 0.0
      %vm3102 = vcmp.ge.f32.partialorder %v3094, 0.0
      %vm3103 = vcmp.ge.f32.partialorder %v3095, 0.0
      %vm3104 = vcmp.ge.f32.partialorder %v3096, 0.0
      %v3105 = vmul.f32 %v3089, 0.1
      %v3106 = vmul.f32 %v3090, 0.1
      %v3107 = vmul.f32 %v3091, 0.1
      %v3108 = vmul.f32 %v3092, 0.1
      %v3109 = vmul.f32 %v3093, 0.1
      %v3110 = vmul.f32 %v3094, 0.1
      %v3111 = vmul.f32 %v3095, 0.1
      %v3112 = vmul.f32 %v3096, 0.1
      %v3113 = vsel %vm3097, %v3089, %v3105
      %v3114 = vsel %vm3098, %v3090, %v3106
      %v3115 = vsel %vm3099, %v3091, %v3107
      %v3116 = vsel %vm3100, %v3092, %v3108
      %v3117 = vsel %vm3101, %v3093, %v3109
      %v3118 = vsel %vm3102, %v3094, %v3110
      %v3119 = vsel %vm3103, %v3095, %v3111
      %v3120 = vsel %vm3104, %v3096, %v3112
      %3121 = vst [vmem:[#allocation3] sm:$0xff] 0.0
      %3122 = vst [vmem:[#allocation3 + $0x8] sm:$0x3] 0.0
      %3123 = vst [vmem:[#allocation3 + $0x10] sm:$0xff] 0.0
      %3124 = vst [vmem:[#allocation3 + $0x18] sm:$0x3] 0.0
      %3125 = vst [vmem:[#allocation3 + $0x20] sm:$0xff] 0.0
      %3126 = vst [vmem:[#allocation3 + $0x28] sm:$0x3] 0.0
      %3127 = vst [vmem:[#allocation3 + $0x30] sm:$0xff] 0.0
      %3128 = vst [vmem:[#allocation3 + $0x38] sm:$0x3] 0.0
      %3129 = vst [vmem:[#allocation3 + $0x40] sm:$0xff] 0.0
      %3130 = vst [vmem:[#allocation3 + $0x48] sm:$0x3] 0.0
      %3131 = vst [vmem:[#allocation3 + $0x50] sm:$0xff] 0.0
      %3132 = vst [vmem:[#allocation3 + $0x58] sm:$0x3] 0.0
      %3133 = vst [vmem:[#allocation3 + $0x60] sm:$0xff] 0.0
      %3134 = vst [vmem:[#allocation3 + $0x68] sm:$0x3] 0.0
      %3135 = vst [vmem:[#allocation3 + $0x70] sm:$0xff] 0.0
      %3136 = vst [vmem:[#allocation3 + $0x78] sm:$0x3] 0.0
      %3137 = vst [vmem:[#allocation3 + $0x80] sm:$0xff] 0.0
      %3138 = vst [vmem:[#allocation3 + $0x88] sm:$0x3] 0.0
      %3139 = vst [vmem:[#allocation3 + $0x90] sm:$0xff] 0.0
      %3140 = vst [vmem:[#allocation3 + $0x98] sm:$0x3] 0.0
      %s3141 = scalar_lea.vmem [#allocation3], 16
      %3142 = vst [vmem:[%s3141 + $0x1] sm:$0xff] %v3113
      %3143 = vst [vmem:[%s3141 + $0x11] sm:$0xff] %v3114
      %3144 = vst [vmem:[%s3141 + $0x21] sm:$0xff] %v3115
      %3145 = vst [vmem:[%s3141 + $0x31] sm:$0xff] %v3116
      %3146 = vst [vmem:[%s3141 + $0x41] sm:$0xff] %v3117
      %3147 = vst [vmem:[%s3141 + $0x51] sm:$0xff] %v3118
      %3148 = vst [vmem:[%s3141 + $0x61] sm:$0xff] %v3119
      %3149 = vst [vmem:[%s3141 + $0x71] sm:$0xff] %v3120
      %v3150 = vld [vmem:[#allocation3] sm:$0xff]
      %v3151 = vld [vmem:[#allocation3 + $0x10] sm:$0xff]
      %v3152 = vld [vmem:[#allocation3 + $0x20] sm:$0xff]
      %v3153 = vld [vmem:[#allocation3 + $0x30] sm:$0xff]
      %v3154 = vld [vmem:[#allocation3 + $0x40] sm:$0xff]
      %v3155 = vld [vmem:[#allocation3 + $0x50] sm:$0xff]
      %v3156 = vld [vmem:[#allocation3 + $0x60] sm:$0xff]
      %v3157 = vld [vmem:[#allocation3 + $0x70] sm:$0xff]
      %v3158 = vpack.c.bf16 %v3151, %v3150
      %v3159 = vpack.c.bf16 %v3153, %v3152
      %v3160 = vpack.c.bf16 %v3155, %v3154
      %v3161 = vpack.c.bf16 %v3157, %v3156
      %v3162 = vld [vmem:[%s3] sm:$0xf]
      %v3163 = vld [vmem:[%s3 + $0x4] sm:$0xf]
      %v3164 = vld [vmem:[%s3 + $0x8] sm:$0xf]
      %v3165 = vld [vmem:[%s3 + $0xc] sm:$0xf]
      %v3166 = vld [vmem:[%s3 + $0x10] sm:$0xf]
      %v3167 = vld [vmem:[%s3 + $0x14] sm:$0xf]
      %v3168 = vld [vmem:[%s3 + $0x18] sm:$0xf]
      %v3169 = vld [vmem:[%s3 + $0x1c] sm:$0xf]
      %v3170 = vld [vmem:[%s3 + $0x20] sm:$0xf]
      %v3171 = vld [vmem:[%s3 + $0x24] sm:$0xf]
      %v3172 = vld [vmem:[%s3 + $0x28] sm:$0xf]
      %v3173 = vld [vmem:[%s3 + $0x2c] sm:$0xf]
      %v3174 = vld [vmem:[%s3 + $0x30] sm:$0xf]
      %v3175 = vld [vmem:[%s3 + $0x34] sm:$0xf]
      %v3176 = vld [vmem:[%s3 + $0x38] sm:$0xf]
      %v3177 = vld [vmem:[%s3 + $0x3c] sm:$0xf]
      %v3178 = vld [vmem:[#allocation3 + $0x1] sm:$0xff]
      %v3179 = vld [vmem:[#allocation3 + $0x11] sm:$0xff]
      %v3180 = vld [vmem:[#allocation3 + $0x21] sm:$0xff]
      %v3181 = vld [vmem:[#allocation3 + $0x31] sm:$0xff]
      %v3182 = vld [vmem:[#allocation3 + $0x41] sm:$0xff]
      %v3183 = vld [vmem:[#allocation3 + $0x51] sm:$0xff]
      %v3184 = vld [vmem:[#allocation3 + $0x61] sm:$0xff]
      %v3185 = vld [vmem:[#allocation3 + $0x71] sm:$0xff]
      %v3186 = vpack.c.bf16 %v3179, %v3178
      %v3187 = vpack.c.bf16 %v3181, %v3180
      %v3188 = vpack.c.bf16 %v3183, %v3182
      %v3189 = vpack.c.bf16 %v3185, %v3184
      %s3190 = scalar_lea.vmem %s3, 64
      %v3191 = vld [vmem:[%s3190] sm:$0xf]
      %v3192 = vld [vmem:[%s3190 + $0x4] sm:$0xf]
      %v3193 = vld [vmem:[%s3190 + $0x8] sm:$0xf]
      %v3194 = vld [vmem:[%s3190 + $0xc] sm:$0xf]
      %v3195 = vld [vmem:[%s3190 + $0x10] sm:$0xf]
      %v3196 = vld [vmem:[%s3190 + $0x14] sm:$0xf]
      %v3197 = vld [vmem:[%s3190 + $0x18] sm:$0xf]
      %v3198 = vld [vmem:[%s3190 + $0x1c] sm:$0xf]
      %v3199 = vld [vmem:[%s3190 + $0x20] sm:$0xf]
      %v3200 = vld [vmem:[%s3190 + $0x24] sm:$0xf]
      %v3201 = vld [vmem:[%s3190 + $0x28] sm:$0xf]
      %v3202 = vld [vmem:[%s3190 + $0x2c] sm:$0xf]
      %v3203 = vld [vmem:[%s3190 + $0x30] sm:$0xf]
      %v3204 = vld [vmem:[%s3190 + $0x34] sm:$0xf]
      %v3205 = vld [vmem:[%s3190 + $0x38] sm:$0xf]
      %v3206 = vld [vmem:[%s3190 + $0x3c] sm:$0xf]
      %v3223 = vunpack.c.l.b16 %v3191
      %v3224 = vunpack.c.l.b16 %v3192
      %v3225 = vunpack.c.l.b16 %v3193
      %v3226 = vunpack.c.l.b16 %v3194
      %v3227 = vunpack.c.l.b16 %v3195
      %v3228 = vunpack.c.l.b16 %v3196
      %v3229 = vunpack.c.l.b16 %v3197
      %v3230 = vunpack.c.l.b16 %v3198
      %v3231 = vunpack.c.l.b16 %v3199
      %v3232 = vunpack.c.l.b16 %v3200
      %v3233 = vunpack.c.l.b16 %v3201
      %v3234 = vunpack.c.l.b16 %v3202
      %v3235 = vunpack.c.l.b16 %v3203
      %v3236 = vunpack.c.l.b16 %v3204
      %v3237 = vunpack.c.l.b16 %v3205
      %v3238 = vunpack.c.l.b16 %v3206
      %v3239 = vpack.c.b16 %v3224, %v3223
      %v3240 = vpack.c.b16 %v3226, %v3225
      %v3241 = vpack.c.b16 %v3228, %v3227
      %v3242 = vpack.c.b16 %v3230, %v3229
      %v3243 = vpack.c.b16 %v3232, %v3231
      %v3244 = vpack.c.b16 %v3234, %v3233
      %v3245 = vpack.c.b16 %v3236, %v3235
      %v3246 = vpack.c.b16 %v3238, %v3237
      %3255 = vmatprep.subr.bf16.mxu0 0
      %3256 = vmatpush1.bf16.msra.mxu0 %v3246
      %3257 = vmatprep.subr.bf16.mxu0 0
      %3258 = vmatpush1.bf16.msra.mxu0 %v3245
      %3259 = vmatprep.subr.bf16.mxu0 0
      %3260 = vmatpush1.bf16.msra.mxu0 %v3244
      %3261 = vmatprep.subr.bf16.mxu0 0
      %3262 = vmatpush1.bf16.msra.mxu0 %v3243
      %3263 = vmatprep.subr.bf16.mxu0 0
      %3264 = vmatpush1.bf16.msra.mxu0 %v3242
      %3265 = vmatprep.subr.bf16.mxu0 0
      %3266 = vmatpush1.bf16.msra.mxu0 %v3241
      %3267 = vmatprep.subr.bf16.mxu0 0
      %3268 = vmatpush1.bf16.msra.mxu0 %v3240
      %3269 = vmatprep.subr.bf16.mxu0 0
      %3270 = vmatpush1.bf16.msra.mxu0 %v3239
      %3271 = vmatprep.subr.bf16.mxu0 0
      %3272 = vmatpush2.bf16.msra.mxu0 0
      %3273 = vmatprep.subr.bf16.mxu0 0
      %3274 = vmatpush2.bf16.msra.mxu0 0
      %3275 = vmatprep.subr.bf16.mxu0 0
      %3276 = vmatpush2.bf16.msra.mxu0 0
      %3277 = vmatprep.subr.bf16.mxu0 0
      %3278 = vmatpush2.bf16.msra.mxu0 0
      %3279 = vmatprep.subr.bf16.mxu0 0
      %3280 = vmatpush2.bf16.msra.mxu0 0
      %3281 = vmatprep.subr.bf16.mxu0 0
      %3282 = vmatpush2.bf16.msra.mxu0 0
      %3283 = vmatprep.subr.bf16.mxu0 0
      %3284 = vmatpush2.bf16.msra.mxu0 0
      %3285 = vmatprep.subr.bf16.mxu0 0
      %3286 = vmatpush2.bf16.msra.mxu0 0
      %3287 = vmatprep.mubr.bf16.mxu0 0
      %3288 = vmatmul.mubr.bf16.gmra.mxu0 %v3186
      %v3289 = vpop.f32.mrf.mxu0
      %v3290 = vadd.f32 0.0, %v3289
      %v3291 = vpop.f32.mrf.mxu0
      %v3292 = vpop.f32.mrf.mxu0
      %v3293 = vadd.f32 0.0, %v3292
      %v3294 = vpop.f32.mrf.mxu0
      %3295 = vmatprep.mubr.bf16.mxu0 0
      %3296 = vmatmul.mubr.bf16.gmra.mxu0 %v3187
      %v3297 = vpop.f32.mrf.mxu0
      %v3298 = vadd.f32 0.0, %v3297
      %v3299 = vpop.f32.mrf.mxu0
      %v3300 = vpop.f32.mrf.mxu0
      %v3301 = vadd.f32 0.0, %v3300
      %v3302 = vpop.f32.mrf.mxu0
      %3303 = vmatprep.mubr.bf16.mxu0 0
      %3304 = vmatmul.mubr.bf16.gmra.mxu0 %v3188
      %v3305 = vpop.f32.mrf.mxu0
      %v3306 = vadd.f32 0.0, %v3305
      %v3307 = vpop.f32.mrf.mxu0
      %v3308 = vpop.f32.mrf.mxu0
      %v3309 = vadd.f32 0.0, %v3308
      %v3310 = vpop.f32.mrf.mxu0
      %3311 = vmatprep.mubr.bf16.mxu0 0
      %3312 = vmatmul.mubr.bf16.gmra.mxu0 %v3189
      %v3313 = vpop.f32.mrf.mxu0
      %v3314 = vadd.f32 0.0, %v3313
      %v3315 = vpop.f32.mrf.mxu0
      %v3316 = vpop.f32.mrf.mxu0
      %v3317 = vadd.f32 0.0, %v3316
      %v3318 = vpop.f32.mrf.mxu0
      %3319 = vdwg.mxu0
      %v3336 = vunpack.c.l.b16 %v3162
      %v3337 = vunpack.c.l.b16 %v3163
      %v3338 = vunpack.c.l.b16 %v3164
      %v3339 = vunpack.c.l.b16 %v3165
      %v3340 = vunpack.c.l.b16 %v3166
      %v3341 = vunpack.c.l.b16 %v3167
      %v3342 = vunpack.c.l.b16 %v3168
      %v3343 = vunpack.c.l.b16 %v3169
      %v3344 = vunpack.c.l.b16 %v3170
      %v3345 = vunpack.c.l.b16 %v3171
      %v3346 = vunpack.c.l.b16 %v3172
      %v3347 = vunpack.c.l.b16 %v3173
      %v3348 = vunpack.c.l.b16 %v3174
      %v3349 = vunpack.c.l.b16 %v3175
      %v3350 = vunpack.c.l.b16 %v3176
      %v3351 = vunpack.c.l.b16 %v3177
      %v3352 = vpack.c.b16 %v3337, %v3336
      %v3353 = vpack.c.b16 %v3339, %v3338
      %v3354 = vpack.c.b16 %v3341, %v3340
      %v3355 = vpack.c.b16 %v3343, %v3342
      %v3356 = vpack.c.b16 %v3345, %v3344
      %v3357 = vpack.c.b16 %v3347, %v3346
      %v3358 = vpack.c.b16 %v3349, %v3348
      %v3359 = vpack.c.b16 %v3351, %v3350
      %3368 = vmatprep.subr.bf16.mxu0 0
      %3369 = vmatpush1.bf16.msra.mxu0 %v3359
      %3370 = vmatprep.subr.bf16.mxu0 0
      %3371 = vmatpush1.bf16.msra.mxu0 %v3358
      %3372 = vmatprep.subr.bf16.mxu0 0
      %3373 = vmatpush1.bf16.msra.mxu0 %v3357
      %3374 = vmatprep.subr.bf16.mxu0 0
      %3375 = vmatpush1.bf16.msra.mxu0 %v3356
      %3376 = vmatprep.subr.bf16.mxu0 0
      %3377 = vmatpush1.bf16.msra.mxu0 %v3355
      %3378 = vmatprep.subr.bf16.mxu0 0
      %3379 = vmatpush1.bf16.msra.mxu0 %v3354
      %3380 = vmatprep.subr.bf16.mxu0 0
      %3381 = vmatpush1.bf16.msra.mxu0 %v3353
      %3382 = vmatprep.subr.bf16.mxu0 0
      %3383 = vmatpush1.bf16.msra.mxu0 %v3352
      %3384 = vmatprep.subr.bf16.mxu0 0
      %3385 = vmatpush2.bf16.msra.mxu0 0
      %3386 = vmatprep.subr.bf16.mxu0 0
      %3387 = vmatpush2.bf16.msra.mxu0 0
      %3388 = vmatprep.subr.bf16.mxu0 0
      %3389 = vmatpush2.bf16.msra.mxu0 0
      %3390 = vmatprep.subr.bf16.mxu0 0
      %3391 = vmatpush2.bf16.msra.mxu0 0
      %3392 = vmatprep.subr.bf16.mxu0 0
      %3393 = vmatpush2.bf16.msra.mxu0 0
      %3394 = vmatprep.subr.bf16.mxu0 0
      %3395 = vmatpush2.bf16.msra.mxu0 0
      %3396 = vmatprep.subr.bf16.mxu0 0
      %3397 = vmatpush2.bf16.msra.mxu0 0
      %3398 = vmatprep.subr.bf16.mxu0 0
      %3399 = vmatpush2.bf16.msra.mxu0 0
      %3400 = vmatprep.mubr.bf16.mxu0 0
      %3401 = vmatmul.mubr.bf16.gmra.mxu0 %v3158
      %v3402 = vpop.f32.mrf.mxu0
      %v3403 = vadd.f32 %v3290, %v3402
      %v3404 = vpop.f32.mrf.mxu0
      %v3405 = vpop.f32.mrf.mxu0
      %v3406 = vadd.f32 %v3293, %v3405
      %v3407 = vpop.f32.mrf.mxu0
      %3408 = vmatprep.mubr.bf16.mxu0 0
      %3409 = vmatmul.mubr.bf16.gmra.mxu0 %v3159
      %v3410 = vpop.f32.mrf.mxu0
      %v3411 = vadd.f32 %v3298, %v3410
      %v3412 = vpop.f32.mrf.mxu0
      %v3413 = vpop.f32.mrf.mxu0
      %v3414 = vadd.f32 %v3301, %v3413
      %v3415 = vpop.f32.mrf.mxu0
      %3416 = vmatprep.mubr.bf16.mxu0 0
      %3417 = vmatmul.mubr.bf16.gmra.mxu0 %v3160
      %v3418 = vpop.f32.mrf.mxu0
      %v3419 = vadd.f32 %v3306, %v3418
      %v3420 = vpop.f32.mrf.mxu0
      %v3421 = vpop.f32.mrf.mxu0
      %v3422 = vadd.f32 %v3309, %v3421
      %v3423 = vpop.f32.mrf.mxu0
      %3424 = vmatprep.mubr.bf16.mxu0 0
      %3425 = vmatmul.mubr.bf16.gmra.mxu0 %v3161
      %v3426 = vpop.f32.mrf.mxu0
      %v3427 = vadd.f32 %v3314, %v3426
      %v3428 = vpop.f32.mrf.mxu0
      %v3429 = vpop.f32.mrf.mxu0
      %v3430 = vadd.f32 %v3317, %v3429
      %v3431 = vpop.f32.mrf.mxu0
      %3432 = vdwg.mxu0
      %v3433 = vld [vmem:[#allocation3 + $0x2] sm:$0xff]
      %v3434 = vld [vmem:[#allocation3 + $0x12] sm:$0xff]
      %v3435 = vld [vmem:[#allocation3 + $0x22] sm:$0xff]
      %v3436 = vld [vmem:[#allocation3 + $0x32] sm:$0xff]
      %v3437 = vld [vmem:[#allocation3 + $0x42] sm:$0xff]
      %v3438 = vld [vmem:[#allocation3 + $0x52] sm:$0xff]
      %v3439 = vld [vmem:[#allocation3 + $0x62] sm:$0xff]
      %v3440 = vld [vmem:[#allocation3 + $0x72] sm:$0xff]
      %v3441 = vpack.c.bf16 %v3434, %v3433
      %v3442 = vpack.c.bf16 %v3436, %v3435
      %v3443 = vpack.c.bf16 %v3438, %v3437
      %v3444 = vpack.c.bf16 %v3440, %v3439
      %s3445 = scalar_lea.vmem %s3, 128
      %v3446 = vld [vmem:[%s3445] sm:$0xf]
      %v3447 = vld [vmem:[%s3445 + $0x4] sm:$0xf]
      %v3448 = vld [vmem:[%s3445 + $0x8] sm:$0xf]
      %v3449 = vld [vmem:[%s3445 + $0xc] sm:$0xf]
      %v3450 = vld [vmem:[%s3445 + $0x10] sm:$0xf]
      %v3451 = vld [vmem:[%s3445 + $0x14] sm:$0xf]
      %v3452 = vld [vmem:[%s3445 + $0x18] sm:$0xf]
      %v3453 = vld [vmem:[%s3445 + $0x1c] sm:$0xf]
      %v3454 = vld [vmem:[%s3445 + $0x20] sm:$0xf]
      %v3455 = vld [vmem:[%s3445 + $0x24] sm:$0xf]
      %v3456 = vld [vmem:[%s3445 + $0x28] sm:$0xf]
      %v3457 = vld [vmem:[%s3445 + $0x2c] sm:$0xf]
      %v3458 = vld [vmem:[%s3445 + $0x30] sm:$0xf]
      %v3459 = vld [vmem:[%s3445 + $0x34] sm:$0xf]
      %v3460 = vld [vmem:[%s3445 + $0x38] sm:$0xf]
      %v3461 = vld [vmem:[%s3445 + $0x3c] sm:$0xf]
      %v3478 = vunpack.c.l.b16 %v3446
      %v3479 = vunpack.c.l.b16 %v3447
      %v3480 = vunpack.c.l.b16 %v3448
      %v3481 = vunpack.c.l.b16 %v3449
      %v3482 = vunpack.c.l.b16 %v3450
      %v3483 = vunpack.c.l.b16 %v3451
      %v3484 = vunpack.c.l.b16 %v3452
      %v3485 = vunpack.c.l.b16 %v3453
      %v3486 = vunpack.c.l.b16 %v3454
      %v3487 = vunpack.c.l.b16 %v3455
      %v3488 = vunpack.c.l.b16 %v3456
      %v3489 = vunpack.c.l.b16 %v3457
      %v3490 = vunpack.c.l.b16 %v3458
      %v3491 = vunpack.c.l.b16 %v3459
      %v3492 = vunpack.c.l.b16 %v3460
      %v3493 = vunpack.c.l.b16 %v3461
      %v3494 = vpack.c.b16 %v3479, %v3478
      %v3495 = vpack.c.b16 %v3481, %v3480
      %v3496 = vpack.c.b16 %v3483, %v3482
      %v3497 = vpack.c.b16 %v3485, %v3484
      %v3498 = vpack.c.b16 %v3487, %v3486
      %v3499 = vpack.c.b16 %v3489, %v3488
      %v3500 = vpack.c.b16 %v3491, %v3490
      %v3501 = vpack.c.b16 %v3493, %v3492
      %3510 = vmatprep.subr.bf16.mxu0 0
      %3511 = vmatpush1.bf16.msra.mxu0 %v3501
      %3512 = vmatprep.subr.bf16.mxu0 0
      %3513 = vmatpush1.bf16.msra.mxu0 %v3500
      %3514 = vmatprep.subr.bf16.mxu0 0
      %3515 = vmatpush1.bf16.msra.mxu0 %v3499
      %3516 = vmatprep.subr.bf16.mxu0 0
      %3517 = vmatpush1.bf16.msra.mxu0 %v3498
      %3518 = vmatprep.subr.bf16.mxu0 0
      %3519 = vmatpush1.bf16.msra.mxu0 %v3497
      %3520 = vmatprep.subr.bf16.mxu0 0
      %3521 = vmatpush1.bf16.msra.mxu0 %v3496
      %3522 = vmatprep.subr.bf16.mxu0 0
      %3523 = vmatpush1.bf16.msra.mxu0 %v3495
      %3524 = vmatprep.subr.bf16.mxu0 0
      %3525 = vmatpush1.bf16.msra.mxu0 %v3494
      %3526 = vmatprep.subr.bf16.mxu0 0
      %3527 = vmatpush2.bf16.msra.mxu0 0
      %3528 = vmatprep.subr.bf16.mxu0 0
      %3529 = vmatpush2.bf16.msra.mxu0 0
      %3530 = vmatprep.subr.bf16.mxu0 0
      %3531 = vmatpush2.bf16.msra.mxu0 0
      %3532 = vmatprep.subr.bf16.mxu0 0
      %3533 = vmatpush2.bf16.msra.mxu0 0
      %3534 = vmatprep.subr.bf16.mxu0 0
      %3535 = vmatpush2.bf16.msra.mxu0 0
      %3536 = vmatprep.subr.bf16.mxu0 0
      %3537 = vmatpush2.bf16.msra.mxu0 0
      %3538 = vmatprep.subr.bf16.mxu0 0
      %3539 = vmatpush2.bf16.msra.mxu0 0
      %3540 = vmatprep.subr.bf16.mxu0 0
      %3541 = vmatpush2.bf16.msra.mxu0 0
      %3542 = vmatprep.mubr.bf16.mxu0 0
      %3543 = vmatmul.mubr.bf16.gmra.mxu0 %v3441
      %v3544 = vpop.f32.mrf.mxu0
      %v3545 = vadd.f32 0.0, %v3544
      %v3546 = vpop.f32.mrf.mxu0
      %v3547 = vpop.f32.mrf.mxu0
      %v3548 = vadd.f32 0.0, %v3547
      %v3549 = vpop.f32.mrf.mxu0
      %3550 = vmatprep.mubr.bf16.mxu0 0
      %3551 = vmatmul.mubr.bf16.gmra.mxu0 %v3442
      %v3552 = vpop.f32.mrf.mxu0
      %v3553 = vadd.f32 0.0, %v3552
      %v3554 = vpop.f32.mrf.mxu0
      %v3555 = vpop.f32.mrf.mxu0
      %v3556 = vadd.f32 0.0, %v3555
      %v3557 = vpop.f32.mrf.mxu0
      %3558 = vmatprep.mubr.bf16.mxu0 0
      %3559 = vmatmul.mubr.bf16.gmra.mxu0 %v3443
      %v3560 = vpop.f32.mrf.mxu0
      %v3561 = vadd.f32 0.0, %v3560
      %v3562 = vpop.f32.mrf.mxu0
      %v3563 = vpop.f32.mrf.mxu0
      %v3564 = vadd.f32 0.0, %v3563
      %v3565 = vpop.f32.mrf.mxu0
      %3566 = vmatprep.mubr.bf16.mxu0 0
      %3567 = vmatmul.mubr.bf16.gmra.mxu0 %v3444
      %v3568 = vpop.f32.mrf.mxu0
      %v3569 = vadd.f32 0.0, %v3568
      %v3570 = vpop.f32.mrf.mxu0
      %v3571 = vpop.f32.mrf.mxu0
      %v3572 = vadd.f32 0.0, %v3571
      %v3573 = vpop.f32.mrf.mxu0
      %3574 = vdwg.mxu0
      %v3575 = vadd.f32 %v3403, %v3545
      %v3576 = vadd.f32 %v3406, %v3548
      %v3577 = vadd.f32 %v3411, %v3553
      %v3578 = vadd.f32 %v3414, %v3556
      %v3579 = vadd.f32 %v3419, %v3561
      %v3580 = vadd.f32 %v3422, %v3564
      %v3581 = vadd.f32 %v3427, %v3569
      %v3582 = vadd.f32 %v3430, %v3572
      %v3583 = vld [vmem:[%s3141] sm:$0xff]
      %v3584 = vld [vmem:[%s3141 + $0x10] sm:$0xff]
      %v3585 = vld [vmem:[%s3141 + $0x20] sm:$0xff]
      %v3586 = vld [vmem:[%s3141 + $0x30] sm:$0xff]
      %v3587 = vld [vmem:[%s3141 + $0x40] sm:$0xff]
      %v3588 = vld [vmem:[%s3141 + $0x50] sm:$0xff]
      %v3589 = vld [vmem:[%s3141 + $0x60] sm:$0xff]
      %v3590 = vld [vmem:[%s3141 + $0x70] sm:$0xff]
      %v3591 = vpack.c.bf16 %v3584, %v3583
      %v3592 = vpack.c.bf16 %v3586, %v3585
      %v3593 = vpack.c.bf16 %v3588, %v3587
      %v3594 = vpack.c.bf16 %v3590, %v3589
      %s3595 = scalar_lea.vmem %s3, 192
      %v3596 = vld [vmem:[%s3595] sm:$0xf]
      %v3597 = vld [vmem:[%s3595 + $0x4] sm:$0xf]
      %v3598 = vld [vmem:[%s3595 + $0x8] sm:$0xf]
      %v3599 = vld [vmem:[%s3595 + $0xc] sm:$0xf]
      %v3600 = vld [vmem:[%s3595 + $0x10] sm:$0xf]
      %v3601 = vld [vmem:[%s3595 + $0x14] sm:$0xf]
      %v3602 = vld [vmem:[%s3595 + $0x18] sm:$0xf]
      %v3603 = vld [vmem:[%s3595 + $0x1c] sm:$0xf]
      %v3604 = vld [vmem:[%s3595 + $0x20] sm:$0xf]
      %v3605 = vld [vmem:[%s3595 + $0x24] sm:$0xf]
      %v3606 = vld [vmem:[%s3595 + $0x28] sm:$0xf]
      %v3607 = vld [vmem:[%s3595 + $0x2c] sm:$0xf]
      %v3608 = vld [vmem:[%s3595 + $0x30] sm:$0xf]
      %v3609 = vld [vmem:[%s3595 + $0x34] sm:$0xf]
      %v3610 = vld [vmem:[%s3595 + $0x38] sm:$0xf]
      %v3611 = vld [vmem:[%s3595 + $0x3c] sm:$0xf]
      %v3628 = vunpack.c.l.b16 %v3596
      %v3629 = vunpack.c.l.b16 %v3597
      %v3630 = vunpack.c.l.b16 %v3598
      %v3631 = vunpack.c.l.b16 %v3599
      %v3632 = vunpack.c.l.b16 %v3600
      %v3633 = vunpack.c.l.b16 %v3601
      %v3634 = vunpack.c.l.b16 %v3602
      %v3635 = vunpack.c.l.b16 %v3603
      %v3636 = vunpack.c.l.b16 %v3604
      %v3637 = vunpack.c.l.b16 %v3605
      %v3638 = vunpack.c.l.b16 %v3606
      %v3639 = vunpack.c.l.b16 %v3607
      %v3640 = vunpack.c.l.b16 %v3608
      %v3641 = vunpack.c.l.b16 %v3609
      %v3642 = vunpack.c.l.b16 %v3610
      %v3643 = vunpack.c.l.b16 %v3611
      %v3644 = vpack.c.b16 %v3629, %v3628
      %v3645 = vpack.c.b16 %v3631, %v3630
      %v3646 = vpack.c.b16 %v3633, %v3632
      %v3647 = vpack.c.b16 %v3635, %v3634
      %v3648 = vpack.c.b16 %v3637, %v3636
      %v3649 = vpack.c.b16 %v3639, %v3638
      %v3650 = vpack.c.b16 %v3641, %v3640
      %v3651 = vpack.c.b16 %v3643, %v3642
      %3660 = vmatprep.subr.bf16.mxu0 0
      %3661 = vmatpush1.bf16.msra.mxu0 %v3651
      %3662 = vmatprep.subr.bf16.mxu0 0
      %3663 = vmatpush1.bf16.msra.mxu0 %v3650
      %3664 = vmatprep.subr.bf16.mxu0 0
      %3665 = vmatpush1.bf16.msra.mxu0 %v3649
      %3666 = vmatprep.subr.bf16.mxu0 0
      %3667 = vmatpush1.bf16.msra.mxu0 %v3648
      %3668 = vmatprep.subr.bf16.mxu0 0
      %3669 = vmatpush1.bf16.msra.mxu0 %v3647
      %3670 = vmatprep.subr.bf16.mxu0 0
      %3671 = vmatpush1.bf16.msra.mxu0 %v3646
      %3672 = vmatprep.subr.bf16.mxu0 0
      %3673 = vmatpush1.bf16.msra.mxu0 %v3645
      %3674 = vmatprep.subr.bf16.mxu0 0
      %3675 = vmatpush1.bf16.msra.mxu0 %v3644
      %3676 = vmatprep.subr.bf16.mxu0 0
      %3677 = vmatpush2.bf16.msra.mxu0 0
      %3678 = vmatprep.subr.bf16.mxu0 0
      %3679 = vmatpush2.bf16.msra.mxu0 0
      %3680 = vmatprep.subr.bf16.mxu0 0
      %3681 = vmatpush2.bf16.msra.mxu0 0
      %3682 = vmatprep.subr.bf16.mxu0 0
      %3683 = vmatpush2.bf16.msra.mxu0 0
      %3684 = vmatprep.subr.bf16.mxu0 0
      %3685 = vmatpush2.bf16.msra.mxu0 0
      %3686 = vmatprep.subr.bf16.mxu0 0
      %3687 = vmatpush2.bf16.msra.mxu0 0
      %3688 = vmatprep.subr.bf16.mxu0 0
      %3689 = vmatpush2.bf16.msra.mxu0 0
      %3690 = vmatprep.subr.bf16.mxu0 0
      %3691 = vmatpush2.bf16.msra.mxu0 0
      %3692 = vmatprep.mubr.bf16.mxu0 0
      %3693 = vmatmul.mubr.bf16.gmra.mxu0 %v3591
      %v3694 = vpop.f32.mrf.mxu0
      %v3695 = vadd.f32 0.0, %v3694
      %v3696 = vpop.f32.mrf.mxu0
      %v3697 = vpop.f32.mrf.mxu0
      %v3698 = vadd.f32 0.0, %v3697
      %v3699 = vpop.f32.mrf.mxu0
      %3700 = vmatprep.mubr.bf16.mxu0 0
      %3701 = vmatmul.mubr.bf16.gmra.mxu0 %v3592
      %v3702 = vpop.f32.mrf.mxu0
      %v3703 = vadd.f32 0.0, %v3702
      %v3704 = vpop.f32.mrf.mxu0
      %v3705 = vpop.f32.mrf.mxu0
      %v3706 = vadd.f32 0.0, %v3705
      %v3707 = vpop.f32.mrf.mxu0
      %3708 = vmatprep.mubr.bf16.mxu0 0
      %3709 = vmatmul.mubr.bf16.gmra.mxu0 %v3593
      %v3710 = vpop.f32.mrf.mxu0
      %v3711 = vadd.f32 0.0, %v3710
      %v3712 = vpop.f32.mrf.mxu0
      %v3713 = vpop.f32.mrf.mxu0
      %v3714 = vadd.f32 0.0, %v3713
      %v3715 = vpop.f32.mrf.mxu0
      %3716 = vmatprep.mubr.bf16.mxu0 0
      %3717 = vmatmul.mubr.bf16.gmra.mxu0 %v3594
      %v3718 = vpop.f32.mrf.mxu0
      %v3719 = vadd.f32 0.0, %v3718
      %v3720 = vpop.f32.mrf.mxu0
      %v3721 = vpop.f32.mrf.mxu0
      %v3722 = vadd.f32 0.0, %v3721
      %v3723 = vpop.f32.mrf.mxu0
      %3724 = vdwg.mxu0
      %v3725 = vadd.f32 %v3575, %v3695
      %v3726 = vadd.f32 %v3576, %v3698
      %v3727 = vadd.f32 %v3577, %v3703
      %v3728 = vadd.f32 %v3578, %v3706
      %v3729 = vadd.f32 %v3579, %v3711
      %v3730 = vadd.f32 %v3580, %v3714
      %v3731 = vadd.f32 %v3581, %v3719
      %v3732 = vadd.f32 %v3582, %v3722
      %v3733 = vld [vmem:[%s3141 + $0x1] sm:$0xff]
      %v3734 = vld [vmem:[%s3141 + $0x11] sm:$0xff]
      %v3735 = vld [vmem:[%s3141 + $0x21] sm:$0xff]
      %v3736 = vld [vmem:[%s3141 + $0x31] sm:$0xff]
      %v3737 = vld [vmem:[%s3141 + $0x41] sm:$0xff]
      %v3738 = vld [vmem:[%s3141 + $0x51] sm:$0xff]
      %v3739 = vld [vmem:[%s3141 + $0x61] sm:$0xff]
      %v3740 = vld [vmem:[%s3141 + $0x71] sm:$0xff]
      %v3741 = vpack.c.bf16 %v3734, %v3733
      %v3742 = vpack.c.bf16 %v3736, %v3735
      %v3743 = vpack.c.bf16 %v3738, %v3737
      %v3744 = vpack.c.bf16 %v3740, %v3739
      %s3745 = scalar_lea.vmem %s3, 256
      %v3746 = vld [vmem:[%s3745] sm:$0xf]
      %v3747 = vld [vmem:[%s3745 + $0x4] sm:$0xf]
      %v3748 = vld [vmem:[%s3745 + $0x8] sm:$0xf]
      %v3749 = vld [vmem:[%s3745 + $0xc] sm:$0xf]
      %v3750 = vld [vmem:[%s3745 + $0x10] sm:$0xf]
      %v3751 = vld [vmem:[%s3745 + $0x14] sm:$0xf]
      %v3752 = vld [vmem:[%s3745 + $0x18] sm:$0xf]
      %v3753 = vld [vmem:[%s3745 + $0x1c] sm:$0xf]
      %v3754 = vld [vmem:[%s3745 + $0x20] sm:$0xf]
      %v3755 = vld [vmem:[%s3745 + $0x24] sm:$0xf]
      %v3756 = vld [vmem:[%s3745 + $0x28] sm:$0xf]
      %v3757 = vld [vmem:[%s3745 + $0x2c] sm:$0xf]
      %v3758 = vld [vmem:[%s3745 + $0x30] sm:$0xf]
      %v3759 = vld [vmem:[%s3745 + $0x34] sm:$0xf]
      %v3760 = vld [vmem:[%s3745 + $0x38] sm:$0xf]
      %v3761 = vld [vmem:[%s3745 + $0x3c] sm:$0xf]
      %v3778 = vunpack.c.l.b16 %v3746
      %v3779 = vunpack.c.l.b16 %v3747
      %v3780 = vunpack.c.l.b16 %v3748
      %v3781 = vunpack.c.l.b16 %v3749
      %v3782 = vunpack.c.l.b16 %v3750
      %v3783 = vunpack.c.l.b16 %v3751
      %v3784 = vunpack.c.l.b16 %v3752
      %v3785 = vunpack.c.l.b16 %v3753
      %v3786 = vunpack.c.l.b16 %v3754
      %v3787 = vunpack.c.l.b16 %v3755
      %v3788 = vunpack.c.l.b16 %v3756
      %v3789 = vunpack.c.l.b16 %v3757
      %v3790 = vunpack.c.l.b16 %v3758
      %v3791 = vunpack.c.l.b16 %v3759
      %v3792 = vunpack.c.l.b16 %v3760
      %v3793 = vunpack.c.l.b16 %v3761
      %v3794 = vpack.c.b16 %v3779, %v3778
      %v3795 = vpack.c.b16 %v3781, %v3780
      %v3796 = vpack.c.b16 %v3783, %v3782
      %v3797 = vpack.c.b16 %v3785, %v3784
      %v3798 = vpack.c.b16 %v3787, %v3786
      %v3799 = vpack.c.b16 %v3789, %v3788
      %v3800 = vpack.c.b16 %v3791, %v3790
      %v3801 = vpack.c.b16 %v3793, %v3792
      %3810 = vmatprep.subr.bf16.mxu0 0
      %3811 = vmatpush1.bf16.msra.mxu0 %v3801
      %3812 = vmatprep.subr.bf16.mxu0 0
      %3813 = vmatpush1.bf16.msra.mxu0 %v3800
      %3814 = vmatprep.subr.bf16.mxu0 0
      %3815 = vmatpush1.bf16.msra.mxu0 %v3799
      %3816 = vmatprep.subr.bf16.mxu0 0
      %3817 = vmatpush1.bf16.msra.mxu0 %v3798
      %3818 = vmatprep.subr.bf16.mxu0 0
      %3819 = vmatpush1.bf16.msra.mxu0 %v3797
      %3820 = vmatprep.subr.bf16.mxu0 0
      %3821 = vmatpush1.bf16.msra.mxu0 %v3796
      %3822 = vmatprep.subr.bf16.mxu0 0
      %3823 = vmatpush1.bf16.msra.mxu0 %v3795
      %3824 = vmatprep.subr.bf16.mxu0 0
      %3825 = vmatpush1.bf16.msra.mxu0 %v3794
      %3826 = vmatprep.subr.bf16.mxu0 0
      %3827 = vmatpush2.bf16.msra.mxu0 0
      %3828 = vmatprep.subr.bf16.mxu0 0
      %3829 = vmatpush2.bf16.msra.mxu0 0
      %3830 = vmatprep.subr.bf16.mxu0 0
      %3831 = vmatpush2.bf16.msra.mxu0 0
      %3832 = vmatprep.subr.bf16.mxu0 0
      %3833 = vmatpush2.bf16.msra.mxu0 0
      %3834 = vmatprep.subr.bf16.mxu0 0
      %3835 = vmatpush2.bf16.msra.mxu0 0
      %3836 = vmatprep.subr.bf16.mxu0 0
      %3837 = vmatpush2.bf16.msra.mxu0 0
      %3838 = vmatprep.subr.bf16.mxu0 0
      %3839 = vmatpush2.bf16.msra.mxu0 0
      %3840 = vmatprep.subr.bf16.mxu0 0
      %3841 = vmatpush2.bf16.msra.mxu0 0
      %3842 = vmatprep.mubr.bf16.mxu0 0
      %3843 = vmatmul.mubr.bf16.gmra.mxu0 %v3741
      %v3844 = vpop.f32.mrf.mxu0
      %v3845 = vadd.f32 0.0, %v3844
      %v3846 = vpop.f32.mrf.mxu0
      %v3847 = vpop.f32.mrf.mxu0
      %v3848 = vadd.f32 0.0, %v3847
      %v3849 = vpop.f32.mrf.mxu0
      %3850 = vmatprep.mubr.bf16.mxu0 0
      %3851 = vmatmul.mubr.bf16.gmra.mxu0 %v3742
      %v3852 = vpop.f32.mrf.mxu0
      %v3853 = vadd.f32 0.0, %v3852
      %v3854 = vpop.f32.mrf.mxu0
      %v3855 = vpop.f32.mrf.mxu0
      %v3856 = vadd.f32 0.0, %v3855
      %v3857 = vpop.f32.mrf.mxu0
      %3858 = vmatprep.mubr.bf16.mxu0 0
      %3859 = vmatmul.mubr.bf16.gmra.mxu0 %v3743
      %v3860 = vpop.f32.mrf.mxu0
      %v3861 = vadd.f32 0.0, %v3860
      %v3862 = vpop.f32.mrf.mxu0
      %v3863 = vpop.f32.mrf.mxu0
      %v3864 = vadd.f32 0.0, %v3863
      %v3865 = vpop.f32.mrf.mxu0
      %3866 = vmatprep.mubr.bf16.mxu0 0
      %3867 = vmatmul.mubr.bf16.gmra.mxu0 %v3744
      %v3868 = vpop.f32.mrf.mxu0
      %v3869 = vadd.f32 0.0, %v3868
      %v3870 = vpop.f32.mrf.mxu0
      %v3871 = vpop.f32.mrf.mxu0
      %v3872 = vadd.f32 0.0, %v3871
      %v3873 = vpop.f32.mrf.mxu0
      %3874 = vdwg.mxu0
      %v3875 = vadd.f32 %v3725, %v3845
      %v3876 = vadd.f32 %v3726, %v3848
      %v3877 = vadd.f32 %v3727, %v3853
      %v3878 = vadd.f32 %v3728, %v3856
      %v3879 = vadd.f32 %v3729, %v3861
      %v3880 = vadd.f32 %v3730, %v3864
      %v3881 = vadd.f32 %v3731, %v3869
      %v3882 = vadd.f32 %v3732, %v3872
      %v3883 = vld [vmem:[%s3141 + $0x2] sm:$0xff]
      %v3884 = vld [vmem:[%s3141 + $0x12] sm:$0xff]
      %v3885 = vld [vmem:[%s3141 + $0x22] sm:$0xff]
      %v3886 = vld [vmem:[%s3141 + $0x32] sm:$0xff]
      %v3887 = vld [vmem:[%s3141 + $0x42] sm:$0xff]
      %v3888 = vld [vmem:[%s3141 + $0x52] sm:$0xff]
      %v3889 = vld [vmem:[%s3141 + $0x62] sm:$0xff]
      %v3890 = vld [vmem:[%s3141 + $0x72] sm:$0xff]
      %v3891 = vpack.c.bf16 %v3884, %v3883
      %v3892 = vpack.c.bf16 %v3886, %v3885
      %v3893 = vpack.c.bf16 %v3888, %v3887
      %v3894 = vpack.c.bf16 %v3890, %v3889
      %s3895 = scalar_lea.vmem %s3, 320
      %v3896 = vld [vmem:[%s3895] sm:$0xf]
      %v3897 = vld [vmem:[%s3895 + $0x4] sm:$0xf]
      %v3898 = vld [vmem:[%s3895 + $0x8] sm:$0xf]
      %v3899 = vld [vmem:[%s3895 + $0xc] sm:$0xf]
      %v3900 = vld [vmem:[%s3895 + $0x10] sm:$0xf]
      %v3901 = vld [vmem:[%s3895 + $0x14] sm:$0xf]
      %v3902 = vld [vmem:[%s3895 + $0x18] sm:$0xf]
      %v3903 = vld [vmem:[%s3895 + $0x1c] sm:$0xf]
      %v3904 = vld [vmem:[%s3895 + $0x20] sm:$0xf]
      %v3905 = vld [vmem:[%s3895 + $0x24] sm:$0xf]
      %v3906 = vld [vmem:[%s3895 + $0x28] sm:$0xf]
      %v3907 = vld [vmem:[%s3895 + $0x2c] sm:$0xf]
      %v3908 = vld [vmem:[%s3895 + $0x30] sm:$0xf]
      %v3909 = vld [vmem:[%s3895 + $0x34] sm:$0xf]
      %v3910 = vld [vmem:[%s3895 + $0x38] sm:$0xf]
      %v3911 = vld [vmem:[%s3895 + $0x3c] sm:$0xf]
      %v3928 = vunpack.c.l.b16 %v3896
      %v3929 = vunpack.c.l.b16 %v3897
      %v3930 = vunpack.c.l.b16 %v3898
      %v3931 = vunpack.c.l.b16 %v3899
      %v3932 = vunpack.c.l.b16 %v3900
      %v3933 = vunpack.c.l.b16 %v3901
      %v3934 = vunpack.c.l.b16 %v3902
      %v3935 = vunpack.c.l.b16 %v3903
      %v3936 = vunpack.c.l.b16 %v3904
      %v3937 = vunpack.c.l.b16 %v3905
      %v3938 = vunpack.c.l.b16 %v3906
      %v3939 = vunpack.c.l.b16 %v3907
      %v3940 = vunpack.c.l.b16 %v3908
      %v3941 = vunpack.c.l.b16 %v3909
      %v3942 = vunpack.c.l.b16 %v3910
      %v3943 = vunpack.c.l.b16 %v3911
      %v3944 = vpack.c.b16 %v3929, %v3928
      %v3945 = vpack.c.b16 %v3931, %v3930
      %v3946 = vpack.c.b16 %v3933, %v3932
      %v3947 = vpack.c.b16 %v3935, %v3934
      %v3948 = vpack.c.b16 %v3937, %v3936
      %v3949 = vpack.c.b16 %v3939, %v3938
      %v3950 = vpack.c.b16 %v3941, %v3940
      %v3951 = vpack.c.b16 %v3943, %v3942
      %3960 = vmatprep.subr.bf16.mxu0 0
      %3961 = vmatpush1.bf16.msra.mxu0 %v3951
      %3962 = vmatprep.subr.bf16.mxu0 0
      %3963 = vmatpush1.bf16.msra.mxu0 %v3950
      %3964 = vmatprep.subr.bf16.mxu0 0
      %3965 = vmatpush1.bf16.msra.mxu0 %v3949
      %3966 = vmatprep.subr.bf16.mxu0 0
      %3967 = vmatpush1.bf16.msra.mxu0 %v3948
      %3968 = vmatprep.subr.bf16.mxu0 0
      %3969 = vmatpush1.bf16.msra.mxu0 %v3947
      %3970 = vmatprep.subr.bf16.mxu0 0
      %3971 = vmatpush1.bf16.msra.mxu0 %v3946
      %3972 = vmatprep.subr.bf16.mxu0 0
      %3973 = vmatpush1.bf16.msra.mxu0 %v3945
      %3974 = vmatprep.subr.bf16.mxu0 0
      %3975 = vmatpush1.bf16.msra.mxu0 %v3944
      %3976 = vmatprep.subr.bf16.mxu0 0
      %3977 = vmatpush2.bf16.msra.mxu0 0
      %3978 = vmatprep.subr.bf16.mxu0 0
      %3979 = vmatpush2.bf16.msra.mxu0 0
      %3980 = vmatprep.subr.bf16.mxu0 0
      %3981 = vmatpush2.bf16.msra.mxu0 0
      %3982 = vmatprep.subr.bf16.mxu0 0
      %3983 = vmatpush2.bf16.msra.mxu0 0
      %3984 = vmatprep.subr.bf16.mxu0 0
      %3985 = vmatpush2.bf16.msra.mxu0 0
      %3986 = vmatprep.subr.bf16.mxu0 0
      %3987 = vmatpush2.bf16.msra.mxu0 0
      %3988 = vmatprep.subr.bf16.mxu0 0
      %3989 = vmatpush2.bf16.msra.mxu0 0
      %3990 = vmatprep.subr.bf16.mxu0 0
      %3991 = vmatpush2.bf16.msra.mxu0 0
      %3992 = vmatprep.mubr.bf16.mxu0 0
      %3993 = vmatmul.mubr.bf16.gmra.mxu0 %v3891
      %v3994 = vpop.f32.mrf.mxu0
      %v3995 = vadd.f32 0.0, %v3994
      %v3996 = vpop.f32.mrf.mxu0
      %v3997 = vpop.f32.mrf.mxu0
      %v3998 = vadd.f32 0.0, %v3997
      %v3999 = vpop.f32.mrf.mxu0
      %4000 = vmatprep.mubr.bf16.mxu0 0
      %4001 = vmatmul.mubr.bf16.gmra.mxu0 %v3892
      %v4002 = vpop.f32.mrf.mxu0
      %v4003 = vadd.f32 0.0, %v4002
      %v4004 = vpop.f32.mrf.mxu0
      %v4005 = vpop.f32.mrf.mxu0
      %v4006 = vadd.f32 0.0, %v4005
      %v4007 = vpop.f32.mrf.mxu0
      %4008 = vmatprep.mubr.bf16.mxu0 0
      %4009 = vmatmul.mubr.bf16.gmra.mxu0 %v3893
      %v4010 = vpop.f32.mrf.mxu0
      %v4011 = vadd.f32 0.0, %v4010
      %v4012 = vpop.f32.mrf.mxu0
      %v4013 = vpop.f32.mrf.mxu0
      %v4014 = vadd.f32 0.0, %v4013
      %v4015 = vpop.f32.mrf.mxu0
      %4016 = vmatprep.mubr.bf16.mxu0 0
      %4017 = vmatmul.mubr.bf16.gmra.mxu0 %v3894
      %v4018 = vpop.f32.mrf.mxu0
      %v4019 = vadd.f32 0.0, %v4018
      %v4020 = vpop.f32.mrf.mxu0
      %v4021 = vpop.f32.mrf.mxu0
      %v4022 = vadd.f32 0.0, %v4021
      %v4023 = vpop.f32.mrf.mxu0
      %4024 = vdwg.mxu0
      %v4025 = vadd.f32 %v3875, %v3995
      %v4026 = vadd.f32 %v3876, %v3998
      %v4027 = vadd.f32 %v3877, %v4003
      %v4028 = vadd.f32 %v3878, %v4006
      %v4029 = vadd.f32 %v3879, %v4011
      %v4030 = vadd.f32 %v3880, %v4014
      %v4031 = vadd.f32 %v3881, %v4019
      %v4032 = vadd.f32 %v3882, %v4022
      %s4033 = scalar_lea.vmem [#allocation3], 32
      %v4034 = vld [vmem:[%s4033] sm:$0xff]
      %v4035 = vld [vmem:[%s4033 + $0x10] sm:$0xff]
      %v4036 = vld [vmem:[%s4033 + $0x20] sm:$0xff]
      %v4037 = vld [vmem:[%s4033 + $0x30] sm:$0xff]
      %v4038 = vld [vmem:[%s4033 + $0x40] sm:$0xff]
      %v4039 = vld [vmem:[%s4033 + $0x50] sm:$0xff]
      %v4040 = vld [vmem:[%s4033 + $0x60] sm:$0xff]
      %v4041 = vld [vmem:[%s4033 + $0x70] sm:$0xff]
      %v4042 = vpack.c.bf16 %v4035, %v4034
      %v4043 = vpack.c.bf16 %v4037, %v4036
      %v4044 = vpack.c.bf16 %v4039, %v4038
      %v4045 = vpack.c.bf16 %v4041, %v4040
      %s4046 = scalar_lea.vmem %s3, 384
      %v4047 = vld [vmem:[%s4046] sm:$0xf]
      %v4048 = vld [vmem:[%s4046 + $0x4] sm:$0xf]
      %v4049 = vld [vmem:[%s4046 + $0x8] sm:$0xf]
      %v4050 = vld [vmem:[%s4046 + $0xc] sm:$0xf]
      %v4051 = vld [vmem:[%s4046 + $0x10] sm:$0xf]
      %v4052 = vld [vmem:[%s4046 + $0x14] sm:$0xf]
      %v4053 = vld [vmem:[%s4046 + $0x18] sm:$0xf]
      %v4054 = vld [vmem:[%s4046 + $0x1c] sm:$0xf]
      %v4055 = vld [vmem:[%s4046 + $0x20] sm:$0xf]
      %v4056 = vld [vmem:[%s4046 + $0x24] sm:$0xf]
      %v4057 = vld [vmem:[%s4046 + $0x28] sm:$0xf]
      %v4058 = vld [vmem:[%s4046 + $0x2c] sm:$0xf]
      %v4059 = vld [vmem:[%s4046 + $0x30] sm:$0xf]
      %v4060 = vld [vmem:[%s4046 + $0x34] sm:$0xf]
      %v4061 = vld [vmem:[%s4046 + $0x38] sm:$0xf]
      %v4062 = vld [vmem:[%s4046 + $0x3c] sm:$0xf]
      %v4079 = vunpack.c.l.b16 %v4047
      %v4080 = vunpack.c.l.b16 %v4048
      %v4081 = vunpack.c.l.b16 %v4049
      %v4082 = vunpack.c.l.b16 %v4050
      %v4083 = vunpack.c.l.b16 %v4051
      %v4084 = vunpack.c.l.b16 %v4052
      %v4085 = vunpack.c.l.b16 %v4053
      %v4086 = vunpack.c.l.b16 %v4054
      %v4087 = vunpack.c.l.b16 %v4055
      %v4088 = vunpack.c.l.b16 %v4056
      %v4089 = vunpack.c.l.b16 %v4057
      %v4090 = vunpack.c.l.b16 %v4058
      %v4091 = vunpack.c.l.b16 %v4059
      %v4092 = vunpack.c.l.b16 %v4060
      %v4093 = vunpack.c.l.b16 %v4061
      %v4094 = vunpack.c.l.b16 %v4062
      %v4095 = vpack.c.b16 %v4080, %v4079
      %v4096 = vpack.c.b16 %v4082, %v4081
      %v4097 = vpack.c.b16 %v4084, %v4083
      %v4098 = vpack.c.b16 %v4086, %v4085
      %v4099 = vpack.c.b16 %v4088, %v4087
      %v4100 = vpack.c.b16 %v4090, %v4089
      %v4101 = vpack.c.b16 %v4092, %v4091
      %v4102 = vpack.c.b16 %v4094, %v4093
      %4111 = vmatprep.subr.bf16.mxu0 0
      %4112 = vmatpush1.bf16.msra.mxu0 %v4102
      %4113 = vmatprep.subr.bf16.mxu0 0
      %4114 = vmatpush1.bf16.msra.mxu0 %v4101
      %4115 = vmatprep.subr.bf16.mxu0 0
      %4116 = vmatpush1.bf16.msra.mxu0 %v4100
      %4117 = vmatprep.subr.bf16.mxu0 0
      %4118 = vmatpush1.bf16.msra.mxu0 %v4099
      %4119 = vmatprep.subr.bf16.mxu0 0
      %4120 = vmatpush1.bf16.msra.mxu0 %v4098
      %4121 = vmatprep.subr.bf16.mxu0 0
      %4122 = vmatpush1.bf16.msra.mxu0 %v4097
      %4123 = vmatprep.subr.bf16.mxu0 0
      %4124 = vmatpush1.bf16.msra.mxu0 %v4096
      %4125 = vmatprep.subr.bf16.mxu0 0
      %4126 = vmatpush1.bf16.msra.mxu0 %v4095
      %4127 = vmatprep.subr.bf16.mxu0 0
      %4128 = vmatpush2.bf16.msra.mxu0 0
      %4129 = vmatprep.subr.bf16.mxu0 0
      %4130 = vmatpush2.bf16.msra.mxu0 0
      %4131 = vmatprep.subr.bf16.mxu0 0
      %4132 = vmatpush2.bf16.msra.mxu0 0
      %4133 = vmatprep.subr.bf16.mxu0 0
      %4134 = vmatpush2.bf16.msra.mxu0 0
      %4135 = vmatprep.subr.bf16.mxu0 0
      %4136 = vmatpush2.bf16.msra.mxu0 0
      %4137 = vmatprep.subr.bf16.mxu0 0
      %4138 = vmatpush2.bf16.msra.mxu0 0
      %4139 = vmatprep.subr.bf16.mxu0 0
      %4140 = vmatpush2.bf16.msra.mxu0 0
      %4141 = vmatprep.subr.bf16.mxu0 0
      %4142 = vmatpush2.bf16.msra.mxu0 0
      %4143 = vmatprep.mubr.bf16.mxu0 0
      %4144 = vmatmul.mubr.bf16.gmra.mxu0 %v4042
      %v4145 = vpop.f32.mrf.mxu0
      %v4146 = vadd.f32 0.0, %v4145
      %v4147 = vpop.f32.mrf.mxu0
      %v4148 = vpop.f32.mrf.mxu0
      %v4149 = vadd.f32 0.0, %v4148
      %v4150 = vpop.f32.mrf.mxu0
      %4151 = vmatprep.mubr.bf16.mxu0 0
      %4152 = vmatmul.mubr.bf16.gmra.mxu0 %v4043
      %v4153 = vpop.f32.mrf.mxu0
      %v4154 = vadd.f32 0.0, %v4153
      %v4155 = vpop.f32.mrf.mxu0
      %v4156 = vpop.f32.mrf.mxu0
      %v4157 = vadd.f32 0.0, %v4156
      %v4158 = vpop.f32.mrf.mxu0
      %4159 = vmatprep.mubr.bf16.mxu0 0
      %4160 = vmatmul.mubr.bf16.gmra.mxu0 %v4044
      %v4161 = vpop.f32.mrf.mxu0
      %v4162 = vadd.f32 0.0, %v4161
      %v4163 = vpop.f32.mrf.mxu0
      %v4164 = vpop.f32.mrf.mxu0
      %v4165 = vadd.f32 0.0, %v4164
      %v4166 = vpop.f32.mrf.mxu0
      %4167 = vmatprep.mubr.bf16.mxu0 0
      %4168 = vmatmul.mubr.bf16.gmra.mxu0 %v4045
      %v4169 = vpop.f32.mrf.mxu0
      %v4170 = vadd.f32 0.0, %v4169
      %v4171 = vpop.f32.mrf.mxu0
      %v4172 = vpop.f32.mrf.mxu0
      %v4173 = vadd.f32 0.0, %v4172
      %v4174 = vpop.f32.mrf.mxu0
      %4175 = vdwg.mxu0
      %v4176 = vadd.f32 %v4025, %v4146
      %v4177 = vadd.f32 %v4026, %v4149
      %v4178 = vadd.f32 %v4027, %v4154
      %v4179 = vadd.f32 %v4028, %v4157
      %v4180 = vadd.f32 %v4029, %v4162
      %v4181 = vadd.f32 %v4030, %v4165
      %v4182 = vadd.f32 %v4031, %v4170
      %v4183 = vadd.f32 %v4032, %v4173
      %v4184 = vld [vmem:[%s4033 + $0x1] sm:$0xff]
      %v4185 = vld [vmem:[%s4033 + $0x11] sm:$0xff]
      %v4186 = vld [vmem:[%s4033 + $0x21] sm:$0xff]
      %v4187 = vld [vmem:[%s4033 + $0x31] sm:$0xff]
      %v4188 = vld [vmem:[%s4033 + $0x41] sm:$0xff]
      %v4189 = vld [vmem:[%s4033 + $0x51] sm:$0xff]
      %v4190 = vld [vmem:[%s4033 + $0x61] sm:$0xff]
      %v4191 = vld [vmem:[%s4033 + $0x71] sm:$0xff]
      %v4192 = vpack.c.bf16 %v4185, %v4184
      %v4193 = vpack.c.bf16 %v4187, %v4186
      %v4194 = vpack.c.bf16 %v4189, %v4188
      %v4195 = vpack.c.bf16 %v4191, %v4190
      %s4196 = scalar_lea.vmem %s3, 448
      %v4197 = vld [vmem:[%s4196] sm:$0xf]
      %v4198 = vld [vmem:[%s4196 + $0x4] sm:$0xf]
      %v4199 = vld [vmem:[%s4196 + $0x8] sm:$0xf]
      %v4200 = vld [vmem:[%s4196 + $0xc] sm:$0xf]
      %v4201 = vld [vmem:[%s4196 + $0x10] sm:$0xf]
      %v4202 = vld [vmem:[%s4196 + $0x14] sm:$0xf]
      %v4203 = vld [vmem:[%s4196 + $0x18] sm:$0xf]
      %v4204 = vld [vmem:[%s4196 + $0x1c] sm:$0xf]
      %v4205 = vld [vmem:[%s4196 + $0x20] sm:$0xf]
      %v4206 = vld [vmem:[%s4196 + $0x24] sm:$0xf]
      %v4207 = vld [vmem:[%s4196 + $0x28] sm:$0xf]
      %v4208 = vld [vmem:[%s4196 + $0x2c] sm:$0xf]
      %v4209 = vld [vmem:[%s4196 + $0x30] sm:$0xf]
      %v4210 = vld [vmem:[%s4196 + $0x34] sm:$0xf]
      %v4211 = vld [vmem:[%s4196 + $0x38] sm:$0xf]
      %v4212 = vld [vmem:[%s4196 + $0x3c] sm:$0xf]
      %v4229 = vunpack.c.l.b16 %v4197
      %v4230 = vunpack.c.l.b16 %v4198
      %v4231 = vunpack.c.l.b16 %v4199
      %v4232 = vunpack.c.l.b16 %v4200
      %v4233 = vunpack.c.l.b16 %v4201
      %v4234 = vunpack.c.l.b16 %v4202
      %v4235 = vunpack.c.l.b16 %v4203
      %v4236 = vunpack.c.l.b16 %v4204
      %v4237 = vunpack.c.l.b16 %v4205
      %v4238 = vunpack.c.l.b16 %v4206
      %v4239 = vunpack.c.l.b16 %v4207
      %v4240 = vunpack.c.l.b16 %v4208
      %v4241 = vunpack.c.l.b16 %v4209
      %v4242 = vunpack.c.l.b16 %v4210
      %v4243 = vunpack.c.l.b16 %v4211
      %v4244 = vunpack.c.l.b16 %v4212
      %v4245 = vpack.c.b16 %v4230, %v4229
      %v4246 = vpack.c.b16 %v4232, %v4231
      %v4247 = vpack.c.b16 %v4234, %v4233
      %v4248 = vpack.c.b16 %v4236, %v4235
      %v4249 = vpack.c.b16 %v4238, %v4237
      %v4250 = vpack.c.b16 %v4240, %v4239
      %v4251 = vpack.c.b16 %v4242, %v4241
      %v4252 = vpack.c.b16 %v4244, %v4243
      %4261 = vmatprep.subr.bf16.mxu0 0
      %4262 = vmatpush1.bf16.msra.mxu0 %v4252
      %4263 = vmatprep.subr.bf16.mxu0 0
      %4264 = vmatpush1.bf16.msra.mxu0 %v4251
      %4265 = vmatprep.subr.bf16.mxu0 0
      %4266 = vmatpush1.bf16.msra.mxu0 %v4250
      %4267 = vmatprep.subr.bf16.mxu0 0
      %4268 = vmatpush1.bf16.msra.mxu0 %v4249
      %4269 = vmatprep.subr.bf16.mxu0 0
      %4270 = vmatpush1.bf16.msra.mxu0 %v4248
      %4271 = vmatprep.subr.bf16.mxu0 0
      %4272 = vmatpush1.bf16.msra.mxu0 %v4247
      %4273 = vmatprep.subr.bf16.mxu0 0
      %4274 = vmatpush1.bf16.msra.mxu0 %v4246
      %4275 = vmatprep.subr.bf16.mxu0 0
      %4276 = vmatpush1.bf16.msra.mxu0 %v4245
      %4277 = vmatprep.subr.bf16.mxu0 0
      %4278 = vmatpush2.bf16.msra.mxu0 0
      %4279 = vmatprep.subr.bf16.mxu0 0
      %4280 = vmatpush2.bf16.msra.mxu0 0
      %4281 = vmatprep.subr.bf16.mxu0 0
      %4282 = vmatpush2.bf16.msra.mxu0 0
      %4283 = vmatprep.subr.bf16.mxu0 0
      %4284 = vmatpush2.bf16.msra.mxu0 0
      %4285 = vmatprep.subr.bf16.mxu0 0
      %4286 = vmatpush2.bf16.msra.mxu0 0
      %4287 = vmatprep.subr.bf16.mxu0 0
      %4288 = vmatpush2.bf16.msra.mxu0 0
      %4289 = vmatprep.subr.bf16.mxu0 0
      %4290 = vmatpush2.bf16.msra.mxu0 0
      %4291 = vmatprep.subr.bf16.mxu0 0
      %4292 = vmatpush2.bf16.msra.mxu0 0
      %4293 = vmatprep.mubr.bf16.mxu0 0
      %4294 = vmatmul.mubr.bf16.gmra.mxu0 %v4192
      %v4295 = vpop.f32.mrf.mxu0
      %v4296 = vadd.f32 0.0, %v4295
      %v4297 = vpop.f32.mrf.mxu0
      %v4298 = vpop.f32.mrf.mxu0
      %v4299 = vadd.f32 0.0, %v4298
      %v4300 = vpop.f32.mrf.mxu0
      %4301 = vmatprep.mubr.bf16.mxu0 0
      %4302 = vmatmul.mubr.bf16.gmra.mxu0 %v4193
      %v4303 = vpop.f32.mrf.mxu0
      %v4304 = vadd.f32 0.0, %v4303
      %v4305 = vpop.f32.mrf.mxu0
      %v4306 = vpop.f32.mrf.mxu0
      %v4307 = vadd.f32 0.0, %v4306
      %v4308 = vpop.f32.mrf.mxu0
      %4309 = vmatprep.mubr.bf16.mxu0 0
      %4310 = vmatmul.mubr.bf16.gmra.mxu0 %v4194
      %v4311 = vpop.f32.mrf.mxu0
      %v4312 = vadd.f32 0.0, %v4311
      %v4313 = vpop.f32.mrf.mxu0
      %v4314 = vpop.f32.mrf.mxu0
      %v4315 = vadd.f32 0.0, %v4314
      %v4316 = vpop.f32.mrf.mxu0
      %4317 = vmatprep.mubr.bf16.mxu0 0
      %4318 = vmatmul.mubr.bf16.gmra.mxu0 %v4195
      %v4319 = vpop.f32.mrf.mxu0
      %v4320 = vadd.f32 0.0, %v4319
      %v4321 = vpop.f32.mrf.mxu0
      %v4322 = vpop.f32.mrf.mxu0
      %v4323 = vadd.f32 0.0, %v4322
      %v4324 = vpop.f32.mrf.mxu0
      %4325 = vdwg.mxu0
      %v4326 = vadd.f32 %v4176, %v4296
      %v4327 = vadd.f32 %v4177, %v4299
      %v4328 = vadd.f32 %v4178, %v4304
      %v4329 = vadd.f32 %v4179, %v4307
      %v4330 = vadd.f32 %v4180, %v4312
      %v4331 = vadd.f32 %v4181, %v4315
      %v4332 = vadd.f32 %v4182, %v4320
      %v4333 = vadd.f32 %v4183, %v4323
      %v4334 = vld [vmem:[%s4033 + $0x2] sm:$0xff]
      %v4335 = vld [vmem:[%s4033 + $0x12] sm:$0xff]
      %v4336 = vld [vmem:[%s4033 + $0x22] sm:$0xff]
      %v4337 = vld [vmem:[%s4033 + $0x32] sm:$0xff]
      %v4338 = vld [vmem:[%s4033 + $0x42] sm:$0xff]
      %v4339 = vld [vmem:[%s4033 + $0x52] sm:$0xff]
      %v4340 = vld [vmem:[%s4033 + $0x62] sm:$0xff]
      %v4341 = vld [vmem:[%s4033 + $0x72] sm:$0xff]
      %v4342 = vpack.c.bf16 %v4335, %v4334
      %v4343 = vpack.c.bf16 %v4337, %v4336
      %v4344 = vpack.c.bf16 %v4339, %v4338
      %v4345 = vpack.c.bf16 %v4341, %v4340
      %s4346 = scalar_lea.vmem %s3, 512
      %v4347 = vld [vmem:[%s4346] sm:$0xf]
      %v4348 = vld [vmem:[%s4346 + $0x4] sm:$0xf]
      %v4349 = vld [vmem:[%s4346 + $0x8] sm:$0xf]
      %v4350 = vld [vmem:[%s4346 + $0xc] sm:$0xf]
      %v4351 = vld [vmem:[%s4346 + $0x10] sm:$0xf]
      %v4352 = vld [vmem:[%s4346 + $0x14] sm:$0xf]
      %v4353 = vld [vmem:[%s4346 + $0x18] sm:$0xf]
      %v4354 = vld [vmem:[%s4346 + $0x1c] sm:$0xf]
      %v4355 = vld [vmem:[%s4346 + $0x20] sm:$0xf]
      %v4356 = vld [vmem:[%s4346 + $0x24] sm:$0xf]
      %v4357 = vld [vmem:[%s4346 + $0x28] sm:$0xf]
      %v4358 = vld [vmem:[%s4346 + $0x2c] sm:$0xf]
      %v4359 = vld [vmem:[%s4346 + $0x30] sm:$0xf]
      %v4360 = vld [vmem:[%s4346 + $0x34] sm:$0xf]
      %v4361 = vld [vmem:[%s4346 + $0x38] sm:$0xf]
      %v4362 = vld [vmem:[%s4346 + $0x3c] sm:$0xf]
      %v4379 = vunpack.c.l.b16 %v4347
      %v4380 = vunpack.c.l.b16 %v4348
      %v4381 = vunpack.c.l.b16 %v4349
      %v4382 = vunpack.c.l.b16 %v4350
      %v4383 = vunpack.c.l.b16 %v4351
      %v4384 = vunpack.c.l.b16 %v4352
      %v4385 = vunpack.c.l.b16 %v4353
      %v4386 = vunpack.c.l.b16 %v4354
      %v4387 = vunpack.c.l.b16 %v4355
      %v4388 = vunpack.c.l.b16 %v4356
      %v4389 = vunpack.c.l.b16 %v4357
      %v4390 = vunpack.c.l.b16 %v4358
      %v4391 = vunpack.c.l.b16 %v4359
      %v4392 = vunpack.c.l.b16 %v4360
      %v4393 = vunpack.c.l.b16 %v4361
      %v4394 = vunpack.c.l.b16 %v4362
      %v4395 = vpack.c.b16 %v4380, %v4379
      %v4396 = vpack.c.b16 %v4382, %v4381
      %v4397 = vpack.c.b16 %v4384, %v4383
      %v4398 = vpack.c.b16 %v4386, %v4385
      %v4399 = vpack.c.b16 %v4388, %v4387
      %v4400 = vpack.c.b16 %v4390, %v4389
      %v4401 = vpack.c.b16 %v4392, %v4391
      %v4402 = vpack.c.b16 %v4394, %v4393
      %4411 = vmatprep.subr.bf16.mxu0 0
      %4412 = vmatpush1.bf16.msra.mxu0 %v4402
      %4413 = vmatprep.subr.bf16.mxu0 0
      %4414 = vmatpush1.bf16.msra.mxu0 %v4401
      %4415 = vmatprep.subr.bf16.mxu0 0
      %4416 = vmatpush1.bf16.msra.mxu0 %v4400
      %4417 = vmatprep.subr.bf16.mxu0 0
      %4418 = vmatpush1.bf16.msra.mxu0 %v4399
      %4419 = vmatprep.subr.bf16.mxu0 0
      %4420 = vmatpush1.bf16.msra.mxu0 %v4398
      %4421 = vmatprep.subr.bf16.mxu0 0
      %4422 = vmatpush1.bf16.msra.mxu0 %v4397
      %4423 = vmatprep.subr.bf16.mxu0 0
      %4424 = vmatpush1.bf16.msra.mxu0 %v4396
      %4425 = vmatprep.subr.bf16.mxu0 0
      %4426 = vmatpush1.bf16.msra.mxu0 %v4395
      %4427 = vmatprep.subr.bf16.mxu0 0
      %4428 = vmatpush2.bf16.msra.mxu0 0
      %4429 = vmatprep.subr.bf16.mxu0 0
      %4430 = vmatpush2.bf16.msra.mxu0 0
      %4431 = vmatprep.subr.bf16.mxu0 0
      %4432 = vmatpush2.bf16.msra.mxu0 0
      %4433 = vmatprep.subr.bf16.mxu0 0
      %4434 = vmatpush2.bf16.msra.mxu0 0
      %4435 = vmatprep.subr.bf16.mxu0 0
      %4436 = vmatpush2.bf16.msra.mxu0 0
      %4437 = vmatprep.subr.bf16.mxu0 0
      %4438 = vmatpush2.bf16.msra.mxu0 0
      %4439 = vmatprep.subr.bf16.mxu0 0
      %4440 = vmatpush2.bf16.msra.mxu0 0
      %4441 = vmatprep.subr.bf16.mxu0 0
      %4442 = vmatpush2.bf16.msra.mxu0 0
      %4443 = vmatprep.mubr.bf16.mxu0 0
      %4444 = vmatmul.mubr.bf16.gmra.mxu0 %v4342
      %v4445 = vpop.f32.mrf.mxu0
      %v4446 = vadd.f32 0.0, %v4445
      %v4447 = vpop.f32.mrf.mxu0
      %v4448 = vpop.f32.mrf.mxu0
      %v4449 = vadd.f32 0.0, %v4448
      %v4450 = vpop.f32.mrf.mxu0
      %4451 = vmatprep.mubr.bf16.mxu0 0
      %4452 = vmatmul.mubr.bf16.gmra.mxu0 %v4343
      %v4453 = vpop.f32.mrf.mxu0
      %v4454 = vadd.f32 0.0, %v4453
      %v4455 = vpop.f32.mrf.mxu0
      %v4456 = vpop.f32.mrf.mxu0
      %v4457 = vadd.f32 0.0, %v4456
      %v4458 = vpop.f32.mrf.mxu0
      %4459 = vmatprep.mubr.bf16.mxu0 0
      %4460 = vmatmul.mubr.bf16.gmra.mxu0 %v4344
      %v4461 = vpop.f32.mrf.mxu0
      %v4462 = vadd.f32 0.0, %v4461
      %v4463 = vpop.f32.mrf.mxu0
      %v4464 = vpop.f32.mrf.mxu0
      %v4465 = vadd.f32 0.0, %v4464
      %v4466 = vpop.f32.mrf.mxu0
      %4467 = vmatprep.mubr.bf16.mxu0 0
      %4468 = vmatmul.mubr.bf16.gmra.mxu0 %v4345
      %v4469 = vpop.f32.mrf.mxu0
      %v4470 = vadd.f32 0.0, %v4469
      %v4471 = vpop.f32.mrf.mxu0
      %v4472 = vpop.f32.mrf.mxu0
      %v4473 = vadd.f32 0.0, %v4472
      %v4474 = vpop.f32.mrf.mxu0
      %4475 = vdwg.mxu0
      %v4476 = vadd.f32 %v4326, %v4446
      %v4477 = vadd.f32 %v4327, %v4449
      %v4478 = vadd.f32 %v4328, %v4454
      %v4479 = vadd.f32 %v4329, %v4457
      %v4480 = vadd.f32 %v4330, %v4462
      %v4481 = vadd.f32 %v4331, %v4465
      %v4482 = vadd.f32 %v4332, %v4470
      %v4483 = vadd.f32 %v4333, %v4473
      %v4484 = vld [vmem:[%s4] sm:$0x1]
      %v4486 = vlaneseq
      %v4487 = vshrl.u32 %v4486, 7
      %v4488 = vsub.s32 0, %v4487
      %v4489 = vrot.slane %v4484, %v4488
      %v4491 = vadd.f32 %v4476, %v4489
      %v4492 = vadd.f32 %v4477, %v4489
      %v4493 = vadd.f32 %v4478, %v4489
      %v4494 = vadd.f32 %v4479, %v4489
      %v4495 = vadd.f32 %v4480, %v4489
      %v4496 = vadd.f32 %v4481, %v4489
      %v4497 = vadd.f32 %v4482, %v4489
      %v4498 = vadd.f32 %v4483, %v4489
      %vm4499 = vcmp.ge.f32.partialorder %v4491, 0.0
      %vm4500 = vcmp.ge.f32.partialorder %v4492, 0.0
      %vm4501 = vcmp.ge.f32.partialorder %v4493, 0.0
      %vm4502 = vcmp.ge.f32.partialorder %v4494, 0.0
      %vm4503 = vcmp.ge.f32.partialorder %v4495, 0.0
      %vm4504 = vcmp.ge.f32.partialorder %v4496, 0.0
      %vm4505 = vcmp.ge.f32.partialorder %v4497, 0.0
      %vm4506 = vcmp.ge.f32.partialorder %v4498, 0.0
      %v4507 = vmul.f32 %v4491, 0.1
      %v4508 = vmul.f32 %v4492, 0.1
      %v4509 = vmul.f32 %v4493, 0.1
      %v4510 = vmul.f32 %v4494, 0.1
      %v4511 = vmul.f32 %v4495, 0.1
      %v4512 = vmul.f32 %v4496, 0.1
      %v4513 = vmul.f32 %v4497, 0.1
      %v4514 = vmul.f32 %v4498, 0.1
      %v4515 = vsel %vm4499, %v4491, %v4507
      %v4516 = vsel %vm4500, %v4492, %v4508
      %v4517 = vsel %vm4501, %v4493, %v4509
      %v4518 = vsel %vm4502, %v4494, %v4510
      %v4519 = vsel %vm4503, %v4495, %v4511
      %v4520 = vsel %vm4504, %v4496, %v4512
      %v4521 = vsel %vm4505, %v4497, %v4513
      %v4522 = vsel %vm4506, %v4498, %v4514
      %4523 = vst [vmem:[%s3141 + $0x1] sm:$0xff] %v4515
      %4524 = vst [vmem:[%s3141 + $0x11] sm:$0xff] %v4516
      %4525 = vst [vmem:[%s3141 + $0x21] sm:$0xff] %v4517
      %4526 = vst [vmem:[%s3141 + $0x31] sm:$0xff] %v4518
      %4527 = vst [vmem:[%s3141 + $0x41] sm:$0xff] %v4519
      %4528 = vst [vmem:[%s3141 + $0x51] sm:$0xff] %v4520
      %4529 = vst [vmem:[%s3141 + $0x61] sm:$0xff] %v4521
      %4530 = vst [vmem:[%s3141 + $0x71] sm:$0xff] %v4522
      %v4531 = vld [vmem:[#allocation3] sm:$0xff]
      %v4532 = vld [vmem:[#allocation3 + $0x10] sm:$0xff]
      %v4533 = vld [vmem:[#allocation3 + $0x20] sm:$0xff]
      %v4534 = vld [vmem:[#allocation3 + $0x30] sm:$0xff]
      %v4535 = vld [vmem:[#allocation3 + $0x40] sm:$0xff]
      %v4536 = vld [vmem:[#allocation3 + $0x50] sm:$0xff]
      %v4537 = vld [vmem:[#allocation3 + $0x60] sm:$0xff]
      %v4538 = vld [vmem:[#allocation3 + $0x70] sm:$0xff]
      %v4539 = vpack.c.bf16 %v4532, %v4531
      %v4540 = vpack.c.bf16 %v4534, %v4533
      %v4541 = vpack.c.bf16 %v4536, %v4535
      %v4542 = vpack.c.bf16 %v4538, %v4537
      %v4543 = vld [vmem:[%s5] sm:$0xf]
      %v4544 = vld [vmem:[%s5 + $0x4] sm:$0xf]
      %v4545 = vld [vmem:[%s5 + $0x8] sm:$0xf]
      %v4546 = vld [vmem:[%s5 + $0xc] sm:$0xf]
      %v4547 = vld [vmem:[%s5 + $0x10] sm:$0xf]
      %v4548 = vld [vmem:[%s5 + $0x14] sm:$0xf]
      %v4549 = vld [vmem:[%s5 + $0x18] sm:$0xf]
      %v4550 = vld [vmem:[%s5 + $0x1c] sm:$0xf]
      %v4551 = vld [vmem:[%s5 + $0x20] sm:$0xf]
      %v4552 = vld [vmem:[%s5 + $0x24] sm:$0xf]
      %v4553 = vld [vmem:[%s5 + $0x28] sm:$0xf]
      %v4554 = vld [vmem:[%s5 + $0x2c] sm:$0xf]
      %v4555 = vld [vmem:[%s5 + $0x30] sm:$0xf]
      %v4556 = vld [vmem:[%s5 + $0x34] sm:$0xf]
      %v4557 = vld [vmem:[%s5 + $0x38] sm:$0xf]
      %v4558 = vld [vmem:[%s5 + $0x3c] sm:$0xf]
      %v4559 = vld [vmem:[#allocation3 + $0x1] sm:$0xff]
      %v4560 = vld [vmem:[#allocation3 + $0x11] sm:$0xff]
      %v4561 = vld [vmem:[#allocation3 + $0x21] sm:$0xff]
      %v4562 = vld [vmem:[#allocation3 + $0x31] sm:$0xff]
      %v4563 = vld [vmem:[#allocation3 + $0x41] sm:$0xff]
      %v4564 = vld [vmem:[#allocation3 + $0x51] sm:$0xff]
      %v4565 = vld [vmem:[#allocation3 + $0x61] sm:$0xff]
      %v4566 = vld [vmem:[#allocation3 + $0x71] sm:$0xff]
      %v4567 = vpack.c.bf16 %v4560, %v4559
      %v4568 = vpack.c.bf16 %v4562, %v4561
      %v4569 = vpack.c.bf16 %v4564, %v4563
      %v4570 = vpack.c.bf16 %v4566, %v4565
      %s4571 = scalar_lea.vmem %s5, 64
      %v4572 = vld [vmem:[%s4571] sm:$0xf]
      %v4573 = vld [vmem:[%s4571 + $0x4] sm:$0xf]
      %v4574 = vld [vmem:[%s4571 + $0x8] sm:$0xf]
      %v4575 = vld [vmem:[%s4571 + $0xc] sm:$0xf]
      %v4576 = vld [vmem:[%s4571 + $0x10] sm:$0xf]
      %v4577 = vld [vmem:[%s4571 + $0x14] sm:$0xf]
      %v4578 = vld [vmem:[%s4571 + $0x18] sm:$0xf]
      %v4579 = vld [vmem:[%s4571 + $0x1c] sm:$0xf]
      %v4580 = vld [vmem:[%s4571 + $0x20] sm:$0xf]
      %v4581 = vld [vmem:[%s4571 + $0x24] sm:$0xf]
      %v4582 = vld [vmem:[%s4571 + $0x28] sm:$0xf]
      %v4583 = vld [vmem:[%s4571 + $0x2c] sm:$0xf]
      %v4584 = vld [vmem:[%s4571 + $0x30] sm:$0xf]
      %v4585 = vld [vmem:[%s4571 + $0x34] sm:$0xf]
      %v4586 = vld [vmem:[%s4571 + $0x38] sm:$0xf]
      %v4587 = vld [vmem:[%s4571 + $0x3c] sm:$0xf]
      %v4604 = vunpack.c.l.b16 %v4572
      %v4605 = vunpack.c.l.b16 %v4573
      %v4606 = vunpack.c.l.b16 %v4574
      %v4607 = vunpack.c.l.b16 %v4575
      %v4608 = vunpack.c.l.b16 %v4576
      %v4609 = vunpack.c.l.b16 %v4577
      %v4610 = vunpack.c.l.b16 %v4578
      %v4611 = vunpack.c.l.b16 %v4579
      %v4612 = vunpack.c.l.b16 %v4580
      %v4613 = vunpack.c.l.b16 %v4581
      %v4614 = vunpack.c.l.b16 %v4582
      %v4615 = vunpack.c.l.b16 %v4583
      %v4616 = vunpack.c.l.b16 %v4584
      %v4617 = vunpack.c.l.b16 %v4585
      %v4618 = vunpack.c.l.b16 %v4586
      %v4619 = vunpack.c.l.b16 %v4587
      %v4620 = vpack.c.b16 %v4605, %v4604
      %v4621 = vpack.c.b16 %v4607, %v4606
      %v4622 = vpack.c.b16 %v4609, %v4608
      %v4623 = vpack.c.b16 %v4611, %v4610
      %v4624 = vpack.c.b16 %v4613, %v4612
      %v4625 = vpack.c.b16 %v4615, %v4614
      %v4626 = vpack.c.b16 %v4617, %v4616
      %v4627 = vpack.c.b16 %v4619, %v4618
      %4636 = vmatprep.subr.bf16.mxu0 0
      %4637 = vmatpush1.bf16.msra.mxu0 %v4627
      %4638 = vmatprep.subr.bf16.mxu0 0
      %4639 = vmatpush1.bf16.msra.mxu0 %v4626
      %4640 = vmatprep.subr.bf16.mxu0 0
      %4641 = vmatpush1.bf16.msra.mxu0 %v4625
      %4642 = vmatprep.subr.bf16.mxu0 0
      %4643 = vmatpush1.bf16.msra.mxu0 %v4624
      %4644 = vmatprep.subr.bf16.mxu0 0
      %4645 = vmatpush1.bf16.msra.mxu0 %v4623
      %4646 = vmatprep.subr.bf16.mxu0 0
      %4647 = vmatpush1.bf16.msra.mxu0 %v4622
      %4648 = vmatprep.subr.bf16.mxu0 0
      %4649 = vmatpush1.bf16.msra.mxu0 %v4621
      %4650 = vmatprep.subr.bf16.mxu0 0
      %4651 = vmatpush1.bf16.msra.mxu0 %v4620
      %4652 = vmatprep.subr.bf16.mxu0 0
      %4653 = vmatpush2.bf16.msra.mxu0 0
      %4654 = vmatprep.subr.bf16.mxu0 0
      %4655 = vmatpush2.bf16.msra.mxu0 0
      %4656 = vmatprep.subr.bf16.mxu0 0
      %4657 = vmatpush2.bf16.msra.mxu0 0
      %4658 = vmatprep.subr.bf16.mxu0 0
      %4659 = vmatpush2.bf16.msra.mxu0 0
      %4660 = vmatprep.subr.bf16.mxu0 0
      %4661 = vmatpush2.bf16.msra.mxu0 0
      %4662 = vmatprep.subr.bf16.mxu0 0
      %4663 = vmatpush2.bf16.msra.mxu0 0
      %4664 = vmatprep.subr.bf16.mxu0 0
      %4665 = vmatpush2.bf16.msra.mxu0 0
      %4666 = vmatprep.subr.bf16.mxu0 0
      %4667 = vmatpush2.bf16.msra.mxu0 0
      %4668 = vmatprep.mubr.bf16.mxu0 0
      %4669 = vmatmul.mubr.bf16.gmra.mxu0 %v4567
      %v4670 = vpop.f32.mrf.mxu0
      %v4671 = vadd.f32 0.0, %v4670
      %v4672 = vpop.f32.mrf.mxu0
      %v4673 = vpop.f32.mrf.mxu0
      %v4674 = vadd.f32 0.0, %v4673
      %v4675 = vpop.f32.mrf.mxu0
      %4676 = vmatprep.mubr.bf16.mxu0 0
      %4677 = vmatmul.mubr.bf16.gmra.mxu0 %v4568
      %v4678 = vpop.f32.mrf.mxu0
      %v4679 = vadd.f32 0.0, %v4678
      %v4680 = vpop.f32.mrf.mxu0
      %v4681 = vpop.f32.mrf.mxu0
      %v4682 = vadd.f32 0.0, %v4681
      %v4683 = vpop.f32.mrf.mxu0
      %4684 = vmatprep.mubr.bf16.mxu0 0
      %4685 = vmatmul.mubr.bf16.gmra.mxu0 %v4569
      %v4686 = vpop.f32.mrf.mxu0
      %v4687 = vadd.f32 0.0, %v4686
      %v4688 = vpop.f32.mrf.mxu0
      %v4689 = vpop.f32.mrf.mxu0
      %v4690 = vadd.f32 0.0, %v4689
      %v4691 = vpop.f32.mrf.mxu0
      %4692 = vmatprep.mubr.bf16.mxu0 0
      %4693 = vmatmul.mubr.bf16.gmra.mxu0 %v4570
      %v4694 = vpop.f32.mrf.mxu0
      %v4695 = vadd.f32 0.0, %v4694
      %v4696 = vpop.f32.mrf.mxu0
      %v4697 = vpop.f32.mrf.mxu0
      %v4698 = vadd.f32 0.0, %v4697
      %v4699 = vpop.f32.mrf.mxu0
      %4700 = vdwg.mxu0
      %v4717 = vunpack.c.l.b16 %v4543
      %v4718 = vunpack.c.l.b16 %v4544
      %v4719 = vunpack.c.l.b16 %v4545
      %v4720 = vunpack.c.l.b16 %v4546
      %v4721 = vunpack.c.l.b16 %v4547
      %v4722 = vunpack.c.l.b16 %v4548
      %v4723 = vunpack.c.l.b16 %v4549
      %v4724 = vunpack.c.l.b16 %v4550
      %v4725 = vunpack.c.l.b16 %v4551
      %v4726 = vunpack.c.l.b16 %v4552
      %v4727 = vunpack.c.l.b16 %v4553
      %v4728 = vunpack.c.l.b16 %v4554
      %v4729 = vunpack.c.l.b16 %v4555
      %v4730 = vunpack.c.l.b16 %v4556
      %v4731 = vunpack.c.l.b16 %v4557
      %v4732 = vunpack.c.l.b16 %v4558
      %v4733 = vpack.c.b16 %v4718, %v4717
      %v4734 = vpack.c.b16 %v4720, %v4719
      %v4735 = vpack.c.b16 %v4722, %v4721
      %v4736 = vpack.c.b16 %v4724, %v4723
      %v4737 = vpack.c.b16 %v4726, %v4725
      %v4738 = vpack.c.b16 %v4728, %v4727
      %v4739 = vpack.c.b16 %v4730, %v4729
      %v4740 = vpack.c.b16 %v4732, %v4731
      %4749 = vmatprep.subr.bf16.mxu0 0
      %4750 = vmatpush1.bf16.msra.mxu0 %v4740
      %4751 = vmatprep.subr.bf16.mxu0 0
      %4752 = vmatpush1.bf16.msra.mxu0 %v4739
      %4753 = vmatprep.subr.bf16.mxu0 0
      %4754 = vmatpush1.bf16.msra.mxu0 %v4738
      %4755 = vmatprep.subr.bf16.mxu0 0
      %4756 = vmatpush1.bf16.msra.mxu0 %v4737
      %4757 = vmatprep.subr.bf16.mxu0 0
      %4758 = vmatpush1.bf16.msra.mxu0 %v4736
      %4759 = vmatprep.subr.bf16.mxu0 0
      %4760 = vmatpush1.bf16.msra.mxu0 %v4735
      %4761 = vmatprep.subr.bf16.mxu0 0
      %4762 = vmatpush1.bf16.msra.mxu0 %v4734
      %4763 = vmatprep.subr.bf16.mxu0 0
      %4764 = vmatpush1.bf16.msra.mxu0 %v4733
      %4765 = vmatprep.subr.bf16.mxu0 0
      %4766 = vmatpush2.bf16.msra.mxu0 0
      %4767 = vmatprep.subr.bf16.mxu0 0
      %4768 = vmatpush2.bf16.msra.mxu0 0
      %4769 = vmatprep.subr.bf16.mxu0 0
      %4770 = vmatpush2.bf16.msra.mxu0 0
      %4771 = vmatprep.subr.bf16.mxu0 0
      %4772 = vmatpush2.bf16.msra.mxu0 0
      %4773 = vmatprep.subr.bf16.mxu0 0
      %4774 = vmatpush2.bf16.msra.mxu0 0
      %4775 = vmatprep.subr.bf16.mxu0 0
      %4776 = vmatpush2.bf16.msra.mxu0 0
      %4777 = vmatprep.subr.bf16.mxu0 0
      %4778 = vmatpush2.bf16.msra.mxu0 0
      %4779 = vmatprep.subr.bf16.mxu0 0
      %4780 = vmatpush2.bf16.msra.mxu0 0
      %4781 = vmatprep.mubr.bf16.mxu0 0
      %4782 = vmatmul.mubr.bf16.gmra.mxu0 %v4539
      %v4783 = vpop.f32.mrf.mxu0
      %v4784 = vadd.f32 %v4671, %v4783
      %v4785 = vpop.f32.mrf.mxu0
      %v4786 = vpop.f32.mrf.mxu0
      %v4787 = vadd.f32 %v4674, %v4786
      %v4788 = vpop.f32.mrf.mxu0
      %4789 = vmatprep.mubr.bf16.mxu0 0
      %4790 = vmatmul.mubr.bf16.gmra.mxu0 %v4540
      %v4791 = vpop.f32.mrf.mxu0
      %v4792 = vadd.f32 %v4679, %v4791
      %v4793 = vpop.f32.mrf.mxu0
      %v4794 = vpop.f32.mrf.mxu0
      %v4795 = vadd.f32 %v4682, %v4794
      %v4796 = vpop.f32.mrf.mxu0
      %4797 = vmatprep.mubr.bf16.mxu0 0
      %4798 = vmatmul.mubr.bf16.gmra.mxu0 %v4541
      %v4799 = vpop.f32.mrf.mxu0
      %v4800 = vadd.f32 %v4687, %v4799
      %v4801 = vpop.f32.mrf.mxu0
      %v4802 = vpop.f32.mrf.mxu0
      %v4803 = vadd.f32 %v4690, %v4802
      %v4804 = vpop.f32.mrf.mxu0
      %4805 = vmatprep.mubr.bf16.mxu0 0
      %4806 = vmatmul.mubr.bf16.gmra.mxu0 %v4542
      %v4807 = vpop.f32.mrf.mxu0
      %v4808 = vadd.f32 %v4695, %v4807
      %v4809 = vpop.f32.mrf.mxu0
      %v4810 = vpop.f32.mrf.mxu0
      %v4811 = vadd.f32 %v4698, %v4810
      %v4812 = vpop.f32.mrf.mxu0
      %4813 = vdwg.mxu0
      %v4814 = vld [vmem:[%s3141] sm:$0xff]
      %v4815 = vld [vmem:[%s3141 + $0x10] sm:$0xff]
      %v4816 = vld [vmem:[%s3141 + $0x20] sm:$0xff]
      %v4817 = vld [vmem:[%s3141 + $0x30] sm:$0xff]
      %v4818 = vld [vmem:[%s3141 + $0x40] sm:$0xff]
      %v4819 = vld [vmem:[%s3141 + $0x50] sm:$0xff]
      %v4820 = vld [vmem:[%s3141 + $0x60] sm:$0xff]
      %v4821 = vld [vmem:[%s3141 + $0x70] sm:$0xff]
      %v4822 = vpack.c.bf16 %v4815, %v4814
      %v4823 = vpack.c.bf16 %v4817, %v4816
      %v4824 = vpack.c.bf16 %v4819, %v4818
      %v4825 = vpack.c.bf16 %v4821, %v4820
      %s4826 = scalar_lea.vmem %s5, 128
      %v4827 = vld [vmem:[%s4826] sm:$0xf]
      %v4828 = vld [vmem:[%s4826 + $0x4] sm:$0xf]
      %v4829 = vld [vmem:[%s4826 + $0x8] sm:$0xf]
      %v4830 = vld [vmem:[%s4826 + $0xc] sm:$0xf]
      %v4831 = vld [vmem:[%s4826 + $0x10] sm:$0xf]
      %v4832 = vld [vmem:[%s4826 + $0x14] sm:$0xf]
      %v4833 = vld [vmem:[%s4826 + $0x18] sm:$0xf]
      %v4834 = vld [vmem:[%s4826 + $0x1c] sm:$0xf]
      %v4835 = vld [vmem:[%s4826 + $0x20] sm:$0xf]
      %v4836 = vld [vmem:[%s4826 + $0x24] sm:$0xf]
      %v4837 = vld [vmem:[%s4826 + $0x28] sm:$0xf]
      %v4838 = vld [vmem:[%s4826 + $0x2c] sm:$0xf]
      %v4839 = vld [vmem:[%s4826 + $0x30] sm:$0xf]
      %v4840 = vld [vmem:[%s4826 + $0x34] sm:$0xf]
      %v4841 = vld [vmem:[%s4826 + $0x38] sm:$0xf]
      %v4842 = vld [vmem:[%s4826 + $0x3c] sm:$0xf]
      %v4859 = vunpack.c.l.b16 %v4827
      %v4860 = vunpack.c.l.b16 %v4828
      %v4861 = vunpack.c.l.b16 %v4829
      %v4862 = vunpack.c.l.b16 %v4830
      %v4863 = vunpack.c.l.b16 %v4831
      %v4864 = vunpack.c.l.b16 %v4832
      %v4865 = vunpack.c.l.b16 %v4833
      %v4866 = vunpack.c.l.b16 %v4834
      %v4867 = vunpack.c.l.b16 %v4835
      %v4868 = vunpack.c.l.b16 %v4836
      %v4869 = vunpack.c.l.b16 %v4837
      %v4870 = vunpack.c.l.b16 %v4838
      %v4871 = vunpack.c.l.b16 %v4839
      %v4872 = vunpack.c.l.b16 %v4840
      %v4873 = vunpack.c.l.b16 %v4841
      %v4874 = vunpack.c.l.b16 %v4842
      %v4875 = vpack.c.b16 %v4860, %v4859
      %v4876 = vpack.c.b16 %v4862, %v4861
      %v4877 = vpack.c.b16 %v4864, %v4863
      %v4878 = vpack.c.b16 %v4866, %v4865
      %v4879 = vpack.c.b16 %v4868, %v4867
      %v4880 = vpack.c.b16 %v4870, %v4869
      %v4881 = vpack.c.b16 %v4872, %v4871
      %v4882 = vpack.c.b16 %v4874, %v4873
      %4891 = vmatprep.subr.bf16.mxu0 0
      %4892 = vmatpush1.bf16.msra.mxu0 %v4882
      %4893 = vmatprep.subr.bf16.mxu0 0
      %4894 = vmatpush1.bf16.msra.mxu0 %v4881
      %4895 = vmatprep.subr.bf16.mxu0 0
      %4896 = vmatpush1.bf16.msra.mxu0 %v4880
      %4897 = vmatprep.subr.bf16.mxu0 0
      %4898 = vmatpush1.bf16.msra.mxu0 %v4879
      %4899 = vmatprep.subr.bf16.mxu0 0
      %4900 = vmatpush1.bf16.msra.mxu0 %v4878
      %4901 = vmatprep.subr.bf16.mxu0 0
      %4902 = vmatpush1.bf16.msra.mxu0 %v4877
      %4903 = vmatprep.subr.bf16.mxu0 0
      %4904 = vmatpush1.bf16.msra.mxu0 %v4876
      %4905 = vmatprep.subr.bf16.mxu0 0
      %4906 = vmatpush1.bf16.msra.mxu0 %v4875
      %4907 = vmatprep.subr.bf16.mxu0 0
      %4908 = vmatpush2.bf16.msra.mxu0 0
      %4909 = vmatprep.subr.bf16.mxu0 0
      %4910 = vmatpush2.bf16.msra.mxu0 0
      %4911 = vmatprep.subr.bf16.mxu0 0
      %4912 = vmatpush2.bf16.msra.mxu0 0
      %4913 = vmatprep.subr.bf16.mxu0 0
      %4914 = vmatpush2.bf16.msra.mxu0 0
      %4915 = vmatprep.subr.bf16.mxu0 0
      %4916 = vmatpush2.bf16.msra.mxu0 0
      %4917 = vmatprep.subr.bf16.mxu0 0
      %4918 = vmatpush2.bf16.msra.mxu0 0
      %4919 = vmatprep.subr.bf16.mxu0 0
      %4920 = vmatpush2.bf16.msra.mxu0 0
      %4921 = vmatprep.subr.bf16.mxu0 0
      %4922 = vmatpush2.bf16.msra.mxu0 0
      %4923 = vmatprep.mubr.bf16.mxu0 0
      %4924 = vmatmul.mubr.bf16.gmra.mxu0 %v4822
      %v4925 = vpop.f32.mrf.mxu0
      %v4926 = vadd.f32 0.0, %v4925
      %v4927 = vpop.f32.mrf.mxu0
      %v4928 = vpop.f32.mrf.mxu0
      %v4929 = vadd.f32 0.0, %v4928
      %v4930 = vpop.f32.mrf.mxu0
      %4931 = vmatprep.mubr.bf16.mxu0 0
      %4932 = vmatmul.mubr.bf16.gmra.mxu0 %v4823
      %v4933 = vpop.f32.mrf.mxu0
      %v4934 = vadd.f32 0.0, %v4933
      %v4935 = vpop.f32.mrf.mxu0
      %v4936 = vpop.f32.mrf.mxu0
      %v4937 = vadd.f32 0.0, %v4936
      %v4938 = vpop.f32.mrf.mxu0
      %4939 = vmatprep.mubr.bf16.mxu0 0
      %4940 = vmatmul.mubr.bf16.gmra.mxu0 %v4824
      %v4941 = vpop.f32.mrf.mxu0
      %v4942 = vadd.f32 0.0, %v4941
      %v4943 = vpop.f32.mrf.mxu0
      %v4944 = vpop.f32.mrf.mxu0
      %v4945 = vadd.f32 0.0, %v4944
      %v4946 = vpop.f32.mrf.mxu0
      %4947 = vmatprep.mubr.bf16.mxu0 0
      %4948 = vmatmul.mubr.bf16.gmra.mxu0 %v4825
      %v4949 = vpop.f32.mrf.mxu0
      %v4950 = vadd.f32 0.0, %v4949
      %v4951 = vpop.f32.mrf.mxu0
      %v4952 = vpop.f32.mrf.mxu0
      %v4953 = vadd.f32 0.0, %v4952
      %v4954 = vpop.f32.mrf.mxu0
      %4955 = vdwg.mxu0
      %v4956 = vadd.f32 %v4784, %v4926
      %v4957 = vadd.f32 %v4787, %v4929
      %v4958 = vadd.f32 %v4792, %v4934
      %v4959 = vadd.f32 %v4795, %v4937
      %v4960 = vadd.f32 %v4800, %v4942
      %v4961 = vadd.f32 %v4803, %v4945
      %v4962 = vadd.f32 %v4808, %v4950
      %v4963 = vadd.f32 %v4811, %v4953
      %v4964 = vld [vmem:[%s3141 + $0x1] sm:$0xff]
      %v4965 = vld [vmem:[%s3141 + $0x11] sm:$0xff]
      %v4966 = vld [vmem:[%s3141 + $0x21] sm:$0xff]
      %v4967 = vld [vmem:[%s3141 + $0x31] sm:$0xff]
      %v4968 = vld [vmem:[%s3141 + $0x41] sm:$0xff]
      %v4969 = vld [vmem:[%s3141 + $0x51] sm:$0xff]
      %v4970 = vld [vmem:[%s3141 + $0x61] sm:$0xff]
      %v4971 = vld [vmem:[%s3141 + $0x71] sm:$0xff]
      %v4972 = vpack.c.bf16 %v4965, %v4964
      %v4973 = vpack.c.bf16 %v4967, %v4966
      %v4974 = vpack.c.bf16 %v4969, %v4968
      %v4975 = vpack.c.bf16 %v4971, %v4970
      %s4976 = scalar_lea.vmem %s5, 192
      %v4977 = vld [vmem:[%s4976] sm:$0xf]
      %v4978 = vld [vmem:[%s4976 + $0x4] sm:$0xf]
      %v4979 = vld [vmem:[%s4976 + $0x8] sm:$0xf]
      %v4980 = vld [vmem:[%s4976 + $0xc] sm:$0xf]
      %v4981 = vld [vmem:[%s4976 + $0x10] sm:$0xf]
      %v4982 = vld [vmem:[%s4976 + $0x14] sm:$0xf]
      %v4983 = vld [vmem:[%s4976 + $0x18] sm:$0xf]
      %v4984 = vld [vmem:[%s4976 + $0x1c] sm:$0xf]
      %v4985 = vld [vmem:[%s4976 + $0x20] sm:$0xf]
      %v4986 = vld [vmem:[%s4976 + $0x24] sm:$0xf]
      %v4987 = vld [vmem:[%s4976 + $0x28] sm:$0xf]
      %v4988 = vld [vmem:[%s4976 + $0x2c] sm:$0xf]
      %v4989 = vld [vmem:[%s4976 + $0x30] sm:$0xf]
      %v4990 = vld [vmem:[%s4976 + $0x34] sm:$0xf]
      %v4991 = vld [vmem:[%s4976 + $0x38] sm:$0xf]
      %v4992 = vld [vmem:[%s4976 + $0x3c] sm:$0xf]
      %v5009 = vunpack.c.l.b16 %v4977
      %v5010 = vunpack.c.l.b16 %v4978
      %v5011 = vunpack.c.l.b16 %v4979
      %v5012 = vunpack.c.l.b16 %v4980
      %v5013 = vunpack.c.l.b16 %v4981
      %v5014 = vunpack.c.l.b16 %v4982
      %v5015 = vunpack.c.l.b16 %v4983
      %v5016 = vunpack.c.l.b16 %v4984
      %v5017 = vunpack.c.l.b16 %v4985
      %v5018 = vunpack.c.l.b16 %v4986
      %v5019 = vunpack.c.l.b16 %v4987
      %v5020 = vunpack.c.l.b16 %v4988
      %v5021 = vunpack.c.l.b16 %v4989
      %v5022 = vunpack.c.l.b16 %v4990
      %v5023 = vunpack.c.l.b16 %v4991
      %v5024 = vunpack.c.l.b16 %v4992
      %v5025 = vpack.c.b16 %v5010, %v5009
      %v5026 = vpack.c.b16 %v5012, %v5011
      %v5027 = vpack.c.b16 %v5014, %v5013
      %v5028 = vpack.c.b16 %v5016, %v5015
      %v5029 = vpack.c.b16 %v5018, %v5017
      %v5030 = vpack.c.b16 %v5020, %v5019
      %v5031 = vpack.c.b16 %v5022, %v5021
      %v5032 = vpack.c.b16 %v5024, %v5023
      %5041 = vmatprep.subr.bf16.mxu0 0
      %5042 = vmatpush1.bf16.msra.mxu0 %v5032
      %5043 = vmatprep.subr.bf16.mxu0 0
      %5044 = vmatpush1.bf16.msra.mxu0 %v5031
      %5045 = vmatprep.subr.bf16.mxu0 0
      %5046 = vmatpush1.bf16.msra.mxu0 %v5030
      %5047 = vmatprep.subr.bf16.mxu0 0
      %5048 = vmatpush1.bf16.msra.mxu0 %v5029
      %5049 = vmatprep.subr.bf16.mxu0 0
      %5050 = vmatpush1.bf16.msra.mxu0 %v5028
      %5051 = vmatprep.subr.bf16.mxu0 0
      %5052 = vmatpush1.bf16.msra.mxu0 %v5027
      %5053 = vmatprep.subr.bf16.mxu0 0
      %5054 = vmatpush1.bf16.msra.mxu0 %v5026
      %5055 = vmatprep.subr.bf16.mxu0 0
      %5056 = vmatpush1.bf16.msra.mxu0 %v5025
      %5057 = vmatprep.subr.bf16.mxu0 0
      %5058 = vmatpush2.bf16.msra.mxu0 0
      %5059 = vmatprep.subr.bf16.mxu0 0
      %5060 = vmatpush2.bf16.msra.mxu0 0
      %5061 = vmatprep.subr.bf16.mxu0 0
      %5062 = vmatpush2.bf16.msra.mxu0 0
      %5063 = vmatprep.subr.bf16.mxu0 0
      %5064 = vmatpush2.bf16.msra.mxu0 0
      %5065 = vmatprep.subr.bf16.mxu0 0
      %5066 = vmatpush2.bf16.msra.mxu0 0
      %5067 = vmatprep.subr.bf16.mxu0 0
      %5068 = vmatpush2.bf16.msra.mxu0 0
      %5069 = vmatprep.subr.bf16.mxu0 0
      %5070 = vmatpush2.bf16.msra.mxu0 0
      %5071 = vmatprep.subr.bf16.mxu0 0
      %5072 = vmatpush2.bf16.msra.mxu0 0
      %5073 = vmatprep.mubr.bf16.mxu0 0
      %5074 = vmatmul.mubr.bf16.gmra.mxu0 %v4972
      %v5075 = vpop.f32.mrf.mxu0
      %v5076 = vadd.f32 0.0, %v5075
      %v5077 = vpop.f32.mrf.mxu0
      %v5078 = vpop.f32.mrf.mxu0
      %v5079 = vadd.f32 0.0, %v5078
      %v5080 = vpop.f32.mrf.mxu0
      %5081 = vmatprep.mubr.bf16.mxu0 0
      %5082 = vmatmul.mubr.bf16.gmra.mxu0 %v4973
      %v5083 = vpop.f32.mrf.mxu0
      %v5084 = vadd.f32 0.0, %v5083
      %v5085 = vpop.f32.mrf.mxu0
      %v5086 = vpop.f32.mrf.mxu0
      %v5087 = vadd.f32 0.0, %v5086
      %v5088 = vpop.f32.mrf.mxu0
      %5089 = vmatprep.mubr.bf16.mxu0 0
      %5090 = vmatmul.mubr.bf16.gmra.mxu0 %v4974
      %v5091 = vpop.f32.mrf.mxu0
      %v5092 = vadd.f32 0.0, %v5091
      %v5093 = vpop.f32.mrf.mxu0
      %v5094 = vpop.f32.mrf.mxu0
      %v5095 = vadd.f32 0.0, %v5094
      %v5096 = vpop.f32.mrf.mxu0
      %5097 = vmatprep.mubr.bf16.mxu0 0
      %5098 = vmatmul.mubr.bf16.gmra.mxu0 %v4975
      %v5099 = vpop.f32.mrf.mxu0
      %v5100 = vadd.f32 0.0, %v5099
      %v5101 = vpop.f32.mrf.mxu0
      %v5102 = vpop.f32.mrf.mxu0
      %v5103 = vadd.f32 0.0, %v5102
      %v5104 = vpop.f32.mrf.mxu0
      %5105 = vdwg.mxu0
      %v5106 = vadd.f32 %v4956, %v5076
      %v5107 = vadd.f32 %v4957, %v5079
      %v5108 = vadd.f32 %v4958, %v5084
      %v5109 = vadd.f32 %v4959, %v5087
      %v5110 = vadd.f32 %v4960, %v5092
      %v5111 = vadd.f32 %v4961, %v5095
      %v5112 = vadd.f32 %v4962, %v5100
      %v5113 = vadd.f32 %v4963, %v5103
      %vm5114 = vcmp.ge.f32.partialorder %v5106, 0.0
      %vm5115 = vcmp.ge.f32.partialorder %v5107, 0.0
      %vm5116 = vcmp.ge.f32.partialorder %v5108, 0.0
      %vm5117 = vcmp.ge.f32.partialorder %v5109, 0.0
      %vm5118 = vcmp.ge.f32.partialorder %v5110, 0.0
      %vm5119 = vcmp.ge.f32.partialorder %v5111, 0.0
      %vm5120 = vcmp.ge.f32.partialorder %v5112, 0.0
      %vm5121 = vcmp.ge.f32.partialorder %v5113, 0.0
      %v5122 = vmul.f32 %v5106, 0.1
      %v5123 = vmul.f32 %v5107, 0.1
      %v5124 = vmul.f32 %v5108, 0.1
      %v5125 = vmul.f32 %v5109, 0.1
      %v5126 = vmul.f32 %v5110, 0.1
      %v5127 = vmul.f32 %v5111, 0.1
      %v5128 = vmul.f32 %v5112, 0.1
      %v5129 = vmul.f32 %v5113, 0.1
      %v5130 = vsel %vm5114, %v5106, %v5122
      %v5131 = vsel %vm5115, %v5107, %v5123
      %v5132 = vsel %vm5116, %v5108, %v5124
      %v5133 = vsel %vm5117, %v5109, %v5125
      %v5134 = vsel %vm5118, %v5110, %v5126
      %v5135 = vsel %vm5119, %v5111, %v5127
      %v5136 = vsel %vm5120, %v5112, %v5128
      %v5137 = vsel %vm5121, %v5113, %v5129
      %vm5138 = vcmask 523264
      %5139 = vst.msk [vmem:[%s251] sm:$0xff] %vm5138, %v5130
      %5140 = vst.msk [vmem:[%s251 + $0x8] sm:$0xff] %vm5138, %v5131
      %5141 = vst.msk [vmem:[%s251 + $0x10] sm:$0xff] %vm5138, %v5132
      %5142 = vst.msk [vmem:[%s251 + $0x18] sm:$0xff] %vm5138, %v5133
      %5143 = vst.msk [vmem:[%s251 + $0x20] sm:$0xff] %vm5138, %v5134
      %5144 = vst.msk [vmem:[%s251 + $0x28] sm:$0xff] %vm5138, %v5135
      %5145 = vst.msk [vmem:[%s251 + $0x30] sm:$0xff] %vm5138, %v5136
      %5146 = vst.msk [vmem:[%s251 + $0x38] sm:$0xff] %vm5138, %v5137
      %v5147 = vld [vmem:[#allocation3 + $0x1] sm:$0xff]
      %v5148 = vld [vmem:[#allocation3 + $0x11] sm:$0xff]
      %v5149 = vld [vmem:[#allocation3 + $0x21] sm:$0xff]
      %v5150 = vld [vmem:[#allocation3 + $0x31] sm:$0xff]
      %v5151 = vld [vmem:[#allocation3 + $0x41] sm:$0xff]
      %v5152 = vld [vmem:[#allocation3 + $0x51] sm:$0xff]
      %v5153 = vld [vmem:[#allocation3 + $0x61] sm:$0xff]
      %v5154 = vld [vmem:[#allocation3 + $0x71] sm:$0xff]
      %v5155 = vpack.c.bf16 %v5148, %v5147
      %v5156 = vpack.c.bf16 %v5150, %v5149
      %v5157 = vpack.c.bf16 %v5152, %v5151
      %v5158 = vpack.c.bf16 %v5154, %v5153
      %s5159 = scalar_lea.vmem %s5, 256
      %v5160 = vld [vmem:[%s5159] sm:$0xf]
      %v5161 = vld [vmem:[%s5159 + $0x4] sm:$0xf]
      %v5162 = vld [vmem:[%s5159 + $0x8] sm:$0xf]
      %v5163 = vld [vmem:[%s5159 + $0xc] sm:$0xf]
      %v5164 = vld [vmem:[%s5159 + $0x10] sm:$0xf]
      %v5165 = vld [vmem:[%s5159 + $0x14] sm:$0xf]
      %v5166 = vld [vmem:[%s5159 + $0x18] sm:$0xf]
      %v5167 = vld [vmem:[%s5159 + $0x1c] sm:$0xf]
      %v5168 = vld [vmem:[%s5159 + $0x20] sm:$0xf]
      %v5169 = vld [vmem:[%s5159 + $0x24] sm:$0xf]
      %v5170 = vld [vmem:[%s5159 + $0x28] sm:$0xf]
      %v5171 = vld [vmem:[%s5159 + $0x2c] sm:$0xf]
      %v5172 = vld [vmem:[%s5159 + $0x30] sm:$0xf]
      %v5173 = vld [vmem:[%s5159 + $0x34] sm:$0xf]
      %v5174 = vld [vmem:[%s5159 + $0x38] sm:$0xf]
      %v5175 = vld [vmem:[%s5159 + $0x3c] sm:$0xf]
      %v5176 = vld [vmem:[#allocation3 + $0x2] sm:$0xff]
      %v5177 = vld [vmem:[#allocation3 + $0x12] sm:$0xff]
      %v5178 = vld [vmem:[#allocation3 + $0x22] sm:$0xff]
      %v5179 = vld [vmem:[#allocation3 + $0x32] sm:$0xff]
      %v5180 = vld [vmem:[#allocation3 + $0x42] sm:$0xff]
      %v5181 = vld [vmem:[#allocation3 + $0x52] sm:$0xff]
      %v5182 = vld [vmem:[#allocation3 + $0x62] sm:$0xff]
      %v5183 = vld [vmem:[#allocation3 + $0x72] sm:$0xff]
      %v5184 = vpack.c.bf16 %v5177, %v5176
      %v5185 = vpack.c.bf16 %v5179, %v5178
      %v5186 = vpack.c.bf16 %v5181, %v5180
      %v5187 = vpack.c.bf16 %v5183, %v5182
      %s5188 = scalar_lea.vmem %s5, 320
      %v5189 = vld [vmem:[%s5188] sm:$0xf]
      %v5190 = vld [vmem:[%s5188 + $0x4] sm:$0xf]
      %v5191 = vld [vmem:[%s5188 + $0x8] sm:$0xf]
      %v5192 = vld [vmem:[%s5188 + $0xc] sm:$0xf]
      %v5193 = vld [vmem:[%s5188 + $0x10] sm:$0xf]
      %v5194 = vld [vmem:[%s5188 + $0x14] sm:$0xf]
      %v5195 = vld [vmem:[%s5188 + $0x18] sm:$0xf]
      %v5196 = vld [vmem:[%s5188 + $0x1c] sm:$0xf]
      %v5197 = vld [vmem:[%s5188 + $0x20] sm:$0xf]
      %v5198 = vld [vmem:[%s5188 + $0x24] sm:$0xf]
      %v5199 = vld [vmem:[%s5188 + $0x28] sm:$0xf]
      %v5200 = vld [vmem:[%s5188 + $0x2c] sm:$0xf]
      %v5201 = vld [vmem:[%s5188 + $0x30] sm:$0xf]
      %v5202 = vld [vmem:[%s5188 + $0x34] sm:$0xf]
      %v5203 = vld [vmem:[%s5188 + $0x38] sm:$0xf]
      %v5204 = vld [vmem:[%s5188 + $0x3c] sm:$0xf]
      %v5221 = vunpack.c.l.b16 %v5189
      %v5222 = vunpack.c.l.b16 %v5190
      %v5223 = vunpack.c.l.b16 %v5191
      %v5224 = vunpack.c.l.b16 %v5192
      %v5225 = vunpack.c.l.b16 %v5193
      %v5226 = vunpack.c.l.b16 %v5194
      %v5227 = vunpack.c.l.b16 %v5195
      %v5228 = vunpack.c.l.b16 %v5196
      %v5229 = vunpack.c.l.b16 %v5197
      %v5230 = vunpack.c.l.b16 %v5198
      %v5231 = vunpack.c.l.b16 %v5199
      %v5232 = vunpack.c.l.b16 %v5200
      %v5233 = vunpack.c.l.b16 %v5201
      %v5234 = vunpack.c.l.b16 %v5202
      %v5235 = vunpack.c.l.b16 %v5203
      %v5236 = vunpack.c.l.b16 %v5204
      %v5237 = vpack.c.b16 %v5222, %v5221
      %v5238 = vpack.c.b16 %v5224, %v5223
      %v5239 = vpack.c.b16 %v5226, %v5225
      %v5240 = vpack.c.b16 %v5228, %v5227
      %v5241 = vpack.c.b16 %v5230, %v5229
      %v5242 = vpack.c.b16 %v5232, %v5231
      %v5243 = vpack.c.b16 %v5234, %v5233
      %v5244 = vpack.c.b16 %v5236, %v5235
      %5253 = vmatprep.subr.bf16.mxu0 0
      %5254 = vmatpush1.bf16.msra.mxu0 %v5244
      %5255 = vmatprep.subr.bf16.mxu0 0
      %5256 = vmatpush1.bf16.msra.mxu0 %v5243
      %5257 = vmatprep.subr.bf16.mxu0 0
      %5258 = vmatpush1.bf16.msra.mxu0 %v5242
      %5259 = vmatprep.subr.bf16.mxu0 0
      %5260 = vmatpush1.bf16.msra.mxu0 %v5241
      %5261 = vmatprep.subr.bf16.mxu0 0
      %5262 = vmatpush1.bf16.msra.mxu0 %v5240
      %5263 = vmatprep.subr.bf16.mxu0 0
      %5264 = vmatpush1.bf16.msra.mxu0 %v5239
      %5265 = vmatprep.subr.bf16.mxu0 0
      %5266 = vmatpush1.bf16.msra.mxu0 %v5238
      %5267 = vmatprep.subr.bf16.mxu0 0
      %5268 = vmatpush1.bf16.msra.mxu0 %v5237
      %5269 = vmatprep.subr.bf16.mxu0 0
      %5270 = vmatpush2.bf16.msra.mxu0 0
      %5271 = vmatprep.subr.bf16.mxu0 0
      %5272 = vmatpush2.bf16.msra.mxu0 0
      %5273 = vmatprep.subr.bf16.mxu0 0
      %5274 = vmatpush2.bf16.msra.mxu0 0
      %5275 = vmatprep.subr.bf16.mxu0 0
      %5276 = vmatpush2.bf16.msra.mxu0 0
      %5277 = vmatprep.subr.bf16.mxu0 0
      %5278 = vmatpush2.bf16.msra.mxu0 0
      %5279 = vmatprep.subr.bf16.mxu0 0
      %5280 = vmatpush2.bf16.msra.mxu0 0
      %5281 = vmatprep.subr.bf16.mxu0 0
      %5282 = vmatpush2.bf16.msra.mxu0 0
      %5283 = vmatprep.subr.bf16.mxu0 0
      %5284 = vmatpush2.bf16.msra.mxu0 0
      %5285 = vmatprep.mubr.bf16.mxu0 0
      %5286 = vmatmul.mubr.bf16.gmra.mxu0 %v5184
      %v5287 = vpop.f32.mrf.mxu0
      %v5288 = vadd.f32 0.0, %v5287
      %v5289 = vpop.f32.mrf.mxu0
      %v5290 = vpop.f32.mrf.mxu0
      %v5291 = vadd.f32 0.0, %v5290
      %v5292 = vpop.f32.mrf.mxu0
      %5293 = vmatprep.mubr.bf16.mxu0 0
      %5294 = vmatmul.mubr.bf16.gmra.mxu0 %v5185
      %v5295 = vpop.f32.mrf.mxu0
      %v5296 = vadd.f32 0.0, %v5295
      %v5297 = vpop.f32.mrf.mxu0
      %v5298 = vpop.f32.mrf.mxu0
      %v5299 = vadd.f32 0.0, %v5298
      %v5300 = vpop.f32.mrf.mxu0
      %5301 = vmatprep.mubr.bf16.mxu0 0
      %5302 = vmatmul.mubr.bf16.gmra.mxu0 %v5186
      %v5303 = vpop.f32.mrf.mxu0
      %v5304 = vadd.f32 0.0, %v5303
      %v5305 = vpop.f32.mrf.mxu0
      %v5306 = vpop.f32.mrf.mxu0
      %v5307 = vadd.f32 0.0, %v5306
      %v5308 = vpop.f32.mrf.mxu0
      %5309 = vmatprep.mubr.bf16.mxu0 0
      %5310 = vmatmul.mubr.bf16.gmra.mxu0 %v5187
      %v5311 = vpop.f32.mrf.mxu0
      %v5312 = vadd.f32 0.0, %v5311
      %v5313 = vpop.f32.mrf.mxu0
      %v5314 = vpop.f32.mrf.mxu0
      %v5315 = vadd.f32 0.0, %v5314
      %v5316 = vpop.f32.mrf.mxu0
      %5317 = vdwg.mxu0
      %v5334 = vunpack.c.l.b16 %v5160
      %v5335 = vunpack.c.l.b16 %v5161
      %v5336 = vunpack.c.l.b16 %v5162
      %v5337 = vunpack.c.l.b16 %v5163
      %v5338 = vunpack.c.l.b16 %v5164
      %v5339 = vunpack.c.l.b16 %v5165
      %v5340 = vunpack.c.l.b16 %v5166
      %v5341 = vunpack.c.l.b16 %v5167
      %v5342 = vunpack.c.l.b16 %v5168
      %v5343 = vunpack.c.l.b16 %v5169
      %v5344 = vunpack.c.l.b16 %v5170
      %v5345 = vunpack.c.l.b16 %v5171
      %v5346 = vunpack.c.l.b16 %v5172
      %v5347 = vunpack.c.l.b16 %v5173
      %v5348 = vunpack.c.l.b16 %v5174
      %v5349 = vunpack.c.l.b16 %v5175
      %v5350 = vpack.c.b16 %v5335, %v5334
      %v5351 = vpack.c.b16 %v5337, %v5336
      %v5352 = vpack.c.b16 %v5339, %v5338
      %v5353 = vpack.c.b16 %v5341, %v5340
      %v5354 = vpack.c.b16 %v5343, %v5342
      %v5355 = vpack.c.b16 %v5345, %v5344
      %v5356 = vpack.c.b16 %v5347, %v5346
      %v5357 = vpack.c.b16 %v5349, %v5348
      %5366 = vmatprep.subr.bf16.mxu0 0
      %5367 = vmatpush1.bf16.msra.mxu0 %v5357
      %5368 = vmatprep.subr.bf16.mxu0 0
      %5369 = vmatpush1.bf16.msra.mxu0 %v5356
      %5370 = vmatprep.subr.bf16.mxu0 0
      %5371 = vmatpush1.bf16.msra.mxu0 %v5355
      %5372 = vmatprep.subr.bf16.mxu0 0
      %5373 = vmatpush1.bf16.msra.mxu0 %v5354
      %5374 = vmatprep.subr.bf16.mxu0 0
      %5375 = vmatpush1.bf16.msra.mxu0 %v5353
      %5376 = vmatprep.subr.bf16.mxu0 0
      %5377 = vmatpush1.bf16.msra.mxu0 %v5352
      %5378 = vmatprep.subr.bf16.mxu0 0
      %5379 = vmatpush1.bf16.msra.mxu0 %v5351
      %5380 = vmatprep.subr.bf16.mxu0 0
      %5381 = vmatpush1.bf16.msra.mxu0 %v5350
      %5382 = vmatprep.subr.bf16.mxu0 0
      %5383 = vmatpush2.bf16.msra.mxu0 0
      %5384 = vmatprep.subr.bf16.mxu0 0
      %5385 = vmatpush2.bf16.msra.mxu0 0
      %5386 = vmatprep.subr.bf16.mxu0 0
      %5387 = vmatpush2.bf16.msra.mxu0 0
      %5388 = vmatprep.subr.bf16.mxu0 0
      %5389 = vmatpush2.bf16.msra.mxu0 0
      %5390 = vmatprep.subr.bf16.mxu0 0
      %5391 = vmatpush2.bf16.msra.mxu0 0
      %5392 = vmatprep.subr.bf16.mxu0 0
      %5393 = vmatpush2.bf16.msra.mxu0 0
      %5394 = vmatprep.subr.bf16.mxu0 0
      %5395 = vmatpush2.bf16.msra.mxu0 0
      %5396 = vmatprep.subr.bf16.mxu0 0
      %5397 = vmatpush2.bf16.msra.mxu0 0
      %5398 = vmatprep.mubr.bf16.mxu0 0
      %5399 = vmatmul.mubr.bf16.gmra.mxu0 %v5155
      %v5400 = vpop.f32.mrf.mxu0
      %v5401 = vadd.f32 %v5288, %v5400
      %v5402 = vpop.f32.mrf.mxu0
      %v5403 = vpop.f32.mrf.mxu0
      %v5404 = vadd.f32 %v5291, %v5403
      %v5405 = vpop.f32.mrf.mxu0
      %5406 = vmatprep.mubr.bf16.mxu0 0
      %5407 = vmatmul.mubr.bf16.gmra.mxu0 %v5156
      %v5408 = vpop.f32.mrf.mxu0
      %v5409 = vadd.f32 %v5296, %v5408
      %v5410 = vpop.f32.mrf.mxu0
      %v5411 = vpop.f32.mrf.mxu0
      %v5412 = vadd.f32 %v5299, %v5411
      %v5413 = vpop.f32.mrf.mxu0
      %5414 = vmatprep.mubr.bf16.mxu0 0
      %5415 = vmatmul.mubr.bf16.gmra.mxu0 %v5157
      %v5416 = vpop.f32.mrf.mxu0
      %v5417 = vadd.f32 %v5304, %v5416
      %v5418 = vpop.f32.mrf.mxu0
      %v5419 = vpop.f32.mrf.mxu0
      %v5420 = vadd.f32 %v5307, %v5419
      %v5421 = vpop.f32.mrf.mxu0
      %5422 = vmatprep.mubr.bf16.mxu0 0
      %5423 = vmatmul.mubr.bf16.gmra.mxu0 %v5158
      %v5424 = vpop.f32.mrf.mxu0
      %v5425 = vadd.f32 %v5312, %v5424
      %v5426 = vpop.f32.mrf.mxu0
      %v5427 = vpop.f32.mrf.mxu0
      %v5428 = vadd.f32 %v5315, %v5427
      %v5429 = vpop.f32.mrf.mxu0
      %5430 = vdwg.mxu0
      %v5431 = vld [vmem:[%s3141 + $0x1] sm:$0xff]
      %v5432 = vld [vmem:[%s3141 + $0x11] sm:$0xff]
      %v5433 = vld [vmem:[%s3141 + $0x21] sm:$0xff]
      %v5434 = vld [vmem:[%s3141 + $0x31] sm:$0xff]
      %v5435 = vld [vmem:[%s3141 + $0x41] sm:$0xff]
      %v5436 = vld [vmem:[%s3141 + $0x51] sm:$0xff]
      %v5437 = vld [vmem:[%s3141 + $0x61] sm:$0xff]
      %v5438 = vld [vmem:[%s3141 + $0x71] sm:$0xff]
      %v5439 = vpack.c.bf16 %v5432, %v5431
      %v5440 = vpack.c.bf16 %v5434, %v5433
      %v5441 = vpack.c.bf16 %v5436, %v5435
      %v5442 = vpack.c.bf16 %v5438, %v5437
      %s5443 = scalar_lea.vmem %s5, 384
      %v5444 = vld [vmem:[%s5443] sm:$0xf]
      %v5445 = vld [vmem:[%s5443 + $0x4] sm:$0xf]
      %v5446 = vld [vmem:[%s5443 + $0x8] sm:$0xf]
      %v5447 = vld [vmem:[%s5443 + $0xc] sm:$0xf]
      %v5448 = vld [vmem:[%s5443 + $0x10] sm:$0xf]
      %v5449 = vld [vmem:[%s5443 + $0x14] sm:$0xf]
      %v5450 = vld [vmem:[%s5443 + $0x18] sm:$0xf]
      %v5451 = vld [vmem:[%s5443 + $0x1c] sm:$0xf]
      %v5452 = vld [vmem:[%s5443 + $0x20] sm:$0xf]
      %v5453 = vld [vmem:[%s5443 + $0x24] sm:$0xf]
      %v5454 = vld [vmem:[%s5443 + $0x28] sm:$0xf]
      %v5455 = vld [vmem:[%s5443 + $0x2c] sm:$0xf]
      %v5456 = vld [vmem:[%s5443 + $0x30] sm:$0xf]
      %v5457 = vld [vmem:[%s5443 + $0x34] sm:$0xf]
      %v5458 = vld [vmem:[%s5443 + $0x38] sm:$0xf]
      %v5459 = vld [vmem:[%s5443 + $0x3c] sm:$0xf]
      %v5476 = vunpack.c.l.b16 %v5444
      %v5477 = vunpack.c.l.b16 %v5445
      %v5478 = vunpack.c.l.b16 %v5446
      %v5479 = vunpack.c.l.b16 %v5447
      %v5480 = vunpack.c.l.b16 %v5448
      %v5481 = vunpack.c.l.b16 %v5449
      %v5482 = vunpack.c.l.b16 %v5450
      %v5483 = vunpack.c.l.b16 %v5451
      %v5484 = vunpack.c.l.b16 %v5452
      %v5485 = vunpack.c.l.b16 %v5453
      %v5486 = vunpack.c.l.b16 %v5454
      %v5487 = vunpack.c.l.b16 %v5455
      %v5488 = vunpack.c.l.b16 %v5456
      %v5489 = vunpack.c.l.b16 %v5457
      %v5490 = vunpack.c.l.b16 %v5458
      %v5491 = vunpack.c.l.b16 %v5459
      %v5492 = vpack.c.b16 %v5477, %v5476
      %v5493 = vpack.c.b16 %v5479, %v5478
      %v5494 = vpack.c.b16 %v5481, %v5480
      %v5495 = vpack.c.b16 %v5483, %v5482
      %v5496 = vpack.c.b16 %v5485, %v5484
      %v5497 = vpack.c.b16 %v5487, %v5486
      %v5498 = vpack.c.b16 %v5489, %v5488
      %v5499 = vpack.c.b16 %v5491, %v5490
      %5508 = vmatprep.subr.bf16.mxu0 0
      %5509 = vmatpush1.bf16.msra.mxu0 %v5499
      %5510 = vmatprep.subr.bf16.mxu0 0
      %5511 = vmatpush1.bf16.msra.mxu0 %v5498
      %5512 = vmatprep.subr.bf16.mxu0 0
      %5513 = vmatpush1.bf16.msra.mxu0 %v5497
      %5514 = vmatprep.subr.bf16.mxu0 0
      %5515 = vmatpush1.bf16.msra.mxu0 %v5496
      %5516 = vmatprep.subr.bf16.mxu0 0
      %5517 = vmatpush1.bf16.msra.mxu0 %v5495
      %5518 = vmatprep.subr.bf16.mxu0 0
      %5519 = vmatpush1.bf16.msra.mxu0 %v5494
      %5520 = vmatprep.subr.bf16.mxu0 0
      %5521 = vmatpush1.bf16.msra.mxu0 %v5493
      %5522 = vmatprep.subr.bf16.mxu0 0
      %5523 = vmatpush1.bf16.msra.mxu0 %v5492
      %5524 = vmatprep.subr.bf16.mxu0 0
      %5525 = vmatpush2.bf16.msra.mxu0 0
      %5526 = vmatprep.subr.bf16.mxu0 0
      %5527 = vmatpush2.bf16.msra.mxu0 0
      %5528 = vmatprep.subr.bf16.mxu0 0
      %5529 = vmatpush2.bf16.msra.mxu0 0
      %5530 = vmatprep.subr.bf16.mxu0 0
      %5531 = vmatpush2.bf16.msra.mxu0 0
      %5532 = vmatprep.subr.bf16.mxu0 0
      %5533 = vmatpush2.bf16.msra.mxu0 0
      %5534 = vmatprep.subr.bf16.mxu0 0
      %5535 = vmatpush2.bf16.msra.mxu0 0
      %5536 = vmatprep.subr.bf16.mxu0 0
      %5537 = vmatpush2.bf16.msra.mxu0 0
      %5538 = vmatprep.subr.bf16.mxu0 0
      %5539 = vmatpush2.bf16.msra.mxu0 0
      %5540 = vmatprep.mubr.bf16.mxu0 0
      %5541 = vmatmul.mubr.bf16.gmra.mxu0 %v5439
      %v5542 = vpop.f32.mrf.mxu0
      %v5543 = vadd.f32 0.0, %v5542
      %v5544 = vpop.f32.mrf.mxu0
      %v5545 = vpop.f32.mrf.mxu0
      %v5546 = vadd.f32 0.0, %v5545
      %v5547 = vpop.f32.mrf.mxu0
      %5548 = vmatprep.mubr.bf16.mxu0 0
      %5549 = vmatmul.mubr.bf16.gmra.mxu0 %v5440
      %v5550 = vpop.f32.mrf.mxu0
      %v5551 = vadd.f32 0.0, %v5550
      %v5552 = vpop.f32.mrf.mxu0
      %v5553 = vpop.f32.mrf.mxu0
      %v5554 = vadd.f32 0.0, %v5553
      %v5555 = vpop.f32.mrf.mxu0
      %5556 = vmatprep.mubr.bf16.mxu0 0
      %5557 = vmatmul.mubr.bf16.gmra.mxu0 %v5441
      %v5558 = vpop.f32.mrf.mxu0
      %v5559 = vadd.f32 0.0, %v5558
      %v5560 = vpop.f32.mrf.mxu0
      %v5561 = vpop.f32.mrf.mxu0
      %v5562 = vadd.f32 0.0, %v5561
      %v5563 = vpop.f32.mrf.mxu0
      %5564 = vmatprep.mubr.bf16.mxu0 0
      %5565 = vmatmul.mubr.bf16.gmra.mxu0 %v5442
      %v5566 = vpop.f32.mrf.mxu0
      %v5567 = vadd.f32 0.0, %v5566
      %v5568 = vpop.f32.mrf.mxu0
      %v5569 = vpop.f32.mrf.mxu0
      %v5570 = vadd.f32 0.0, %v5569
      %v5571 = vpop.f32.mrf.mxu0
      %5572 = vdwg.mxu0
      %v5573 = vadd.f32 %v5401, %v5543
      %v5574 = vadd.f32 %v5404, %v5546
      %v5575 = vadd.f32 %v5409, %v5551
      %v5576 = vadd.f32 %v5412, %v5554
      %v5577 = vadd.f32 %v5417, %v5559
      %v5578 = vadd.f32 %v5420, %v5562
      %v5579 = vadd.f32 %v5425, %v5567
      %v5580 = vadd.f32 %v5428, %v5570
      %v5581 = vld [vmem:[%s3141 + $0x2] sm:$0xff]
      %v5582 = vld [vmem:[%s3141 + $0x12] sm:$0xff]
      %v5583 = vld [vmem:[%s3141 + $0x22] sm:$0xff]
      %v5584 = vld [vmem:[%s3141 + $0x32] sm:$0xff]
      %v5585 = vld [vmem:[%s3141 + $0x42] sm:$0xff]
      %v5586 = vld [vmem:[%s3141 + $0x52] sm:$0xff]
      %v5587 = vld [vmem:[%s3141 + $0x62] sm:$0xff]
      %v5588 = vld [vmem:[%s3141 + $0x72] sm:$0xff]
      %v5589 = vpack.c.bf16 %v5582, %v5581
      %v5590 = vpack.c.bf16 %v5584, %v5583
      %v5591 = vpack.c.bf16 %v5586, %v5585
      %v5592 = vpack.c.bf16 %v5588, %v5587
      %s5593 = scalar_lea.vmem %s5, 448
      %v5594 = vld [vmem:[%s5593] sm:$0xf]
      %v5595 = vld [vmem:[%s5593 + $0x4] sm:$0xf]
      %v5596 = vld [vmem:[%s5593 + $0x8] sm:$0xf]
      %v5597 = vld [vmem:[%s5593 + $0xc] sm:$0xf]
      %v5598 = vld [vmem:[%s5593 + $0x10] sm:$0xf]
      %v5599 = vld [vmem:[%s5593 + $0x14] sm:$0xf]
      %v5600 = vld [vmem:[%s5593 + $0x18] sm:$0xf]
      %v5601 = vld [vmem:[%s5593 + $0x1c] sm:$0xf]
      %v5602 = vld [vmem:[%s5593 + $0x20] sm:$0xf]
      %v5603 = vld [vmem:[%s5593 + $0x24] sm:$0xf]
      %v5604 = vld [vmem:[%s5593 + $0x28] sm:$0xf]
      %v5605 = vld [vmem:[%s5593 + $0x2c] sm:$0xf]
      %v5606 = vld [vmem:[%s5593 + $0x30] sm:$0xf]
      %v5607 = vld [vmem:[%s5593 + $0x34] sm:$0xf]
      %v5608 = vld [vmem:[%s5593 + $0x38] sm:$0xf]
      %v5609 = vld [vmem:[%s5593 + $0x3c] sm:$0xf]
      %v5626 = vunpack.c.l.b16 %v5594
      %v5627 = vunpack.c.l.b16 %v5595
      %v5628 = vunpack.c.l.b16 %v5596
      %v5629 = vunpack.c.l.b16 %v5597
      %v5630 = vunpack.c.l.b16 %v5598
      %v5631 = vunpack.c.l.b16 %v5599
      %v5632 = vunpack.c.l.b16 %v5600
      %v5633 = vunpack.c.l.b16 %v5601
      %v5634 = vunpack.c.l.b16 %v5602
      %v5635 = vunpack.c.l.b16 %v5603
      %v5636 = vunpack.c.l.b16 %v5604
      %v5637 = vunpack.c.l.b16 %v5605
      %v5638 = vunpack.c.l.b16 %v5606
      %v5639 = vunpack.c.l.b16 %v5607
      %v5640 = vunpack.c.l.b16 %v5608
      %v5641 = vunpack.c.l.b16 %v5609
      %v5642 = vpack.c.b16 %v5627, %v5626
      %v5643 = vpack.c.b16 %v5629, %v5628
      %v5644 = vpack.c.b16 %v5631, %v5630
      %v5645 = vpack.c.b16 %v5633, %v5632
      %v5646 = vpack.c.b16 %v5635, %v5634
      %v5647 = vpack.c.b16 %v5637, %v5636
      %v5648 = vpack.c.b16 %v5639, %v5638
      %v5649 = vpack.c.b16 %v5641, %v5640
      %5658 = vmatprep.subr.bf16.mxu0 0
      %5659 = vmatpush1.bf16.msra.mxu0 %v5649
      %5660 = vmatprep.subr.bf16.mxu0 0
      %5661 = vmatpush1.bf16.msra.mxu0 %v5648
      %5662 = vmatprep.subr.bf16.mxu0 0
      %5663 = vmatpush1.bf16.msra.mxu0 %v5647
      %5664 = vmatprep.subr.bf16.mxu0 0
      %5665 = vmatpush1.bf16.msra.mxu0 %v5646
      %5666 = vmatprep.subr.bf16.mxu0 0
      %5667 = vmatpush1.bf16.msra.mxu0 %v5645
      %5668 = vmatprep.subr.bf16.mxu0 0
      %5669 = vmatpush1.bf16.msra.mxu0 %v5644
      %5670 = vmatprep.subr.bf16.mxu0 0
      %5671 = vmatpush1.bf16.msra.mxu0 %v5643
      %5672 = vmatprep.subr.bf16.mxu0 0
      %5673 = vmatpush1.bf16.msra.mxu0 %v5642
      %5674 = vmatprep.subr.bf16.mxu0 0
      %5675 = vmatpush2.bf16.msra.mxu0 0
      %5676 = vmatprep.subr.bf16.mxu0 0
      %5677 = vmatpush2.bf16.msra.mxu0 0
      %5678 = vmatprep.subr.bf16.mxu0 0
      %5679 = vmatpush2.bf16.msra.mxu0 0
      %5680 = vmatprep.subr.bf16.mxu0 0
      %5681 = vmatpush2.bf16.msra.mxu0 0
      %5682 = vmatprep.subr.bf16.mxu0 0
      %5683 = vmatpush2.bf16.msra.mxu0 0
      %5684 = vmatprep.subr.bf16.mxu0 0
      %5685 = vmatpush2.bf16.msra.mxu0 0
      %5686 = vmatprep.subr.bf16.mxu0 0
      %5687 = vmatpush2.bf16.msra.mxu0 0
      %5688 = vmatprep.subr.bf16.mxu0 0
      %5689 = vmatpush2.bf16.msra.mxu0 0
      %5690 = vmatprep.mubr.bf16.mxu0 0
      %5691 = vmatmul.mubr.bf16.gmra.mxu0 %v5589
      %v5692 = vpop.f32.mrf.mxu0
      %v5693 = vadd.f32 0.0, %v5692
      %v5694 = vpop.f32.mrf.mxu0
      %v5695 = vpop.f32.mrf.mxu0
      %v5696 = vadd.f32 0.0, %v5695
      %v5697 = vpop.f32.mrf.mxu0
      %5698 = vmatprep.mubr.bf16.mxu0 0
      %5699 = vmatmul.mubr.bf16.gmra.mxu0 %v5590
      %v5700 = vpop.f32.mrf.mxu0
      %v5701 = vadd.f32 0.0, %v5700
      %v5702 = vpop.f32.mrf.mxu0
      %v5703 = vpop.f32.mrf.mxu0
      %v5704 = vadd.f32 0.0, %v5703
      %v5705 = vpop.f32.mrf.mxu0
      %5706 = vmatprep.mubr.bf16.mxu0 0
      %5707 = vmatmul.mubr.bf16.gmra.mxu0 %v5591
      %v5708 = vpop.f32.mrf.mxu0
      %v5709 = vadd.f32 0.0, %v5708
      %v5710 = vpop.f32.mrf.mxu0
      %v5711 = vpop.f32.mrf.mxu0
      %v5712 = vadd.f32 0.0, %v5711
      %v5713 = vpop.f32.mrf.mxu0
      %5714 = vmatprep.mubr.bf16.mxu0 0
      %5715 = vmatmul.mubr.bf16.gmra.mxu0 %v5592
      %v5716 = vpop.f32.mrf.mxu0
      %v5717 = vadd.f32 0.0, %v5716
      %v5718 = vpop.f32.mrf.mxu0
      %v5719 = vpop.f32.mrf.mxu0
      %v5720 = vadd.f32 0.0, %v5719
      %v5721 = vpop.f32.mrf.mxu0
      %5722 = vdwg.mxu0
      %v5723 = vadd.f32 %v5573, %v5693
      %v5724 = vadd.f32 %v5574, %v5696
      %v5725 = vadd.f32 %v5575, %v5701
      %v5726 = vadd.f32 %v5576, %v5704
      %v5727 = vadd.f32 %v5577, %v5709
      %v5728 = vadd.f32 %v5578, %v5712
      %v5729 = vadd.f32 %v5579, %v5717
      %v5730 = vadd.f32 %v5580, %v5720
      %vm5731 = vcmp.ge.f32.partialorder %v5723, 0.0
      %vm5732 = vcmp.ge.f32.partialorder %v5724, 0.0
      %vm5733 = vcmp.ge.f32.partialorder %v5725, 0.0
      %vm5734 = vcmp.ge.f32.partialorder %v5726, 0.0
      %vm5735 = vcmp.ge.f32.partialorder %v5727, 0.0
      %vm5736 = vcmp.ge.f32.partialorder %v5728, 0.0
      %vm5737 = vcmp.ge.f32.partialorder %v5729, 0.0
      %vm5738 = vcmp.ge.f32.partialorder %v5730, 0.0
      %v5739 = vmul.f32 %v5723, 0.1
      %v5740 = vmul.f32 %v5724, 0.1
      %v5741 = vmul.f32 %v5725, 0.1
      %v5742 = vmul.f32 %v5726, 0.1
      %v5743 = vmul.f32 %v5727, 0.1
      %v5744 = vmul.f32 %v5728, 0.1
      %v5745 = vmul.f32 %v5729, 0.1
      %v5746 = vmul.f32 %v5730, 0.1
      %v5747 = vsel %vm5731, %v5723, %v5739
      %v5748 = vsel %vm5732, %v5724, %v5740
      %v5749 = vsel %vm5733, %v5725, %v5741
      %v5750 = vsel %vm5734, %v5726, %v5742
      %v5751 = vsel %vm5735, %v5727, %v5743
      %v5752 = vsel %vm5736, %v5728, %v5744
      %v5753 = vsel %vm5737, %v5729, %v5745
      %v5754 = vsel %vm5738, %v5730, %v5746
      %s5755 = scalar_lea.vmem %s251, 64
      %5756 = vst.msk [vmem:[%s5755] sm:$0xff] %vm5138, %v5747
      %5757 = vst.msk [vmem:[%s5755 + $0x8] sm:$0xff] %vm5138, %v5748
      %5758 = vst.msk [vmem:[%s5755 + $0x10] sm:$0xff] %vm5138, %v5749
      %5759 = vst.msk [vmem:[%s5755 + $0x18] sm:$0xff] %vm5138, %v5750
      %5760 = vst.msk [vmem:[%s5755 + $0x20] sm:$0xff] %vm5138, %v5751
      %5761 = vst.msk [vmem:[%s5755 + $0x28] sm:$0xff] %vm5138, %v5752
      %5762 = vst.msk [vmem:[%s5755 + $0x30] sm:$0xff] %vm5138, %v5753
      %5763 = vst.msk [vmem:[%s5755 + $0x38] sm:$0xff] %vm5138, %v5754
      %v5764 = vld [vmem:[%s3141] sm:$0xff]
      %v5765 = vld [vmem:[%s3141 + $0x10] sm:$0xff]
      %v5766 = vld [vmem:[%s3141 + $0x20] sm:$0xff]
      %v5767 = vld [vmem:[%s3141 + $0x30] sm:$0xff]
      %v5768 = vld [vmem:[%s3141 + $0x40] sm:$0xff]
      %v5769 = vld [vmem:[%s3141 + $0x50] sm:$0xff]
      %v5770 = vld [vmem:[%s3141 + $0x60] sm:$0xff]
      %v5771 = vld [vmem:[%s3141 + $0x70] sm:$0xff]
      %v5772 = vpack.c.bf16 %v5765, %v5764
      %v5773 = vpack.c.bf16 %v5767, %v5766
      %v5774 = vpack.c.bf16 %v5769, %v5768
      %v5775 = vpack.c.bf16 %v5771, %v5770
      %s5776 = scalar_lea.vmem %s5, 512
      %v5777 = vld [vmem:[%s5776] sm:$0xf]
      %v5778 = vld [vmem:[%s5776 + $0x4] sm:$0xf]
      %v5779 = vld [vmem:[%s5776 + $0x8] sm:$0xf]
      %v5780 = vld [vmem:[%s5776 + $0xc] sm:$0xf]
      %v5781 = vld [vmem:[%s5776 + $0x10] sm:$0xf]
      %v5782 = vld [vmem:[%s5776 + $0x14] sm:$0xf]
      %v5783 = vld [vmem:[%s5776 + $0x18] sm:$0xf]
      %v5784 = vld [vmem:[%s5776 + $0x1c] sm:$0xf]
      %v5785 = vld [vmem:[%s5776 + $0x20] sm:$0xf]
      %v5786 = vld [vmem:[%s5776 + $0x24] sm:$0xf]
      %v5787 = vld [vmem:[%s5776 + $0x28] sm:$0xf]
      %v5788 = vld [vmem:[%s5776 + $0x2c] sm:$0xf]
      %v5789 = vld [vmem:[%s5776 + $0x30] sm:$0xf]
      %v5790 = vld [vmem:[%s5776 + $0x34] sm:$0xf]
      %v5791 = vld [vmem:[%s5776 + $0x38] sm:$0xf]
      %v5792 = vld [vmem:[%s5776 + $0x3c] sm:$0xf]
      %v5793 = vld [vmem:[%s3141 + $0x1] sm:$0xff]
      %v5794 = vld [vmem:[%s3141 + $0x11] sm:$0xff]
      %v5795 = vld [vmem:[%s3141 + $0x21] sm:$0xff]
      %v5796 = vld [vmem:[%s3141 + $0x31] sm:$0xff]
      %v5797 = vld [vmem:[%s3141 + $0x41] sm:$0xff]
      %v5798 = vld [vmem:[%s3141 + $0x51] sm:$0xff]
      %v5799 = vld [vmem:[%s3141 + $0x61] sm:$0xff]
      %v5800 = vld [vmem:[%s3141 + $0x71] sm:$0xff]
      %v5801 = vpack.c.bf16 %v5794, %v5793
      %v5802 = vpack.c.bf16 %v5796, %v5795
      %v5803 = vpack.c.bf16 %v5798, %v5797
      %v5804 = vpack.c.bf16 %v5800, %v5799
      %s5805 = scalar_lea.vmem %s5, 576
      %v5806 = vld [vmem:[%s5805] sm:$0xf]
      %v5807 = vld [vmem:[%s5805 + $0x4] sm:$0xf]
      %v5808 = vld [vmem:[%s5805 + $0x8] sm:$0xf]
      %v5809 = vld [vmem:[%s5805 + $0xc] sm:$0xf]
      %v5810 = vld [vmem:[%s5805 + $0x10] sm:$0xf]
      %v5811 = vld [vmem:[%s5805 + $0x14] sm:$0xf]
      %v5812 = vld [vmem:[%s5805 + $0x18] sm:$0xf]
      %v5813 = vld [vmem:[%s5805 + $0x1c] sm:$0xf]
      %v5814 = vld [vmem:[%s5805 + $0x20] sm:$0xf]
      %v5815 = vld [vmem:[%s5805 + $0x24] sm:$0xf]
      %v5816 = vld [vmem:[%s5805 + $0x28] sm:$0xf]
      %v5817 = vld [vmem:[%s5805 + $0x2c] sm:$0xf]
      %v5818 = vld [vmem:[%s5805 + $0x30] sm:$0xf]
      %v5819 = vld [vmem:[%s5805 + $0x34] sm:$0xf]
      %v5820 = vld [vmem:[%s5805 + $0x38] sm:$0xf]
      %v5821 = vld [vmem:[%s5805 + $0x3c] sm:$0xf]
      %v5838 = vunpack.c.l.b16 %v5806
      %v5839 = vunpack.c.l.b16 %v5807
      %v5840 = vunpack.c.l.b16 %v5808
      %v5841 = vunpack.c.l.b16 %v5809
      %v5842 = vunpack.c.l.b16 %v5810
      %v5843 = vunpack.c.l.b16 %v5811
      %v5844 = vunpack.c.l.b16 %v5812
      %v5845 = vunpack.c.l.b16 %v5813
      %v5846 = vunpack.c.l.b16 %v5814
      %v5847 = vunpack.c.l.b16 %v5815
      %v5848 = vunpack.c.l.b16 %v5816
      %v5849 = vunpack.c.l.b16 %v5817
      %v5850 = vunpack.c.l.b16 %v5818
      %v5851 = vunpack.c.l.b16 %v5819
      %v5852 = vunpack.c.l.b16 %v5820
      %v5853 = vunpack.c.l.b16 %v5821
      %v5854 = vpack.c.b16 %v5839, %v5838
      %v5855 = vpack.c.b16 %v5841, %v5840
      %v5856 = vpack.c.b16 %v5843, %v5842
      %v5857 = vpack.c.b16 %v5845, %v5844
      %v5858 = vpack.c.b16 %v5847, %v5846
      %v5859 = vpack.c.b16 %v5849, %v5848
      %v5860 = vpack.c.b16 %v5851, %v5850
      %v5861 = vpack.c.b16 %v5853, %v5852
      %5870 = vmatprep.subr.bf16.mxu0 0
      %5871 = vmatpush1.bf16.msra.mxu0 %v5861
      %5872 = vmatprep.subr.bf16.mxu0 0
      %5873 = vmatpush1.bf16.msra.mxu0 %v5860
      %5874 = vmatprep.subr.bf16.mxu0 0
      %5875 = vmatpush1.bf16.msra.mxu0 %v5859
      %5876 = vmatprep.subr.bf16.mxu0 0
      %5877 = vmatpush1.bf16.msra.mxu0 %v5858
      %5878 = vmatprep.subr.bf16.mxu0 0
      %5879 = vmatpush1.bf16.msra.mxu0 %v5857
      %5880 = vmatprep.subr.bf16.mxu0 0
      %5881 = vmatpush1.bf16.msra.mxu0 %v5856
      %5882 = vmatprep.subr.bf16.mxu0 0
      %5883 = vmatpush1.bf16.msra.mxu0 %v5855
      %5884 = vmatprep.subr.bf16.mxu0 0
      %5885 = vmatpush1.bf16.msra.mxu0 %v5854
      %5886 = vmatprep.subr.bf16.mxu0 0
      %5887 = vmatpush2.bf16.msra.mxu0 0
      %5888 = vmatprep.subr.bf16.mxu0 0
      %5889 = vmatpush2.bf16.msra.mxu0 0
      %5890 = vmatprep.subr.bf16.mxu0 0
      %5891 = vmatpush2.bf16.msra.mxu0 0
      %5892 = vmatprep.subr.bf16.mxu0 0
      %5893 = vmatpush2.bf16.msra.mxu0 0
      %5894 = vmatprep.subr.bf16.mxu0 0
      %5895 = vmatpush2.bf16.msra.mxu0 0
      %5896 = vmatprep.subr.bf16.mxu0 0
      %5897 = vmatpush2.bf16.msra.mxu0 0
      %5898 = vmatprep.subr.bf16.mxu0 0
      %5899 = vmatpush2.bf16.msra.mxu0 0
      %5900 = vmatprep.subr.bf16.mxu0 0
      %5901 = vmatpush2.bf16.msra.mxu0 0
      %5902 = vmatprep.mubr.bf16.mxu0 0
      %5903 = vmatmul.mubr.bf16.gmra.mxu0 %v5801
      %v5904 = vpop.f32.mrf.mxu0
      %v5905 = vadd.f32 0.0, %v5904
      %v5906 = vpop.f32.mrf.mxu0
      %v5907 = vpop.f32.mrf.mxu0
      %v5908 = vadd.f32 0.0, %v5907
      %v5909 = vpop.f32.mrf.mxu0
      %5910 = vmatprep.mubr.bf16.mxu0 0
      %5911 = vmatmul.mubr.bf16.gmra.mxu0 %v5802
      %v5912 = vpop.f32.mrf.mxu0
      %v5913 = vadd.f32 0.0, %v5912
      %v5914 = vpop.f32.mrf.mxu0
      %v5915 = vpop.f32.mrf.mxu0
      %v5916 = vadd.f32 0.0, %v5915
      %v5917 = vpop.f32.mrf.mxu0
      %5918 = vmatprep.mubr.bf16.mxu0 0
      %5919 = vmatmul.mubr.bf16.gmra.mxu0 %v5803
      %v5920 = vpop.f32.mrf.mxu0
      %v5921 = vadd.f32 0.0, %v5920
      %v5922 = vpop.f32.mrf.mxu0
      %v5923 = vpop.f32.mrf.mxu0
      %v5924 = vadd.f32 0.0, %v5923
      %v5925 = vpop.f32.mrf.mxu0
      %5926 = vmatprep.mubr.bf16.mxu0 0
      %5927 = vmatmul.mubr.bf16.gmra.mxu0 %v5804
      %v5928 = vpop.f32.mrf.mxu0
      %v5929 = vadd.f32 0.0, %v5928
      %v5930 = vpop.f32.mrf.mxu0
      %v5931 = vpop.f32.mrf.mxu0
      %v5932 = vadd.f32 0.0, %v5931
      %v5933 = vpop.f32.mrf.mxu0
      %5934 = vdwg.mxu0
      %v5951 = vunpack.c.l.b16 %v5777
      %v5952 = vunpack.c.l.b16 %v5778
      %v5953 = vunpack.c.l.b16 %v5779
      %v5954 = vunpack.c.l.b16 %v5780
      %v5955 = vunpack.c.l.b16 %v5781
      %v5956 = vunpack.c.l.b16 %v5782
      %v5957 = vunpack.c.l.b16 %v5783
      %v5958 = vunpack.c.l.b16 %v5784
      %v5959 = vunpack.c.l.b16 %v5785
      %v5960 = vunpack.c.l.b16 %v5786
      %v5961 = vunpack.c.l.b16 %v5787
      %v5962 = vunpack.c.l.b16 %v5788
      %v5963 = vunpack.c.l.b16 %v5789
      %v5964 = vunpack.c.l.b16 %v5790
      %v5965 = vunpack.c.l.b16 %v5791
      %v5966 = vunpack.c.l.b16 %v5792
      %v5967 = vpack.c.b16 %v5952, %v5951
      %v5968 = vpack.c.b16 %v5954, %v5953
      %v5969 = vpack.c.b16 %v5956, %v5955
      %v5970 = vpack.c.b16 %v5958, %v5957
      %v5971 = vpack.c.b16 %v5960, %v5959
      %v5972 = vpack.c.b16 %v5962, %v5961
      %v5973 = vpack.c.b16 %v5964, %v5963
      %v5974 = vpack.c.b16 %v5966, %v5965
      %5983 = vmatprep.subr.bf16.mxu0 0
      %5984 = vmatpush1.bf16.msra.mxu0 %v5974
      %5985 = vmatprep.subr.bf16.mxu0 0
      %5986 = vmatpush1.bf16.msra.mxu0 %v5973
      %5987 = vmatprep.subr.bf16.mxu0 0
      %5988 = vmatpush1.bf16.msra.mxu0 %v5972
      %5989 = vmatprep.subr.bf16.mxu0 0
      %5990 = vmatpush1.bf16.msra.mxu0 %v5971
      %5991 = vmatprep.subr.bf16.mxu0 0
      %5992 = vmatpush1.bf16.msra.mxu0 %v5970
      %5993 = vmatprep.subr.bf16.mxu0 0
      %5994 = vmatpush1.bf16.msra.mxu0 %v5969
      %5995 = vmatprep.subr.bf16.mxu0 0
      %5996 = vmatpush1.bf16.msra.mxu0 %v5968
      %5997 = vmatprep.subr.bf16.mxu0 0
      %5998 = vmatpush1.bf16.msra.mxu0 %v5967
      %5999 = vmatprep.subr.bf16.mxu0 0
      %6000 = vmatpush2.bf16.msra.mxu0 0
      %6001 = vmatprep.subr.bf16.mxu0 0
      %6002 = vmatpush2.bf16.msra.mxu0 0
      %6003 = vmatprep.subr.bf16.mxu0 0
      %6004 = vmatpush2.bf16.msra.mxu0 0
      %6005 = vmatprep.subr.bf16.mxu0 0
      %6006 = vmatpush2.bf16.msra.mxu0 0
      %6007 = vmatprep.subr.bf16.mxu0 0
      %6008 = vmatpush2.bf16.msra.mxu0 0
      %6009 = vmatprep.subr.bf16.mxu0 0
      %6010 = vmatpush2.bf16.msra.mxu0 0
      %6011 = vmatprep.subr.bf16.mxu0 0
      %6012 = vmatpush2.bf16.msra.mxu0 0
      %6013 = vmatprep.subr.bf16.mxu0 0
      %6014 = vmatpush2.bf16.msra.mxu0 0
      %6015 = vmatprep.mubr.bf16.mxu0 0
      %6016 = vmatmul.mubr.bf16.gmra.mxu0 %v5772
      %v6017 = vpop.f32.mrf.mxu0
      %v6018 = vadd.f32 %v5905, %v6017
      %v6019 = vpop.f32.mrf.mxu0
      %v6020 = vpop.f32.mrf.mxu0
      %v6021 = vadd.f32 %v5908, %v6020
      %v6022 = vpop.f32.mrf.mxu0
      %6023 = vmatprep.mubr.bf16.mxu0 0
      %6024 = vmatmul.mubr.bf16.gmra.mxu0 %v5773
      %v6025 = vpop.f32.mrf.mxu0
      %v6026 = vadd.f32 %v5913, %v6025
      %v6027 = vpop.f32.mrf.mxu0
      %v6028 = vpop.f32.mrf.mxu0
      %v6029 = vadd.f32 %v5916, %v6028
      %v6030 = vpop.f32.mrf.mxu0
      %6031 = vmatprep.mubr.bf16.mxu0 0
      %6032 = vmatmul.mubr.bf16.gmra.mxu0 %v5774
      %v6033 = vpop.f32.mrf.mxu0
      %v6034 = vadd.f32 %v5921, %v6033
      %v6035 = vpop.f32.mrf.mxu0
      %v6036 = vpop.f32.mrf.mxu0
      %v6037 = vadd.f32 %v5924, %v6036
      %v6038 = vpop.f32.mrf.mxu0
      %6039 = vmatprep.mubr.bf16.mxu0 0
      %6040 = vmatmul.mubr.bf16.gmra.mxu0 %v5775
      %v6041 = vpop.f32.mrf.mxu0
      %v6042 = vadd.f32 %v5929, %v6041
      %v6043 = vpop.f32.mrf.mxu0
      %v6044 = vpop.f32.mrf.mxu0
      %v6045 = vadd.f32 %v5932, %v6044
      %v6046 = vpop.f32.mrf.mxu0
      %6047 = vdwg.mxu0
      %v6048 = vld [vmem:[%s4033] sm:$0xff]
      %v6049 = vld [vmem:[%s4033 + $0x10] sm:$0xff]
      %v6050 = vld [vmem:[%s4033 + $0x20] sm:$0xff]
      %v6051 = vld [vmem:[%s4033 + $0x30] sm:$0xff]
      %v6052 = vld [vmem:[%s4033 + $0x40] sm:$0xff]
      %v6053 = vld [vmem:[%s4033 + $0x50] sm:$0xff]
      %v6054 = vld [vmem:[%s4033 + $0x60] sm:$0xff]
      %v6055 = vld [vmem:[%s4033 + $0x70] sm:$0xff]
      %v6056 = vpack.c.bf16 %v6049, %v6048
      %v6057 = vpack.c.bf16 %v6051, %v6050
      %v6058 = vpack.c.bf16 %v6053, %v6052
      %v6059 = vpack.c.bf16 %v6055, %v6054
      %s6060 = scalar_lea.vmem %s5, 640
      %v6061 = vld [vmem:[%s6060] sm:$0xf]
      %v6062 = vld [vmem:[%s6060 + $0x4] sm:$0xf]
      %v6063 = vld [vmem:[%s6060 + $0x8] sm:$0xf]
      %v6064 = vld [vmem:[%s6060 + $0xc] sm:$0xf]
      %v6065 = vld [vmem:[%s6060 + $0x10] sm:$0xf]
      %v6066 = vld [vmem:[%s6060 + $0x14] sm:$0xf]
      %v6067 = vld [vmem:[%s6060 + $0x18] sm:$0xf]
      %v6068 = vld [vmem:[%s6060 + $0x1c] sm:$0xf]
      %v6069 = vld [vmem:[%s6060 + $0x20] sm:$0xf]
      %v6070 = vld [vmem:[%s6060 + $0x24] sm:$0xf]
      %v6071 = vld [vmem:[%s6060 + $0x28] sm:$0xf]
      %v6072 = vld [vmem:[%s6060 + $0x2c] sm:$0xf]
      %v6073 = vld [vmem:[%s6060 + $0x30] sm:$0xf]
      %v6074 = vld [vmem:[%s6060 + $0x34] sm:$0xf]
      %v6075 = vld [vmem:[%s6060 + $0x38] sm:$0xf]
      %v6076 = vld [vmem:[%s6060 + $0x3c] sm:$0xf]
      %v6093 = vunpack.c.l.b16 %v6061
      %v6094 = vunpack.c.l.b16 %v6062
      %v6095 = vunpack.c.l.b16 %v6063
      %v6096 = vunpack.c.l.b16 %v6064
      %v6097 = vunpack.c.l.b16 %v6065
      %v6098 = vunpack.c.l.b16 %v6066
      %v6099 = vunpack.c.l.b16 %v6067
      %v6100 = vunpack.c.l.b16 %v6068
      %v6101 = vunpack.c.l.b16 %v6069
      %v6102 = vunpack.c.l.b16 %v6070
      %v6103 = vunpack.c.l.b16 %v6071
      %v6104 = vunpack.c.l.b16 %v6072
      %v6105 = vunpack.c.l.b16 %v6073
      %v6106 = vunpack.c.l.b16 %v6074
      %v6107 = vunpack.c.l.b16 %v6075
      %v6108 = vunpack.c.l.b16 %v6076
      %v6109 = vpack.c.b16 %v6094, %v6093
      %v6110 = vpack.c.b16 %v6096, %v6095
      %v6111 = vpack.c.b16 %v6098, %v6097
      %v6112 = vpack.c.b16 %v6100, %v6099
      %v6113 = vpack.c.b16 %v6102, %v6101
      %v6114 = vpack.c.b16 %v6104, %v6103
      %v6115 = vpack.c.b16 %v6106, %v6105
      %v6116 = vpack.c.b16 %v6108, %v6107
      %6125 = vmatprep.subr.bf16.mxu0 0
      %6126 = vmatpush1.bf16.msra.mxu0 %v6116
      %6127 = vmatprep.subr.bf16.mxu0 0
      %6128 = vmatpush1.bf16.msra.mxu0 %v6115
      %6129 = vmatprep.subr.bf16.mxu0 0
      %6130 = vmatpush1.bf16.msra.mxu0 %v6114
      %6131 = vmatprep.subr.bf16.mxu0 0
      %6132 = vmatpush1.bf16.msra.mxu0 %v6113
      %6133 = vmatprep.subr.bf16.mxu0 0
      %6134 = vmatpush1.bf16.msra.mxu0 %v6112
      %6135 = vmatprep.subr.bf16.mxu0 0
      %6136 = vmatpush1.bf16.msra.mxu0 %v6111
      %6137 = vmatprep.subr.bf16.mxu0 0
      %6138 = vmatpush1.bf16.msra.mxu0 %v6110
      %6139 = vmatprep.subr.bf16.mxu0 0
      %6140 = vmatpush1.bf16.msra.mxu0 %v6109
      %6141 = vmatprep.subr.bf16.mxu0 0
      %6142 = vmatpush2.bf16.msra.mxu0 0
      %6143 = vmatprep.subr.bf16.mxu0 0
      %6144 = vmatpush2.bf16.msra.mxu0 0
      %6145 = vmatprep.subr.bf16.mxu0 0
      %6146 = vmatpush2.bf16.msra.mxu0 0
      %6147 = vmatprep.subr.bf16.mxu0 0
      %6148 = vmatpush2.bf16.msra.mxu0 0
      %6149 = vmatprep.subr.bf16.mxu0 0
      %6150 = vmatpush2.bf16.msra.mxu0 0
      %6151 = vmatprep.subr.bf16.mxu0 0
      %6152 = vmatpush2.bf16.msra.mxu0 0
      %6153 = vmatprep.subr.bf16.mxu0 0
      %6154 = vmatpush2.bf16.msra.mxu0 0
      %6155 = vmatprep.subr.bf16.mxu0 0
      %6156 = vmatpush2.bf16.msra.mxu0 0
      %6157 = vmatprep.mubr.bf16.mxu0 0
      %6158 = vmatmul.mubr.bf16.gmra.mxu0 %v6056
      %v6159 = vpop.f32.mrf.mxu0
      %v6160 = vadd.f32 0.0, %v6159
      %v6161 = vpop.f32.mrf.mxu0
      %v6162 = vpop.f32.mrf.mxu0
      %v6163 = vadd.f32 0.0, %v6162
      %v6164 = vpop.f32.mrf.mxu0
      %6165 = vmatprep.mubr.bf16.mxu0 0
      %6166 = vmatmul.mubr.bf16.gmra.mxu0 %v6057
      %v6167 = vpop.f32.mrf.mxu0
      %v6168 = vadd.f32 0.0, %v6167
      %v6169 = vpop.f32.mrf.mxu0
      %v6170 = vpop.f32.mrf.mxu0
      %v6171 = vadd.f32 0.0, %v6170
      %v6172 = vpop.f32.mrf.mxu0
      %6173 = vmatprep.mubr.bf16.mxu0 0
      %6174 = vmatmul.mubr.bf16.gmra.mxu0 %v6058
      %v6175 = vpop.f32.mrf.mxu0
      %v6176 = vadd.f32 0.0, %v6175
      %v6177 = vpop.f32.mrf.mxu0
      %v6178 = vpop.f32.mrf.mxu0
      %v6179 = vadd.f32 0.0, %v6178
      %v6180 = vpop.f32.mrf.mxu0
      %6181 = vmatprep.mubr.bf16.mxu0 0
      %6182 = vmatmul.mubr.bf16.gmra.mxu0 %v6059
      %v6183 = vpop.f32.mrf.mxu0
      %v6184 = vadd.f32 0.0, %v6183
      %v6185 = vpop.f32.mrf.mxu0
      %v6186 = vpop.f32.mrf.mxu0
      %v6187 = vadd.f32 0.0, %v6186
      %v6188 = vpop.f32.mrf.mxu0
      %6189 = vdwg.mxu0
      %v6190 = vadd.f32 %v6018, %v6160
      %v6191 = vadd.f32 %v6021, %v6163
      %v6192 = vadd.f32 %v6026, %v6168
      %v6193 = vadd.f32 %v6029, %v6171
      %v6194 = vadd.f32 %v6034, %v6176
      %v6195 = vadd.f32 %v6037, %v6179
      %v6196 = vadd.f32 %v6042, %v6184
      %v6197 = vadd.f32 %v6045, %v6187
      %v6198 = vld [vmem:[%s4033 + $0x1] sm:$0xff]
      %v6199 = vld [vmem:[%s4033 + $0x11] sm:$0xff]
      %v6200 = vld [vmem:[%s4033 + $0x21] sm:$0xff]
      %v6201 = vld [vmem:[%s4033 + $0x31] sm:$0xff]
      %v6202 = vld [vmem:[%s4033 + $0x41] sm:$0xff]
      %v6203 = vld [vmem:[%s4033 + $0x51] sm:$0xff]
      %v6204 = vld [vmem:[%s4033 + $0x61] sm:$0xff]
      %v6205 = vld [vmem:[%s4033 + $0x71] sm:$0xff]
      %v6206 = vpack.c.bf16 %v6199, %v6198
      %v6207 = vpack.c.bf16 %v6201, %v6200
      %v6208 = vpack.c.bf16 %v6203, %v6202
      %v6209 = vpack.c.bf16 %v6205, %v6204
      %s6210 = scalar_lea.vmem %s5, 704
      %v6211 = vld [vmem:[%s6210] sm:$0xf]
      %v6212 = vld [vmem:[%s6210 + $0x4] sm:$0xf]
      %v6213 = vld [vmem:[%s6210 + $0x8] sm:$0xf]
      %v6214 = vld [vmem:[%s6210 + $0xc] sm:$0xf]
      %v6215 = vld [vmem:[%s6210 + $0x10] sm:$0xf]
      %v6216 = vld [vmem:[%s6210 + $0x14] sm:$0xf]
      %v6217 = vld [vmem:[%s6210 + $0x18] sm:$0xf]
      %v6218 = vld [vmem:[%s6210 + $0x1c] sm:$0xf]
      %v6219 = vld [vmem:[%s6210 + $0x20] sm:$0xf]
      %v6220 = vld [vmem:[%s6210 + $0x24] sm:$0xf]
      %v6221 = vld [vmem:[%s6210 + $0x28] sm:$0xf]
      %v6222 = vld [vmem:[%s6210 + $0x2c] sm:$0xf]
      %v6223 = vld [vmem:[%s6210 + $0x30] sm:$0xf]
      %v6224 = vld [vmem:[%s6210 + $0x34] sm:$0xf]
      %v6225 = vld [vmem:[%s6210 + $0x38] sm:$0xf]
      %v6226 = vld [vmem:[%s6210 + $0x3c] sm:$0xf]
      %v6243 = vunpack.c.l.b16 %v6211
      %v6244 = vunpack.c.l.b16 %v6212
      %v6245 = vunpack.c.l.b16 %v6213
      %v6246 = vunpack.c.l.b16 %v6214
      %v6247 = vunpack.c.l.b16 %v6215
      %v6248 = vunpack.c.l.b16 %v6216
      %v6249 = vunpack.c.l.b16 %v6217
      %v6250 = vunpack.c.l.b16 %v6218
      %v6251 = vunpack.c.l.b16 %v6219
      %v6252 = vunpack.c.l.b16 %v6220
      %v6253 = vunpack.c.l.b16 %v6221
      %v6254 = vunpack.c.l.b16 %v6222
      %v6255 = vunpack.c.l.b16 %v6223
      %v6256 = vunpack.c.l.b16 %v6224
      %v6257 = vunpack.c.l.b16 %v6225
      %v6258 = vunpack.c.l.b16 %v6226
      %v6259 = vpack.c.b16 %v6244, %v6243
      %v6260 = vpack.c.b16 %v6246, %v6245
      %v6261 = vpack.c.b16 %v6248, %v6247
      %v6262 = vpack.c.b16 %v6250, %v6249
      %v6263 = vpack.c.b16 %v6252, %v6251
      %v6264 = vpack.c.b16 %v6254, %v6253
      %v6265 = vpack.c.b16 %v6256, %v6255
      %v6266 = vpack.c.b16 %v6258, %v6257
      %6275 = vmatprep.subr.bf16.mxu0 0
      %6276 = vmatpush1.bf16.msra.mxu0 %v6266
      %6277 = vmatprep.subr.bf16.mxu0 0
      %6278 = vmatpush1.bf16.msra.mxu0 %v6265
      %6279 = vmatprep.subr.bf16.mxu0 0
      %6280 = vmatpush1.bf16.msra.mxu0 %v6264
      %6281 = vmatprep.subr.bf16.mxu0 0
      %6282 = vmatpush1.bf16.msra.mxu0 %v6263
      %6283 = vmatprep.subr.bf16.mxu0 0
      %6284 = vmatpush1.bf16.msra.mxu0 %v6262
      %6285 = vmatprep.subr.bf16.mxu0 0
      %6286 = vmatpush1.bf16.msra.mxu0 %v6261
      %6287 = vmatprep.subr.bf16.mxu0 0
      %6288 = vmatpush1.bf16.msra.mxu0 %v6260
      %6289 = vmatprep.subr.bf16.mxu0 0
      %6290 = vmatpush1.bf16.msra.mxu0 %v6259
      %6291 = vmatprep.subr.bf16.mxu0 0
      %6292 = vmatpush2.bf16.msra.mxu0 0
      %6293 = vmatprep.subr.bf16.mxu0 0
      %6294 = vmatpush2.bf16.msra.mxu0 0
      %6295 = vmatprep.subr.bf16.mxu0 0
      %6296 = vmatpush2.bf16.msra.mxu0 0
      %6297 = vmatprep.subr.bf16.mxu0 0
      %6298 = vmatpush2.bf16.msra.mxu0 0
      %6299 = vmatprep.subr.bf16.mxu0 0
      %6300 = vmatpush2.bf16.msra.mxu0 0
      %6301 = vmatprep.subr.bf16.mxu0 0
      %6302 = vmatpush2.bf16.msra.mxu0 0
      %6303 = vmatprep.subr.bf16.mxu0 0
      %6304 = vmatpush2.bf16.msra.mxu0 0
      %6305 = vmatprep.subr.bf16.mxu0 0
      %6306 = vmatpush2.bf16.msra.mxu0 0
      %6307 = vmatprep.mubr.bf16.mxu0 0
      %6308 = vmatmul.mubr.bf16.gmra.mxu0 %v6206
      %v6309 = vpop.f32.mrf.mxu0
      %v6310 = vadd.f32 0.0, %v6309
      %v6311 = vpop.f32.mrf.mxu0
      %v6312 = vpop.f32.mrf.mxu0
      %v6313 = vadd.f32 0.0, %v6312
      %v6314 = vpop.f32.mrf.mxu0
      %6315 = vmatprep.mubr.bf16.mxu0 0
      %6316 = vmatmul.mubr.bf16.gmra.mxu0 %v6207
      %v6317 = vpop.f32.mrf.mxu0
      %v6318 = vadd.f32 0.0, %v6317
      %v6319 = vpop.f32.mrf.mxu0
      %v6320 = vpop.f32.mrf.mxu0
      %v6321 = vadd.f32 0.0, %v6320
      %v6322 = vpop.f32.mrf.mxu0
      %6323 = vmatprep.mubr.bf16.mxu0 0
      %6324 = vmatmul.mubr.bf16.gmra.mxu0 %v6208
      %v6325 = vpop.f32.mrf.mxu0
      %v6326 = vadd.f32 0.0, %v6325
      %v6327 = vpop.f32.mrf.mxu0
      %v6328 = vpop.f32.mrf.mxu0
      %v6329 = vadd.f32 0.0, %v6328
      %v6330 = vpop.f32.mrf.mxu0
      %6331 = vmatprep.mubr.bf16.mxu0 0
      %6332 = vmatmul.mubr.bf16.gmra.mxu0 %v6209
      %v6333 = vpop.f32.mrf.mxu0
      %v6334 = vadd.f32 0.0, %v6333
      %v6335 = vpop.f32.mrf.mxu0
      %v6336 = vpop.f32.mrf.mxu0
      %v6337 = vadd.f32 0.0, %v6336
      %v6338 = vpop.f32.mrf.mxu0
      %6339 = vdwg.mxu0
      %v6340 = vadd.f32 %v6190, %v6310
      %v6341 = vadd.f32 %v6191, %v6313
      %v6342 = vadd.f32 %v6192, %v6318
      %v6343 = vadd.f32 %v6193, %v6321
      %v6344 = vadd.f32 %v6194, %v6326
      %v6345 = vadd.f32 %v6195, %v6329
      %v6346 = vadd.f32 %v6196, %v6334
      %v6347 = vadd.f32 %v6197, %v6337
      %vm6348 = vcmp.ge.f32.partialorder %v6340, 0.0
      %vm6349 = vcmp.ge.f32.partialorder %v6341, 0.0
      %vm6350 = vcmp.ge.f32.partialorder %v6342, 0.0
      %vm6351 = vcmp.ge.f32.partialorder %v6343, 0.0
      %vm6352 = vcmp.ge.f32.partialorder %v6344, 0.0
      %vm6353 = vcmp.ge.f32.partialorder %v6345, 0.0
      %vm6354 = vcmp.ge.f32.partialorder %v6346, 0.0
      %vm6355 = vcmp.ge.f32.partialorder %v6347, 0.0
      %v6356 = vmul.f32 %v6340, 0.1
      %v6357 = vmul.f32 %v6341, 0.1
      %v6358 = vmul.f32 %v6342, 0.1
      %v6359 = vmul.f32 %v6343, 0.1
      %v6360 = vmul.f32 %v6344, 0.1
      %v6361 = vmul.f32 %v6345, 0.1
      %v6362 = vmul.f32 %v6346, 0.1
      %v6363 = vmul.f32 %v6347, 0.1
      %v6364 = vsel %vm6348, %v6340, %v6356
      %v6365 = vsel %vm6349, %v6341, %v6357
      %v6366 = vsel %vm6350, %v6342, %v6358
      %v6367 = vsel %vm6351, %v6343, %v6359
      %v6368 = vsel %vm6352, %v6344, %v6360
      %v6369 = vsel %vm6353, %v6345, %v6361
      %v6370 = vsel %vm6354, %v6346, %v6362
      %v6371 = vsel %vm6355, %v6347, %v6363
      %s6372 = scalar_lea.vmem %s251, 128
      %6373 = vst.msk [vmem:[%s6372] sm:$0xff] %vm5138, %v6364
      %6374 = vst.msk [vmem:[%s6372 + $0x8] sm:$0xff] %vm5138, %v6365
      %6375 = vst.msk [vmem:[%s6372 + $0x10] sm:$0xff] %vm5138, %v6366
      %6376 = vst.msk [vmem:[%s6372 + $0x18] sm:$0xff] %vm5138, %v6367
      %6377 = vst.msk [vmem:[%s6372 + $0x20] sm:$0xff] %vm5138, %v6368
      %6378 = vst.msk [vmem:[%s6372 + $0x28] sm:$0xff] %vm5138, %v6369
      %6379 = vst.msk [vmem:[%s6372 + $0x30] sm:$0xff] %vm5138, %v6370
      %6380 = vst.msk [vmem:[%s6372 + $0x38] sm:$0xff] %vm5138, %v6371
      %v6381 = vld [vmem:[%s3141 + $0x1] sm:$0xff]
      %v6382 = vld [vmem:[%s3141 + $0x11] sm:$0xff]
      %v6383 = vld [vmem:[%s3141 + $0x21] sm:$0xff]
      %v6384 = vld [vmem:[%s3141 + $0x31] sm:$0xff]
      %v6385 = vld [vmem:[%s3141 + $0x41] sm:$0xff]
      %v6386 = vld [vmem:[%s3141 + $0x51] sm:$0xff]
      %v6387 = vld [vmem:[%s3141 + $0x61] sm:$0xff]
      %v6388 = vld [vmem:[%s3141 + $0x71] sm:$0xff]
      %v6389 = vpack.c.bf16 %v6382, %v6381
      %v6390 = vpack.c.bf16 %v6384, %v6383
      %v6391 = vpack.c.bf16 %v6386, %v6385
      %v6392 = vpack.c.bf16 %v6388, %v6387
      %s6393 = scalar_lea.vmem %s5, 768
      %v6394 = vld [vmem:[%s6393] sm:$0xf]
      %v6395 = vld [vmem:[%s6393 + $0x4] sm:$0xf]
      %v6396 = vld [vmem:[%s6393 + $0x8] sm:$0xf]
      %v6397 = vld [vmem:[%s6393 + $0xc] sm:$0xf]
      %v6398 = vld [vmem:[%s6393 + $0x10] sm:$0xf]
      %v6399 = vld [vmem:[%s6393 + $0x14] sm:$0xf]
      %v6400 = vld [vmem:[%s6393 + $0x18] sm:$0xf]
      %v6401 = vld [vmem:[%s6393 + $0x1c] sm:$0xf]
      %v6402 = vld [vmem:[%s6393 + $0x20] sm:$0xf]
      %v6403 = vld [vmem:[%s6393 + $0x24] sm:$0xf]
      %v6404 = vld [vmem:[%s6393 + $0x28] sm:$0xf]
      %v6405 = vld [vmem:[%s6393 + $0x2c] sm:$0xf]
      %v6406 = vld [vmem:[%s6393 + $0x30] sm:$0xf]
      %v6407 = vld [vmem:[%s6393 + $0x34] sm:$0xf]
      %v6408 = vld [vmem:[%s6393 + $0x38] sm:$0xf]
      %v6409 = vld [vmem:[%s6393 + $0x3c] sm:$0xf]
      %v6410 = vld [vmem:[%s3141 + $0x2] sm:$0xff]
      %v6411 = vld [vmem:[%s3141 + $0x12] sm:$0xff]
      %v6412 = vld [vmem:[%s3141 + $0x22] sm:$0xff]
      %v6413 = vld [vmem:[%s3141 + $0x32] sm:$0xff]
      %v6414 = vld [vmem:[%s3141 + $0x42] sm:$0xff]
      %v6415 = vld [vmem:[%s3141 + $0x52] sm:$0xff]
      %v6416 = vld [vmem:[%s3141 + $0x62] sm:$0xff]
      %v6417 = vld [vmem:[%s3141 + $0x72] sm:$0xff]
      %v6418 = vpack.c.bf16 %v6411, %v6410
      %v6419 = vpack.c.bf16 %v6413, %v6412
      %v6420 = vpack.c.bf16 %v6415, %v6414
      %v6421 = vpack.c.bf16 %v6417, %v6416
      %s6422 = scalar_lea.vmem %s5, 832
      %v6423 = vld [vmem:[%s6422] sm:$0xf]
      %v6424 = vld [vmem:[%s6422 + $0x4] sm:$0xf]
      %v6425 = vld [vmem:[%s6422 + $0x8] sm:$0xf]
      %v6426 = vld [vmem:[%s6422 + $0xc] sm:$0xf]
      %v6427 = vld [vmem:[%s6422 + $0x10] sm:$0xf]
      %v6428 = vld [vmem:[%s6422 + $0x14] sm:$0xf]
      %v6429 = vld [vmem:[%s6422 + $0x18] sm:$0xf]
      %v6430 = vld [vmem:[%s6422 + $0x1c] sm:$0xf]
      %v6431 = vld [vmem:[%s6422 + $0x20] sm:$0xf]
      %v6432 = vld [vmem:[%s6422 + $0x24] sm:$0xf]
      %v6433 = vld [vmem:[%s6422 + $0x28] sm:$0xf]
      %v6434 = vld [vmem:[%s6422 + $0x2c] sm:$0xf]
      %v6435 = vld [vmem:[%s6422 + $0x30] sm:$0xf]
      %v6436 = vld [vmem:[%s6422 + $0x34] sm:$0xf]
      %v6437 = vld [vmem:[%s6422 + $0x38] sm:$0xf]
      %v6438 = vld [vmem:[%s6422 + $0x3c] sm:$0xf]
      %v6455 = vunpack.c.l.b16 %v6423
      %v6456 = vunpack.c.l.b16 %v6424
      %v6457 = vunpack.c.l.b16 %v6425
      %v6458 = vunpack.c.l.b16 %v6426
      %v6459 = vunpack.c.l.b16 %v6427
      %v6460 = vunpack.c.l.b16 %v6428
      %v6461 = vunpack.c.l.b16 %v6429
      %v6462 = vunpack.c.l.b16 %v6430
      %v6463 = vunpack.c.l.b16 %v6431
      %v6464 = vunpack.c.l.b16 %v6432
      %v6465 = vunpack.c.l.b16 %v6433
      %v6466 = vunpack.c.l.b16 %v6434
      %v6467 = vunpack.c.l.b16 %v6435
      %v6468 = vunpack.c.l.b16 %v6436
      %v6469 = vunpack.c.l.b16 %v6437
      %v6470 = vunpack.c.l.b16 %v6438
      %v6471 = vpack.c.b16 %v6456, %v6455
      %v6472 = vpack.c.b16 %v6458, %v6457
      %v6473 = vpack.c.b16 %v6460, %v6459
      %v6474 = vpack.c.b16 %v6462, %v6461
      %v6475 = vpack.c.b16 %v6464, %v6463
      %v6476 = vpack.c.b16 %v6466, %v6465
      %v6477 = vpack.c.b16 %v6468, %v6467
      %v6478 = vpack.c.b16 %v6470, %v6469
      %6487 = vmatprep.subr.bf16.mxu0 0
      %6488 = vmatpush1.bf16.msra.mxu0 %v6478
      %6489 = vmatprep.subr.bf16.mxu0 0
      %6490 = vmatpush1.bf16.msra.mxu0 %v6477
      %6491 = vmatprep.subr.bf16.mxu0 0
      %6492 = vmatpush1.bf16.msra.mxu0 %v6476
      %6493 = vmatprep.subr.bf16.mxu0 0
      %6494 = vmatpush1.bf16.msra.mxu0 %v6475
      %6495 = vmatprep.subr.bf16.mxu0 0
      %6496 = vmatpush1.bf16.msra.mxu0 %v6474
      %6497 = vmatprep.subr.bf16.mxu0 0
      %6498 = vmatpush1.bf16.msra.mxu0 %v6473
      %6499 = vmatprep.subr.bf16.mxu0 0
      %6500 = vmatpush1.bf16.msra.mxu0 %v6472
      %6501 = vmatprep.subr.bf16.mxu0 0
      %6502 = vmatpush1.bf16.msra.mxu0 %v6471
      %6503 = vmatprep.subr.bf16.mxu0 0
      %6504 = vmatpush2.bf16.msra.mxu0 0
      %6505 = vmatprep.subr.bf16.mxu0 0
      %6506 = vmatpush2.bf16.msra.mxu0 0
      %6507 = vmatprep.subr.bf16.mxu0 0
      %6508 = vmatpush2.bf16.msra.mxu0 0
      %6509 = vmatprep.subr.bf16.mxu0 0
      %6510 = vmatpush2.bf16.msra.mxu0 0
      %6511 = vmatprep.subr.bf16.mxu0 0
      %6512 = vmatpush2.bf16.msra.mxu0 0
      %6513 = vmatprep.subr.bf16.mxu0 0
      %6514 = vmatpush2.bf16.msra.mxu0 0
      %6515 = vmatprep.subr.bf16.mxu0 0
      %6516 = vmatpush2.bf16.msra.mxu0 0
      %6517 = vmatprep.subr.bf16.mxu0 0
      %6518 = vmatpush2.bf16.msra.mxu0 0
      %6519 = vmatprep.mubr.bf16.mxu0 0
      %6520 = vmatmul.mubr.bf16.gmra.mxu0 %v6418
      %v6521 = vpop.f32.mrf.mxu0
      %v6522 = vadd.f32 0.0, %v6521
      %v6523 = vpop.f32.mrf.mxu0
      %v6524 = vpop.f32.mrf.mxu0
      %v6525 = vadd.f32 0.0, %v6524
      %v6526 = vpop.f32.mrf.mxu0
      %6527 = vmatprep.mubr.bf16.mxu0 0
      %6528 = vmatmul.mubr.bf16.gmra.mxu0 %v6419
      %v6529 = vpop.f32.mrf.mxu0
      %v6530 = vadd.f32 0.0, %v6529
      %v6531 = vpop.f32.mrf.mxu0
      %v6532 = vpop.f32.mrf.mxu0
      %v6533 = vadd.f32 0.0, %v6532
      %v6534 = vpop.f32.mrf.mxu0
      %6535 = vmatprep.mubr.bf16.mxu0 0
      %6536 = vmatmul.mubr.bf16.gmra.mxu0 %v6420
      %v6537 = vpop.f32.mrf.mxu0
      %v6538 = vadd.f32 0.0, %v6537
      %v6539 = vpop.f32.mrf.mxu0
      %v6540 = vpop.f32.mrf.mxu0
      %v6541 = vadd.f32 0.0, %v6540
      %v6542 = vpop.f32.mrf.mxu0
      %6543 = vmatprep.mubr.bf16.mxu0 0
      %6544 = vmatmul.mubr.bf16.gmra.mxu0 %v6421
      %v6545 = vpop.f32.mrf.mxu0
      %v6546 = vadd.f32 0.0, %v6545
      %v6547 = vpop.f32.mrf.mxu0
      %v6548 = vpop.f32.mrf.mxu0
      %v6549 = vadd.f32 0.0, %v6548
      %v6550 = vpop.f32.mrf.mxu0
      %6551 = vdwg.mxu0
      %v6568 = vunpack.c.l.b16 %v6394
      %v6569 = vunpack.c.l.b16 %v6395
      %v6570 = vunpack.c.l.b16 %v6396
      %v6571 = vunpack.c.l.b16 %v6397
      %v6572 = vunpack.c.l.b16 %v6398
      %v6573 = vunpack.c.l.b16 %v6399
      %v6574 = vunpack.c.l.b16 %v6400
      %v6575 = vunpack.c.l.b16 %v6401
      %v6576 = vunpack.c.l.b16 %v6402
      %v6577 = vunpack.c.l.b16 %v6403
      %v6578 = vunpack.c.l.b16 %v6404
      %v6579 = vunpack.c.l.b16 %v6405
      %v6580 = vunpack.c.l.b16 %v6406
      %v6581 = vunpack.c.l.b16 %v6407
      %v6582 = vunpack.c.l.b16 %v6408
      %v6583 = vunpack.c.l.b16 %v6409
      %v6584 = vpack.c.b16 %v6569, %v6568
      %v6585 = vpack.c.b16 %v6571, %v6570
      %v6586 = vpack.c.b16 %v6573, %v6572
      %v6587 = vpack.c.b16 %v6575, %v6574
      %v6588 = vpack.c.b16 %v6577, %v6576
      %v6589 = vpack.c.b16 %v6579, %v6578
      %v6590 = vpack.c.b16 %v6581, %v6580
      %v6591 = vpack.c.b16 %v6583, %v6582
      %6600 = vmatprep.subr.bf16.mxu0 0
      %6601 = vmatpush1.bf16.msra.mxu0 %v6591
      %6602 = vmatprep.subr.bf16.mxu0 0
      %6603 = vmatpush1.bf16.msra.mxu0 %v6590
      %6604 = vmatprep.subr.bf16.mxu0 0
      %6605 = vmatpush1.bf16.msra.mxu0 %v6589
      %6606 = vmatprep.subr.bf16.mxu0 0
      %6607 = vmatpush1.bf16.msra.mxu0 %v6588
      %6608 = vmatprep.subr.bf16.mxu0 0
      %6609 = vmatpush1.bf16.msra.mxu0 %v6587
      %6610 = vmatprep.subr.bf16.mxu0 0
      %6611 = vmatpush1.bf16.msra.mxu0 %v6586
      %6612 = vmatprep.subr.bf16.mxu0 0
      %6613 = vmatpush1.bf16.msra.mxu0 %v6585
      %6614 = vmatprep.subr.bf16.mxu0 0
      %6615 = vmatpush1.bf16.msra.mxu0 %v6584
      %6616 = vmatprep.subr.bf16.mxu0 0
      %6617 = vmatpush2.bf16.msra.mxu0 0
      %6618 = vmatprep.subr.bf16.mxu0 0
      %6619 = vmatpush2.bf16.msra.mxu0 0
      %6620 = vmatprep.subr.bf16.mxu0 0
      %6621 = vmatpush2.bf16.msra.mxu0 0
      %6622 = vmatprep.subr.bf16.mxu0 0
      %6623 = vmatpush2.bf16.msra.mxu0 0
      %6624 = vmatprep.subr.bf16.mxu0 0
      %6625 = vmatpush2.bf16.msra.mxu0 0
      %6626 = vmatprep.subr.bf16.mxu0 0
      %6627 = vmatpush2.bf16.msra.mxu0 0
      %6628 = vmatprep.subr.bf16.mxu0 0
      %6629 = vmatpush2.bf16.msra.mxu0 0
      %6630 = vmatprep.subr.bf16.mxu0 0
      %6631 = vmatpush2.bf16.msra.mxu0 0
      %6632 = vmatprep.mubr.bf16.mxu0 0
      %6633 = vmatmul.mubr.bf16.gmra.mxu0 %v6389
      %v6634 = vpop.f32.mrf.mxu0
      %v6635 = vadd.f32 %v6522, %v6634
      %v6636 = vpop.f32.mrf.mxu0
      %v6637 = vpop.f32.mrf.mxu0
      %v6638 = vadd.f32 %v6525, %v6637
      %v6639 = vpop.f32.mrf.mxu0
      %6640 = vmatprep.mubr.bf16.mxu0 0
      %6641 = vmatmul.mubr.bf16.gmra.mxu0 %v6390
      %v6642 = vpop.f32.mrf.mxu0
      %v6643 = vadd.f32 %v6530, %v6642
      %v6644 = vpop.f32.mrf.mxu0
      %v6645 = vpop.f32.mrf.mxu0
      %v6646 = vadd.f32 %v6533, %v6645
      %v6647 = vpop.f32.mrf.mxu0
      %6648 = vmatprep.mubr.bf16.mxu0 0
      %6649 = vmatmul.mubr.bf16.gmra.mxu0 %v6391
      %v6650 = vpop.f32.mrf.mxu0
      %v6651 = vadd.f32 %v6538, %v6650
      %v6652 = vpop.f32.mrf.mxu0
      %v6653 = vpop.f32.mrf.mxu0
      %v6654 = vadd.f32 %v6541, %v6653
      %v6655 = vpop.f32.mrf.mxu0
      %6656 = vmatprep.mubr.bf16.mxu0 0
      %6657 = vmatmul.mubr.bf16.gmra.mxu0 %v6392
      %v6658 = vpop.f32.mrf.mxu0
      %v6659 = vadd.f32 %v6546, %v6658
      %v6660 = vpop.f32.mrf.mxu0
      %v6661 = vpop.f32.mrf.mxu0
      %v6662 = vadd.f32 %v6549, %v6661
      %v6663 = vpop.f32.mrf.mxu0
      %6664 = vdwg.mxu0
      %v6665 = vld [vmem:[%s4033 + $0x1] sm:$0xff]
      %v6666 = vld [vmem:[%s4033 + $0x11] sm:$0xff]
      %v6667 = vld [vmem:[%s4033 + $0x21] sm:$0xff]
      %v6668 = vld [vmem:[%s4033 + $0x31] sm:$0xff]
      %v6669 = vld [vmem:[%s4033 + $0x41] sm:$0xff]
      %v6670 = vld [vmem:[%s4033 + $0x51] sm:$0xff]
      %v6671 = vld [vmem:[%s4033 + $0x61] sm:$0xff]
      %v6672 = vld [vmem:[%s4033 + $0x71] sm:$0xff]
      %v6673 = vpack.c.bf16 %v6666, %v6665
      %v6674 = vpack.c.bf16 %v6668, %v6667
      %v6675 = vpack.c.bf16 %v6670, %v6669
      %v6676 = vpack.c.bf16 %v6672, %v6671
      %s6677 = scalar_lea.vmem %s5, 896
      %v6678 = vld [vmem:[%s6677] sm:$0xf]
      %v6679 = vld [vmem:[%s6677 + $0x4] sm:$0xf]
      %v6680 = vld [vmem:[%s6677 + $0x8] sm:$0xf]
      %v6681 = vld [vmem:[%s6677 + $0xc] sm:$0xf]
      %v6682 = vld [vmem:[%s6677 + $0x10] sm:$0xf]
      %v6683 = vld [vmem:[%s6677 + $0x14] sm:$0xf]
      %v6684 = vld [vmem:[%s6677 + $0x18] sm:$0xf]
      %v6685 = vld [vmem:[%s6677 + $0x1c] sm:$0xf]
      %v6686 = vld [vmem:[%s6677 + $0x20] sm:$0xf]
      %v6687 = vld [vmem:[%s6677 + $0x24] sm:$0xf]
      %v6688 = vld [vmem:[%s6677 + $0x28] sm:$0xf]
      %v6689 = vld [vmem:[%s6677 + $0x2c] sm:$0xf]
      %v6690 = vld [vmem:[%s6677 + $0x30] sm:$0xf]
      %v6691 = vld [vmem:[%s6677 + $0x34] sm:$0xf]
      %v6692 = vld [vmem:[%s6677 + $0x38] sm:$0xf]
      %v6693 = vld [vmem:[%s6677 + $0x3c] sm:$0xf]
      %v6710 = vunpack.c.l.b16 %v6678
      %v6711 = vunpack.c.l.b16 %v6679
      %v6712 = vunpack.c.l.b16 %v6680
      %v6713 = vunpack.c.l.b16 %v6681
      %v6714 = vunpack.c.l.b16 %v6682
      %v6715 = vunpack.c.l.b16 %v6683
      %v6716 = vunpack.c.l.b16 %v6684
      %v6717 = vunpack.c.l.b16 %v6685
      %v6718 = vunpack.c.l.b16 %v6686
      %v6719 = vunpack.c.l.b16 %v6687
      %v6720 = vunpack.c.l.b16 %v6688
      %v6721 = vunpack.c.l.b16 %v6689
      %v6722 = vunpack.c.l.b16 %v6690
      %v6723 = vunpack.c.l.b16 %v6691
      %v6724 = vunpack.c.l.b16 %v6692
      %v6725 = vunpack.c.l.b16 %v6693
      %v6726 = vpack.c.b16 %v6711, %v6710
      %v6727 = vpack.c.b16 %v6713, %v6712
      %v6728 = vpack.c.b16 %v6715, %v6714
      %v6729 = vpack.c.b16 %v6717, %v6716
      %v6730 = vpack.c.b16 %v6719, %v6718
      %v6731 = vpack.c.b16 %v6721, %v6720
      %v6732 = vpack.c.b16 %v6723, %v6722
      %v6733 = vpack.c.b16 %v6725, %v6724
      %6742 = vmatprep.subr.bf16.mxu0 0
      %6743 = vmatpush1.bf16.msra.mxu0 %v6733
      %6744 = vmatprep.subr.bf16.mxu0 0
      %6745 = vmatpush1.bf16.msra.mxu0 %v6732
      %6746 = vmatprep.subr.bf16.mxu0 0
      %6747 = vmatpush1.bf16.msra.mxu0 %v6731
      %6748 = vmatprep.subr.bf16.mxu0 0
      %6749 = vmatpush1.bf16.msra.mxu0 %v6730
      %6750 = vmatprep.subr.bf16.mxu0 0
      %6751 = vmatpush1.bf16.msra.mxu0 %v6729
      %6752 = vmatprep.subr.bf16.mxu0 0
      %6753 = vmatpush1.bf16.msra.mxu0 %v6728
      %6754 = vmatprep.subr.bf16.mxu0 0
      %6755 = vmatpush1.bf16.msra.mxu0 %v6727
      %6756 = vmatprep.subr.bf16.mxu0 0
      %6757 = vmatpush1.bf16.msra.mxu0 %v6726
      %6758 = vmatprep.subr.bf16.mxu0 0
      %6759 = vmatpush2.bf16.msra.mxu0 0
      %6760 = vmatprep.subr.bf16.mxu0 0
      %6761 = vmatpush2.bf16.msra.mxu0 0
      %6762 = vmatprep.subr.bf16.mxu0 0
      %6763 = vmatpush2.bf16.msra.mxu0 0
      %6764 = vmatprep.subr.bf16.mxu0 0
      %6765 = vmatpush2.bf16.msra.mxu0 0
      %6766 = vmatprep.subr.bf16.mxu0 0
      %6767 = vmatpush2.bf16.msra.mxu0 0
      %6768 = vmatprep.subr.bf16.mxu0 0
      %6769 = vmatpush2.bf16.msra.mxu0 0
      %6770 = vmatprep.subr.bf16.mxu0 0
      %6771 = vmatpush2.bf16.msra.mxu0 0
      %6772 = vmatprep.subr.bf16.mxu0 0
      %6773 = vmatpush2.bf16.msra.mxu0 0
      %6774 = vmatprep.mubr.bf16.mxu0 0
      %6775 = vmatmul.mubr.bf16.gmra.mxu0 %v6673
      %v6776 = vpop.f32.mrf.mxu0
      %v6777 = vadd.f32 0.0, %v6776
      %v6778 = vpop.f32.mrf.mxu0
      %v6779 = vpop.f32.mrf.mxu0
      %v6780 = vadd.f32 0.0, %v6779
      %v6781 = vpop.f32.mrf.mxu0
      %6782 = vmatprep.mubr.bf16.mxu0 0
      %6783 = vmatmul.mubr.bf16.gmra.mxu0 %v6674
      %v6784 = vpop.f32.mrf.mxu0
      %v6785 = vadd.f32 0.0, %v6784
      %v6786 = vpop.f32.mrf.mxu0
      %v6787 = vpop.f32.mrf.mxu0
      %v6788 = vadd.f32 0.0, %v6787
      %v6789 = vpop.f32.mrf.mxu0
      %6790 = vmatprep.mubr.bf16.mxu0 0
      %6791 = vmatmul.mubr.bf16.gmra.mxu0 %v6675
      %v6792 = vpop.f32.mrf.mxu0
      %v6793 = vadd.f32 0.0, %v6792
      %v6794 = vpop.f32.mrf.mxu0
      %v6795 = vpop.f32.mrf.mxu0
      %v6796 = vadd.f32 0.0, %v6795
      %v6797 = vpop.f32.mrf.mxu0
      %6798 = vmatprep.mubr.bf16.mxu0 0
      %6799 = vmatmul.mubr.bf16.gmra.mxu0 %v6676
      %v6800 = vpop.f32.mrf.mxu0
      %v6801 = vadd.f32 0.0, %v6800
      %v6802 = vpop.f32.mrf.mxu0
      %v6803 = vpop.f32.mrf.mxu0
      %v6804 = vadd.f32 0.0, %v6803
      %v6805 = vpop.f32.mrf.mxu0
      %6806 = vdwg.mxu0
      %v6807 = vadd.f32 %v6635, %v6777
      %v6808 = vadd.f32 %v6638, %v6780
      %v6809 = vadd.f32 %v6643, %v6785
      %v6810 = vadd.f32 %v6646, %v6788
      %v6811 = vadd.f32 %v6651, %v6793
      %v6812 = vadd.f32 %v6654, %v6796
      %v6813 = vadd.f32 %v6659, %v6801
      %v6814 = vadd.f32 %v6662, %v6804
      %v6815 = vld [vmem:[%s4033 + $0x2] sm:$0xff]
      %v6816 = vld [vmem:[%s4033 + $0x12] sm:$0xff]
      %v6817 = vld [vmem:[%s4033 + $0x22] sm:$0xff]
      %v6818 = vld [vmem:[%s4033 + $0x32] sm:$0xff]
      %v6819 = vld [vmem:[%s4033 + $0x42] sm:$0xff]
      %v6820 = vld [vmem:[%s4033 + $0x52] sm:$0xff]
      %v6821 = vld [vmem:[%s4033 + $0x62] sm:$0xff]
      %v6822 = vld [vmem:[%s4033 + $0x72] sm:$0xff]
      %v6823 = vpack.c.bf16 %v6816, %v6815
      %v6824 = vpack.c.bf16 %v6818, %v6817
      %v6825 = vpack.c.bf16 %v6820, %v6819
      %v6826 = vpack.c.bf16 %v6822, %v6821
      %s6827 = scalar_lea.vmem %s5, 960
      %v6828 = vld [vmem:[%s6827] sm:$0xf]
      %v6829 = vld [vmem:[%s6827 + $0x4] sm:$0xf]
      %v6830 = vld [vmem:[%s6827 + $0x8] sm:$0xf]
      %v6831 = vld [vmem:[%s6827 + $0xc] sm:$0xf]
      %v6832 = vld [vmem:[%s6827 + $0x10] sm:$0xf]
      %v6833 = vld [vmem:[%s6827 + $0x14] sm:$0xf]
      %v6834 = vld [vmem:[%s6827 + $0x18] sm:$0xf]
      %v6835 = vld [vmem:[%s6827 + $0x1c] sm:$0xf]
      %v6836 = vld [vmem:[%s6827 + $0x20] sm:$0xf]
      %v6837 = vld [vmem:[%s6827 + $0x24] sm:$0xf]
      %v6838 = vld [vmem:[%s6827 + $0x28] sm:$0xf]
      %v6839 = vld [vmem:[%s6827 + $0x2c] sm:$0xf]
      %v6840 = vld [vmem:[%s6827 + $0x30] sm:$0xf]
      %v6841 = vld [vmem:[%s6827 + $0x34] sm:$0xf]
      %v6842 = vld [vmem:[%s6827 + $0x38] sm:$0xf]
      %v6843 = vld [vmem:[%s6827 + $0x3c] sm:$0xf]
      %v6860 = vunpack.c.l.b16 %v6828
      %v6861 = vunpack.c.l.b16 %v6829
      %v6862 = vunpack.c.l.b16 %v6830
      %v6863 = vunpack.c.l.b16 %v6831
      %v6864 = vunpack.c.l.b16 %v6832
      %v6865 = vunpack.c.l.b16 %v6833
      %v6866 = vunpack.c.l.b16 %v6834
      %v6867 = vunpack.c.l.b16 %v6835
      %v6868 = vunpack.c.l.b16 %v6836
      %v6869 = vunpack.c.l.b16 %v6837
      %v6870 = vunpack.c.l.b16 %v6838
      %v6871 = vunpack.c.l.b16 %v6839
      %v6872 = vunpack.c.l.b16 %v6840
      %v6873 = vunpack.c.l.b16 %v6841
      %v6874 = vunpack.c.l.b16 %v6842
      %v6875 = vunpack.c.l.b16 %v6843
      %v6876 = vpack.c.b16 %v6861, %v6860
      %v6877 = vpack.c.b16 %v6863, %v6862
      %v6878 = vpack.c.b16 %v6865, %v6864
      %v6879 = vpack.c.b16 %v6867, %v6866
      %v6880 = vpack.c.b16 %v6869, %v6868
      %v6881 = vpack.c.b16 %v6871, %v6870
      %v6882 = vpack.c.b16 %v6873, %v6872
      %v6883 = vpack.c.b16 %v6875, %v6874
      %6892 = vmatprep.subr.bf16.mxu0 0
      %6893 = vmatpush1.bf16.msra.mxu0 %v6883
      %6894 = vmatprep.subr.bf16.mxu0 0
      %6895 = vmatpush1.bf16.msra.mxu0 %v6882
      %6896 = vmatprep.subr.bf16.mxu0 0
      %6897 = vmatpush1.bf16.msra.mxu0 %v6881
      %6898 = vmatprep.subr.bf16.mxu0 0
      %6899 = vmatpush1.bf16.msra.mxu0 %v6880
      %6900 = vmatprep.subr.bf16.mxu0 0
      %6901 = vmatpush1.bf16.msra.mxu0 %v6879
      %6902 = vmatprep.subr.bf16.mxu0 0
      %6903 = vmatpush1.bf16.msra.mxu0 %v6878
      %6904 = vmatprep.subr.bf16.mxu0 0
      %6905 = vmatpush1.bf16.msra.mxu0 %v6877
      %6906 = vmatprep.subr.bf16.mxu0 0
      %6907 = vmatpush1.bf16.msra.mxu0 %v6876
      %6908 = vmatprep.subr.bf16.mxu0 0
      %6909 = vmatpush2.bf16.msra.mxu0 0
      %6910 = vmatprep.subr.bf16.mxu0 0
      %6911 = vmatpush2.bf16.msra.mxu0 0
      %6912 = vmatprep.subr.bf16.mxu0 0
      %6913 = vmatpush2.bf16.msra.mxu0 0
      %6914 = vmatprep.subr.bf16.mxu0 0
      %6915 = vmatpush2.bf16.msra.mxu0 0
      %6916 = vmatprep.subr.bf16.mxu0 0
      %6917 = vmatpush2.bf16.msra.mxu0 0
      %6918 = vmatprep.subr.bf16.mxu0 0
      %6919 = vmatpush2.bf16.msra.mxu0 0
      %6920 = vmatprep.subr.bf16.mxu0 0
      %6921 = vmatpush2.bf16.msra.mxu0 0
      %6922 = vmatprep.subr.bf16.mxu0 0
      %6923 = vmatpush2.bf16.msra.mxu0 0
      %6924 = vmatprep.mubr.bf16.mxu0 0
      %6925 = vmatmul.mubr.bf16.gmra.mxu0 %v6823
      %v6926 = vpop.f32.mrf.mxu0
      %v6927 = vadd.f32 0.0, %v6926
      %v6928 = vpop.f32.mrf.mxu0
      %v6929 = vpop.f32.mrf.mxu0
      %v6930 = vadd.f32 0.0, %v6929
      %v6931 = vpop.f32.mrf.mxu0
      %6932 = vmatprep.mubr.bf16.mxu0 0
      %6933 = vmatmul.mubr.bf16.gmra.mxu0 %v6824
      %v6934 = vpop.f32.mrf.mxu0
      %v6935 = vadd.f32 0.0, %v6934
      %v6936 = vpop.f32.mrf.mxu0
      %v6937 = vpop.f32.mrf.mxu0
      %v6938 = vadd.f32 0.0, %v6937
      %v6939 = vpop.f32.mrf.mxu0
      %6940 = vmatprep.mubr.bf16.mxu0 0
      %6941 = vmatmul.mubr.bf16.gmra.mxu0 %v6825
      %v6942 = vpop.f32.mrf.mxu0
      %v6943 = vadd.f32 0.0, %v6942
      %v6944 = vpop.f32.mrf.mxu0
      %v6945 = vpop.f32.mrf.mxu0
      %v6946 = vadd.f32 0.0, %v6945
      %v6947 = vpop.f32.mrf.mxu0
      %6948 = vmatprep.mubr.bf16.mxu0 0
      %6949 = vmatmul.mubr.bf16.gmra.mxu0 %v6826
      %v6950 = vpop.f32.mrf.mxu0
      %v6951 = vadd.f32 0.0, %v6950
      %v6952 = vpop.f32.mrf.mxu0
      %v6953 = vpop.f32.mrf.mxu0
      %v6954 = vadd.f32 0.0, %v6953
      %v6955 = vpop.f32.mrf.mxu0
      %6956 = vdwg.mxu0
      %v6957 = vadd.f32 %v6807, %v6927
      %v6958 = vadd.f32 %v6808, %v6930
      %v6959 = vadd.f32 %v6809, %v6935
      %v6960 = vadd.f32 %v6810, %v6938
      %v6961 = vadd.f32 %v6811, %v6943
      %v6962 = vadd.f32 %v6812, %v6946
      %v6963 = vadd.f32 %v6813, %v6951
      %v6964 = vadd.f32 %v6814, %v6954
      %vm6965 = vcmp.ge.f32.partialorder %v6957, 0.0
      %vm6966 = vcmp.ge.f32.partialorder %v6958, 0.0
      %vm6967 = vcmp.ge.f32.partialorder %v6959, 0.0
      %vm6968 = vcmp.ge.f32.partialorder %v6960, 0.0
      %vm6969 = vcmp.ge.f32.partialorder %v6961, 0.0
      %vm6970 = vcmp.ge.f32.partialorder %v6962, 0.0
      %vm6971 = vcmp.ge.f32.partialorder %v6963, 0.0
      %vm6972 = vcmp.ge.f32.partialorder %v6964, 0.0
      %v6973 = vmul.f32 %v6957, 0.1
      %v6974 = vmul.f32 %v6958, 0.1
      %v6975 = vmul.f32 %v6959, 0.1
      %v6976 = vmul.f32 %v6960, 0.1
      %v6977 = vmul.f32 %v6961, 0.1
      %v6978 = vmul.f32 %v6962, 0.1
      %v6979 = vmul.f32 %v6963, 0.1
      %v6980 = vmul.f32 %v6964, 0.1
      %v6981 = vsel %vm6965, %v6957, %v6973
      %v6982 = vsel %vm6966, %v6958, %v6974
      %v6983 = vsel %vm6967, %v6959, %v6975
      %v6984 = vsel %vm6968, %v6960, %v6976
      %v6985 = vsel %vm6969, %v6961, %v6977
      %v6986 = vsel %vm6970, %v6962, %v6978
      %v6987 = vsel %vm6971, %v6963, %v6979
      %v6988 = vsel %vm6972, %v6964, %v6980
      %s6989 = scalar_lea.vmem %s251, 192
      %6990 = vst.msk [vmem:[%s6989] sm:$0xff] %vm5138, %v6981
      %6991 = vst.msk [vmem:[%s6989 + $0x8] sm:$0xff] %vm5138, %v6982
      %6992 = vst.msk [vmem:[%s6989 + $0x10] sm:$0xff] %vm5138, %v6983
      %6993 = vst.msk [vmem:[%s6989 + $0x18] sm:$0xff] %vm5138, %v6984
      %6994 = vst.msk [vmem:[%s6989 + $0x20] sm:$0xff] %vm5138, %v6985
      %6995 = vst.msk [vmem:[%s6989 + $0x28] sm:$0xff] %vm5138, %v6986
      %6996 = vst.msk [vmem:[%s6989 + $0x30] sm:$0xff] %vm5138, %v6987
      %6997 = vst.msk [vmem:[%s6989 + $0x38] sm:$0xff] %vm5138, %v6988
      %p6998 = scmp.lt.s32.totalorder %s17, 1
      %s6999 = scalar_select %p6998, %s17, 1
      %s7000 = smul.addr %s6999, 32
      %s7001 = smul.addr %s7000, 8
      %s7002 = scalar_lea.vmem %s6, %s7001
      // Predicated region
      $region45: #{regressor_forward.2} parent=43 // pred_check
        %p7003 = pneg %p166
      $region46: #{regressor_forward.2} parent=43 // pred_check_branch
        %7005 = sbr.rel (%p7003) target = $region48
      $region47: #{regressor_forward.2} parent=43 // pred_region
        _
      $region48: #{regressor_forward.2} parent=43 // pred_fallthru
        _
    $region44: #{regressor_forward.2} parent=5 // pred_fallthru
      _
    %p7006 = scmp.le.s32.totalorder 2, %s12
    // Predicated region
    $region49: #{regressor_forward.2} parent=5 // pred_check
      %p7007 = pneg %p7006
    $region50: #{regressor_forward.2} parent=5 // pred_check_branch
      %7009 = sbr.rel (%p7007) target = $region52
    $region51: #{regressor_forward.2} parent=5 // pred_region
      %s7010 = ssub.s32 %s12, 2
      // Predicated region
      $region53: #{regressor_forward.2} parent=51 // pred_check
        %p7011 = pneg %p172
      $region54: #{regressor_forward.2} parent=51 // pred_check_branch
        %7013 = sbr.rel (%p7011) target = $region56
      $region55: #{regressor_forward.2} parent=51 // pred_region
        %p7014 = scmp.lt.s32.totalorder %s18, 1
        %s7015 = scalar_select %p7014, %s18, 1
        %s7016 = smul.addr %s7015, 32
        %s7017 = smul.addr %s7016, 8
        %s7018 = scalar_lea.vmem %s6, %s7017
      $region56: #{regressor_forward.2} parent=51 // pred_fallthru
        _
    $region52: #{regressor_forward.2} parent=5 // pred_fallthru
      _
  $region6: #{regressor_forward.2} parent=0 // loop_footer
    %s16 = sadd.s32 1, %s12
  $region7: #{regressor_forward.2} parent=0 // loop_footer_branch
    %11 = sbr.rel target = $region3
  $region8: #{regressor_forward.2} parent=0 // loop_exit
    _

</llo_original>
